<compile_context>
chip_gen: v6e
topology: v6e:2x2x1
jax: 0.10.0
libtpu: 0.0.40
codegen_flags: <defaults>
</compile_context>

<pallas_src>
import functools
import math

import jax
import jax.numpy as jnp
from jax import lax
from jax.experimental import pallas as pl
from jax.experimental.pallas import tpu as pltpu

# ----------------------------- configuration --------------------------------
STYLE_DIM = 128          # latent / style width (small stand-in for 512)
MAP_LAYERS = 8           # mapping network depth
MAP_LR_MUL = 0.01        # EqualLinear lr_mul in mapping network
IMG_SIZE = 16            # small stand-in for args.size
CHANNELS = {4: 32, 8: 16, 16: 8}
RESOLUTIONS = [8, 16]
BATCH = 2
SQRT2 = math.sqrt(2.0)
EPS = 1e-8


def _log2(v):
    return int(math.log2(v))


# ------------------------------ static plan ----------------------------------
def _build_plan():
    c4 = CHANNELS[4]
    convs = [dict(cin=c4, cout=c4, res=4)]
    rgbs = [dict(cin=c4, res=4)]
    mod_order = [('conv', 0), ('rgb', 0)]
    cprev, ci, ri = c4, 1, 1
    for res in RESOLUTIONS:
        c = CHANNELS[res]
        convs.append(dict(cin=cprev, cout=c, res=res))
        convs.append(dict(cin=c, cout=c, res=res))
        rgbs.append(dict(cin=c, res=res))
        mod_order += [('conv', ci), ('conv', ci + 1), ('rgb', ri)]
        ci += 2
        ri += 1
        cprev = c
    off = 0
    for kind, idx in mod_order:
        ent = convs[idx] if kind == 'conv' else rgbs[idx]
        ent['mod'] = (off, ent['cin'])
        off += ent['cin']
    return dict(convs=convs, rgbs=rgbs, mod_order=mod_order, mod_total=off)


_PLAN = _build_plan()


# -------------------------- in-kernel helper math -----------------------------
def _expand_cols(v, n, hw):
    """(C, B) -> (C, n): replicate column b over lane block [b*hw, (b+1)*hw)."""
    nb = v.shape[1]
    col = lax.broadcasted_iota(jnp.int32, (1, n), 1)
    b_of = jnp.right_shift(col, _log2(hw))
    out = jnp.where(b_of == 0, v[:, 0:1], jnp.float32(0.0))
    for b in range(1, nb):
        out = jnp.where(b_of == b, v[:, b:b + 1], out)
    return out


def _shift_cols(x, delta):
    """Shift lanes by +delta (reads x[:, n+delta]); vacated lanes are zero."""
    c, n = x.shape
    if delta == 0:
        return x
    if delta > 0:
        return jnp.concatenate(
            [x[:, delta:], jnp.zeros((c, delta), x.dtype)], axis=1)
    return jnp.concatenate(
        [jnp.zeros((c, -delta), x.dtype), x[:, :n + delta]], axis=1)


def _tap_params(n, hw, w_sp):
    """For each 3x3 tap: (flat lane delta, validity mask (1, n))."""
    h_sp = hw // w_sp
    col = lax.broadcasted_iota(jnp.int32, (1, n), 1)
    p = jnp.bitwise_and(col, hw - 1)
    i = jnp.right_shift(p, _log2(w_sp))
    j = jnp.bitwise_and(p, w_sp - 1)
    taps = []
    for kh in range(3):
        for kw in range(3):
            dh, dw = kh - 1, kw - 1
            ii = i + dh
            jj = j + dw
            valid = (ii >= 0) & (ii < h_sp) & (jj >= 0) & (jj < w_sp)
            taps.append((dh * w_sp + dw, valid))
    return taps


def _upsample_mat(hw_in, w_in, batch):
    """0/1 matrix U (B*hw_in, B*4*hw_in): x_up = x @ U is nearest-neighbor 2x."""
    w_out = w_in * 2
    hw_out = hw_in * 4
    n_in = batch * hw_in
    n_out = batch * hw_out
    q = lax.broadcasted_iota(jnp.int32, (n_in, n_out), 0)
    n = lax.broadcasted_iota(jnp.int32, (n_in, n_out), 1)
    b_o = jnp.right_shift(n, _log2(hw_out))
    p_o = jnp.bitwise_and(n, hw_out - 1)
    i_o = jnp.right_shift(p_o, _log2(w_out))
    j_o = jnp.bitwise_and(p_o, w_out - 1)
    src = (b_o * hw_in + jnp.right_shift(i_o, 1) * w_in
           + jnp.right_shift(j_o, 1))
    return jnp.where(q == src, jnp.float32(1.0), jnp.float32(0.0))


def _modulated_conv3x3(x, s, w_flat, w2, bias, noise, nstrength, hw, w_sp):
    """StyledConv: modulated 3x3 conv + demod + noise + FusedLeakyReLU.

    x:     (Cin, N=B*HW) activation
    s:     (Cin, B)      per-sample modulation
    w_flat:(Cout, 9*Cin) shared weight, tap-major, conv scale folded in
    w2:    (Cout, Cin)   sum over taps of (scaled weight)^2 (for demod)
    bias:  (Cout, 1)     FusedLeakyReLU bias
    noise: (1, N)        noise image, nstrength: (1, 1)
    """
    _, n = x.shape
    xm = x * _expand_cols(s, n, hw)                      # modulate activations
    taps = [jnp.where(valid, _shift_cols(xm, delta), jnp.float32(0.0))
            for delta, valid in _tap_params(n, hw, w_sp)]
    patches = jnp.concatenate(taps, axis=0)              # (9*Cin, N)
    out = jnp.dot(w_flat, patches, preferred_element_type=jnp.float32)
    demod = lax.rsqrt(
        jnp.dot(w2, s * s, preferred_element_type=jnp.float32) + EPS)
    out = out * _expand_cols(demod, n, hw)               # per-(b, Cout) scale
    out = out + nstrength * noise                        # noise injection
    out = out + bias
    return jnp.maximum(out, 0.2 * out) * SQRT2           # fused leaky relu


def _to_rgb_conv(x, s, w_rgb, bias, hw):
    """ToRGB: modulated 1x1 conv (no demod) + bias."""
    n = x.shape[1]
    xm = x * _expand_cols(s, n, hw)
    return jnp.dot(w_rgb, xm, preferred_element_type=jnp.float32) + bias


# ------------------------------- kernels -------------------------------------
def _mapping_kernel(z_ref, w_ref, b_ref, o_ref, *, n_layers):
    """PixelNorm + n_layers x (EqualLinear + fused leaky relu), fully fused.

    Weights are pre-transposed and pre-scaled; no in-kernel transpose.
    """
    x = z_ref[...]                                              # (B, D)
    x = x * lax.rsqrt(jnp.mean(x * x, axis=1, keepdims=True) + 1e-8)
    for l in range(n_layers):
        y = jnp.dot(x, w_ref[l], preferred_element_type=jnp.float32) + b_ref[l]
        x = jnp.maximum(y, 0.2 * y) * SQRT2
    o_ref[...] = x


def _synthesis_kernel(*refs, plan, batch):
    """Full StyleGAN2-style synthesis (const 4x4 -> RGB 16x16), one generator
    per grid step.  Activations live entirely in VMEM / vregs."""
    convs = plan['convs']
    rgbs = plan['rgbs']

    wT = refs[0][...]                 # (D, B) shared latent (transposed)
    modw = refs[1][0]                 # (S, D) stacked modulation weights
    modb = refs[2][0]                 # (S, 1)
    const = refs[3][0]                # (C4, B*16) pre-tiled constant input
    k = 4
    cw, cw2, cb, cn = [], [], [], []
    for _ in convs:
        cw.append(refs[k][0])
        cw2.append(refs[k + 1][0])
        cb.append(refs[k + 2][0])
        cn.append(refs[k + 3][0])
        k += 4
    rw, rb = [], []
    for _ in rgbs:
        rw.append(refs[k][0])
        rb.append(refs[k + 1][0])
        k += 2
    nstr = refs[k][0]                 # (1, padded n_conv) noise strengths
    out_ref = refs[k + 1]

    # All modulation EqualLinear layers fused into one matmul: (S, D) @ (D, B).
    s_all = jnp.dot(modw, wT, preferred_element_type=jnp.float32) + modb

    def sty(entry):
        off, cin = entry['mod']
        return s_all[off:off + cin, :]                    # (Cin, B)

    wsp = convs[0]['res']
    hw = wsp * wsp
    x = const                                             # (C4, B*16)
    x = _modulated_conv3x3(x, sty(convs[0]), cw[0], cw2[0], cb[0],
                           cn[0], nstr[:, 0:1], hw, wsp)
    skip = _to_rgb_conv(x, sty(rgbs[0]), rw[0], rb[0], hw)

    ci = 1
    for ri in range(1, len(rgbs)):
        # nearest-neighbor 2x upsample of activation and RGB skip (in-kernel)
        up = _upsample_mat(hw, wsp, batch)
        x = jnp.dot(x, up, preferred_element_type=jnp.float32)
        skip = jnp.dot(skip, up, preferred_element_type=jnp.float32)
        hw, wsp = hw * 4, wsp * 2
        for _ in range(2):                                # conv_up, conv
            x = _modulated_conv3x3(x, sty(convs[ci]), cw[ci], cw2[ci], cb[ci],
                                   cn[ci], nstr[:, ci:ci + 1], hw, wsp)
            ci += 1
        skip = skip + _to_rgb_conv(x, sty(rgbs[ri]), rw[ri], rb[ri], hw)

    out_ref[0] = skip                                     # (3, B*H*W) lane-dense


# ----------------------------- pallas wrappers --------------------------------
def mapping_network(map_w, map_b, z):
    b, d = z.shape
    n_layers = map_w.shape[0]
    return pl.pallas_call(
        functools.partial(_mapping_kernel, n_layers=n_layers),
        out_shape=jax.ShapeDtypeStruct((b, d), jnp.float32),
        grid=(1,),
        in_specs=[pl.BlockSpec((b, d), lambda i: (0, 0)),
                  pl.BlockSpec((n_layers, d, d), lambda i: (0, 0, 0)),
                  pl.BlockSpec((n_layers, 1, d), lambda i: (0, 0, 0))],
        out_specs=pl.BlockSpec((b, d), lambda i: (0, 0)),
    )(z, map_w, map_b)


def _gen_spec(shape):
    """BlockSpec selecting the per-generator slab of a (2, ...) stacked input."""
    rest = tuple(shape[1:])
    zeros = (0,) * len(rest)
    return pl.BlockSpec((1,) + rest, lambda g, _z=zeros: (g,) + _z)


def synthesize_pair(packed, w, noise_key_frozen, noise_key_train, batch):
    """Run frozen + trainable generators in ONE fused pallas_call (grid=(2,))."""
    wT = jnp.transpose(w)                                 # (D, B)

    convs_plan = _PLAN['convs']
    keys_f = jax.random.split(noise_key_frozen, len(convs_plan))
    keys_t = jax.random.split(noise_key_train, len(convs_plan))
    noises = []
    for i, cv in enumerate(convs_plan):
        hw = cv['res'] * cv['res']
        nf = jax.random.normal(keys_f[i], (batch, hw),
                               jnp.float32).reshape(1, batch * hw)
        nt = jax.random.normal(keys_t[i], (batch, hw),
                               jnp.float32).reshape(1, batch * hw)
        noises.append(jnp.stack([nf, nt], axis=0))        # (2, 1, B*hw)

    inputs = [wT, packed['modw'], packed['modb'], packed['const']]
    in_specs = [pl.BlockSpec(wT.shape, lambda g: (0, 0)),
                _gen_spec(packed['modw'].shape),
                _gen_spec(packed['modb'].shape),
                _gen_spec(packed['const'].shape)]
    for i, cd in enumerate(packed['convs']):
        for name in ('wflat', 'w2', 'bias'):
            inputs.append(cd[name])
            in_specs.append(_gen_spec(cd[name].shape))
        inputs.append(noises[i])
        in_specs.append(_gen_spec(noises[i].shape))
    for rd in packed['rgbs']:
        for name in ('w', 'bias'):
            inputs.append(rd[name])
            in_specs.append(_gen_spec(rd[name].shape))
    inputs.append(packed['nstrength'])
    in_specs.append(_gen_spec(packed['nstrength'].shape))

    n_out = batch * IMG_SIZE * IMG_SIZE
    out = pl.pallas_call(
        functools.partial(_synthesis_kernel, plan=_PLAN, batch=batch),
        out_shape=jax.ShapeDtypeStruct((2, 3, n_out), jnp.float32),
        grid=(2,),
        in_specs=in_specs,
        out_specs=pl.BlockSpec((1, 3, n_out), lambda g: (g, 0, 0)),
        compiler_params=pltpu.CompilerParams(
            dimension_semantics=("parallel",)),
    )(*inputs)
    # (2, 3, B*H*W) -> (2, B, 3, H, W)   (wrapper-side layout plumbing only)
    return out.reshape(2, 3, batch, IMG_SIZE, IMG_SIZE).transpose(0, 2, 1, 3, 4)


@functools.partial(jax.jit, static_argnames=("batch", "input_is_latent"))
def zssgan_forward(packed, map_w, map_b, z, key_f, key_t, batch,
                   input_is_latent):
    w = z if input_is_latent else mapping_network(map_w, map_b, z)
    return synthesize_pair(packed, w, key_f, key_t, batch)


# ---------------------------- parameter init ----------------------------------
def init_generator_params(seed):
    """Raw StyleGAN2-style parameters (PyTorch layout)."""
    key = jax.random.PRNGKey(seed)
    keys = iter(jax.random.split(key, 64))

    def nxt():
        return next(keys)

    def styled_conv_params(cin, cout):
        return dict(
            mod_w=jax.random.normal(nxt(), (cin, STYLE_DIM), jnp.float32),
            mod_b=jnp.ones((cin,), jnp.float32),                  # bias_init=1
            weight=jax.random.normal(nxt(), (cout, cin, 3, 3), jnp.float32),
            act_bias=jnp.zeros((cout,), jnp.float32),             # FusedLeakyReLU
            noise_strength=jnp.zeros((), jnp.float32),            # NoiseInjection
        )

    def to_rgb_params(cin):
        return dict(
            mod_w=jax.random.normal(nxt(), (cin, STYLE_DIM), jnp.float32),
            mod_b=jnp.ones((cin,), jnp.float32),
            weight=jax.random.normal(nxt(), (3, cin, 1, 1), jnp.float32),
            bias=jnp.zeros((3,), jnp.float32),
        )

    p = {
        'map_w': jax.random.normal(nxt(), (MAP_LAYERS, STYLE_DIM, STYLE_DIM),
                                   jnp.float32),
        'map_b': jnp.zeros((MAP_LAYERS, STYLE_DIM), jnp.float32),
        'const': jax.random.normal(nxt(), (1, CHANNELS[4], 4, 4), jnp.float32),
        'conv1': styled_conv_params(CHANNELS[4], CHANNELS[4]),
        'to_rgb1': to_rgb_params(CHANNELS[4]),
    }
    cprev = CHANNELS[4]
    for res in RESOLUTIONS:
        c = CHANNELS[res]
        p[f'res{res}'] = dict(
            conv_up=styled_conv_params(cprev, c),
            conv=styled_conv_params(c, c),
            to_rgb=to_rgb_params(c),
        )
        cprev = c
    return p


def pack_generator_params(p, batch):
    """Pre-transpose / pre-scale / flatten raw params into kernel-ready arrays."""
    convs_raw = [p['conv1']]
    rgbs_raw = [p['to_rgb1']]
    for res in RESOLUTIONS:
        convs_raw += [p[f'res{res}']['conv_up'], p[f'res{res}']['conv']]
        rgbs_raw.append(p[f'res{res}']['to_rgb'])

    mod_scale = 1.0 / math.sqrt(STYLE_DIM)
    modw_rows, modb_rows = [], []
    for kind, idx in _PLAN['mod_order']:
        layer = convs_raw[idx] if kind == 'conv' else rgbs_raw[idx]
        modw_rows.append(layer['mod_w'] * mod_scale)
        modb_rows.append(layer['mod_b'])
    modw = jnp.concatenate(modw_rows, axis=0)                   # (160, D)
    modb = jnp.concatenate(modb_rows, axis=0)[:, None]          # (160, 1)

    convs = []
    for layer in convs_raw:
        wt = layer['weight']                                    # (Cout,Cin,3,3)
        cout, cin = wt.shape[0], wt.shape[1]
        ws = wt * (1.0 / math.sqrt(cin * 9))                    # fold conv scale
        convs.append(dict(
            wflat=jnp.transpose(ws, (0, 2, 3, 1)).reshape(cout, 9 * cin),
            w2=jnp.sum(ws * ws, axis=(2, 3)),                   # (Cout, Cin)
            bias=layer['act_bias'][:, None]))

    rgbs = []
    for layer in rgbs_raw:
        wt = layer['weight']                                    # (3, Cin, 1, 1)
        cin = wt.shape[1]
        rgbs.append(dict(w=wt[:, :, 0, 0] * (1.0 / math.sqrt(cin)),
                         bias=layer['bias'][:, None]))

    nconv = len(convs_raw)
    npad = max(8, nconv)
    nstr = jnp.zeros((1, npad), jnp.float32).at[0, :nconv].set(
        jnp.stack([layer['noise_strength'] for layer in convs_raw]))

    c4 = CHANNELS[4]
    const = jnp.tile(p['const'][0].reshape(c4, 16), (1, batch))  # (C4, B*16)

    return dict(modw=modw, modb=modb, const=const, convs=convs,
                rgbs=rgbs, nstrength=nstr)


# ------------------------------- ZSSGAN ---------------------------------------
class ZSSGANPallas:
    """Pallas re-implementation of ZSSGAN.forward (need_loss=False branch)."""

    def __init__(self, seed=0, batch=BATCH):
        self.batch = batch
        frozen_raw = init_generator_params(seed + 1)
        train_raw = init_generator_params(seed + 2)
        packed_f = pack_generator_params(frozen_raw, batch)
        packed_t = pack_generator_params(train_raw, batch)
        # stack frozen/trainable params along a leading generator axis of size 2
        self.packed = jax.tree_util.tree_map(
            lambda a, b: jnp.stack([a, b], axis=0), packed_f, packed_t)
        # mapping network (frozen generator's .style), pre-transposed / scaled
        map_scale = (1.0 / math.sqrt(STYLE_DIM)) * MAP_LR_MUL
        self.map_w = jnp.transpose(frozen_raw['map_w'], (0, 2, 1)) * map_scale
        self.map_b = (frozen_raw['map_b'] * MAP_LR_MUL)[:, None, :]  # (L, 1, D)
        self.noise_key_frozen = jax.random.PRNGKey(seed + 101)
        self.noise_key_train = jax.random.PRNGKey(seed + 102)

    def forward(self, styles, input_is_latent=False, need_loss=False):
        z = styles[0]
        imgs = zssgan_forward(self.packed, self.map_w, self.map_b, z,
                              self.noise_key_frozen, self.noise_key_train,
                              batch=self.batch,
                              input_is_latent=input_is_latent)
        frozen_img, trainable_img = imgs[0], imgs[1]
        # TODO(synk): CLIP directional loss requires pretrained CLIP; returning 0
        # like the need_loss=False branch of the reference module.
        return [frozen_img, trainable_img], 0.0


# --------------------------------- main ----------------------------------------
if __name__ == "__main__":
    key = jax.random.PRNGKey(0)
    z = jax.random.normal(key, (BATCH, STYLE_DIM), jnp.float32)

    model = ZSSGANPallas(seed=0, batch=BATCH)
    (frozen_img, trainable_img), clip_loss = model.forward([z], need_loss=False)

    frozen_img = jax.block_until_ready(frozen_img)
    trainable_img = jax.block_until_ready(trainable_img)

    assert frozen_img.shape == (BATCH, 3, IMG_SIZE, IMG_SIZE)
    assert trainable_img.shape == (BATCH, 3, IMG_SIZE, IMG_SIZE)
    assert frozen_img.dtype == jnp.float32 and trainable_img.dtype == jnp.float32
    assert bool(jnp.all(jnp.isfinite(frozen_img)))
    assert bool(jnp.all(jnp.isfinite(trainable_img)))
    print("KERNEL_OK")
</pallas_src>

<mosaic_0001>
module attributes {stable_mosaic.version = 11 : i64} {
  func.func @_mapping_kernel(%arg0: i32, %arg1: memref<2x128xf32, #tpu.memory_space<vmem>>, %arg2: memref<8x128x128xf32, #tpu.memory_space<vmem>>, %arg3: memref<8x1x128xf32, #tpu.memory_space<vmem>>, %arg4: memref<2x128xf32, #tpu.memory_space<vmem>>) attributes {dimension_semantics = [#tpu.dimension_semantics<arbitrary>], iteration_bounds = array<i64: 1>, scalar_prefetch = 0 : i64, scratch_operands = 0 : i64, tpu.core_type = #tpu.core_type<tc>, window_params = [{pipeline_mode = #tpu.pipeline_mode<synchronous>, transform_indices = @transform_0, window_bounds = array<i64: 2, 128>}, {pipeline_mode = #tpu.pipeline_mode<synchronous>, transform_indices = @transform_1, window_bounds = array<i64: 8, 128, 128>}, {pipeline_mode = #tpu.pipeline_mode<synchronous>, transform_indices = @transform_2, window_bounds = array<i64: 8, 1, 128>}, {pipeline_mode = #tpu.pipeline_mode<synchronous>, transform_indices = @transform_3, window_bounds = array<i64: 2, 128>}]} {
    %c0 = arith.constant 0 : index
    %c0_0 = arith.constant 0 : index
    %0 = vector.load %arg1[%c0, %c0_0] : memref<2x128xf32, #tpu.memory_space<vmem>>, vector<2x128xf32>
    %1 = arith.mulf %0, %0 : vector<2x128xf32>
    %cst = arith.constant dense<0.000000e+00> : vector<2xf32>
    %2 = vector.multi_reduction <add>, %1, %cst [1] : vector<2x128xf32> to vector<2xf32>
    %3 = vector.shape_cast %2 : vector<2xf32> to vector<2x1xf32>
    %cst_1 = arith.constant 1.280000e+02 : f32
    %4 = vector.broadcast %cst_1 : f32 to vector<2x1xf32>
    %5 = arith.divf %3, %4 : vector<2x1xf32>
    %cst_2 = arith.constant 9.99999993E-9 : f32
    %6 = vector.broadcast %cst_2 : f32 to vector<2x1xf32>
    %7 = arith.addf %5, %6 : vector<2x1xf32>
    %8 = math.rsqrt %7 : vector<2x1xf32>
    %9 = vector.broadcast %8 : vector<2x1xf32> to vector<2x128xf32>
    %10 = arith.mulf %0, %9 : vector<2x128xf32>
    %c0_3 = arith.constant 0 : index
    %c0_4 = arith.constant 0 : index
    %c0_5 = arith.constant 0 : index
    %11 = vector.load %arg2[%c0_3, %c0_4, %c0_5] : memref<8x128x128xf32, #tpu.memory_space<vmem>>, vector<1x128x128xf32>
    %12 = vector.shape_cast %11 : vector<1x128x128xf32> to vector<128x128xf32>
    %cst_6 = arith.constant dense<0.000000e+00> : vector<2x128xf32>
    %13 = tpu.matmul %10, %12, %cst_6 {dimension_numbers = #tpu.dot_dimension_numbers<[1], [0], [0], [1], [0, 0, 1, 1], [], []>} : vector<2x128xf32>, vector<128x128xf32>, vector<2x128xf32> -> vector<2x128xf32>
    %c0_7 = arith.constant 0 : index
    %c0_8 = arith.constant 0 : index
    %c0_9 = arith.constant 0 : index
    %14 = vector.load %arg3[%c0_7, %c0_8, %c0_9] : memref<8x1x128xf32, #tpu.memory_space<vmem>>, vector<1x1x128xf32>
    %15 = vector.shape_cast %14 : vector<1x1x128xf32> to vector<1x128xf32>
    %16 = vector.broadcast %15 : vector<1x128xf32> to vector<2x128xf32>
    %17 = arith.addf %13, %16 : vector<2x128xf32>
    %cst_10 = arith.constant 2.000000e-01 : f32
    %18 = vector.broadcast %cst_10 : f32 to vector<2x128xf32>
    %19 = arith.mulf %18, %17 : vector<2x128xf32>
    %20 = arith.maximumf %17, %19 : vector<2x128xf32>
    %cst_11 = arith.constant 1.41421354 : f32
    %21 = vector.broadcast %cst_11 : f32 to vector<2x128xf32>
    %22 = arith.mulf %20, %21 : vector<2x128xf32>
    %c1 = arith.constant 1 : index
    %c0_12 = arith.constant 0 : index
    %c0_13 = arith.constant 0 : index
    %23 = vector.load %arg2[%c1, %c0_12, %c0_13] : memref<8x128x128xf32, #tpu.memory_space<vmem>>, vector<1x128x128xf32>
    %24 = vector.shape_cast %23 : vector<1x128x128xf32> to vector<128x128xf32>
    %cst_14 = arith.constant dense<0.000000e+00> : vector<2x128xf32>
    %25 = tpu.matmul %22, %24, %cst_14 {dimension_numbers = #tpu.dot_dimension_numbers<[1], [0], [0], [1], [0, 0, 1, 1], [], []>} : vector<2x128xf32>, vector<128x128xf32>, vector<2x128xf32> -> vector<2x128xf32>
    %c1_15 = arith.constant 1 : index
    %c0_16 = arith.constant 0 : index
    %c0_17 = arith.constant 0 : index
    %26 = vector.load %arg3[%c1_15, %c0_16, %c0_17] : memref<8x1x128xf32, #tpu.memory_space<vmem>>, vector<1x1x128xf32>
    %27 = vector.shape_cast %26 : vector<1x1x128xf32> to vector<1x128xf32>
    %28 = vector.broadcast %27 : vector<1x128xf32> to vector<2x128xf32>
    %29 = arith.addf %25, %28 : vector<2x128xf32>
    %cst_18 = arith.constant 2.000000e-01 : f32
    %30 = vector.broadcast %cst_18 : f32 to vector<2x128xf32>
    %31 = arith.mulf %30, %29 : vector<2x128xf32>
    %32 = arith.maximumf %29, %31 : vector<2x128xf32>
    %cst_19 = arith.constant 1.41421354 : f32
    %33 = vector.broadcast %cst_19 : f32 to vector<2x128xf32>
    %34 = arith.mulf %32, %33 : vector<2x128xf32>
    %c2 = arith.constant 2 : index
    %c0_20 = arith.constant 0 : index
    %c0_21 = arith.constant 0 : index
    %35 = vector.load %arg2[%c2, %c0_20, %c0_21] : memref<8x128x128xf32, #tpu.memory_space<vmem>>, vector<1x128x128xf32>
    %36 = vector.shape_cast %35 : vector<1x128x128xf32> to vector<128x128xf32>
    %cst_22 = arith.constant dense<0.000000e+00> : vector<2x128xf32>
    %37 = tpu.matmul %34, %36, %cst_22 {dimension_numbers = #tpu.dot_dimension_numbers<[1], [0], [0], [1], [0, 0, 1, 1], [], []>} : vector<2x128xf32>, vector<128x128xf32>, vector<2x128xf32> -> vector<2x128xf32>
    %c2_23 = arith.constant 2 : index
    %c0_24 = arith.constant 0 : index
    %c0_25 = arith.constant 0 : index
    %38 = vector.load %arg3[%c2_23, %c0_24, %c0_25] : memref<8x1x128xf32, #tpu.memory_space<vmem>>, vector<1x1x128xf32>
    %39 = vector.shape_cast %38 : vector<1x1x128xf32> to vector<1x128xf32>
    %40 = vector.broadcast %39 : vector<1x128xf32> to vector<2x128xf32>
    %41 = arith.addf %37, %40 : vector<2x128xf32>
    %cst_26 = arith.constant 2.000000e-01 : f32
    %42 = vector.broadcast %cst_26 : f32 to vector<2x128xf32>
    %43 = arith.mulf %42, %41 : vector<2x128xf32>
    %44 = arith.maximumf %41, %43 : vector<2x128xf32>
    %cst_27 = arith.constant 1.41421354 : f32
    %45 = vector.broadcast %cst_27 : f32 to vector<2x128xf32>
    %46 = arith.mulf %44, %45 : vector<2x128xf32>
    %c3 = arith.constant 3 : index
    %c0_28 = arith.constant 0 : index
    %c0_29 = arith.constant 0 : index
    %47 = vector.load %arg2[%c3, %c0_28, %c0_29] : memref<8x128x128xf32, #tpu.memory_space<vmem>>, vector<1x128x128xf32>
    %48 = vector.shape_cast %47 : vector<1x128x128xf32> to vector<128x128xf32>
    %cst_30 = arith.constant dense<0.000000e+00> : vector<2x128xf32>
    %49 = tpu.matmul %46, %48, %cst_30 {dimension_numbers = #tpu.dot_dimension_numbers<[1], [0], [0], [1], [0, 0, 1, 1], [], []>} : vector<2x128xf32>, vector<128x128xf32>, vector<2x128xf32> -> vector<2x128xf32>
    %c3_31 = arith.constant 3 : index
    %c0_32 = arith.constant 0 : index
    %c0_33 = arith.constant 0 : index
    %50 = vector.load %arg3[%c3_31, %c0_32, %c0_33] : memref<8x1x128xf32, #tpu.memory_space<vmem>>, vector<1x1x128xf32>
    %51 = vector.shape_cast %50 : vector<1x1x128xf32> to vector<1x128xf32>
    %52 = vector.broadcast %51 : vector<1x128xf32> to vector<2x128xf32>
    %53 = arith.addf %49, %52 : vector<2x128xf32>
    %cst_34 = arith.constant 2.000000e-01 : f32
    %54 = vector.broadcast %cst_34 : f32 to vector<2x128xf32>
    %55 = arith.mulf %54, %53 : vector<2x128xf32>
    %56 = arith.maximumf %53, %55 : vector<2x128xf32>
    %cst_35 = arith.constant 1.41421354 : f32
    %57 = vector.broadcast %cst_35 : f32 to vector<2x128xf32>
    %58 = arith.mulf %56, %57 : vector<2x128xf32>
    %c4 = arith.constant 4 : index
    %c0_36 = arith.constant 0 : index
    %c0_37 = arith.constant 0 : index
    %59 = vector.load %arg2[%c4, %c0_36, %c0_37] : memref<8x128x128xf32, #tpu.memory_space<vmem>>, vector<1x128x128xf32>
    %60 = vector.shape_cast %59 : vector<1x128x128xf32> to vector<128x128xf32>
    %cst_38 = arith.constant dense<0.000000e+00> : vector<2x128xf32>
    %61 = tpu.matmul %58, %60, %cst_38 {dimension_numbers = #tpu.dot_dimension_numbers<[1], [0], [0], [1], [0, 0, 1, 1], [], []>} : vector<2x128xf32>, vector<128x128xf32>, vector<2x128xf32> -> vector<2x128xf32>
    %c4_39 = arith.constant 4 : index
    %c0_40 = arith.constant 0 : index
    %c0_41 = arith.constant 0 : index
    %62 = vector.load %arg3[%c4_39, %c0_40, %c0_41] : memref<8x1x128xf32, #tpu.memory_space<vmem>>, vector<1x1x128xf32>
    %63 = vector.shape_cast %62 : vector<1x1x128xf32> to vector<1x128xf32>
    %64 = vector.broadcast %63 : vector<1x128xf32> to vector<2x128xf32>
    %65 = arith.addf %61, %64 : vector<2x128xf32>
    %cst_42 = arith.constant 2.000000e-01 : f32
    %66 = vector.broadcast %cst_42 : f32 to vector<2x128xf32>
    %67 = arith.mulf %66, %65 : vector<2x128xf32>
    %68 = arith.maximumf %65, %67 : vector<2x128xf32>
    %cst_43 = arith.constant 1.41421354 : f32
    %69 = vector.broadcast %cst_43 : f32 to vector<2x128xf32>
    %70 = arith.mulf %68, %69 : vector<2x128xf32>
    %c5 = arith.constant 5 : index
    %c0_44 = arith.constant 0 : index
    %c0_45 = arith.constant 0 : index
    %71 = vector.load %arg2[%c5, %c0_44, %c0_45] : memref<8x128x128xf32, #tpu.memory_space<vmem>>, vector<1x128x128xf32>
    %72 = vector.shape_cast %71 : vector<1x128x128xf32> to vector<128x128xf32>
    %cst_46 = arith.constant dense<0.000000e+00> : vector<2x128xf32>
    %73 = tpu.matmul %70, %72, %cst_46 {dimension_numbers = #tpu.dot_dimension_numbers<[1], [0], [0], [1], [0, 0, 1, 1], [], []>} : vector<2x128xf32>, vector<128x128xf32>, vector<2x128xf32> -> vector<2x128xf32>
    %c5_47 = arith.constant 5 : index
    %c0_48 = arith.constant 0 : index
    %c0_49 = arith.constant 0 : index
    %74 = vector.load %arg3[%c5_47, %c0_48, %c0_49] : memref<8x1x128xf32, #tpu.memory_space<vmem>>, vector<1x1x128xf32>
    %75 = vector.shape_cast %74 : vector<1x1x128xf32> to vector<1x128xf32>
    %76 = vector.broadcast %75 : vector<1x128xf32> to vector<2x128xf32>
    %77 = arith.addf %73, %76 : vector<2x128xf32>
    %cst_50 = arith.constant 2.000000e-01 : f32
    %78 = vector.broadcast %cst_50 : f32 to vector<2x128xf32>
    %79 = arith.mulf %78, %77 : vector<2x128xf32>
    %80 = arith.maximumf %77, %79 : vector<2x128xf32>
    %cst_51 = arith.constant 1.41421354 : f32
    %81 = vector.broadcast %cst_51 : f32 to vector<2x128xf32>
    %82 = arith.mulf %80, %81 : vector<2x128xf32>
    %c6 = arith.constant 6 : index
    %c0_52 = arith.constant 0 : index
    %c0_53 = arith.constant 0 : index
    %83 = vector.load %arg2[%c6, %c0_52, %c0_53] : memref<8x128x128xf32, #tpu.memory_space<vmem>>, vector<1x128x128xf32>
    %84 = vector.shape_cast %83 : vector<1x128x128xf32> to vector<128x128xf32>
    %cst_54 = arith.constant dense<0.000000e+00> : vector<2x128xf32>
    %85 = tpu.matmul %82, %84, %cst_54 {dimension_numbers = #tpu.dot_dimension_numbers<[1], [0], [0], [1], [0, 0, 1, 1], [], []>} : vector<2x128xf32>, vector<128x128xf32>, vector<2x128xf32> -> vector<2x128xf32>
    %c6_55 = arith.constant 6 : index
    %c0_56 = arith.constant 0 : index
    %c0_57 = arith.constant 0 : index
    %86 = vector.load %arg3[%c6_55, %c0_56, %c0_57] : memref<8x1x128xf32, #tpu.memory_space<vmem>>, vector<1x1x128xf32>
    %87 = vector.shape_cast %86 : vector<1x1x128xf32> to vector<1x128xf32>
    %88 = vector.broadcast %87 : vector<1x128xf32> to vector<2x128xf32>
    %89 = arith.addf %85, %88 : vector<2x128xf32>
    %cst_58 = arith.constant 2.000000e-01 : f32
    %90 = vector.broadcast %cst_58 : f32 to vector<2x128xf32>
    %91 = arith.mulf %90, %89 : vector<2x128xf32>
    %92 = arith.maximumf %89, %91 : vector<2x128xf32>
    %cst_59 = arith.constant 1.41421354 : f32
    %93 = vector.broadcast %cst_59 : f32 to vector<2x128xf32>
    %94 = arith.mulf %92, %93 : vector<2x128xf32>
    %c7 = arith.constant 7 : index
    %c0_60 = arith.constant 0 : index
    %c0_61 = arith.constant 0 : index
    %95 = vector.load %arg2[%c7, %c0_60, %c0_61] : memref<8x128x128xf32, #tpu.memory_space<vmem>>, vector<1x128x128xf32>
    %96 = vector.shape_cast %95 : vector<1x128x128xf32> to vector<128x128xf32>
    %cst_62 = arith.constant dense<0.000000e+00> : vector<2x128xf32>
    %97 = tpu.matmul %94, %96, %cst_62 {dimension_numbers = #tpu.dot_dimension_numbers<[1], [0], [0], [1], [0, 0, 1, 1], [], []>} : vector<2x128xf32>, vector<128x128xf32>, vector<2x128xf32> -> vector<2x128xf32>
    %c7_63 = arith.constant 7 : index
    %c0_64 = arith.constant 0 : index
    %c0_65 = arith.constant 0 : index
    %98 = vector.load %arg3[%c7_63, %c0_64, %c0_65] : memref<8x1x128xf32, #tpu.memory_space<vmem>>, vector<1x1x128xf32>
    %99 = vector.shape_cast %98 : vector<1x1x128xf32> to vector<1x128xf32>
    %100 = vector.broadcast %99 : vector<1x128xf32> to vector<2x128xf32>
    %101 = arith.addf %97, %100 : vector<2x128xf32>
    %cst_66 = arith.constant 2.000000e-01 : f32
    %102 = vector.broadcast %cst_66 : f32 to vector<2x128xf32>
    %103 = arith.mulf %102, %101 : vector<2x128xf32>
    %104 = arith.maximumf %101, %103 : vector<2x128xf32>
    %cst_67 = arith.constant 1.41421354 : f32
    %105 = vector.broadcast %cst_67 : f32 to vector<2x128xf32>
    %106 = arith.mulf %104, %105 : vector<2x128xf32>
    %c0_68 = arith.constant 0 : index
    %c0_69 = arith.constant 0 : index
    %107 = vector.load %arg4[%c0_68, %c0_69] : memref<2x128xf32, #tpu.memory_space<vmem>>, vector<2x128xf32>
    tpu.vector_store %arg4[%c0_68, %c0_69], %106 {strides = array<i32>} : memref<2x128xf32, #tpu.memory_space<vmem>>, vector<2x128xf32>,
    return
  }
  func.func @transform_0(%arg0: i32) -> (i32, i32) {
    %c0_i32 = arith.constant 0 : i32
    %c0_i32_0 = arith.constant 0 : i32
    %c0_i32_1 = arith.constant 0 : i32
    return %c0_i32, %c0_i32_0 : i32, i32
  }
  func.func @transform_1(%arg0: i32) -> (i32, i32, i32) {
    %c0_i32 = arith.constant 0 : i32
    %c0_i32_0 = arith.constant 0 : i32
    %c0_i32_1 = arith.constant 0 : i32
    %c0_i32_2 = arith.constant 0 : i32
    return %c0_i32, %c0_i32_0, %c0_i32_1 : i32, i32, i32
  }
  func.func @transform_2(%arg0: i32) -> (i32, i32, i32) {
    %c0_i32 = arith.constant 0 : i32
    %c0_i32_0 = arith.constant 0 : i32
    %c0_i32_1 = arith.constant 0 : i32
    %c0_i32_2 = arith.constant 0 : i32
    return %c0_i32, %c0_i32_0, %c0_i32_1 : i32, i32, i32
  }
  func.func @transform_3(%arg0: i32) -> (i32, i32) {
    %c0_i32 = arith.constant 0 : i32
    %c0_i32_0 = arith.constant 0 : i32
    %c0_i32_1 = arith.constant 0 : i32
    return %c0_i32, %c0_i32_0 : i32, i32
  }
}

module attributes {stable_mosaic.version = 11 : i64} {
  func.func @_synthesis_kernel(%arg0: i32, %arg1: memref<128x2xf32, #tpu.memory_space<vmem>>, %arg2: memref<1x160x128xf32, #tpu.memory_space<vmem>>, %arg3: memref<1x160x1xf32, #tpu.memory_space<vmem>>, %arg4: memref<1x32x32xf32, #tpu.memory_space<vmem>>, %arg5: memref<1x32x288xf32, #tpu.memory_space<vmem>>, %arg6: memref<1x32x32xf32, #tpu.memory_space<vmem>>, %arg7: memref<1x32x1xf32, #tpu.memory_space<vmem>>, %arg8: memref<1x1x32xf32, #tpu.memory_space<vmem>>, %arg9: memref<1x16x288xf32, #tpu.memory_space<vmem>>, %arg10: memref<1x16x32xf32, #tpu.memory_space<vmem>>, %arg11: memref<1x16x1xf32, #tpu.memory_space<vmem>>, %arg12: memref<1x1x128xf32, #tpu.memory_space<vmem>>, %arg13: memref<1x16x144xf32, #tpu.memory_space<vmem>>, %arg14: memref<1x16x16xf32, #tpu.memory_space<vmem>>, %arg15: memref<1x16x1xf32, #tpu.memory_space<vmem>>, %arg16: memref<1x1x128xf32, #tpu.memory_space<vmem>>, %arg17: memref<1x8x144xf32, #tpu.memory_space<vmem>>, %arg18: memref<1x8x16xf32, #tpu.memory_space<vmem>>, %arg19: memref<1x8x1xf32, #tpu.memory_space<vmem>>, %arg20: memref<1x1x512xf32, #tpu.memory_space<vmem>>, %arg21: memref<1x8x72xf32, #tpu.memory_space<vmem>>, %arg22: memref<1x8x8xf32, #tpu.memory_space<vmem>>, %arg23: memref<1x8x1xf32, #tpu.memory_space<vmem>>, %arg24: memref<1x1x512xf32, #tpu.memory_space<vmem>>, %arg25: memref<1x3x32xf32, #tpu.memory_space<vmem>>, %arg26: memref<1x3x1xf32, #tpu.memory_space<vmem>>, %arg27: memref<1x3x16xf32, #tpu.memory_space<vmem>>, %arg28: memref<1x3x1xf32, #tpu.memory_space<vmem>>, %arg29: memref<1x3x8xf32, #tpu.memory_space<vmem>>, %arg30: memref<1x3x1xf32, #tpu.memory_space<vmem>>, %arg31: memref<1x1x8xf32, #tpu.memory_space<vmem>>, %arg32: memref<1x3x512xf32, #tpu.memory_space<vmem>>) attributes {dimension_semantics = [#tpu.dimension_semantics<parallel>], iteration_bounds = array<i64: 2>, scalar_prefetch = 0 : i64, scratch_operands = 0 : i64, tpu.core_type = #tpu.core_type<tc>, window_params = [{pipeline_mode = #tpu.pipeline_mode<synchronous>, transform_indices = @transform_0, window_bounds = array<i64: 128, 2>}, {transform_indices = @transform_1, window_bounds = array<i64: 1, 160, 128>}, {transform_indices = @transform_2, window_bounds = array<i64: 1, 160, 1>}, {transform_indices = @transform_3, window_bounds = array<i64: 1, 32, 32>}, {transform_indices = @transform_4, window_bounds = array<i64: 1, 32, 288>}, {transform_indices = @transform_5, window_bounds = array<i64: 1, 32, 32>}, {transform_indices = @transform_6, window_bounds = array<i64: 1, 32, 1>}, {transform_indices = @transform_7, window_bounds = array<i64: 1, 1, 32>}, {transform_indices = @transform_8, window_bounds = array<i64: 1, 16, 288>}, {transform_indices = @transform_9, window_bounds = array<i64: 1, 16, 32>}, {transform_indices = @transform_10, window_bounds = array<i64: 1, 16, 1>}, {transform_indices = @transform_11, window_bounds = array<i64: 1, 1, 128>}, {transform_indices = @transform_12, window_bounds = array<i64: 1, 16, 144>}, {transform_indices = @transform_13, window_bounds = array<i64: 1, 16, 16>}, {transform_indices = @transform_14, window_bounds = array<i64: 1, 16, 1>}, {transform_indices = @transform_15, window_bounds = array<i64: 1, 1, 128>}, {transform_indices = @transform_16, window_bounds = array<i64: 1, 8, 144>}, {transform_indices = @transform_17, window_bounds = array<i64: 1, 8, 16>}, {transform_indices = @transform_18, window_bounds = array<i64: 1, 8, 1>}, {transform_indices = @transform_19, window_bounds = array<i64: 1, 1, 512>}, {transform_indices = @transform_20, window_bounds = array<i64: 1, 8, 72>}, {transform_indices = @transform_21, window_bounds = array<i64: 1, 8, 8>}, {transform_indices = @transform_22, window_bounds = array<i64: 1, 8, 1>}, {transform_indices = @transform_23, window_bounds = array<i64: 1, 1, 512>}, {transform_indices = @transform_24, window_bounds = array<i64: 1, 3, 32>}, {transform_indices = @transform_25, window_bounds = array<i64: 1, 3, 1>}, {transform_indices = @transform_26, window_bounds = array<i64: 1, 3, 16>}, {transform_indices = @transform_27, window_bounds = array<i64: 1, 3, 1>}, {transform_indices = @transform_28, window_bounds = array<i64: 1, 3, 8>}, {transform_indices = @transform_29, window_bounds = array<i64: 1, 3, 1>}, {transform_indices = @transform_30, window_bounds = array<i64: 1, 1, 8>}, {transform_indices = @transform_31, window_bounds = array<i64: 1, 3, 512>}]} {
    %c0 = arith.constant 0 : index
    %c0_0 = arith.constant 0 : index
    %0 = vector.load %arg1[%c0, %c0_0] : memref<128x2xf32, #tpu.memory_space<vmem>>, vector<128x2xf32>
    %c0_1 = arith.constant 0 : index
    %c0_2 = arith.constant 0 : index
    %c0_3 = arith.constant 0 : index
    %1 = vector.load %arg2[%c0_1, %c0_2, %c0_3] : memref<1x160x128xf32, #tpu.memory_space<vmem>>, vector<1x160x128xf32>
    %2 = vector.shape_cast %1 : vector<1x160x128xf32> to vector<160x128xf32>
    %c0_4 = arith.constant 0 : index
    %c0_5 = arith.constant 0 : index
    %c0_6 = arith.constant 0 : index
    %3 = vector.load %arg3[%c0_4, %c0_5, %c0_6] : memref<1x160x1xf32, #tpu.memory_space<vmem>>, vector<1x160x1xf32>
    %4 = vector.shape_cast %3 : vector<1x160x1xf32> to vector<160x1xf32>
    %c0_7 = arith.constant 0 : index
    %c0_8 = arith.constant 0 : index
    %c0_9 = arith.constant 0 : index
    %5 = vector.load %arg4[%c0_7, %c0_8, %c0_9] : memref<1x32x32xf32, #tpu.memory_space<vmem>>, vector<1x32x32xf32>
    %6 = vector.shape_cast %5 : vector<1x32x32xf32> to vector<32x32xf32>
    %c0_10 = arith.constant 0 : index
    %c0_11 = arith.constant 0 : index
    %c0_12 = arith.constant 0 : index
    %7 = vector.load %arg5[%c0_10, %c0_11, %c0_12] : memref<1x32x288xf32, #tpu.memory_space<vmem>>, vector<1x32x288xf32>
    %8 = vector.shape_cast %7 : vector<1x32x288xf32> to vector<32x288xf32>
    %c0_13 = arith.constant 0 : index
    %c0_14 = arith.constant 0 : index
    %c0_15 = arith.constant 0 : index
    %9 = vector.load %arg6[%c0_13, %c0_14, %c0_15] : memref<1x32x32xf32, #tpu.memory_space<vmem>>, vector<1x32x32xf32>
    %10 = vector.shape_cast %9 : vector<1x32x32xf32> to vector<32x32xf32>
    %c0_16 = arith.constant 0 : index
    %c0_17 = arith.constant 0 : index
    %c0_18 = arith.constant 0 : index
    %11 = vector.load %arg7[%c0_16, %c0_17, %c0_18] : memref<1x32x1xf32, #tpu.memory_space<vmem>>, vector<1x32x1xf32>
    %12 = vector.shape_cast %11 : vector<1x32x1xf32> to vector<32x1xf32>
    %c0_19 = arith.constant 0 : index
    %c0_20 = arith.constant 0 : index
    %c0_21 = arith.constant 0 : index
    %13 = vector.load %arg8[%c0_19, %c0_20, %c0_21] : memref<1x1x32xf32, #tpu.memory_space<vmem>>, vector<1x1x32xf32>
    %14 = vector.shape_cast %13 : vector<1x1x32xf32> to vector<1x32xf32>
    %c0_22 = arith.constant 0 : index
    %c0_23 = arith.constant 0 : index
    %c0_24 = arith.constant 0 : index
    %15 = vector.load %arg9[%c0_22, %c0_23, %c0_24] : memref<1x16x288xf32, #tpu.memory_space<vmem>>, vector<1x16x288xf32>
    %16 = vector.shape_cast %15 : vector<1x16x288xf32> to vector<16x288xf32>
    %c0_25 = arith.constant 0 : index
    %c0_26 = arith.constant 0 : index
    %c0_27 = arith.constant 0 : index
    %17 = vector.load %arg10[%c0_25, %c0_26, %c0_27] : memref<1x16x32xf32, #tpu.memory_space<vmem>>, vector<1x16x32xf32>
    %18 = vector.shape_cast %17 : vector<1x16x32xf32> to vector<16x32xf32>
    %c0_28 = arith.constant 0 : index
    %c0_29 = arith.constant 0 : index
    %c0_30 = arith.constant 0 : index
    %19 = vector.load %arg11[%c0_28, %c0_29, %c0_30] : memref<1x16x1xf32, #tpu.memory_space<vmem>>, vector<1x16x1xf32>
    %20 = vector.shape_cast %19 : vector<1x16x1xf32> to vector<16x1xf32>
    %c0_31 = arith.constant 0 : index
    %c0_32 = arith.constant 0 : index
    %c0_33 = arith.constant 0 : index
    %21 = vector.load %arg12[%c0_31, %c0_32, %c0_33] : memref<1x1x128xf32, #tpu.memory_space<vmem>>, vector<1x1x128xf32>
    %22 = vector.shape_cast %21 : vector<1x1x128xf32> to vector<1x128xf32>
    %c0_34 = arith.constant 0 : index
    %c0_35 = arith.constant 0 : index
    %c0_36 = arith.constant 0 : index
    %23 = vector.load %arg13[%c0_34, %c0_35, %c0_36] : memref<1x16x144xf32, #tpu.memory_space<vmem>>, vector<1x16x144xf32>
    %24 = vector.shape_cast %23 : vector<1x16x144xf32> to vector<16x144xf32>
    %c0_37 = arith.constant 0 : index
    %c0_38 = arith.constant 0 : index
    %c0_39 = arith.constant 0 : index
    %25 = vector.load %arg14[%c0_37, %c0_38, %c0_39] : memref<1x16x16xf32, #tpu.memory_space<vmem>>, vector<1x16x16xf32>
    %26 = vector.shape_cast %25 : vector<1x16x16xf32> to vector<16x16xf32>
    %c0_40 = arith.constant 0 : index
    %c0_41 = arith.constant 0 : index
    %c0_42 = arith.constant 0 : index
    %27 = vector.load %arg15[%c0_40, %c0_41, %c0_42] : memref<1x16x1xf32, #tpu.memory_space<vmem>>, vector<1x16x1xf32>
    %28 = vector.shape_cast %27 : vector<1x16x1xf32> to vector<16x1xf32>
    %c0_43 = arith.constant 0 : index
    %c0_44 = arith.constant 0 : index
    %c0_45 = arith.constant 0 : index
    %29 = vector.load %arg16[%c0_43, %c0_44, %c0_45] : memref<1x1x128xf32, #tpu.memory_space<vmem>>, vector<1x1x128xf32>
    %30 = vector.shape_cast %29 : vector<1x1x128xf32> to vector<1x128xf32>
    %c0_46 = arith.constant 0 : index
    %c0_47 = arith.constant 0 : index
    %c0_48 = arith.constant 0 : index
    %31 = vector.load %arg17[%c0_46, %c0_47, %c0_48] : memref<1x8x144xf32, #tpu.memory_space<vmem>>, vector<1x8x144xf32>
    %32 = vector.shape_cast %31 : vector<1x8x144xf32> to vector<8x144xf32>
    %c0_49 = arith.constant 0 : index
    %c0_50 = arith.constant 0 : index
    %c0_51 = arith.constant 0 : index
    %33 = vector.load %arg18[%c0_49, %c0_50, %c0_51] : memref<1x8x16xf32, #tpu.memory_space<vmem>>, vector<1x8x16xf32>
    %34 = vector.shape_cast %33 : vector<1x8x16xf32> to vector<8x16xf32>
    %c0_52 = arith.constant 0 : index
    %c0_53 = arith.constant 0 : index
    %c0_54 = arith.constant 0 : index
    %35 = vector.load %arg19[%c0_52, %c0_53, %c0_54] : memref<1x8x1xf32, #tpu.memory_space<vmem>>, vector<1x8x1xf32>
    %36 = vector.shape_cast %35 : vector<1x8x1xf32> to vector<8x1xf32>
    %c0_55 = arith.constant 0 : index
    %c0_56 = arith.constant 0 : index
    %c0_57 = arith.constant 0 : index
    %37 = vector.load %arg20[%c0_55, %c0_56, %c0_57] : memref<1x1x512xf32, #tpu.memory_space<vmem>>, vector<1x1x512xf32>
    %38 = vector.shape_cast %37 : vector<1x1x512xf32> to vector<1x512xf32>
    %c0_58 = arith.constant 0 : index
    %c0_59 = arith.constant 0 : index
    %c0_60 = arith.constant 0 : index
    %39 = vector.load %arg21[%c0_58, %c0_59, %c0_60] : memref<1x8x72xf32, #tpu.memory_space<vmem>>, vector<1x8x72xf32>
    %40 = vector.shape_cast %39 : vector<1x8x72xf32> to vector<8x72xf32>
    %c0_61 = arith.constant 0 : index
    %c0_62 = arith.constant 0 : index
    %c0_63 = arith.constant 0 : index
    %41 = vector.load %arg22[%c0_61, %c0_62, %c0_63] : memref<1x8x8xf32, #tpu.memory_space<vmem>>, vector<1x8x8xf32>
    %42 = vector.shape_cast %41 : vector<1x8x8xf32> to vector<8x8xf32>
    %c0_64 = arith.constant 0 : index
    %c0_65 = arith.constant 0 : index
    %c0_66 = arith.constant 0 : index
    %43 = vector.load %arg23[%c0_64, %c0_65, %c0_66] : memref<1x8x1xf32, #tpu.memory_space<vmem>>, vector<1x8x1xf32>
    %44 = vector.shape_cast %43 : vector<1x8x1xf32> to vector<8x1xf32>
    %c0_67 = arith.constant 0 : index
    %c0_68 = arith.constant 0 : index
    %c0_69 = arith.constant 0 : index
    %45 = vector.load %arg24[%c0_67, %c0_68, %c0_69] : memref<1x1x512xf32, #tpu.memory_space<vmem>>, vector<1x1x512xf32>
    %46 = vector.shape_cast %45 : vector<1x1x512xf32> to vector<1x512xf32>
    %c0_70 = arith.constant 0 : index
    %c0_71 = arith.constant 0 : index
    %c0_72 = arith.constant 0 : index
    %47 = vector.load %arg25[%c0_70, %c0_71, %c0_72] : memref<1x3x32xf32, #tpu.memory_space<vmem>>, vector<1x3x32xf32>
    %48 = vector.shape_cast %47 : vector<1x3x32xf32> to vector<3x32xf32>
    %c0_73 = arith.constant 0 : index
    %c0_74 = arith.constant 0 : index
    %c0_75 = arith.constant 0 : index
    %49 = vector.load %arg26[%c0_73, %c0_74, %c0_75] : memref<1x3x1xf32, #tpu.memory_space<vmem>>, vector<1x3x1xf32>
    %50 = vector.shape_cast %49 : vector<1x3x1xf32> to vector<3x1xf32>
    %c0_76 = arith.constant 0 : index
    %c0_77 = arith.constant 0 : index
    %c0_78 = arith.constant 0 : index
    %51 = vector.load %arg27[%c0_76, %c0_77, %c0_78] : memref<1x3x16xf32, #tpu.memory_space<vmem>>, vector<1x3x16xf32>
    %52 = vector.shape_cast %51 : vector<1x3x16xf32> to vector<3x16xf32>
    %c0_79 = arith.constant 0 : index
    %c0_80 = arith.constant 0 : index
    %c0_81 = arith.constant 0 : index
    %53 = vector.load %arg28[%c0_79, %c0_80, %c0_81] : memref<1x3x1xf32, #tpu.memory_space<vmem>>, vector<1x3x1xf32>
    %54 = vector.shape_cast %53 : vector<1x3x1xf32> to vector<3x1xf32>
    %c0_82 = arith.constant 0 : index
    %c0_83 = arith.constant 0 : index
    %c0_84 = arith.constant 0 : index
    %55 = vector.load %arg29[%c0_82, %c0_83, %c0_84] : memref<1x3x8xf32, #tpu.memory_space<vmem>>, vector<1x3x8xf32>
    %56 = vector.shape_cast %55 : vector<1x3x8xf32> to vector<3x8xf32>
    %c0_85 = arith.constant 0 : index
    %c0_86 = arith.constant 0 : index
    %c0_87 = arith.constant 0 : index
    %57 = vector.load %arg30[%c0_85, %c0_86, %c0_87] : memref<1x3x1xf32, #tpu.memory_space<vmem>>, vector<1x3x1xf32>
    %58 = vector.shape_cast %57 : vector<1x3x1xf32> to vector<3x1xf32>
    %c0_88 = arith.constant 0 : index
    %c0_89 = arith.constant 0 : index
    %c0_90 = arith.constant 0 : index
    %59 = vector.load %arg31[%c0_88, %c0_89, %c0_90] : memref<1x1x8xf32, #tpu.memory_space<vmem>>, vector<1x1x8xf32>
    %60 = vector.shape_cast %59 : vector<1x1x8xf32> to vector<1x8xf32>
    %cst = arith.constant dense<0.000000e+00> : vector<160x2xf32>
    %61 = tpu.matmul %2, %0, %cst {dimension_numbers = #tpu.dot_dimension_numbers<[1], [0], [0], [1], [0, 0, 1, 1], [], []>} : vector<160x128xf32>, vector<128x2xf32>, vector<160x2xf32> -> vector<160x2xf32>
    %62 = vector.broadcast %4 : vector<160x1xf32> to vector<160x2xf32>
    %63 = arith.addf %61, %62 : vector<160x2xf32>
    %64 = vector.extract_strided_slice %63 {offsets = [0, 0], sizes = [32, 2], strides = [1, 1]} : vector<160x2xf32> to vector<32x2xf32>
    %65 = vector.extract_strided_slice %60 {offsets = [0, 0], sizes = [1, 1], strides = [1, 1]} : vector<1x8xf32> to vector<1x1xf32>
    %66 = tpu.iota {dimensions = array<i32: 1>} : vector<1x32xi32>
    %c4_i32 = arith.constant 4 : i32
    %67 = vector.broadcast %c4_i32 : i32 to vector<1x32xi32>
    %68 = arith.shrsi %66, %67 : vector<1x32xi32>
    %c0_i32 = arith.constant 0 : i32
    %69 = vector.broadcast %c0_i32 : i32 to vector<1x32xi32>
    %70 = arith.cmpi eq, %68, %69 : vector<1x32xi32>
    %71 = vector.extract_strided_slice %64 {offsets = [0, 0], sizes = [32, 1], strides = [1, 1]} : vector<32x2xf32> to vector<32x1xf32>
    %cst_91 = arith.constant 0.000000e+00 : f32
    %72 = vector.shape_cast %70 : vector<1x32xi1> to vector<1x32xi1>
    %73 = vector.broadcast %72 : vector<1x32xi1> to vector<32x32xi1>
    %74 = vector.shape_cast %71 : vector<32x1xf32> to vector<32x1xf32>
    %75 = vector.broadcast %74 : vector<32x1xf32> to vector<32x32xf32>
    %76 = vector.broadcast %cst_91 : f32 to vector<32x32xf32>
    %77 = arith.select %73, %75, %76 : vector<32x32xi1>, vector<32x32xf32>
    %c1_i32 = arith.constant 1 : i32
    %78 = vector.broadcast %c1_i32 : i32 to vector<1x32xi32>
    %79 = arith.cmpi eq, %68, %78 : vector<1x32xi32>
    %80 = vector.extract_strided_slice %64 {offsets = [0, 1], sizes = [32, 1], strides = [1, 1]} : vector<32x2xf32> to vector<32x1xf32>
    %81 = vector.shape_cast %79 : vector<1x32xi1> to vector<1x32xi1>
    %82 = vector.broadcast %81 : vector<1x32xi1> to vector<32x32xi1>
    %83 = vector.shape_cast %80 : vector<32x1xf32> to vector<32x1xf32>
    %84 = vector.broadcast %83 : vector<32x1xf32> to vector<32x32xf32>
    %85 = arith.select %82, %84, %77 : vector<32x32xi1>, vector<32x32xf32>
    %86 = arith.mulf %6, %85 : vector<32x32xf32>
    %87 = tpu.iota {dimensions = array<i32: 1>} : vector<1x32xi32>
    %c15_i32 = arith.constant 15 : i32
    %88 = vector.broadcast %c15_i32 : i32 to vector<1x32xi32>
    %89 = arith.andi %87, %88 : vector<1x32xi32>
    %c2_i32 = arith.constant 2 : i32
    %90 = vector.broadcast %c2_i32 : i32 to vector<1x32xi32>
    %91 = arith.shrsi %89, %90 : vector<1x32xi32>
    %c3_i32 = arith.constant 3 : i32
    %92 = vector.broadcast %c3_i32 : i32 to vector<1x32xi32>
    %93 = arith.andi %89, %92 : vector<1x32xi32>
    %c-1_i32 = arith.constant -1 : i32
    %94 = vector.broadcast %c-1_i32 : i32 to vector<1x32xi32>
    %95 = arith.addi %91, %94 : vector<1x32xi32>
    %c-1_i32_92 = arith.constant -1 : i32
    %96 = vector.broadcast %c-1_i32_92 : i32 to vector<1x32xi32>
    %97 = arith.addi %93, %96 : vector<1x32xi32>
    %c0_i32_93 = arith.constant 0 : i32
    %98 = vector.broadcast %c0_i32_93 : i32 to vector<1x32xi32>
    %99 = arith.cmpi sge, %95, %98 : vector<1x32xi32>
    %c4_i32_94 = arith.constant 4 : i32
    %100 = vector.broadcast %c4_i32_94 : i32 to vector<1x32xi32>
    %101 = arith.cmpi slt, %95, %100 : vector<1x32xi32>
    %102 = arith.andi %99, %101 : vector<1x32xi1>
    %c0_i32_95 = arith.constant 0 : i32
    %103 = vector.broadcast %c0_i32_95 : i32 to vector<1x32xi32>
    %104 = arith.cmpi sge, %97, %103 : vector<1x32xi32>
    %105 = arith.andi %102, %104 : vector<1x32xi1>
    %c4_i32_96 = arith.constant 4 : i32
    %106 = vector.broadcast %c4_i32_96 : i32 to vector<1x32xi32>
    %107 = arith.cmpi slt, %97, %106 : vector<1x32xi32>
    %108 = arith.andi %105, %107 : vector<1x32xi1>
    %c-1_i32_97 = arith.constant -1 : i32
    %109 = vector.broadcast %c-1_i32_97 : i32 to vector<1x32xi32>
    %110 = arith.addi %91, %109 : vector<1x32xi32>
    %c0_i32_98 = arith.constant 0 : i32
    %111 = vector.broadcast %c0_i32_98 : i32 to vector<1x32xi32>
    %112 = arith.addi %93, %111 : vector<1x32xi32>
    %c0_i32_99 = arith.constant 0 : i32
    %113 = vector.broadcast %c0_i32_99 : i32 to vector<1x32xi32>
    %114 = arith.cmpi sge, %110, %113 : vector<1x32xi32>
    %c4_i32_100 = arith.constant 4 : i32
    %115 = vector.broadcast %c4_i32_100 : i32 to vector<1x32xi32>
    %116 = arith.cmpi slt, %110, %115 : vector<1x32xi32>
    %117 = arith.andi %114, %116 : vector<1x32xi1>
    %c0_i32_101 = arith.constant 0 : i32
    %118 = vector.broadcast %c0_i32_101 : i32 to vector<1x32xi32>
    %119 = arith.cmpi sge, %112, %118 : vector<1x32xi32>
    %120 = arith.andi %117, %119 : vector<1x32xi1>
    %c4_i32_102 = arith.constant 4 : i32
    %121 = vector.broadcast %c4_i32_102 : i32 to vector<1x32xi32>
    %122 = arith.cmpi slt, %112, %121 : vector<1x32xi32>
    %123 = arith.andi %120, %122 : vector<1x32xi1>
    %c-1_i32_103 = arith.constant -1 : i32
    %124 = vector.broadcast %c-1_i32_103 : i32 to vector<1x32xi32>
    %125 = arith.addi %91, %124 : vector<1x32xi32>
    %c1_i32_104 = arith.constant 1 : i32
    %126 = vector.broadcast %c1_i32_104 : i32 to vector<1x32xi32>
    %127 = arith.addi %93, %126 : vector<1x32xi32>
    %c0_i32_105 = arith.constant 0 : i32
    %128 = vector.broadcast %c0_i32_105 : i32 to vector<1x32xi32>
    %129 = arith.cmpi sge, %125, %128 : vector<1x32xi32>
    %c4_i32_106 = arith.constant 4 : i32
    %130 = vector.broadcast %c4_i32_106 : i32 to vector<1x32xi32>
    %131 = arith.cmpi slt, %125, %130 : vector<1x32xi32>
    %132 = arith.andi %129, %131 : vector<1x32xi1>
    %c0_i32_107 = arith.constant 0 : i32
    %133 = vector.broadcast %c0_i32_107 : i32 to vector<1x32xi32>
    %134 = arith.cmpi sge, %127, %133 : vector<1x32xi32>
    %135 = arith.andi %132, %134 : vector<1x32xi1>
    %c4_i32_108 = arith.constant 4 : i32
    %136 = vector.broadcast %c4_i32_108 : i32 to vector<1x32xi32>
    %137 = arith.cmpi slt, %127, %136 : vector<1x32xi32>
    %138 = arith.andi %135, %137 : vector<1x32xi1>
    %c0_i32_109 = arith.constant 0 : i32
    %139 = vector.broadcast %c0_i32_109 : i32 to vector<1x32xi32>
    %140 = arith.addi %91, %139 : vector<1x32xi32>
    %c-1_i32_110 = arith.constant -1 : i32
    %141 = vector.broadcast %c-1_i32_110 : i32 to vector<1x32xi32>
    %142 = arith.addi %93, %141 : vector<1x32xi32>
    %c0_i32_111 = arith.constant 0 : i32
    %143 = vector.broadcast %c0_i32_111 : i32 to vector<1x32xi32>
    %144 = arith.cmpi sge, %140, %143 : vector<1x32xi32>
    %c4_i32_112 = arith.constant 4 : i32
    %145 = vector.broadcast %c4_i32_112 : i32 to vector<1x32xi32>
    %146 = arith.cmpi slt, %140, %145 : vector<1x32xi32>
    %147 = arith.andi %144, %146 : vector<1x32xi1>
    %c0_i32_113 = arith.constant 0 : i32
    %148 = vector.broadcast %c0_i32_113 : i32 to vector<1x32xi32>
    %149 = arith.cmpi sge, %142, %148 : vector<1x32xi32>
    %150 = arith.andi %147, %149 : vector<1x32xi1>
    %c4_i32_114 = arith.constant 4 : i32
    %151 = vector.broadcast %c4_i32_114 : i32 to vector<1x32xi32>
    %152 = arith.cmpi slt, %142, %151 : vector<1x32xi32>
    %153 = arith.andi %150, %152 : vector<1x32xi1>
    %c0_i32_115 = arith.constant 0 : i32
    %154 = vector.broadcast %c0_i32_115 : i32 to vector<1x32xi32>
    %155 = arith.addi %91, %154 : vector<1x32xi32>
    %c0_i32_116 = arith.constant 0 : i32
    %156 = vector.broadcast %c0_i32_116 : i32 to vector<1x32xi32>
    %157 = arith.addi %93, %156 : vector<1x32xi32>
    %c0_i32_117 = arith.constant 0 : i32
    %158 = vector.broadcast %c0_i32_117 : i32 to vector<1x32xi32>
    %159 = arith.cmpi sge, %155, %158 : vector<1x32xi32>
    %c4_i32_118 = arith.constant 4 : i32
    %160 = vector.broadcast %c4_i32_118 : i32 to vector<1x32xi32>
    %161 = arith.cmpi slt, %155, %160 : vector<1x32xi32>
    %162 = arith.andi %159, %161 : vector<1x32xi1>
    %c0_i32_119 = arith.constant 0 : i32
    %163 = vector.broadcast %c0_i32_119 : i32 to vector<1x32xi32>
    %164 = arith.cmpi sge, %157, %163 : vector<1x32xi32>
    %165 = arith.andi %162, %164 : vector<1x32xi1>
    %c4_i32_120 = arith.constant 4 : i32
    %166 = vector.broadcast %c4_i32_120 : i32 to vector<1x32xi32>
    %167 = arith.cmpi slt, %157, %166 : vector<1x32xi32>
    %168 = arith.andi %165, %167 : vector<1x32xi1>
    %c0_i32_121 = arith.constant 0 : i32
    %169 = vector.broadcast %c0_i32_121 : i32 to vector<1x32xi32>
    %170 = arith.addi %91, %169 : vector<1x32xi32>
    %c1_i32_122 = arith.constant 1 : i32
    %171 = vector.broadcast %c1_i32_122 : i32 to vector<1x32xi32>
    %172 = arith.addi %93, %171 : vector<1x32xi32>
    %c0_i32_123 = arith.constant 0 : i32
    %173 = vector.broadcast %c0_i32_123 : i32 to vector<1x32xi32>
    %174 = arith.cmpi sge, %170, %173 : vector<1x32xi32>
    %c4_i32_124 = arith.constant 4 : i32
    %175 = vector.broadcast %c4_i32_124 : i32 to vector<1x32xi32>
    %176 = arith.cmpi slt, %170, %175 : vector<1x32xi32>
    %177 = arith.andi %174, %176 : vector<1x32xi1>
    %c0_i32_125 = arith.constant 0 : i32
    %178 = vector.broadcast %c0_i32_125 : i32 to vector<1x32xi32>
    %179 = arith.cmpi sge, %172, %178 : vector<1x32xi32>
    %180 = arith.andi %177, %179 : vector<1x32xi1>
    %c4_i32_126 = arith.constant 4 : i32
    %181 = vector.broadcast %c4_i32_126 : i32 to vector<1x32xi32>
    %182 = arith.cmpi slt, %172, %181 : vector<1x32xi32>
    %183 = arith.andi %180, %182 : vector<1x32xi1>
    %c1_i32_127 = arith.constant 1 : i32
    %184 = vector.broadcast %c1_i32_127 : i32 to vector<1x32xi32>
    %185 = arith.addi %91, %184 : vector<1x32xi32>
    %c-1_i32_128 = arith.constant -1 : i32
    %186 = vector.broadcast %c-1_i32_128 : i32 to vector<1x32xi32>
    %187 = arith.addi %93, %186 : vector<1x32xi32>
    %c0_i32_129 = arith.constant 0 : i32
    %188 = vector.broadcast %c0_i32_129 : i32 to vector<1x32xi32>
    %189 = arith.cmpi sge, %185, %188 : vector<1x32xi32>
    %c4_i32_130 = arith.constant 4 : i32
    %190 = vector.broadcast %c4_i32_130 : i32 to vector<1x32xi32>
    %191 = arith.cmpi slt, %185, %190 : vector<1x32xi32>
    %192 = arith.andi %189, %191 : vector<1x32xi1>
    %c0_i32_131 = arith.constant 0 : i32
    %193 = vector.broadcast %c0_i32_131 : i32 to vector<1x32xi32>
    %194 = arith.cmpi sge, %187, %193 : vector<1x32xi32>
    %195 = arith.andi %192, %194 : vector<1x32xi1>
    %c4_i32_132 = arith.constant 4 : i32
    %196 = vector.broadcast %c4_i32_132 : i32 to vector<1x32xi32>
    %197 = arith.cmpi slt, %187, %196 : vector<1x32xi32>
    %198 = arith.andi %195, %197 : vector<1x32xi1>
    %c1_i32_133 = arith.constant 1 : i32
    %199 = vector.broadcast %c1_i32_133 : i32 to vector<1x32xi32>
    %200 = arith.addi %91, %199 : vector<1x32xi32>
    %c0_i32_134 = arith.constant 0 : i32
    %201 = vector.broadcast %c0_i32_134 : i32 to vector<1x32xi32>
    %202 = arith.addi %93, %201 : vector<1x32xi32>
    %c0_i32_135 = arith.constant 0 : i32
    %203 = vector.broadcast %c0_i32_135 : i32 to vector<1x32xi32>
    %204 = arith.cmpi sge, %200, %203 : vector<1x32xi32>
    %c4_i32_136 = arith.constant 4 : i32
    %205 = vector.broadcast %c4_i32_136 : i32 to vector<1x32xi32>
    %206 = arith.cmpi slt, %200, %205 : vector<1x32xi32>
    %207 = arith.andi %204, %206 : vector<1x32xi1>
    %c0_i32_137 = arith.constant 0 : i32
    %208 = vector.broadcast %c0_i32_137 : i32 to vector<1x32xi32>
    %209 = arith.cmpi sge, %202, %208 : vector<1x32xi32>
    %210 = arith.andi %207, %209 : vector<1x32xi1>
    %c4_i32_138 = arith.constant 4 : i32
    %211 = vector.broadcast %c4_i32_138 : i32 to vector<1x32xi32>
    %212 = arith.cmpi slt, %202, %211 : vector<1x32xi32>
    %213 = arith.andi %210, %212 : vector<1x32xi1>
    %c1_i32_139 = arith.constant 1 : i32
    %214 = vector.broadcast %c1_i32_139 : i32 to vector<1x32xi32>
    %215 = arith.addi %91, %214 : vector<1x32xi32>
    %c1_i32_140 = arith.constant 1 : i32
    %216 = vector.broadcast %c1_i32_140 : i32 to vector<1x32xi32>
    %217 = arith.addi %93, %216 : vector<1x32xi32>
    %c0_i32_141 = arith.constant 0 : i32
    %218 = vector.broadcast %c0_i32_141 : i32 to vector<1x32xi32>
    %219 = arith.cmpi sge, %215, %218 : vector<1x32xi32>
    %c4_i32_142 = arith.constant 4 : i32
    %220 = vector.broadcast %c4_i32_142 : i32 to vector<1x32xi32>
    %221 = arith.cmpi slt, %215, %220 : vector<1x32xi32>
    %222 = arith.andi %219, %221 : vector<1x32xi1>
    %c0_i32_143 = arith.constant 0 : i32
    %223 = vector.broadcast %c0_i32_143 : i32 to vector<1x32xi32>
    %224 = arith.cmpi sge, %217, %223 : vector<1x32xi32>
    %225 = arith.andi %222, %224 : vector<1x32xi1>
    %c4_i32_144 = arith.constant 4 : i32
    %226 = vector.broadcast %c4_i32_144 : i32 to vector<1x32xi32>
    %227 = arith.cmpi slt, %217, %226 : vector<1x32xi32>
    %228 = arith.andi %225, %227 : vector<1x32xi1>
    %cst_145 = arith.constant 0.000000e+00 : f32
    %229 = vector.broadcast %cst_145 : f32 to vector<32x5xf32>
    %230 = vector.extract_strided_slice %86 {offsets = [0, 0], sizes = [32, 27], strides = [1, 1]} : vector<32x32xf32> to vector<32x27xf32>
    %231 = tpu.concatenate %229, %230 in 1 : vector<32x5xf32>, vector<32x27xf32> -> vector<32x32xf32>
    %cst_146 = arith.constant 0.000000e+00 : f32
    %232 = vector.shape_cast %108 : vector<1x32xi1> to vector<1x32xi1>
    %233 = vector.broadcast %232 : vector<1x32xi1> to vector<32x32xi1>
    %234 = vector.broadcast %cst_146 : f32 to vector<32x32xf32>
    %235 = arith.select %233, %231, %234 : vector<32x32xi1>, vector<32x32xf32>
    %cst_147 = arith.constant 0.000000e+00 : f32
    %236 = vector.broadcast %cst_147 : f32 to vector<32x4xf32>
    %237 = vector.extract_strided_slice %86 {offsets = [0, 0], sizes = [32, 28], strides = [1, 1]} : vector<32x32xf32> to vector<32x28xf32>
    %238 = tpu.concatenate %236, %237 in 1 : vector<32x4xf32>, vector<32x28xf32> -> vector<32x32xf32>
    %cst_148 = arith.constant 0.000000e+00 : f32
    %239 = vector.shape_cast %123 : vector<1x32xi1> to vector<1x32xi1>
    %240 = vector.broadcast %239 : vector<1x32xi1> to vector<32x32xi1>
    %241 = vector.broadcast %cst_148 : f32 to vector<32x32xf32>
    %242 = arith.select %240, %238, %241 : vector<32x32xi1>, vector<32x32xf32>
    %cst_149 = arith.constant 0.000000e+00 : f32
    %243 = vector.broadcast %cst_149 : f32 to vector<32x3xf32>
    %244 = vector.extract_strided_slice %86 {offsets = [0, 0], sizes = [32, 29], strides = [1, 1]} : vector<32x32xf32> to vector<32x29xf32>
    %245 = tpu.concatenate %243, %244 in 1 : vector<32x3xf32>, vector<32x29xf32> -> vector<32x32xf32>
    %cst_150 = arith.constant 0.000000e+00 : f32
    %246 = vector.shape_cast %138 : vector<1x32xi1> to vector<1x32xi1>
    %247 = vector.broadcast %246 : vector<1x32xi1> to vector<32x32xi1>
    %248 = vector.broadcast %cst_150 : f32 to vector<32x32xf32>
    %249 = arith.select %247, %245, %248 : vector<32x32xi1>, vector<32x32xf32>
    %cst_151 = arith.constant 0.000000e+00 : f32
    %250 = vector.broadcast %cst_151 : f32 to vector<32x1xf32>
    %251 = vector.extract_strided_slice %86 {offsets = [0, 0], sizes = [32, 31], strides = [1, 1]} : vector<32x32xf32> to vector<32x31xf32>
    %252 = tpu.concatenate %250, %251 in 1 : vector<32x1xf32>, vector<32x31xf32> -> vector<32x32xf32>
    %cst_152 = arith.constant 0.000000e+00 : f32
    %253 = vector.shape_cast %153 : vector<1x32xi1> to vector<1x32xi1>
    %254 = vector.broadcast %253 : vector<1x32xi1> to vector<32x32xi1>
    %255 = vector.broadcast %cst_152 : f32 to vector<32x32xf32>
    %256 = arith.select %254, %252, %255 : vector<32x32xi1>, vector<32x32xf32>
    %cst_153 = arith.constant 0.000000e+00 : f32
    %257 = vector.shape_cast %168 : vector<1x32xi1> to vector<1x32xi1>
    %258 = vector.broadcast %257 : vector<1x32xi1> to vector<32x32xi1>
    %259 = vector.broadcast %cst_153 : f32 to vector<32x32xf32>
    %260 = arith.select %258, %86, %259 : vector<32x32xi1>, vector<32x32xf32>
    %261 = vector.extract_strided_slice %86 {offsets = [0, 1], sizes = [32, 31], strides = [1, 1]} : vector<32x32xf32> to vector<32x31xf32>
    %cst_154 = arith.constant 0.000000e+00 : f32
    %262 = vector.broadcast %cst_154 : f32 to vector<32x1xf32>
    %263 = tpu.concatenate %261, %262 in 1 : vector<32x31xf32>, vector<32x1xf32> -> vector<32x32xf32>
    %cst_155 = arith.constant 0.000000e+00 : f32
    %264 = vector.shape_cast %183 : vector<1x32xi1> to vector<1x32xi1>
    %265 = vector.broadcast %264 : vector<1x32xi1> to vector<32x32xi1>
    %266 = vector.broadcast %cst_155 : f32 to vector<32x32xf32>
    %267 = arith.select %265, %263, %266 : vector<32x32xi1>, vector<32x32xf32>
    %268 = vector.extract_strided_slice %86 {offsets = [0, 3], sizes = [32, 29], strides = [1, 1]} : vector<32x32xf32> to vector<32x29xf32>
    %cst_156 = arith.constant 0.000000e+00 : f32
    %269 = vector.broadcast %cst_156 : f32 to vector<32x3xf32>
    %270 = tpu.concatenate %268, %269 in 1 : vector<32x29xf32>, vector<32x3xf32> -> vector<32x32xf32>
    %cst_157 = arith.constant 0.000000e+00 : f32
    %271 = vector.shape_cast %198 : vector<1x32xi1> to vector<1x32xi1>
    %272 = vector.broadcast %271 : vector<1x32xi1> to vector<32x32xi1>
    %273 = vector.broadcast %cst_157 : f32 to vector<32x32xf32>
    %274 = arith.select %272, %270, %273 : vector<32x32xi1>, vector<32x32xf32>
    %275 = vector.extract_strided_slice %86 {offsets = [0, 4], sizes = [32, 28], strides = [1, 1]} : vector<32x32xf32> to vector<32x28xf32>
    %cst_158 = arith.constant 0.000000e+00 : f32
    %276 = vector.broadcast %cst_158 : f32 to vector<32x4xf32>
    %277 = tpu.concatenate %275, %276 in 1 : vector<32x28xf32>, vector<32x4xf32> -> vector<32x32xf32>
    %cst_159 = arith.constant 0.000000e+00 : f32
    %278 = vector.shape_cast %213 : vector<1x32xi1> to vector<1x32xi1>
    %279 = vector.broadcast %278 : vector<1x32xi1> to vector<32x32xi1>
    %280 = vector.broadcast %cst_159 : f32 to vector<32x32xf32>
    %281 = arith.select %279, %277, %280 : vector<32x32xi1>, vector<32x32xf32>
    %282 = vector.extract_strided_slice %86 {offsets = [0, 5], sizes = [32, 27], strides = [1, 1]} : vector<32x32xf32> to vector<32x27xf32>
    %cst_160 = arith.constant 0.000000e+00 : f32
    %283 = vector.broadcast %cst_160 : f32 to vector<32x5xf32>
    %284 = tpu.concatenate %282, %283 in 1 : vector<32x27xf32>, vector<32x5xf32> -> vector<32x32xf32>
    %cst_161 = arith.constant 0.000000e+00 : f32
    %285 = vector.shape_cast %228 : vector<1x32xi1> to vector<1x32xi1>
    %286 = vector.broadcast %285 : vector<1x32xi1> to vector<32x32xi1>
    %287 = vector.broadcast %cst_161 : f32 to vector<32x32xf32>
    %288 = arith.select %286, %284, %287 : vector<32x32xi1>, vector<32x32xf32>
    %289 = tpu.concatenate %235, %242, %249, %256, %260, %267, %274, %281, %288 in 0 : vector<32x32xf32>, vector<32x32xf32>, vector<32x32xf32>, vector<32x32xf32>, vector<32x32xf32>, vector<32x32xf32>, vector<32x32xf32>, vector<32x32xf32>, vector<32x32xf32> -> vector<288x32xf32>
    %cst_162 = arith.constant dense<0.000000e+00> : vector<32x32xf32>
    %290 = tpu.matmul %8, %289, %cst_162 {dimension_numbers = #tpu.dot_dimension_numbers<[1], [0], [0], [1], [0, 0, 1, 1], [], []>} : vector<32x288xf32>, vector<288x32xf32>, vector<32x32xf32> -> vector<32x32xf32>
    %291 = arith.mulf %64, %64 : vector<32x2xf32>
    %cst_163 = arith.constant dense<0.000000e+00> : vector<32x2xf32>
    %292 = tpu.matmul %10, %291, %cst_163 {dimension_numbers = #tpu.dot_dimension_numbers<[1], [0], [0], [1], [0, 0, 1, 1], [], []>} : vector<32x32xf32>, vector<32x2xf32>, vector<32x2xf32> -> vector<32x2xf32>
    %cst_164 = arith.constant 9.99999993E-9 : f32
    %293 = vector.broadcast %cst_164 : f32 to vector<32x2xf32>
    %294 = arith.addf %292, %293 : vector<32x2xf32>
    %295 = math.rsqrt %294 : vector<32x2xf32>
    %296 = tpu.iota {dimensions = array<i32: 1>} : vector<1x32xi32>
    %c4_i32_165 = arith.constant 4 : i32
    %297 = vector.broadcast %c4_i32_165 : i32 to vector<1x32xi32>
    %298 = arith.shrsi %296, %297 : vector<1x32xi32>
    %c0_i32_166 = arith.constant 0 : i32
    %299 = vector.broadcast %c0_i32_166 : i32 to vector<1x32xi32>
    %300 = arith.cmpi eq, %298, %299 : vector<1x32xi32>
    %301 = vector.extract_strided_slice %295 {offsets = [0, 0], sizes = [32, 1], strides = [1, 1]} : vector<32x2xf32> to vector<32x1xf32>
    %cst_167 = arith.constant 0.000000e+00 : f32
    %302 = vector.shape_cast %300 : vector<1x32xi1> to vector<1x32xi1>
    %303 = vector.broadcast %302 : vector<1x32xi1> to vector<32x32xi1>
    %304 = vector.shape_cast %301 : vector<32x1xf32> to vector<32x1xf32>
    %305 = vector.broadcast %304 : vector<32x1xf32> to vector<32x32xf32>
    %306 = vector.broadcast %cst_167 : f32 to vector<32x32xf32>
    %307 = arith.select %303, %305, %306 : vector<32x32xi1>, vector<32x32xf32>
    %c1_i32_168 = arith.constant 1 : i32
    %308 = vector.broadcast %c1_i32_168 : i32 to vector<1x32xi32>
    %309 = arith.cmpi eq, %298, %308 : vector<1x32xi32>
    %310 = vector.extract_strided_slice %295 {offsets = [0, 1], sizes = [32, 1], strides = [1, 1]} : vector<32x2xf32> to vector<32x1xf32>
    %311 = vector.shape_cast %309 : vector<1x32xi1> to vector<1x32xi1>
    %312 = vector.broadcast %311 : vector<1x32xi1> to vector<32x32xi1>
    %313 = vector.shape_cast %310 : vector<32x1xf32> to vector<32x1xf32>
    %314 = vector.broadcast %313 : vector<32x1xf32> to vector<32x32xf32>
    %315 = arith.select %312, %314, %307 : vector<32x32xi1>, vector<32x32xf32>
    %316 = arith.mulf %290, %315 : vector<32x32xf32>
    %317 = vector.broadcast %65 : vector<1x1xf32> to vector<1x32xf32>
    %318 = arith.mulf %317, %14 : vector<1x32xf32>
    %319 = vector.broadcast %318 : vector<1x32xf32> to vector<32x32xf32>
    %320 = arith.addf %316, %319 : vector<32x32xf32>
    %321 = vector.broadcast %12 : vector<32x1xf32> to vector<32x32xf32>
    %322 = arith.addf %320, %321 : vector<32x32xf32>
    %cst_169 = arith.constant 2.000000e-01 : f32
    %323 = vector.broadcast %cst_169 : f32 to vector<32x32xf32>
    %324 = arith.mulf %323, %322 : vector<32x32xf32>
    %325 = arith.maximumf %322, %324 : vector<32x32xf32>
    %cst_170 = arith.constant 1.41421354 : f32
    %326 = vector.broadcast %cst_170 : f32 to vector<32x32xf32>
    %327 = arith.mulf %325, %326 : vector<32x32xf32>
    %328 = vector.extract_strided_slice %63 {offsets = [32, 0], sizes = [32, 2], strides = [1, 1]} : vector<160x2xf32> to vector<32x2xf32>
    %329 = tpu.iota {dimensions = array<i32: 1>} : vector<1x32xi32>
    %c4_i32_171 = arith.constant 4 : i32
    %330 = vector.broadcast %c4_i32_171 : i32 to vector<1x32xi32>
    %331 = arith.shrsi %329, %330 : vector<1x32xi32>
    %c0_i32_172 = arith.constant 0 : i32
    %332 = vector.broadcast %c0_i32_172 : i32 to vector<1x32xi32>
    %333 = arith.cmpi eq, %331, %332 : vector<1x32xi32>
    %334 = vector.extract_strided_slice %328 {offsets = [0, 0], sizes = [32, 1], strides = [1, 1]} : vector<32x2xf32> to vector<32x1xf32>
    %cst_173 = arith.constant 0.000000e+00 : f32
    %335 = vector.shape_cast %333 : vector<1x32xi1> to vector<1x32xi1>
    %336 = vector.broadcast %335 : vector<1x32xi1> to vector<32x32xi1>
    %337 = vector.shape_cast %334 : vector<32x1xf32> to vector<32x1xf32>
    %338 = vector.broadcast %337 : vector<32x1xf32> to vector<32x32xf32>
    %339 = vector.broadcast %cst_173 : f32 to vector<32x32xf32>
    %340 = arith.select %336, %338, %339 : vector<32x32xi1>, vector<32x32xf32>
    %c1_i32_174 = arith.constant 1 : i32
    %341 = vector.broadcast %c1_i32_174 : i32 to vector<1x32xi32>
    %342 = arith.cmpi eq, %331, %341 : vector<1x32xi32>
    %343 = vector.extract_strided_slice %328 {offsets = [0, 1], sizes = [32, 1], strides = [1, 1]} : vector<32x2xf32> to vector<32x1xf32>
    %344 = vector.shape_cast %342 : vector<1x32xi1> to vector<1x32xi1>
    %345 = vector.broadcast %344 : vector<1x32xi1> to vector<32x32xi1>
    %346 = vector.shape_cast %343 : vector<32x1xf32> to vector<32x1xf32>
    %347 = vector.broadcast %346 : vector<32x1xf32> to vector<32x32xf32>
    %348 = arith.select %345, %347, %340 : vector<32x32xi1>, vector<32x32xf32>
    %349 = arith.mulf %327, %348 : vector<32x32xf32>
    %cst_175 = arith.constant dense<0.000000e+00> : vector<3x32xf32>
    %350 = tpu.matmul %48, %349, %cst_175 {dimension_numbers = #tpu.dot_dimension_numbers<[1], [0], [0], [1], [0, 0, 1, 1], [], []>} : vector<3x32xf32>, vector<32x32xf32>, vector<3x32xf32> -> vector<3x32xf32>
    %351 = vector.broadcast %50 : vector<3x1xf32> to vector<3x32xf32>
    %352 = arith.addf %350, %351 : vector<3x32xf32>
    %353 = tpu.iota {dimensions = array<i32: 0>} : vector<32x128xi32>
    %354 = tpu.iota {dimensions = array<i32: 1>} : vector<32x128xi32>
    %c6_i32 = arith.constant 6 : i32
    %355 = vector.broadcast %c6_i32 : i32 to vector<32x128xi32>
    %356 = arith.shrsi %354, %355 : vector<32x128xi32>
    %c63_i32 = arith.constant 63 : i32
    %357 = vector.broadcast %c63_i32 : i32 to vector<32x128xi32>
    %358 = arith.andi %354, %357 : vector<32x128xi32>
    %c3_i32_176 = arith.constant 3 : i32
    %359 = vector.broadcast %c3_i32_176 : i32 to vector<32x128xi32>
    %360 = arith.shrsi %358, %359 : vector<32x128xi32>
    %c7_i32 = arith.constant 7 : i32
    %361 = vector.broadcast %c7_i32 : i32 to vector<32x128xi32>
    %362 = arith.andi %358, %361 : vector<32x128xi32>
    %c16_i32 = arith.constant 16 : i32
    %363 = vector.broadcast %c16_i32 : i32 to vector<32x128xi32>
    %364 = arith.muli %356, %363 : vector<32x128xi32>
    %c1_i32_177 = arith.constant 1 : i32
    %365 = vector.broadcast %c1_i32_177 : i32 to vector<32x128xi32>
    %366 = arith.shrsi %360, %365 : vector<32x128xi32>
    %c4_i32_178 = arith.constant 4 : i32
    %367 = vector.broadcast %c4_i32_178 : i32 to vector<32x128xi32>
    %368 = arith.muli %366, %367 : vector<32x128xi32>
    %369 = arith.addi %364, %368 : vector<32x128xi32>
    %c1_i32_179 = arith.constant 1 : i32
    %370 = vector.broadcast %c1_i32_179 : i32 to vector<32x128xi32>
    %371 = arith.shrsi %362, %370 : vector<32x128xi32>
    %372 = arith.addi %369, %371 : vector<32x128xi32>
    %373 = arith.cmpi eq, %353, %372 : vector<32x128xi32>
    %cst_180 = arith.constant 1.000000e+00 : f32
    %cst_181 = arith.constant 0.000000e+00 : f32
    %374 = vector.broadcast %cst_180 : f32 to vector<32x128xf32>
    %375 = vector.broadcast %cst_181 : f32 to vector<32x128xf32>
    %376 = arith.select %373, %374, %375 : vector<32x128xi1>, vector<32x128xf32>
    %cst_182 = arith.constant dense<0.000000e+00> : vector<32x128xf32>
    %377 = tpu.matmul %327, %376, %cst_182 {dimension_numbers = #tpu.dot_dimension_numbers<[1], [0], [0], [1], [0, 0, 1, 1], [], []>} : vector<32x32xf32>, vector<32x128xf32>, vector<32x128xf32> -> vector<32x128xf32>
    %cst_183 = arith.constant dense<0.000000e+00> : vector<3x128xf32>
    %378 = tpu.matmul %352, %376, %cst_183 {dimension_numbers = #tpu.dot_dimension_numbers<[1], [0], [0], [1], [0, 0, 1, 1], [], []>} : vector<3x32xf32>, vector<32x128xf32>, vector<3x128xf32> -> vector<3x128xf32>
    %379 = vector.extract_strided_slice %63 {offsets = [64, 0], sizes = [32, 2], strides = [1, 1]} : vector<160x2xf32> to vector<32x2xf32>
    %380 = vector.extract_strided_slice %60 {offsets = [0, 1], sizes = [1, 1], strides = [1, 1]} : vector<1x8xf32> to vector<1x1xf32>
    %381 = tpu.iota {dimensions = array<i32: 1>} : vector<1x128xi32>
    %c6_i32_184 = arith.constant 6 : i32
    %382 = vector.broadcast %c6_i32_184 : i32 to vector<1x128xi32>
    %383 = arith.shrsi %381, %382 : vector<1x128xi32>
    %c0_i32_185 = arith.constant 0 : i32
    %384 = vector.broadcast %c0_i32_185 : i32 to vector<1x128xi32>
    %385 = arith.cmpi eq, %383, %384 : vector<1x128xi32>
    %386 = vector.extract_strided_slice %379 {offsets = [0, 0], sizes = [32, 1], strides = [1, 1]} : vector<32x2xf32> to vector<32x1xf32>
    %cst_186 = arith.constant 0.000000e+00 : f32
    %387 = vector.shape_cast %385 : vector<1x128xi1> to vector<1x128xi1>
    %388 = vector.broadcast %387 : vector<1x128xi1> to vector<32x128xi1>
    %389 = vector.shape_cast %386 : vector<32x1xf32> to vector<32x1xf32>
    %390 = vector.broadcast %389 : vector<32x1xf32> to vector<32x128xf32>
    %391 = vector.broadcast %cst_186 : f32 to vector<32x128xf32>
    %392 = arith.select %388, %390, %391 : vector<32x128xi1>, vector<32x128xf32>
    %c1_i32_187 = arith.constant 1 : i32
    %393 = vector.broadcast %c1_i32_187 : i32 to vector<1x128xi32>
    %394 = arith.cmpi eq, %383, %393 : vector<1x128xi32>
    %395 = vector.extract_strided_slice %379 {offsets = [0, 1], sizes = [32, 1], strides = [1, 1]} : vector<32x2xf32> to vector<32x1xf32>
    %396 = vector.shape_cast %394 : vector<1x128xi1> to vector<1x128xi1>
    %397 = vector.broadcast %396 : vector<1x128xi1> to vector<32x128xi1>
    %398 = vector.shape_cast %395 : vector<32x1xf32> to vector<32x1xf32>
    %399 = vector.broadcast %398 : vector<32x1xf32> to vector<32x128xf32>
    %400 = arith.select %397, %399, %392 : vector<32x128xi1>, vector<32x128xf32>
    %401 = arith.mulf %377, %400 : vector<32x128xf32>
    %402 = tpu.iota {dimensions = array<i32: 1>} : vector<1x128xi32>
    %c63_i32_188 = arith.constant 63 : i32
    %403 = vector.broadcast %c63_i32_188 : i32 to vector<1x128xi32>
    %404 = arith.andi %402, %403 : vector<1x128xi32>
    %c3_i32_189 = arith.constant 3 : i32
    %405 = vector.broadcast %c3_i32_189 : i32 to vector<1x128xi32>
    %406 = arith.shrsi %404, %405 : vector<1x128xi32>
    %c7_i32_190 = arith.constant 7 : i32
    %407 = vector.broadcast %c7_i32_190 : i32 to vector<1x128xi32>
    %408 = arith.andi %404, %407 : vector<1x128xi32>
    %c-1_i32_191 = arith.constant -1 : i32
    %409 = vector.broadcast %c-1_i32_191 : i32 to vector<1x128xi32>
    %410 = arith.addi %406, %409 : vector<1x128xi32>
    %c-1_i32_192 = arith.constant -1 : i32
    %411 = vector.broadcast %c-1_i32_192 : i32 to vector<1x128xi32>
    %412 = arith.addi %408, %411 : vector<1x128xi32>
    %c0_i32_193 = arith.constant 0 : i32
    %413 = vector.broadcast %c0_i32_193 : i32 to vector<1x128xi32>
    %414 = arith.cmpi sge, %410, %413 : vector<1x128xi32>
    %c8_i32 = arith.constant 8 : i32
    %415 = vector.broadcast %c8_i32 : i32 to vector<1x128xi32>
    %416 = arith.cmpi slt, %410, %415 : vector<1x128xi32>
    %417 = arith.andi %414, %416 : vector<1x128xi1>
    %c0_i32_194 = arith.constant 0 : i32
    %418 = vector.broadcast %c0_i32_194 : i32 to vector<1x128xi32>
    %419 = arith.cmpi sge, %412, %418 : vector<1x128xi32>
    %420 = arith.andi %417, %419 : vector<1x128xi1>
    %c8_i32_195 = arith.constant 8 : i32
    %421 = vector.broadcast %c8_i32_195 : i32 to vector<1x128xi32>
    %422 = arith.cmpi slt, %412, %421 : vector<1x128xi32>
    %423 = arith.andi %420, %422 : vector<1x128xi1>
    %c-1_i32_196 = arith.constant -1 : i32
    %424 = vector.broadcast %c-1_i32_196 : i32 to vector<1x128xi32>
    %425 = arith.addi %406, %424 : vector<1x128xi32>
    %c0_i32_197 = arith.constant 0 : i32
    %426 = vector.broadcast %c0_i32_197 : i32 to vector<1x128xi32>
    %427 = arith.addi %408, %426 : vector<1x128xi32>
    %c0_i32_198 = arith.constant 0 : i32
    %428 = vector.broadcast %c0_i32_198 : i32 to vector<1x128xi32>
    %429 = arith.cmpi sge, %425, %428 : vector<1x128xi32>
    %c8_i32_199 = arith.constant 8 : i32
    %430 = vector.broadcast %c8_i32_199 : i32 to vector<1x128xi32>
    %431 = arith.cmpi slt, %425, %430 : vector<1x128xi32>
    %432 = arith.andi %429, %431 : vector<1x128xi1>
    %c0_i32_200 = arith.constant 0 : i32
    %433 = vector.broadcast %c0_i32_200 : i32 to vector<1x128xi32>
    %434 = arith.cmpi sge, %427, %433 : vector<1x128xi32>
    %435 = arith.andi %432, %434 : vector<1x128xi1>
    %c8_i32_201 = arith.constant 8 : i32
    %436 = vector.broadcast %c8_i32_201 : i32 to vector<1x128xi32>
    %437 = arith.cmpi slt, %427, %436 : vector<1x128xi32>
    %438 = arith.andi %435, %437 : vector<1x128xi1>
    %c-1_i32_202 = arith.constant -1 : i32
    %439 = vector.broadcast %c-1_i32_202 : i32 to vector<1x128xi32>
    %440 = arith.addi %406, %439 : vector<1x128xi32>
    %c1_i32_203 = arith.constant 1 : i32
    %441 = vector.broadcast %c1_i32_203 : i32 to vector<1x128xi32>
    %442 = arith.addi %408, %441 : vector<1x128xi32>
    %c0_i32_204 = arith.constant 0 : i32
    %443 = vector.broadcast %c0_i32_204 : i32 to vector<1x128xi32>
    %444 = arith.cmpi sge, %440, %443 : vector<1x128xi32>
    %c8_i32_205 = arith.constant 8 : i32
    %445 = vector.broadcast %c8_i32_205 : i32 to vector<1x128xi32>
    %446 = arith.cmpi slt, %440, %445 : vector<1x128xi32>
    %447 = arith.andi %444, %446 : vector<1x128xi1>
    %c0_i32_206 = arith.constant 0 : i32
    %448 = vector.broadcast %c0_i32_206 : i32 to vector<1x128xi32>
    %449 = arith.cmpi sge, %442, %448 : vector<1x128xi32>
    %450 = arith.andi %447, %449 : vector<1x128xi1>
    %c8_i32_207 = arith.constant 8 : i32
    %451 = vector.broadcast %c8_i32_207 : i32 to vector<1x128xi32>
    %452 = arith.cmpi slt, %442, %451 : vector<1x128xi32>
    %453 = arith.andi %450, %452 : vector<1x128xi1>
    %c0_i32_208 = arith.constant 0 : i32
    %454 = vector.broadcast %c0_i32_208 : i32 to vector<1x128xi32>
    %455 = arith.addi %406, %454 : vector<1x128xi32>
    %c-1_i32_209 = arith.constant -1 : i32
    %456 = vector.broadcast %c-1_i32_209 : i32 to vector<1x128xi32>
    %457 = arith.addi %408, %456 : vector<1x128xi32>
    %c0_i32_210 = arith.constant 0 : i32
    %458 = vector.broadcast %c0_i32_210 : i32 to vector<1x128xi32>
    %459 = arith.cmpi sge, %455, %458 : vector<1x128xi32>
    %c8_i32_211 = arith.constant 8 : i32
    %460 = vector.broadcast %c8_i32_211 : i32 to vector<1x128xi32>
    %461 = arith.cmpi slt, %455, %460 : vector<1x128xi32>
    %462 = arith.andi %459, %461 : vector<1x128xi1>
    %c0_i32_212 = arith.constant 0 : i32
    %463 = vector.broadcast %c0_i32_212 : i32 to vector<1x128xi32>
    %464 = arith.cmpi sge, %457, %463 : vector<1x128xi32>
    %465 = arith.andi %462, %464 : vector<1x128xi1>
    %c8_i32_213 = arith.constant 8 : i32
    %466 = vector.broadcast %c8_i32_213 : i32 to vector<1x128xi32>
    %467 = arith.cmpi slt, %457, %466 : vector<1x128xi32>
    %468 = arith.andi %465, %467 : vector<1x128xi1>
    %c0_i32_214 = arith.constant 0 : i32
    %469 = vector.broadcast %c0_i32_214 : i32 to vector<1x128xi32>
    %470 = arith.addi %406, %469 : vector<1x128xi32>
    %c0_i32_215 = arith.constant 0 : i32
    %471 = vector.broadcast %c0_i32_215 : i32 to vector<1x128xi32>
    %472 = arith.addi %408, %471 : vector<1x128xi32>
    %c0_i32_216 = arith.constant 0 : i32
    %473 = vector.broadcast %c0_i32_216 : i32 to vector<1x128xi32>
    %474 = arith.cmpi sge, %470, %473 : vector<1x128xi32>
    %c8_i32_217 = arith.constant 8 : i32
    %475 = vector.broadcast %c8_i32_217 : i32 to vector<1x128xi32>
    %476 = arith.cmpi slt, %470, %475 : vector<1x128xi32>
    %477 = arith.andi %474, %476 : vector<1x128xi1>
    %c0_i32_218 = arith.constant 0 : i32
    %478 = vector.broadcast %c0_i32_218 : i32 to vector<1x128xi32>
    %479 = arith.cmpi sge, %472, %478 : vector<1x128xi32>
    %480 = arith.andi %477, %479 : vector<1x128xi1>
    %c8_i32_219 = arith.constant 8 : i32
    %481 = vector.broadcast %c8_i32_219 : i32 to vector<1x128xi32>
    %482 = arith.cmpi slt, %472, %481 : vector<1x128xi32>
    %483 = arith.andi %480, %482 : vector<1x128xi1>
    %c0_i32_220 = arith.constant 0 : i32
    %484 = vector.broadcast %c0_i32_220 : i32 to vector<1x128xi32>
    %485 = arith.addi %406, %484 : vector<1x128xi32>
    %c1_i32_221 = arith.constant 1 : i32
    %486 = vector.broadcast %c1_i32_221 : i32 to vector<1x128xi32>
    %487 = arith.addi %408, %486 : vector<1x128xi32>
    %c0_i32_222 = arith.constant 0 : i32
    %488 = vector.broadcast %c0_i32_222 : i32 to vector<1x128xi32>
    %489 = arith.cmpi sge, %485, %488 : vector<1x128xi32>
    %c8_i32_223 = arith.constant 8 : i32
    %490 = vector.broadcast %c8_i32_223 : i32 to vector<1x128xi32>
    %491 = arith.cmpi slt, %485, %490 : vector<1x128xi32>
    %492 = arith.andi %489, %491 : vector<1x128xi1>
    %c0_i32_224 = arith.constant 0 : i32
    %493 = vector.broadcast %c0_i32_224 : i32 to vector<1x128xi32>
    %494 = arith.cmpi sge, %487, %493 : vector<1x128xi32>
    %495 = arith.andi %492, %494 : vector<1x128xi1>
    %c8_i32_225 = arith.constant 8 : i32
    %496 = vector.broadcast %c8_i32_225 : i32 to vector<1x128xi32>
    %497 = arith.cmpi slt, %487, %496 : vector<1x128xi32>
    %498 = arith.andi %495, %497 : vector<1x128xi1>
    %c1_i32_226 = arith.constant 1 : i32
    %499 = vector.broadcast %c1_i32_226 : i32 to vector<1x128xi32>
    %500 = arith.addi %406, %499 : vector<1x128xi32>
    %c-1_i32_227 = arith.constant -1 : i32
    %501 = vector.broadcast %c-1_i32_227 : i32 to vector<1x128xi32>
    %502 = arith.addi %408, %501 : vector<1x128xi32>
    %c0_i32_228 = arith.constant 0 : i32
    %503 = vector.broadcast %c0_i32_228 : i32 to vector<1x128xi32>
    %504 = arith.cmpi sge, %500, %503 : vector<1x128xi32>
    %c8_i32_229 = arith.constant 8 : i32
    %505 = vector.broadcast %c8_i32_229 : i32 to vector<1x128xi32>
    %506 = arith.cmpi slt, %500, %505 : vector<1x128xi32>
    %507 = arith.andi %504, %506 : vector<1x128xi1>
    %c0_i32_230 = arith.constant 0 : i32
    %508 = vector.broadcast %c0_i32_230 : i32 to vector<1x128xi32>
    %509 = arith.cmpi sge, %502, %508 : vector<1x128xi32>
    %510 = arith.andi %507, %509 : vector<1x128xi1>
    %c8_i32_231 = arith.constant 8 : i32
    %511 = vector.broadcast %c8_i32_231 : i32 to vector<1x128xi32>
    %512 = arith.cmpi slt, %502, %511 : vector<1x128xi32>
    %513 = arith.andi %510, %512 : vector<1x128xi1>
    %c1_i32_232 = arith.constant 1 : i32
    %514 = vector.broadcast %c1_i32_232 : i32 to vector<1x128xi32>
    %515 = arith.addi %406, %514 : vector<1x128xi32>
    %c0_i32_233 = arith.constant 0 : i32
    %516 = vector.broadcast %c0_i32_233 : i32 to vector<1x128xi32>
    %517 = arith.addi %408, %516 : vector<1x128xi32>
    %c0_i32_234 = arith.constant 0 : i32
    %518 = vector.broadcast %c0_i32_234 : i32 to vector<1x128xi32>
    %519 = arith.cmpi sge, %515, %518 : vector<1x128xi32>
    %c8_i32_235 = arith.constant 8 : i32
    %520 = vector.broadcast %c8_i32_235 : i32 to vector<1x128xi32>
    %521 = arith.cmpi slt, %515, %520 : vector<1x128xi32>
    %522 = arith.andi %519, %521 : vector<1x128xi1>
    %c0_i32_236 = arith.constant 0 : i32
    %523 = vector.broadcast %c0_i32_236 : i32 to vector<1x128xi32>
    %524 = arith.cmpi sge, %517, %523 : vector<1x128xi32>
    %525 = arith.andi %522, %524 : vector<1x128xi1>
    %c8_i32_237 = arith.constant 8 : i32
    %526 = vector.broadcast %c8_i32_237 : i32 to vector<1x128xi32>
    %527 = arith.cmpi slt, %517, %526 : vector<1x128xi32>
    %528 = arith.andi %525, %527 : vector<1x128xi1>
    %c1_i32_238 = arith.constant 1 : i32
    %529 = vector.broadcast %c1_i32_238 : i32 to vector<1x128xi32>
    %530 = arith.addi %406, %529 : vector<1x128xi32>
    %c1_i32_239 = arith.constant 1 : i32
    %531 = vector.broadcast %c1_i32_239 : i32 to vector<1x128xi32>
    %532 = arith.addi %408, %531 : vector<1x128xi32>
    %c0_i32_240 = arith.constant 0 : i32
    %533 = vector.broadcast %c0_i32_240 : i32 to vector<1x128xi32>
    %534 = arith.cmpi sge, %530, %533 : vector<1x128xi32>
    %c8_i32_241 = arith.constant 8 : i32
    %535 = vector.broadcast %c8_i32_241 : i32 to vector<1x128xi32>
    %536 = arith.cmpi slt, %530, %535 : vector<1x128xi32>
    %537 = arith.andi %534, %536 : vector<1x128xi1>
    %c0_i32_242 = arith.constant 0 : i32
    %538 = vector.broadcast %c0_i32_242 : i32 to vector<1x128xi32>
    %539 = arith.cmpi sge, %532, %538 : vector<1x128xi32>
    %540 = arith.andi %537, %539 : vector<1x128xi1>
    %c8_i32_243 = arith.constant 8 : i32
    %541 = vector.broadcast %c8_i32_243 : i32 to vector<1x128xi32>
    %542 = arith.cmpi slt, %532, %541 : vector<1x128xi32>
    %543 = arith.andi %540, %542 : vector<1x128xi1>
    %cst_244 = arith.constant 0.000000e+00 : f32
    %544 = vector.broadcast %cst_244 : f32 to vector<32x9xf32>
    %545 = vector.extract_strided_slice %401 {offsets = [0, 0], sizes = [32, 119], strides = [1, 1]} : vector<32x128xf32> to vector<32x119xf32>
    %546 = tpu.concatenate %544, %545 in 1 : vector<32x9xf32>, vector<32x119xf32> -> vector<32x128xf32>
    %cst_245 = arith.constant 0.000000e+00 : f32
    %547 = vector.shape_cast %423 : vector<1x128xi1> to vector<1x128xi1>
    %548 = vector.broadcast %547 : vector<1x128xi1> to vector<32x128xi1>
    %549 = vector.broadcast %cst_245 : f32 to vector<32x128xf32>
    %550 = arith.select %548, %546, %549 : vector<32x128xi1>, vector<32x128xf32>
    %cst_246 = arith.constant 0.000000e+00 : f32
    %551 = vector.broadcast %cst_246 : f32 to vector<32x8xf32>
    %552 = vector.extract_strided_slice %401 {offsets = [0, 0], sizes = [32, 120], strides = [1, 1]} : vector<32x128xf32> to vector<32x120xf32>
    %553 = tpu.concatenate %551, %552 in 1 : vector<32x8xf32>, vector<32x120xf32> -> vector<32x128xf32>
    %cst_247 = arith.constant 0.000000e+00 : f32
    %554 = vector.shape_cast %438 : vector<1x128xi1> to vector<1x128xi1>
    %555 = vector.broadcast %554 : vector<1x128xi1> to vector<32x128xi1>
    %556 = vector.broadcast %cst_247 : f32 to vector<32x128xf32>
    %557 = arith.select %555, %553, %556 : vector<32x128xi1>, vector<32x128xf32>
    %cst_248 = arith.constant 0.000000e+00 : f32
    %558 = vector.broadcast %cst_248 : f32 to vector<32x7xf32>
    %559 = vector.extract_strided_slice %401 {offsets = [0, 0], sizes = [32, 121], strides = [1, 1]} : vector<32x128xf32> to vector<32x121xf32>
    %560 = tpu.concatenate %558, %559 in 1 : vector<32x7xf32>, vector<32x121xf32> -> vector<32x128xf32>
    %cst_249 = arith.constant 0.000000e+00 : f32
    %561 = vector.shape_cast %453 : vector<1x128xi1> to vector<1x128xi1>
    %562 = vector.broadcast %561 : vector<1x128xi1> to vector<32x128xi1>
    %563 = vector.broadcast %cst_249 : f32 to vector<32x128xf32>
    %564 = arith.select %562, %560, %563 : vector<32x128xi1>, vector<32x128xf32>
    %cst_250 = arith.constant 0.000000e+00 : f32
    %565 = vector.broadcast %cst_250 : f32 to vector<32x1xf32>
    %566 = vector.extract_strided_slice %401 {offsets = [0, 0], sizes = [32, 127], strides = [1, 1]} : vector<32x128xf32> to vector<32x127xf32>
    %567 = tpu.concatenate %565, %566 in 1 : vector<32x1xf32>, vector<32x127xf32> -> vector<32x128xf32>
    %cst_251 = arith.constant 0.000000e+00 : f32
    %568 = vector.shape_cast %468 : vector<1x128xi1> to vector<1x128xi1>
    %569 = vector.broadcast %568 : vector<1x128xi1> to vector<32x128xi1>
    %570 = vector.broadcast %cst_251 : f32 to vector<32x128xf32>
    %571 = arith.select %569, %567, %570 : vector<32x128xi1>, vector<32x128xf32>
    %cst_252 = arith.constant 0.000000e+00 : f32
    %572 = vector.shape_cast %483 : vector<1x128xi1> to vector<1x128xi1>
    %573 = vector.broadcast %572 : vector<1x128xi1> to vector<32x128xi1>
    %574 = vector.broadcast %cst_252 : f32 to vector<32x128xf32>
    %575 = arith.select %573, %401, %574 : vector<32x128xi1>, vector<32x128xf32>
    %576 = vector.extract_strided_slice %401 {offsets = [0, 1], sizes = [32, 127], strides = [1, 1]} : vector<32x128xf32> to vector<32x127xf32>
    %cst_253 = arith.constant 0.000000e+00 : f32
    %577 = vector.broadcast %cst_253 : f32 to vector<32x1xf32>
    %578 = tpu.concatenate %576, %577 in 1 : vector<32x127xf32>, vector<32x1xf32> -> vector<32x128xf32>
    %cst_254 = arith.constant 0.000000e+00 : f32
    %579 = vector.shape_cast %498 : vector<1x128xi1> to vector<1x128xi1>
    %580 = vector.broadcast %579 : vector<1x128xi1> to vector<32x128xi1>
    %581 = vector.broadcast %cst_254 : f32 to vector<32x128xf32>
    %582 = arith.select %580, %578, %581 : vector<32x128xi1>, vector<32x128xf32>
    %583 = vector.extract_strided_slice %401 {offsets = [0, 7], sizes = [32, 121], strides = [1, 1]} : vector<32x128xf32> to vector<32x121xf32>
    %cst_255 = arith.constant 0.000000e+00 : f32
    %584 = vector.broadcast %cst_255 : f32 to vector<32x7xf32>
    %585 = tpu.concatenate %583, %584 in 1 : vector<32x121xf32>, vector<32x7xf32> -> vector<32x128xf32>
    %cst_256 = arith.constant 0.000000e+00 : f32
    %586 = vector.shape_cast %513 : vector<1x128xi1> to vector<1x128xi1>
    %587 = vector.broadcast %586 : vector<1x128xi1> to vector<32x128xi1>
    %588 = vector.broadcast %cst_256 : f32 to vector<32x128xf32>
    %589 = arith.select %587, %585, %588 : vector<32x128xi1>, vector<32x128xf32>
    %590 = vector.extract_strided_slice %401 {offsets = [0, 8], sizes = [32, 120], strides = [1, 1]} : vector<32x128xf32> to vector<32x120xf32>
    %cst_257 = arith.constant 0.000000e+00 : f32
    %591 = vector.broadcast %cst_257 : f32 to vector<32x8xf32>
    %592 = tpu.concatenate %590, %591 in 1 : vector<32x120xf32>, vector<32x8xf32> -> vector<32x128xf32>
    %cst_258 = arith.constant 0.000000e+00 : f32
    %593 = vector.shape_cast %528 : vector<1x128xi1> to vector<1x128xi1>
    %594 = vector.broadcast %593 : vector<1x128xi1> to vector<32x128xi1>
    %595 = vector.broadcast %cst_258 : f32 to vector<32x128xf32>
    %596 = arith.select %594, %592, %595 : vector<32x128xi1>, vector<32x128xf32>
    %597 = vector.extract_strided_slice %401 {offsets = [0, 9], sizes = [32, 119], strides = [1, 1]} : vector<32x128xf32> to vector<32x119xf32>
    %cst_259 = arith.constant 0.000000e+00 : f32
    %598 = vector.broadcast %cst_259 : f32 to vector<32x9xf32>
    %599 = tpu.concatenate %597, %598 in 1 : vector<32x119xf32>, vector<32x9xf32> -> vector<32x128xf32>
    %cst_260 = arith.constant 0.000000e+00 : f32
    %600 = vector.shape_cast %543 : vector<1x128xi1> to vector<1x128xi1>
    %601 = vector.broadcast %600 : vector<1x128xi1> to vector<32x128xi1>
    %602 = vector.broadcast %cst_260 : f32 to vector<32x128xf32>
    %603 = arith.select %601, %599, %602 : vector<32x128xi1>, vector<32x128xf32>
    %604 = tpu.concatenate %550, %557, %564, %571, %575, %582, %589, %596, %603 in 0 : vector<32x128xf32>, vector<32x128xf32>, vector<32x128xf32>, vector<32x128xf32>, vector<32x128xf32>, vector<32x128xf32>, vector<32x128xf32>, vector<32x128xf32>, vector<32x128xf32> -> vector<288x128xf32>
    %cst_261 = arith.constant dense<0.000000e+00> : vector<16x128xf32>
    %605 = tpu.matmul %16, %604, %cst_261 {dimension_numbers = #tpu.dot_dimension_numbers<[1], [0], [0], [1], [0, 0, 1, 1], [], []>} : vector<16x288xf32>, vector<288x128xf32>, vector<16x128xf32> -> vector<16x128xf32>
    %606 = arith.mulf %379, %379 : vector<32x2xf32>
    %cst_262 = arith.constant dense<0.000000e+00> : vector<16x2xf32>
    %607 = tpu.matmul %18, %606, %cst_262 {dimension_numbers = #tpu.dot_dimension_numbers<[1], [0], [0], [1], [0, 0, 1, 1], [], []>} : vector<16x32xf32>, vector<32x2xf32>, vector<16x2xf32> -> vector<16x2xf32>
    %cst_263 = arith.constant 9.99999993E-9 : f32
    %608 = vector.broadcast %cst_263 : f32 to vector<16x2xf32>
    %609 = arith.addf %607, %608 : vector<16x2xf32>
    %610 = math.rsqrt %609 : vector<16x2xf32>
    %611 = tpu.iota {dimensions = array<i32: 1>} : vector<1x128xi32>
    %c6_i32_264 = arith.constant 6 : i32
    %612 = vector.broadcast %c6_i32_264 : i32 to vector<1x128xi32>
    %613 = arith.shrsi %611, %612 : vector<1x128xi32>
    %c0_i32_265 = arith.constant 0 : i32
    %614 = vector.broadcast %c0_i32_265 : i32 to vector<1x128xi32>
    %615 = arith.cmpi eq, %613, %614 : vector<1x128xi32>
    %616 = vector.extract_strided_slice %610 {offsets = [0, 0], sizes = [16, 1], strides = [1, 1]} : vector<16x2xf32> to vector<16x1xf32>
    %cst_266 = arith.constant 0.000000e+00 : f32
    %617 = vector.shape_cast %615 : vector<1x128xi1> to vector<1x128xi1>
    %618 = vector.broadcast %617 : vector<1x128xi1> to vector<16x128xi1>
    %619 = vector.shape_cast %616 : vector<16x1xf32> to vector<16x1xf32>
    %620 = vector.broadcast %619 : vector<16x1xf32> to vector<16x128xf32>
    %621 = vector.broadcast %cst_266 : f32 to vector<16x128xf32>
    %622 = arith.select %618, %620, %621 : vector<16x128xi1>, vector<16x128xf32>
    %c1_i32_267 = arith.constant 1 : i32
    %623 = vector.broadcast %c1_i32_267 : i32 to vector<1x128xi32>
    %624 = arith.cmpi eq, %613, %623 : vector<1x128xi32>
    %625 = vector.extract_strided_slice %610 {offsets = [0, 1], sizes = [16, 1], strides = [1, 1]} : vector<16x2xf32> to vector<16x1xf32>
    %626 = vector.shape_cast %624 : vector<1x128xi1> to vector<1x128xi1>
    %627 = vector.broadcast %626 : vector<1x128xi1> to vector<16x128xi1>
    %628 = vector.shape_cast %625 : vector<16x1xf32> to vector<16x1xf32>
    %629 = vector.broadcast %628 : vector<16x1xf32> to vector<16x128xf32>
    %630 = arith.select %627, %629, %622 : vector<16x128xi1>, vector<16x128xf32>
    %631 = arith.mulf %605, %630 : vector<16x128xf32>
    %632 = vector.broadcast %380 : vector<1x1xf32> to vector<1x128xf32>
    %633 = arith.mulf %632, %22 : vector<1x128xf32>
    %634 = vector.broadcast %633 : vector<1x128xf32> to vector<16x128xf32>
    %635 = arith.addf %631, %634 : vector<16x128xf32>
    %636 = vector.broadcast %20 : vector<16x1xf32> to vector<16x128xf32>
    %637 = arith.addf %635, %636 : vector<16x128xf32>
    %cst_268 = arith.constant 2.000000e-01 : f32
    %638 = vector.broadcast %cst_268 : f32 to vector<16x128xf32>
    %639 = arith.mulf %638, %637 : vector<16x128xf32>
    %640 = arith.maximumf %637, %639 : vector<16x128xf32>
    %cst_269 = arith.constant 1.41421354 : f32
    %641 = vector.broadcast %cst_269 : f32 to vector<16x128xf32>
    %642 = arith.mulf %640, %641 : vector<16x128xf32>
    %643 = vector.extract_strided_slice %63 {offsets = [96, 0], sizes = [16, 2], strides = [1, 1]} : vector<160x2xf32> to vector<16x2xf32>
    %644 = vector.extract_strided_slice %60 {offsets = [0, 2], sizes = [1, 1], strides = [1, 1]} : vector<1x8xf32> to vector<1x1xf32>
    %645 = tpu.iota {dimensions = array<i32: 1>} : vector<1x128xi32>
    %c6_i32_270 = arith.constant 6 : i32
    %646 = vector.broadcast %c6_i32_270 : i32 to vector<1x128xi32>
    %647 = arith.shrsi %645, %646 : vector<1x128xi32>
    %c0_i32_271 = arith.constant 0 : i32
    %648 = vector.broadcast %c0_i32_271 : i32 to vector<1x128xi32>
    %649 = arith.cmpi eq, %647, %648 : vector<1x128xi32>
    %650 = vector.extract_strided_slice %643 {offsets = [0, 0], sizes = [16, 1], strides = [1, 1]} : vector<16x2xf32> to vector<16x1xf32>
    %cst_272 = arith.constant 0.000000e+00 : f32
    %651 = vector.shape_cast %649 : vector<1x128xi1> to vector<1x128xi1>
    %652 = vector.broadcast %651 : vector<1x128xi1> to vector<16x128xi1>
    %653 = vector.shape_cast %650 : vector<16x1xf32> to vector<16x1xf32>
    %654 = vector.broadcast %653 : vector<16x1xf32> to vector<16x128xf32>
    %655 = vector.broadcast %cst_272 : f32 to vector<16x128xf32>
    %656 = arith.select %652, %654, %655 : vector<16x128xi1>, vector<16x128xf32>
    %c1_i32_273 = arith.constant 1 : i32
    %657 = vector.broadcast %c1_i32_273 : i32 to vector<1x128xi32>
    %658 = arith.cmpi eq, %647, %657 : vector<1x128xi32>
    %659 = vector.extract_strided_slice %643 {offsets = [0, 1], sizes = [16, 1], strides = [1, 1]} : vector<16x2xf32> to vector<16x1xf32>
    %660 = vector.shape_cast %658 : vector<1x128xi1> to vector<1x128xi1>
    %661 = vector.broadcast %660 : vector<1x128xi1> to vector<16x128xi1>
    %662 = vector.shape_cast %659 : vector<16x1xf32> to vector<16x1xf32>
    %663 = vector.broadcast %662 : vector<16x1xf32> to vector<16x128xf32>
    %664 = arith.select %661, %663, %656 : vector<16x128xi1>, vector<16x128xf32>
    %665 = arith.mulf %642, %664 : vector<16x128xf32>
    %666 = tpu.iota {dimensions = array<i32: 1>} : vector<1x128xi32>
    %c63_i32_274 = arith.constant 63 : i32
    %667 = vector.broadcast %c63_i32_274 : i32 to vector<1x128xi32>
    %668 = arith.andi %666, %667 : vector<1x128xi32>
    %c3_i32_275 = arith.constant 3 : i32
    %669 = vector.broadcast %c3_i32_275 : i32 to vector<1x128xi32>
    %670 = arith.shrsi %668, %669 : vector<1x128xi32>
    %c7_i32_276 = arith.constant 7 : i32
    %671 = vector.broadcast %c7_i32_276 : i32 to vector<1x128xi32>
    %672 = arith.andi %668, %671 : vector<1x128xi32>
    %c-1_i32_277 = arith.constant -1 : i32
    %673 = vector.broadcast %c-1_i32_277 : i32 to vector<1x128xi32>
    %674 = arith.addi %670, %673 : vector<1x128xi32>
    %c-1_i32_278 = arith.constant -1 : i32
    %675 = vector.broadcast %c-1_i32_278 : i32 to vector<1x128xi32>
    %676 = arith.addi %672, %675 : vector<1x128xi32>
    %c0_i32_279 = arith.constant 0 : i32
    %677 = vector.broadcast %c0_i32_279 : i32 to vector<1x128xi32>
    %678 = arith.cmpi sge, %674, %677 : vector<1x128xi32>
    %c8_i32_280 = arith.constant 8 : i32
    %679 = vector.broadcast %c8_i32_280 : i32 to vector<1x128xi32>
    %680 = arith.cmpi slt, %674, %679 : vector<1x128xi32>
    %681 = arith.andi %678, %680 : vector<1x128xi1>
    %c0_i32_281 = arith.constant 0 : i32
    %682 = vector.broadcast %c0_i32_281 : i32 to vector<1x128xi32>
    %683 = arith.cmpi sge, %676, %682 : vector<1x128xi32>
    %684 = arith.andi %681, %683 : vector<1x128xi1>
    %c8_i32_282 = arith.constant 8 : i32
    %685 = vector.broadcast %c8_i32_282 : i32 to vector<1x128xi32>
    %686 = arith.cmpi slt, %676, %685 : vector<1x128xi32>
    %687 = arith.andi %684, %686 : vector<1x128xi1>
    %c-1_i32_283 = arith.constant -1 : i32
    %688 = vector.broadcast %c-1_i32_283 : i32 to vector<1x128xi32>
    %689 = arith.addi %670, %688 : vector<1x128xi32>
    %c0_i32_284 = arith.constant 0 : i32
    %690 = vector.broadcast %c0_i32_284 : i32 to vector<1x128xi32>
    %691 = arith.addi %672, %690 : vector<1x128xi32>
    %c0_i32_285 = arith.constant 0 : i32
    %692 = vector.broadcast %c0_i32_285 : i32 to vector<1x128xi32>
    %693 = arith.cmpi sge, %689, %692 : vector<1x128xi32>
    %c8_i32_286 = arith.constant 8 : i32
    %694 = vector.broadcast %c8_i32_286 : i32 to vector<1x128xi32>
    %695 = arith.cmpi slt, %689, %694 : vector<1x128xi32>
    %696 = arith.andi %693, %695 : vector<1x128xi1>
    %c0_i32_287 = arith.constant 0 : i32
    %697 = vector.broadcast %c0_i32_287 : i32 to vector<1x128xi32>
    %698 = arith.cmpi sge, %691, %697 : vector<1x128xi32>
    %699 = arith.andi %696, %698 : vector<1x128xi1>
    %c8_i32_288 = arith.constant 8 : i32
    %700 = vector.broadcast %c8_i32_288 : i32 to vector<1x128xi32>
    %701 = arith.cmpi slt, %691, %700 : vector<1x128xi32>
    %702 = arith.andi %699, %701 : vector<1x128xi1>
    %c-1_i32_289 = arith.constant -1 : i32
    %703 = vector.broadcast %c-1_i32_289 : i32 to vector<1x128xi32>
    %704 = arith.addi %670, %703 : vector<1x128xi32>
    %c1_i32_290 = arith.constant 1 : i32
    %705 = vector.broadcast %c1_i32_290 : i32 to vector<1x128xi32>
    %706 = arith.addi %672, %705 : vector<1x128xi32>
    %c0_i32_291 = arith.constant 0 : i32
    %707 = vector.broadcast %c0_i32_291 : i32 to vector<1x128xi32>
    %708 = arith.cmpi sge, %704, %707 : vector<1x128xi32>
    %c8_i32_292 = arith.constant 8 : i32
    %709 = vector.broadcast %c8_i32_292 : i32 to vector<1x128xi32>
    %710 = arith.cmpi slt, %704, %709 : vector<1x128xi32>
    %711 = arith.andi %708, %710 : vector<1x128xi1>
    %c0_i32_293 = arith.constant 0 : i32
    %712 = vector.broadcast %c0_i32_293 : i32 to vector<1x128xi32>
    %713 = arith.cmpi sge, %706, %712 : vector<1x128xi32>
    %714 = arith.andi %711, %713 : vector<1x128xi1>
    %c8_i32_294 = arith.constant 8 : i32
    %715 = vector.broadcast %c8_i32_294 : i32 to vector<1x128xi32>
    %716 = arith.cmpi slt, %706, %715 : vector<1x128xi32>
    %717 = arith.andi %714, %716 : vector<1x128xi1>
    %c0_i32_295 = arith.constant 0 : i32
    %718 = vector.broadcast %c0_i32_295 : i32 to vector<1x128xi32>
    %719 = arith.addi %670, %718 : vector<1x128xi32>
    %c-1_i32_296 = arith.constant -1 : i32
    %720 = vector.broadcast %c-1_i32_296 : i32 to vector<1x128xi32>
    %721 = arith.addi %672, %720 : vector<1x128xi32>
    %c0_i32_297 = arith.constant 0 : i32
    %722 = vector.broadcast %c0_i32_297 : i32 to vector<1x128xi32>
    %723 = arith.cmpi sge, %719, %722 : vector<1x128xi32>
    %c8_i32_298 = arith.constant 8 : i32
    %724 = vector.broadcast %c8_i32_298 : i32 to vector<1x128xi32>
    %725 = arith.cmpi slt, %719, %724 : vector<1x128xi32>
    %726 = arith.andi %723, %725 : vector<1x128xi1>
    %c0_i32_299 = arith.constant 0 : i32
    %727 = vector.broadcast %c0_i32_299 : i32 to vector<1x128xi32>
    %728 = arith.cmpi sge, %721, %727 : vector<1x128xi32>
    %729 = arith.andi %726, %728 : vector<1x128xi1>
    %c8_i32_300 = arith.constant 8 : i32
    %730 = vector.broadcast %c8_i32_300 : i32 to vector<1x128xi32>
    %731 = arith.cmpi slt, %721, %730 : vector<1x128xi32>
    %732 = arith.andi %729, %731 : vector<1x128xi1>
    %c0_i32_301 = arith.constant 0 : i32
    %733 = vector.broadcast %c0_i32_301 : i32 to vector<1x128xi32>
    %734 = arith.addi %670, %733 : vector<1x128xi32>
    %c0_i32_302 = arith.constant 0 : i32
    %735 = vector.broadcast %c0_i32_302 : i32 to vector<1x128xi32>
    %736 = arith.addi %672, %735 : vector<1x128xi32>
    %c0_i32_303 = arith.constant 0 : i32
    %737 = vector.broadcast %c0_i32_303 : i32 to vector<1x128xi32>
    %738 = arith.cmpi sge, %734, %737 : vector<1x128xi32>
    %c8_i32_304 = arith.constant 8 : i32
    %739 = vector.broadcast %c8_i32_304 : i32 to vector<1x128xi32>
    %740 = arith.cmpi slt, %734, %739 : vector<1x128xi32>
    %741 = arith.andi %738, %740 : vector<1x128xi1>
    %c0_i32_305 = arith.constant 0 : i32
    %742 = vector.broadcast %c0_i32_305 : i32 to vector<1x128xi32>
    %743 = arith.cmpi sge, %736, %742 : vector<1x128xi32>
    %744 = arith.andi %741, %743 : vector<1x128xi1>
    %c8_i32_306 = arith.constant 8 : i32
    %745 = vector.broadcast %c8_i32_306 : i32 to vector<1x128xi32>
    %746 = arith.cmpi slt, %736, %745 : vector<1x128xi32>
    %747 = arith.andi %744, %746 : vector<1x128xi1>
    %c0_i32_307 = arith.constant 0 : i32
    %748 = vector.broadcast %c0_i32_307 : i32 to vector<1x128xi32>
    %749 = arith.addi %670, %748 : vector<1x128xi32>
    %c1_i32_308 = arith.constant 1 : i32
    %750 = vector.broadcast %c1_i32_308 : i32 to vector<1x128xi32>
    %751 = arith.addi %672, %750 : vector<1x128xi32>
    %c0_i32_309 = arith.constant 0 : i32
    %752 = vector.broadcast %c0_i32_309 : i32 to vector<1x128xi32>
    %753 = arith.cmpi sge, %749, %752 : vector<1x128xi32>
    %c8_i32_310 = arith.constant 8 : i32
    %754 = vector.broadcast %c8_i32_310 : i32 to vector<1x128xi32>
    %755 = arith.cmpi slt, %749, %754 : vector<1x128xi32>
    %756 = arith.andi %753, %755 : vector<1x128xi1>
    %c0_i32_311 = arith.constant 0 : i32
    %757 = vector.broadcast %c0_i32_311 : i32 to vector<1x128xi32>
    %758 = arith.cmpi sge, %751, %757 : vector<1x128xi32>
    %759 = arith.andi %756, %758 : vector<1x128xi1>
    %c8_i32_312 = arith.constant 8 : i32
    %760 = vector.broadcast %c8_i32_312 : i32 to vector<1x128xi32>
    %761 = arith.cmpi slt, %751, %760 : vector<1x128xi32>
    %762 = arith.andi %759, %761 : vector<1x128xi1>
    %c1_i32_313 = arith.constant 1 : i32
    %763 = vector.broadcast %c1_i32_313 : i32 to vector<1x128xi32>
    %764 = arith.addi %670, %763 : vector<1x128xi32>
    %c-1_i32_314 = arith.constant -1 : i32
    %765 = vector.broadcast %c-1_i32_314 : i32 to vector<1x128xi32>
    %766 = arith.addi %672, %765 : vector<1x128xi32>
    %c0_i32_315 = arith.constant 0 : i32
    %767 = vector.broadcast %c0_i32_315 : i32 to vector<1x128xi32>
    %768 = arith.cmpi sge, %764, %767 : vector<1x128xi32>
    %c8_i32_316 = arith.constant 8 : i32
    %769 = vector.broadcast %c8_i32_316 : i32 to vector<1x128xi32>
    %770 = arith.cmpi slt, %764, %769 : vector<1x128xi32>
    %771 = arith.andi %768, %770 : vector<1x128xi1>
    %c0_i32_317 = arith.constant 0 : i32
    %772 = vector.broadcast %c0_i32_317 : i32 to vector<1x128xi32>
    %773 = arith.cmpi sge, %766, %772 : vector<1x128xi32>
    %774 = arith.andi %771, %773 : vector<1x128xi1>
    %c8_i32_318 = arith.constant 8 : i32
    %775 = vector.broadcast %c8_i32_318 : i32 to vector<1x128xi32>
    %776 = arith.cmpi slt, %766, %775 : vector<1x128xi32>
    %777 = arith.andi %774, %776 : vector<1x128xi1>
    %c1_i32_319 = arith.constant 1 : i32
    %778 = vector.broadcast %c1_i32_319 : i32 to vector<1x128xi32>
    %779 = arith.addi %670, %778 : vector<1x128xi32>
    %c0_i32_320 = arith.constant 0 : i32
    %780 = vector.broadcast %c0_i32_320 : i32 to vector<1x128xi32>
    %781 = arith.addi %672, %780 : vector<1x128xi32>
    %c0_i32_321 = arith.constant 0 : i32
    %782 = vector.broadcast %c0_i32_321 : i32 to vector<1x128xi32>
    %783 = arith.cmpi sge, %779, %782 : vector<1x128xi32>
    %c8_i32_322 = arith.constant 8 : i32
    %784 = vector.broadcast %c8_i32_322 : i32 to vector<1x128xi32>
    %785 = arith.cmpi slt, %779, %784 : vector<1x128xi32>
    %786 = arith.andi %783, %785 : vector<1x128xi1>
    %c0_i32_323 = arith.constant 0 : i32
    %787 = vector.broadcast %c0_i32_323 : i32 to vector<1x128xi32>
    %788 = arith.cmpi sge, %781, %787 : vector<1x128xi32>
    %789 = arith.andi %786, %788 : vector<1x128xi1>
    %c8_i32_324 = arith.constant 8 : i32
    %790 = vector.broadcast %c8_i32_324 : i32 to vector<1x128xi32>
    %791 = arith.cmpi slt, %781, %790 : vector<1x128xi32>
    %792 = arith.andi %789, %791 : vector<1x128xi1>
    %c1_i32_325 = arith.constant 1 : i32
    %793 = vector.broadcast %c1_i32_325 : i32 to vector<1x128xi32>
    %794 = arith.addi %670, %793 : vector<1x128xi32>
    %c1_i32_326 = arith.constant 1 : i32
    %795 = vector.broadcast %c1_i32_326 : i32 to vector<1x128xi32>
    %796 = arith.addi %672, %795 : vector<1x128xi32>
    %c0_i32_327 = arith.constant 0 : i32
    %797 = vector.broadcast %c0_i32_327 : i32 to vector<1x128xi32>
    %798 = arith.cmpi sge, %794, %797 : vector<1x128xi32>
    %c8_i32_328 = arith.constant 8 : i32
    %799 = vector.broadcast %c8_i32_328 : i32 to vector<1x128xi32>
    %800 = arith.cmpi slt, %794, %799 : vector<1x128xi32>
    %801 = arith.andi %798, %800 : vector<1x128xi1>
    %c0_i32_329 = arith.constant 0 : i32
    %802 = vector.broadcast %c0_i32_329 : i32 to vector<1x128xi32>
    %803 = arith.cmpi sge, %796, %802 : vector<1x128xi32>
    %804 = arith.andi %801, %803 : vector<1x128xi1>
    %c8_i32_330 = arith.constant 8 : i32
    %805 = vector.broadcast %c8_i32_330 : i32 to vector<1x128xi32>
    %806 = arith.cmpi slt, %796, %805 : vector<1x128xi32>
    %807 = arith.andi %804, %806 : vector<1x128xi1>
    %cst_331 = arith.constant 0.000000e+00 : f32
    %808 = vector.broadcast %cst_331 : f32 to vector<16x9xf32>
    %809 = vector.extract_strided_slice %665 {offsets = [0, 0], sizes = [16, 119], strides = [1, 1]} : vector<16x128xf32> to vector<16x119xf32>
    %810 = tpu.concatenate %808, %809 in 1 : vector<16x9xf32>, vector<16x119xf32> -> vector<16x128xf32>
    %cst_332 = arith.constant 0.000000e+00 : f32
    %811 = vector.shape_cast %687 : vector<1x128xi1> to vector<1x128xi1>
    %812 = vector.broadcast %811 : vector<1x128xi1> to vector<16x128xi1>
    %813 = vector.broadcast %cst_332 : f32 to vector<16x128xf32>
    %814 = arith.select %812, %810, %813 : vector<16x128xi1>, vector<16x128xf32>
    %cst_333 = arith.constant 0.000000e+00 : f32
    %815 = vector.broadcast %cst_333 : f32 to vector<16x8xf32>
    %816 = vector.extract_strided_slice %665 {offsets = [0, 0], sizes = [16, 120], strides = [1, 1]} : vector<16x128xf32> to vector<16x120xf32>
    %817 = tpu.concatenate %815, %816 in 1 : vector<16x8xf32>, vector<16x120xf32> -> vector<16x128xf32>
    %cst_334 = arith.constant 0.000000e+00 : f32
    %818 = vector.shape_cast %702 : vector<1x128xi1> to vector<1x128xi1>
    %819 = vector.broadcast %818 : vector<1x128xi1> to vector<16x128xi1>
    %820 = vector.broadcast %cst_334 : f32 to vector<16x128xf32>
    %821 = arith.select %819, %817, %820 : vector<16x128xi1>, vector<16x128xf32>
    %cst_335 = arith.constant 0.000000e+00 : f32
    %822 = vector.broadcast %cst_335 : f32 to vector<16x7xf32>
    %823 = vector.extract_strided_slice %665 {offsets = [0, 0], sizes = [16, 121], strides = [1, 1]} : vector<16x128xf32> to vector<16x121xf32>
    %824 = tpu.concatenate %822, %823 in 1 : vector<16x7xf32>, vector<16x121xf32> -> vector<16x128xf32>
    %cst_336 = arith.constant 0.000000e+00 : f32
    %825 = vector.shape_cast %717 : vector<1x128xi1> to vector<1x128xi1>
    %826 = vector.broadcast %825 : vector<1x128xi1> to vector<16x128xi1>
    %827 = vector.broadcast %cst_336 : f32 to vector<16x128xf32>
    %828 = arith.select %826, %824, %827 : vector<16x128xi1>, vector<16x128xf32>
    %cst_337 = arith.constant 0.000000e+00 : f32
    %829 = vector.broadcast %cst_337 : f32 to vector<16x1xf32>
    %830 = vector.extract_strided_slice %665 {offsets = [0, 0], sizes = [16, 127], strides = [1, 1]} : vector<16x128xf32> to vector<16x127xf32>
    %831 = tpu.concatenate %829, %830 in 1 : vector<16x1xf32>, vector<16x127xf32> -> vector<16x128xf32>
    %cst_338 = arith.constant 0.000000e+00 : f32
    %832 = vector.shape_cast %732 : vector<1x128xi1> to vector<1x128xi1>
    %833 = vector.broadcast %832 : vector<1x128xi1> to vector<16x128xi1>
    %834 = vector.broadcast %cst_338 : f32 to vector<16x128xf32>
    %835 = arith.select %833, %831, %834 : vector<16x128xi1>, vector<16x128xf32>
    %cst_339 = arith.constant 0.000000e+00 : f32
    %836 = vector.shape_cast %747 : vector<1x128xi1> to vector<1x128xi1>
    %837 = vector.broadcast %836 : vector<1x128xi1> to vector<16x128xi1>
    %838 = vector.broadcast %cst_339 : f32 to vector<16x128xf32>
    %839 = arith.select %837, %665, %838 : vector<16x128xi1>, vector<16x128xf32>
    %840 = vector.extract_strided_slice %665 {offsets = [0, 1], sizes = [16, 127], strides = [1, 1]} : vector<16x128xf32> to vector<16x127xf32>
    %cst_340 = arith.constant 0.000000e+00 : f32
    %841 = vector.broadcast %cst_340 : f32 to vector<16x1xf32>
    %842 = tpu.concatenate %840, %841 in 1 : vector<16x127xf32>, vector<16x1xf32> -> vector<16x128xf32>
    %cst_341 = arith.constant 0.000000e+00 : f32
    %843 = vector.shape_cast %762 : vector<1x128xi1> to vector<1x128xi1>
    %844 = vector.broadcast %843 : vector<1x128xi1> to vector<16x128xi1>
    %845 = vector.broadcast %cst_341 : f32 to vector<16x128xf32>
    %846 = arith.select %844, %842, %845 : vector<16x128xi1>, vector<16x128xf32>
    %847 = vector.extract_strided_slice %665 {offsets = [0, 7], sizes = [16, 121], strides = [1, 1]} : vector<16x128xf32> to vector<16x121xf32>
    %cst_342 = arith.constant 0.000000e+00 : f32
    %848 = vector.broadcast %cst_342 : f32 to vector<16x7xf32>
    %849 = tpu.concatenate %847, %848 in 1 : vector<16x121xf32>, vector<16x7xf32> -> vector<16x128xf32>
    %cst_343 = arith.constant 0.000000e+00 : f32
    %850 = vector.shape_cast %777 : vector<1x128xi1> to vector<1x128xi1>
    %851 = vector.broadcast %850 : vector<1x128xi1> to vector<16x128xi1>
    %852 = vector.broadcast %cst_343 : f32 to vector<16x128xf32>
    %853 = arith.select %851, %849, %852 : vector<16x128xi1>, vector<16x128xf32>
    %854 = vector.extract_strided_slice %665 {offsets = [0, 8], sizes = [16, 120], strides = [1, 1]} : vector<16x128xf32> to vector<16x120xf32>
    %cst_344 = arith.constant 0.000000e+00 : f32
    %855 = vector.broadcast %cst_344 : f32 to vector<16x8xf32>
    %856 = tpu.concatenate %854, %855 in 1 : vector<16x120xf32>, vector<16x8xf32> -> vector<16x128xf32>
    %cst_345 = arith.constant 0.000000e+00 : f32
    %857 = vector.shape_cast %792 : vector<1x128xi1> to vector<1x128xi1>
    %858 = vector.broadcast %857 : vector<1x128xi1> to vector<16x128xi1>
    %859 = vector.broadcast %cst_345 : f32 to vector<16x128xf32>
    %860 = arith.select %858, %856, %859 : vector<16x128xi1>, vector<16x128xf32>
    %861 = vector.extract_strided_slice %665 {offsets = [0, 9], sizes = [16, 119], strides = [1, 1]} : vector<16x128xf32> to vector<16x119xf32>
    %cst_346 = arith.constant 0.000000e+00 : f32
    %862 = vector.broadcast %cst_346 : f32 to vector<16x9xf32>
    %863 = tpu.concatenate %861, %862 in 1 : vector<16x119xf32>, vector<16x9xf32> -> vector<16x128xf32>
    %cst_347 = arith.constant 0.000000e+00 : f32
    %864 = vector.shape_cast %807 : vector<1x128xi1> to vector<1x128xi1>
    %865 = vector.broadcast %864 : vector<1x128xi1> to vector<16x128xi1>
    %866 = vector.broadcast %cst_347 : f32 to vector<16x128xf32>
    %867 = arith.select %865, %863, %866 : vector<16x128xi1>, vector<16x128xf32>
    %868 = tpu.concatenate %814, %821, %828, %835, %839, %846, %853, %860, %867 in 0 : vector<16x128xf32>, vector<16x128xf32>, vector<16x128xf32>, vector<16x128xf32>, vector<16x128xf32>, vector<16x128xf32>, vector<16x128xf32>, vector<16x128xf32>, vector<16x128xf32> -> vector<144x128xf32>
    %cst_348 = arith.constant dense<0.000000e+00> : vector<16x128xf32>
    %869 = tpu.matmul %24, %868, %cst_348 {dimension_numbers = #tpu.dot_dimension_numbers<[1], [0], [0], [1], [0, 0, 1, 1], [], []>} : vector<16x144xf32>, vector<144x128xf32>, vector<16x128xf32> -> vector<16x128xf32>
    %870 = arith.mulf %643, %643 : vector<16x2xf32>
    %cst_349 = arith.constant dense<0.000000e+00> : vector<16x2xf32>
    %871 = tpu.matmul %26, %870, %cst_349 {dimension_numbers = #tpu.dot_dimension_numbers<[1], [0], [0], [1], [0, 0, 1, 1], [], []>} : vector<16x16xf32>, vector<16x2xf32>, vector<16x2xf32> -> vector<16x2xf32>
    %cst_350 = arith.constant 9.99999993E-9 : f32
    %872 = vector.broadcast %cst_350 : f32 to vector<16x2xf32>
    %873 = arith.addf %871, %872 : vector<16x2xf32>
    %874 = math.rsqrt %873 : vector<16x2xf32>
    %875 = tpu.iota {dimensions = array<i32: 1>} : vector<1x128xi32>
    %c6_i32_351 = arith.constant 6 : i32
    %876 = vector.broadcast %c6_i32_351 : i32 to vector<1x128xi32>
    %877 = arith.shrsi %875, %876 : vector<1x128xi32>
    %c0_i32_352 = arith.constant 0 : i32
    %878 = vector.broadcast %c0_i32_352 : i32 to vector<1x128xi32>
    %879 = arith.cmpi eq, %877, %878 : vector<1x128xi32>
    %880 = vector.extract_strided_slice %874 {offsets = [0, 0], sizes = [16, 1], strides = [1, 1]} : vector<16x2xf32> to vector<16x1xf32>
    %cst_353 = arith.constant 0.000000e+00 : f32
    %881 = vector.shape_cast %879 : vector<1x128xi1> to vector<1x128xi1>
    %882 = vector.broadcast %881 : vector<1x128xi1> to vector<16x128xi1>
    %883 = vector.shape_cast %880 : vector<16x1xf32> to vector<16x1xf32>
    %884 = vector.broadcast %883 : vector<16x1xf32> to vector<16x128xf32>
    %885 = vector.broadcast %cst_353 : f32 to vector<16x128xf32>
    %886 = arith.select %882, %884, %885 : vector<16x128xi1>, vector<16x128xf32>
    %c1_i32_354 = arith.constant 1 : i32
    %887 = vector.broadcast %c1_i32_354 : i32 to vector<1x128xi32>
    %888 = arith.cmpi eq, %877, %887 : vector<1x128xi32>
    %889 = vector.extract_strided_slice %874 {offsets = [0, 1], sizes = [16, 1], strides = [1, 1]} : vector<16x2xf32> to vector<16x1xf32>
    %890 = vector.shape_cast %888 : vector<1x128xi1> to vector<1x128xi1>
    %891 = vector.broadcast %890 : vector<1x128xi1> to vector<16x128xi1>
    %892 = vector.shape_cast %889 : vector<16x1xf32> to vector<16x1xf32>
    %893 = vector.broadcast %892 : vector<16x1xf32> to vector<16x128xf32>
    %894 = arith.select %891, %893, %886 : vector<16x128xi1>, vector<16x128xf32>
    %895 = arith.mulf %869, %894 : vector<16x128xf32>
    %896 = vector.broadcast %644 : vector<1x1xf32> to vector<1x128xf32>
    %897 = arith.mulf %896, %30 : vector<1x128xf32>
    %898 = vector.broadcast %897 : vector<1x128xf32> to vector<16x128xf32>
    %899 = arith.addf %895, %898 : vector<16x128xf32>
    %900 = vector.broadcast %28 : vector<16x1xf32> to vector<16x128xf32>
    %901 = arith.addf %899, %900 : vector<16x128xf32>
    %cst_355 = arith.constant 2.000000e-01 : f32
    %902 = vector.broadcast %cst_355 : f32 to vector<16x128xf32>
    %903 = arith.mulf %902, %901 : vector<16x128xf32>
    %904 = arith.maximumf %901, %903 : vector<16x128xf32>
    %cst_356 = arith.constant 1.41421354 : f32
    %905 = vector.broadcast %cst_356 : f32 to vector<16x128xf32>
    %906 = arith.mulf %904, %905 : vector<16x128xf32>
    %907 = vector.extract_strided_slice %63 {offsets = [112, 0], sizes = [16, 2], strides = [1, 1]} : vector<160x2xf32> to vector<16x2xf32>
    %908 = tpu.iota {dimensions = array<i32: 1>} : vector<1x128xi32>
    %c6_i32_357 = arith.constant 6 : i32
    %909 = vector.broadcast %c6_i32_357 : i32 to vector<1x128xi32>
    %910 = arith.shrsi %908, %909 : vector<1x128xi32>
    %c0_i32_358 = arith.constant 0 : i32
    %911 = vector.broadcast %c0_i32_358 : i32 to vector<1x128xi32>
    %912 = arith.cmpi eq, %910, %911 : vector<1x128xi32>
    %913 = vector.extract_strided_slice %907 {offsets = [0, 0], sizes = [16, 1], strides = [1, 1]} : vector<16x2xf32> to vector<16x1xf32>
    %cst_359 = arith.constant 0.000000e+00 : f32
    %914 = vector.shape_cast %912 : vector<1x128xi1> to vector<1x128xi1>
    %915 = vector.broadcast %914 : vector<1x128xi1> to vector<16x128xi1>
    %916 = vector.shape_cast %913 : vector<16x1xf32> to vector<16x1xf32>
    %917 = vector.broadcast %916 : vector<16x1xf32> to vector<16x128xf32>
    %918 = vector.broadcast %cst_359 : f32 to vector<16x128xf32>
    %919 = arith.select %915, %917, %918 : vector<16x128xi1>, vector<16x128xf32>
    %c1_i32_360 = arith.constant 1 : i32
    %920 = vector.broadcast %c1_i32_360 : i32 to vector<1x128xi32>
    %921 = arith.cmpi eq, %910, %920 : vector<1x128xi32>
    %922 = vector.extract_strided_slice %907 {offsets = [0, 1], sizes = [16, 1], strides = [1, 1]} : vector<16x2xf32> to vector<16x1xf32>
    %923 = vector.shape_cast %921 : vector<1x128xi1> to vector<1x128xi1>
    %924 = vector.broadcast %923 : vector<1x128xi1> to vector<16x128xi1>
    %925 = vector.shape_cast %922 : vector<16x1xf32> to vector<16x1xf32>
    %926 = vector.broadcast %925 : vector<16x1xf32> to vector<16x128xf32>
    %927 = arith.select %924, %926, %919 : vector<16x128xi1>, vector<16x128xf32>
    %928 = arith.mulf %906, %927 : vector<16x128xf32>
    %cst_361 = arith.constant dense<0.000000e+00> : vector<3x128xf32>
    %929 = tpu.matmul %52, %928, %cst_361 {dimension_numbers = #tpu.dot_dimension_numbers<[1], [0], [0], [1], [0, 0, 1, 1], [], []>} : vector<3x16xf32>, vector<16x128xf32>, vector<3x128xf32> -> vector<3x128xf32>
    %930 = vector.broadcast %54 : vector<3x1xf32> to vector<3x128xf32>
    %931 = arith.addf %929, %930 : vector<3x128xf32>
    %932 = arith.addf %378, %931 : vector<3x128xf32>
    %933 = tpu.iota {dimensions = array<i32: 0>} : vector<128x512xi32>
    %934 = tpu.iota {dimensions = array<i32: 1>} : vector<128x512xi32>
    %c8_i32_362 = arith.constant 8 : i32
    %935 = vector.broadcast %c8_i32_362 : i32 to vector<128x512xi32>
    %936 = arith.shrsi %934, %935 : vector<128x512xi32>
    %c255_i32 = arith.constant 255 : i32
    %937 = vector.broadcast %c255_i32 : i32 to vector<128x512xi32>
    %938 = arith.andi %934, %937 : vector<128x512xi32>
    %c4_i32_363 = arith.constant 4 : i32
    %939 = vector.broadcast %c4_i32_363 : i32 to vector<128x512xi32>
    %940 = arith.shrsi %938, %939 : vector<128x512xi32>
    %c15_i32_364 = arith.constant 15 : i32
    %941 = vector.broadcast %c15_i32_364 : i32 to vector<128x512xi32>
    %942 = arith.andi %938, %941 : vector<128x512xi32>
    %c64_i32 = arith.constant 64 : i32
    %943 = vector.broadcast %c64_i32 : i32 to vector<128x512xi32>
    %944 = arith.muli %936, %943 : vector<128x512xi32>
    %c1_i32_365 = arith.constant 1 : i32
    %945 = vector.broadcast %c1_i32_365 : i32 to vector<128x512xi32>
    %946 = arith.shrsi %940, %945 : vector<128x512xi32>
    %c8_i32_366 = arith.constant 8 : i32
    %947 = vector.broadcast %c8_i32_366 : i32 to vector<128x512xi32>
    %948 = arith.muli %946, %947 : vector<128x512xi32>
    %949 = arith.addi %944, %948 : vector<128x512xi32>
    %c1_i32_367 = arith.constant 1 : i32
    %950 = vector.broadcast %c1_i32_367 : i32 to vector<128x512xi32>
    %951 = arith.shrsi %942, %950 : vector<128x512xi32>
    %952 = arith.addi %949, %951 : vector<128x512xi32>
    %953 = arith.cmpi eq, %933, %952 : vector<128x512xi32>
    %cst_368 = arith.constant 1.000000e+00 : f32
    %cst_369 = arith.constant 0.000000e+00 : f32
    %954 = vector.broadcast %cst_368 : f32 to vector<128x512xf32>
    %955 = vector.broadcast %cst_369 : f32 to vector<128x512xf32>
    %956 = arith.select %953, %954, %955 : vector<128x512xi1>, vector<128x512xf32>
    %cst_370 = arith.constant dense<0.000000e+00> : vector<16x512xf32>
    %957 = tpu.matmul %906, %956, %cst_370 {dimension_numbers = #tpu.dot_dimension_numbers<[1], [0], [0], [1], [0, 0, 1, 1], [], []>} : vector<16x128xf32>, vector<128x512xf32>, vector<16x512xf32> -> vector<16x512xf32>
    %cst_371 = arith.constant dense<0.000000e+00> : vector<3x512xf32>
    %958 = tpu.matmul %932, %956, %cst_371 {dimension_numbers = #tpu.dot_dimension_numbers<[1], [0], [0], [1], [0, 0, 1, 1], [], []>} : vector<3x128xf32>, vector<128x512xf32>, vector<3x512xf32> -> vector<3x512xf32>
    %959 = vector.extract_strided_slice %63 {offsets = [128, 0], sizes = [16, 2], strides = [1, 1]} : vector<160x2xf32> to vector<16x2xf32>
    %960 = vector.extract_strided_slice %60 {offsets = [0, 3], sizes = [1, 1], strides = [1, 1]} : vector<1x8xf32> to vector<1x1xf32>
    %961 = tpu.iota {dimensions = array<i32: 1>} : vector<1x512xi32>
    %c8_i32_372 = arith.constant 8 : i32
    %962 = vector.broadcast %c8_i32_372 : i32 to vector<1x512xi32>
    %963 = arith.shrsi %961, %962 : vector<1x512xi32>
    %c0_i32_373 = arith.constant 0 : i32
    %964 = vector.broadcast %c0_i32_373 : i32 to vector<1x512xi32>
    %965 = arith.cmpi eq, %963, %964 : vector<1x512xi32>
    %966 = vector.extract_strided_slice %959 {offsets = [0, 0], sizes = [16, 1], strides = [1, 1]} : vector<16x2xf32> to vector<16x1xf32>
    %cst_374 = arith.constant 0.000000e+00 : f32
    %967 = vector.shape_cast %965 : vector<1x512xi1> to vector<1x512xi1>
    %968 = vector.broadcast %967 : vector<1x512xi1> to vector<16x512xi1>
    %969 = vector.shape_cast %966 : vector<16x1xf32> to vector<16x1xf32>
    %970 = vector.broadcast %969 : vector<16x1xf32> to vector<16x512xf32>
    %971 = vector.broadcast %cst_374 : f32 to vector<16x512xf32>
    %972 = arith.select %968, %970, %971 : vector<16x512xi1>, vector<16x512xf32>
    %c1_i32_375 = arith.constant 1 : i32
    %973 = vector.broadcast %c1_i32_375 : i32 to vector<1x512xi32>
    %974 = arith.cmpi eq, %963, %973 : vector<1x512xi32>
    %975 = vector.extract_strided_slice %959 {offsets = [0, 1], sizes = [16, 1], strides = [1, 1]} : vector<16x2xf32> to vector<16x1xf32>
    %976 = vector.shape_cast %974 : vector<1x512xi1> to vector<1x512xi1>
    %977 = vector.broadcast %976 : vector<1x512xi1> to vector<16x512xi1>
    %978 = vector.shape_cast %975 : vector<16x1xf32> to vector<16x1xf32>
    %979 = vector.broadcast %978 : vector<16x1xf32> to vector<16x512xf32>
    %980 = arith.select %977, %979, %972 : vector<16x512xi1>, vector<16x512xf32>
    %981 = arith.mulf %957, %980 : vector<16x512xf32>
    %982 = tpu.iota {dimensions = array<i32: 1>} : vector<1x512xi32>
    %c255_i32_376 = arith.constant 255 : i32
    %983 = vector.broadcast %c255_i32_376 : i32 to vector<1x512xi32>
    %984 = arith.andi %982, %983 : vector<1x512xi32>
    %c4_i32_377 = arith.constant 4 : i32
    %985 = vector.broadcast %c4_i32_377 : i32 to vector<1x512xi32>
    %986 = arith.shrsi %984, %985 : vector<1x512xi32>
    %c15_i32_378 = arith.constant 15 : i32
    %987 = vector.broadcast %c15_i32_378 : i32 to vector<1x512xi32>
    %988 = arith.andi %984, %987 : vector<1x512xi32>
    %c-1_i32_379 = arith.constant -1 : i32
    %989 = vector.broadcast %c-1_i32_379 : i32 to vector<1x512xi32>
    %990 = arith.addi %986, %989 : vector<1x512xi32>
    %c-1_i32_380 = arith.constant -1 : i32
    %991 = vector.broadcast %c-1_i32_380 : i32 to vector<1x512xi32>
    %992 = arith.addi %988, %991 : vector<1x512xi32>
    %c0_i32_381 = arith.constant 0 : i32
    %993 = vector.broadcast %c0_i32_381 : i32 to vector<1x512xi32>
    %994 = arith.cmpi sge, %990, %993 : vector<1x512xi32>
    %c16_i32_382 = arith.constant 16 : i32
    %995 = vector.broadcast %c16_i32_382 : i32 to vector<1x512xi32>
    %996 = arith.cmpi slt, %990, %995 : vector<1x512xi32>
    %997 = arith.andi %994, %996 : vector<1x512xi1>
    %c0_i32_383 = arith.constant 0 : i32
    %998 = vector.broadcast %c0_i32_383 : i32 to vector<1x512xi32>
    %999 = arith.cmpi sge, %992, %998 : vector<1x512xi32>
    %1000 = arith.andi %997, %999 : vector<1x512xi1>
    %c16_i32_384 = arith.constant 16 : i32
    %1001 = vector.broadcast %c16_i32_384 : i32 to vector<1x512xi32>
    %1002 = arith.cmpi slt, %992, %1001 : vector<1x512xi32>
    %1003 = arith.andi %1000, %1002 : vector<1x512xi1>
    %c-1_i32_385 = arith.constant -1 : i32
    %1004 = vector.broadcast %c-1_i32_385 : i32 to vector<1x512xi32>
    %1005 = arith.addi %986, %1004 : vector<1x512xi32>
    %c0_i32_386 = arith.constant 0 : i32
    %1006 = vector.broadcast %c0_i32_386 : i32 to vector<1x512xi32>
    %1007 = arith.addi %988, %1006 : vector<1x512xi32>
    %c0_i32_387 = arith.constant 0 : i32
    %1008 = vector.broadcast %c0_i32_387 : i32 to vector<1x512xi32>
    %1009 = arith.cmpi sge, %1005, %1008 : vector<1x512xi32>
    %c16_i32_388 = arith.constant 16 : i32
    %1010 = vector.broadcast %c16_i32_388 : i32 to vector<1x512xi32>
    %1011 = arith.cmpi slt, %1005, %1010 : vector<1x512xi32>
    %1012 = arith.andi %1009, %1011 : vector<1x512xi1>
    %c0_i32_389 = arith.constant 0 : i32
    %1013 = vector.broadcast %c0_i32_389 : i32 to vector<1x512xi32>
    %1014 = arith.cmpi sge, %1007, %1013 : vector<1x512xi32>
    %1015 = arith.andi %1012, %1014 : vector<1x512xi1>
    %c16_i32_390 = arith.constant 16 : i32
    %1016 = vector.broadcast %c16_i32_390 : i32 to vector<1x512xi32>
    %1017 = arith.cmpi slt, %1007, %1016 : vector<1x512xi32>
    %1018 = arith.andi %1015, %1017 : vector<1x512xi1>
    %c-1_i32_391 = arith.constant -1 : i32
    %1019 = vector.broadcast %c-1_i32_391 : i32 to vector<1x512xi32>
    %1020 = arith.addi %986, %1019 : vector<1x512xi32>
    %c1_i32_392 = arith.constant 1 : i32
    %1021 = vector.broadcast %c1_i32_392 : i32 to vector<1x512xi32>
    %1022 = arith.addi %988, %1021 : vector<1x512xi32>
    %c0_i32_393 = arith.constant 0 : i32
    %1023 = vector.broadcast %c0_i32_393 : i32 to vector<1x512xi32>
    %1024 = arith.cmpi sge, %1020, %1023 : vector<1x512xi32>
    %c16_i32_394 = arith.constant 16 : i32
    %1025 = vector.broadcast %c16_i32_394 : i32 to vector<1x512xi32>
    %1026 = arith.cmpi slt, %1020, %1025 : vector<1x512xi32>
    %1027 = arith.andi %1024, %1026 : vector<1x512xi1>
    %c0_i32_395 = arith.constant 0 : i32
    %1028 = vector.broadcast %c0_i32_395 : i32 to vector<1x512xi32>
    %1029 = arith.cmpi sge, %1022, %1028 : vector<1x512xi32>
    %1030 = arith.andi %1027, %1029 : vector<1x512xi1>
    %c16_i32_396 = arith.constant 16 : i32
    %1031 = vector.broadcast %c16_i32_396 : i32 to vector<1x512xi32>
    %1032 = arith.cmpi slt, %1022, %1031 : vector<1x512xi32>
    %1033 = arith.andi %1030, %1032 : vector<1x512xi1>
    %c0_i32_397 = arith.constant 0 : i32
    %1034 = vector.broadcast %c0_i32_397 : i32 to vector<1x512xi32>
    %1035 = arith.addi %986, %1034 : vector<1x512xi32>
    %c-1_i32_398 = arith.constant -1 : i32
    %1036 = vector.broadcast %c-1_i32_398 : i32 to vector<1x512xi32>
    %1037 = arith.addi %988, %1036 : vector<1x512xi32>
    %c0_i32_399 = arith.constant 0 : i32
    %1038 = vector.broadcast %c0_i32_399 : i32 to vector<1x512xi32>
    %1039 = arith.cmpi sge, %1035, %1038 : vector<1x512xi32>
    %c16_i32_400 = arith.constant 16 : i32
    %1040 = vector.broadcast %c16_i32_400 : i32 to vector<1x512xi32>
    %1041 = arith.cmpi slt, %1035, %1040 : vector<1x512xi32>
    %1042 = arith.andi %1039, %1041 : vector<1x512xi1>
    %c0_i32_401 = arith.constant 0 : i32
    %1043 = vector.broadcast %c0_i32_401 : i32 to vector<1x512xi32>
    %1044 = arith.cmpi sge, %1037, %1043 : vector<1x512xi32>
    %1045 = arith.andi %1042, %1044 : vector<1x512xi1>
    %c16_i32_402 = arith.constant 16 : i32
    %1046 = vector.broadcast %c16_i32_402 : i32 to vector<1x512xi32>
    %1047 = arith.cmpi slt, %1037, %1046 : vector<1x512xi32>
    %1048 = arith.andi %1045, %1047 : vector<1x512xi1>
    %c0_i32_403 = arith.constant 0 : i32
    %1049 = vector.broadcast %c0_i32_403 : i32 to vector<1x512xi32>
    %1050 = arith.addi %986, %1049 : vector<1x512xi32>
    %c0_i32_404 = arith.constant 0 : i32
    %1051 = vector.broadcast %c0_i32_404 : i32 to vector<1x512xi32>
    %1052 = arith.addi %988, %1051 : vector<1x512xi32>
    %c0_i32_405 = arith.constant 0 : i32
    %1053 = vector.broadcast %c0_i32_405 : i32 to vector<1x512xi32>
    %1054 = arith.cmpi sge, %1050, %1053 : vector<1x512xi32>
    %c16_i32_406 = arith.constant 16 : i32
    %1055 = vector.broadcast %c16_i32_406 : i32 to vector<1x512xi32>
    %1056 = arith.cmpi slt, %1050, %1055 : vector<1x512xi32>
    %1057 = arith.andi %1054, %1056 : vector<1x512xi1>
    %c0_i32_407 = arith.constant 0 : i32
    %1058 = vector.broadcast %c0_i32_407 : i32 to vector<1x512xi32>
    %1059 = arith.cmpi sge, %1052, %1058 : vector<1x512xi32>
    %1060 = arith.andi %1057, %1059 : vector<1x512xi1>
    %c16_i32_408 = arith.constant 16 : i32
    %1061 = vector.broadcast %c16_i32_408 : i32 to vector<1x512xi32>
    %1062 = arith.cmpi slt, %1052, %1061 : vector<1x512xi32>
    %1063 = arith.andi %1060, %1062 : vector<1x512xi1>
    %c0_i32_409 = arith.constant 0 : i32
    %1064 = vector.broadcast %c0_i32_409 : i32 to vector<1x512xi32>
    %1065 = arith.addi %986, %1064 : vector<1x512xi32>
    %c1_i32_410 = arith.constant 1 : i32
    %1066 = vector.broadcast %c1_i32_410 : i32 to vector<1x512xi32>
    %1067 = arith.addi %988, %1066 : vector<1x512xi32>
    %c0_i32_411 = arith.constant 0 : i32
    %1068 = vector.broadcast %c0_i32_411 : i32 to vector<1x512xi32>
    %1069 = arith.cmpi sge, %1065, %1068 : vector<1x512xi32>
    %c16_i32_412 = arith.constant 16 : i32
    %1070 = vector.broadcast %c16_i32_412 : i32 to vector<1x512xi32>
    %1071 = arith.cmpi slt, %1065, %1070 : vector<1x512xi32>
    %1072 = arith.andi %1069, %1071 : vector<1x512xi1>
    %c0_i32_413 = arith.constant 0 : i32
    %1073 = vector.broadcast %c0_i32_413 : i32 to vector<1x512xi32>
    %1074 = arith.cmpi sge, %1067, %1073 : vector<1x512xi32>
    %1075 = arith.andi %1072, %1074 : vector<1x512xi1>
    %c16_i32_414 = arith.constant 16 : i32
    %1076 = vector.broadcast %c16_i32_414 : i32 to vector<1x512xi32>
    %1077 = arith.cmpi slt, %1067, %1076 : vector<1x512xi32>
    %1078 = arith.andi %1075, %1077 : vector<1x512xi1>
    %c1_i32_415 = arith.constant 1 : i32
    %1079 = vector.broadcast %c1_i32_415 : i32 to vector<1x512xi32>
    %1080 = arith.addi %986, %1079 : vector<1x512xi32>
    %c-1_i32_416 = arith.constant -1 : i32
    %1081 = vector.broadcast %c-1_i32_416 : i32 to vector<1x512xi32>
    %1082 = arith.addi %988, %1081 : vector<1x512xi32>
    %c0_i32_417 = arith.constant 0 : i32
    %1083 = vector.broadcast %c0_i32_417 : i32 to vector<1x512xi32>
    %1084 = arith.cmpi sge, %1080, %1083 : vector<1x512xi32>
    %c16_i32_418 = arith.constant 16 : i32
    %1085 = vector.broadcast %c16_i32_418 : i32 to vector<1x512xi32>
    %1086 = arith.cmpi slt, %1080, %1085 : vector<1x512xi32>
    %1087 = arith.andi %1084, %1086 : vector<1x512xi1>
    %c0_i32_419 = arith.constant 0 : i32
    %1088 = vector.broadcast %c0_i32_419 : i32 to vector<1x512xi32>
    %1089 = arith.cmpi sge, %1082, %1088 : vector<1x512xi32>
    %1090 = arith.andi %1087, %1089 : vector<1x512xi1>
    %c16_i32_420 = arith.constant 16 : i32
    %1091 = vector.broadcast %c16_i32_420 : i32 to vector<1x512xi32>
    %1092 = arith.cmpi slt, %1082, %1091 : vector<1x512xi32>
    %1093 = arith.andi %1090, %1092 : vector<1x512xi1>
    %c1_i32_421 = arith.constant 1 : i32
    %1094 = vector.broadcast %c1_i32_421 : i32 to vector<1x512xi32>
    %1095 = arith.addi %986, %1094 : vector<1x512xi32>
    %c0_i32_422 = arith.constant 0 : i32
    %1096 = vector.broadcast %c0_i32_422 : i32 to vector<1x512xi32>
    %1097 = arith.addi %988, %1096 : vector<1x512xi32>
    %c0_i32_423 = arith.constant 0 : i32
    %1098 = vector.broadcast %c0_i32_423 : i32 to vector<1x512xi32>
    %1099 = arith.cmpi sge, %1095, %1098 : vector<1x512xi32>
    %c16_i32_424 = arith.constant 16 : i32
    %1100 = vector.broadcast %c16_i32_424 : i32 to vector<1x512xi32>
    %1101 = arith.cmpi slt, %1095, %1100 : vector<1x512xi32>
    %1102 = arith.andi %1099, %1101 : vector<1x512xi1>
    %c0_i32_425 = arith.constant 0 : i32
    %1103 = vector.broadcast %c0_i32_425 : i32 to vector<1x512xi32>
    %1104 = arith.cmpi sge, %1097, %1103 : vector<1x512xi32>
    %1105 = arith.andi %1102, %1104 : vector<1x512xi1>
    %c16_i32_426 = arith.constant 16 : i32
    %1106 = vector.broadcast %c16_i32_426 : i32 to vector<1x512xi32>
    %1107 = arith.cmpi slt, %1097, %1106 : vector<1x512xi32>
    %1108 = arith.andi %1105, %1107 : vector<1x512xi1>
    %c1_i32_427 = arith.constant 1 : i32
    %1109 = vector.broadcast %c1_i32_427 : i32 to vector<1x512xi32>
    %1110 = arith.addi %986, %1109 : vector<1x512xi32>
    %c1_i32_428 = arith.constant 1 : i32
    %1111 = vector.broadcast %c1_i32_428 : i32 to vector<1x512xi32>
    %1112 = arith.addi %988, %1111 : vector<1x512xi32>
    %c0_i32_429 = arith.constant 0 : i32
    %1113 = vector.broadcast %c0_i32_429 : i32 to vector<1x512xi32>
    %1114 = arith.cmpi sge, %1110, %1113 : vector<1x512xi32>
    %c16_i32_430 = arith.constant 16 : i32
    %1115 = vector.broadcast %c16_i32_430 : i32 to vector<1x512xi32>
    %1116 = arith.cmpi slt, %1110, %1115 : vector<1x512xi32>
    %1117 = arith.andi %1114, %1116 : vector<1x512xi1>
    %c0_i32_431 = arith.constant 0 : i32
    %1118 = vector.broadcast %c0_i32_431 : i32 to vector<1x512xi32>
    %1119 = arith.cmpi sge, %1112, %1118 : vector<1x512xi32>
    %1120 = arith.andi %1117, %1119 : vector<1x512xi1>
    %c16_i32_432 = arith.constant 16 : i32
    %1121 = vector.broadcast %c16_i32_432 : i32 to vector<1x512xi32>
    %1122 = arith.cmpi slt, %1112, %1121 : vector<1x512xi32>
    %1123 = arith.andi %1120, %1122 : vector<1x512xi1>
    %cst_433 = arith.constant 0.000000e+00 : f32
    %1124 = vector.broadcast %cst_433 : f32 to vector<16x17xf32>
    %1125 = vector.extract_strided_slice %981 {offsets = [0, 0], sizes = [16, 495], strides = [1, 1]} : vector<16x512xf32> to vector<16x495xf32>
    %1126 = tpu.concatenate %1124, %1125 in 1 : vector<16x17xf32>, vector<16x495xf32> -> vector<16x512xf32>
    %cst_434 = arith.constant 0.000000e+00 : f32
    %1127 = vector.shape_cast %1003 : vector<1x512xi1> to vector<1x512xi1>
    %1128 = vector.broadcast %1127 : vector<1x512xi1> to vector<16x512xi1>
    %1129 = vector.broadcast %cst_434 : f32 to vector<16x512xf32>
    %1130 = arith.select %1128, %1126, %1129 : vector<16x512xi1>, vector<16x512xf32>
    %cst_435 = arith.constant 0.000000e+00 : f32
    %1131 = vector.broadcast %cst_435 : f32 to vector<16x16xf32>
    %1132 = vector.extract_strided_slice %981 {offsets = [0, 0], sizes = [16, 496], strides = [1, 1]} : vector<16x512xf32> to vector<16x496xf32>
    %1133 = tpu.concatenate %1131, %1132 in 1 : vector<16x16xf32>, vector<16x496xf32> -> vector<16x512xf32>
    %cst_436 = arith.constant 0.000000e+00 : f32
    %1134 = vector.shape_cast %1018 : vector<1x512xi1> to vector<1x512xi1>
    %1135 = vector.broadcast %1134 : vector<1x512xi1> to vector<16x512xi1>
    %1136 = vector.broadcast %cst_436 : f32 to vector<16x512xf32>
    %1137 = arith.select %1135, %1133, %1136 : vector<16x512xi1>, vector<16x512xf32>
    %cst_437 = arith.constant 0.000000e+00 : f32
    %1138 = vector.broadcast %cst_437 : f32 to vector<16x15xf32>
    %1139 = vector.extract_strided_slice %981 {offsets = [0, 0], sizes = [16, 497], strides = [1, 1]} : vector<16x512xf32> to vector<16x497xf32>
    %1140 = tpu.concatenate %1138, %1139 in 1 : vector<16x15xf32>, vector<16x497xf32> -> vector<16x512xf32>
    %cst_438 = arith.constant 0.000000e+00 : f32
    %1141 = vector.shape_cast %1033 : vector<1x512xi1> to vector<1x512xi1>
    %1142 = vector.broadcast %1141 : vector<1x512xi1> to vector<16x512xi1>
    %1143 = vector.broadcast %cst_438 : f32 to vector<16x512xf32>
    %1144 = arith.select %1142, %1140, %1143 : vector<16x512xi1>, vector<16x512xf32>
    %cst_439 = arith.constant 0.000000e+00 : f32
    %1145 = vector.broadcast %cst_439 : f32 to vector<16x1xf32>
    %1146 = vector.extract_strided_slice %981 {offsets = [0, 0], sizes = [16, 511], strides = [1, 1]} : vector<16x512xf32> to vector<16x511xf32>
    %1147 = tpu.concatenate %1145, %1146 in 1 : vector<16x1xf32>, vector<16x511xf32> -> vector<16x512xf32>
    %cst_440 = arith.constant 0.000000e+00 : f32
    %1148 = vector.shape_cast %1048 : vector<1x512xi1> to vector<1x512xi1>
    %1149 = vector.broadcast %1148 : vector<1x512xi1> to vector<16x512xi1>
    %1150 = vector.broadcast %cst_440 : f32 to vector<16x512xf32>
    %1151 = arith.select %1149, %1147, %1150 : vector<16x512xi1>, vector<16x512xf32>
    %cst_441 = arith.constant 0.000000e+00 : f32
    %1152 = vector.shape_cast %1063 : vector<1x512xi1> to vector<1x512xi1>
    %1153 = vector.broadcast %1152 : vector<1x512xi1> to vector<16x512xi1>
    %1154 = vector.broadcast %cst_441 : f32 to vector<16x512xf32>
    %1155 = arith.select %1153, %981, %1154 : vector<16x512xi1>, vector<16x512xf32>
    %1156 = vector.extract_strided_slice %981 {offsets = [0, 1], sizes = [16, 511], strides = [1, 1]} : vector<16x512xf32> to vector<16x511xf32>
    %cst_442 = arith.constant 0.000000e+00 : f32
    %1157 = vector.broadcast %cst_442 : f32 to vector<16x1xf32>
    %1158 = tpu.concatenate %1156, %1157 in 1 : vector<16x511xf32>, vector<16x1xf32> -> vector<16x512xf32>
    %cst_443 = arith.constant 0.000000e+00 : f32
    %1159 = vector.shape_cast %1078 : vector<1x512xi1> to vector<1x512xi1>
    %1160 = vector.broadcast %1159 : vector<1x512xi1> to vector<16x512xi1>
    %1161 = vector.broadcast %cst_443 : f32 to vector<16x512xf32>
    %1162 = arith.select %1160, %1158, %1161 : vector<16x512xi1>, vector<16x512xf32>
    %1163 = vector.extract_strided_slice %981 {offsets = [0, 15], sizes = [16, 497], strides = [1, 1]} : vector<16x512xf32> to vector<16x497xf32>
    %cst_444 = arith.constant 0.000000e+00 : f32
    %1164 = vector.broadcast %cst_444 : f32 to vector<16x15xf32>
    %1165 = tpu.concatenate %1163, %1164 in 1 : vector<16x497xf32>, vector<16x15xf32> -> vector<16x512xf32>
    %cst_445 = arith.constant 0.000000e+00 : f32
    %1166 = vector.shape_cast %1093 : vector<1x512xi1> to vector<1x512xi1>
    %1167 = vector.broadcast %1166 : vector<1x512xi1> to vector<16x512xi1>
    %1168 = vector.broadcast %cst_445 : f32 to vector<16x512xf32>
    %1169 = arith.select %1167, %1165, %1168 : vector<16x512xi1>, vector<16x512xf32>
    %1170 = vector.extract_strided_slice %981 {offsets = [0, 16], sizes = [16, 496], strides = [1, 1]} : vector<16x512xf32> to vector<16x496xf32>
    %cst_446 = arith.constant 0.000000e+00 : f32
    %1171 = vector.broadcast %cst_446 : f32 to vector<16x16xf32>
    %1172 = tpu.concatenate %1170, %1171 in 1 : vector<16x496xf32>, vector<16x16xf32> -> vector<16x512xf32>
    %cst_447 = arith.constant 0.000000e+00 : f32
    %1173 = vector.shape_cast %1108 : vector<1x512xi1> to vector<1x512xi1>
    %1174 = vector.broadcast %1173 : vector<1x512xi1> to vector<16x512xi1>
    %1175 = vector.broadcast %cst_447 : f32 to vector<16x512xf32>
    %1176 = arith.select %1174, %1172, %1175 : vector<16x512xi1>, vector<16x512xf32>
    %1177 = vector.extract_strided_slice %981 {offsets = [0, 17], sizes = [16, 495], strides = [1, 1]} : vector<16x512xf32> to vector<16x495xf32>
    %cst_448 = arith.constant 0.000000e+00 : f32
    %1178 = vector.broadcast %cst_448 : f32 to vector<16x17xf32>
    %1179 = tpu.concatenate %1177, %1178 in 1 : vector<16x495xf32>, vector<16x17xf32> -> vector<16x512xf32>
    %cst_449 = arith.constant 0.000000e+00 : f32
    %1180 = vector.shape_cast %1123 : vector<1x512xi1> to vector<1x512xi1>
    %1181 = vector.broadcast %1180 : vector<1x512xi1> to vector<16x512xi1>
    %1182 = vector.broadcast %cst_449 : f32 to vector<16x512xf32>
    %1183 = arith.select %1181, %1179, %1182 : vector<16x512xi1>, vector<16x512xf32>
    %1184 = tpu.concatenate %1130, %1137, %1144, %1151, %1155, %1162, %1169, %1176, %1183 in 0 : vector<16x512xf32>, vector<16x512xf32>, vector<16x512xf32>, vector<16x512xf32>, vector<16x512xf32>, vector<16x512xf32>, vector<16x512xf32>, vector<16x512xf32>, vector<16x512xf32> -> vector<144x512xf32>
    %cst_450 = arith.constant dense<0.000000e+00> : vector<8x512xf32>
    %1185 = tpu.matmul %32, %1184, %cst_450 {dimension_numbers = #tpu.dot_dimension_numbers<[1], [0], [0], [1], [0, 0, 1, 1], [], []>} : vector<8x144xf32>, vector<144x512xf32>, vector<8x512xf32> -> vector<8x512xf32>
    %1186 = arith.mulf %959, %959 : vector<16x2xf32>
    %cst_451 = arith.constant dense<0.000000e+00> : vector<8x2xf32>
    %1187 = tpu.matmul %34, %1186, %cst_451 {dimension_numbers = #tpu.dot_dimension_numbers<[1], [0], [0], [1], [0, 0, 1, 1], [], []>} : vector<8x16xf32>, vector<16x2xf32>, vector<8x2xf32> -> vector<8x2xf32>
    %cst_452 = arith.constant 9.99999993E-9 : f32
    %1188 = vector.broadcast %cst_452 : f32 to vector<8x2xf32>
    %1189 = arith.addf %1187, %1188 : vector<8x2xf32>
    %1190 = math.rsqrt %1189 : vector<8x2xf32>
    %1191 = tpu.iota {dimensions = array<i32: 1>} : vector<1x512xi32>
    %c8_i32_453 = arith.constant 8 : i32
    %1192 = vector.broadcast %c8_i32_453 : i32 to vector<1x512xi32>
    %1193 = arith.shrsi %1191, %1192 : vector<1x512xi32>
    %c0_i32_454 = arith.constant 0 : i32
    %1194 = vector.broadcast %c0_i32_454 : i32 to vector<1x512xi32>
    %1195 = arith.cmpi eq, %1193, %1194 : vector<1x512xi32>
    %1196 = vector.extract_strided_slice %1190 {offsets = [0, 0], sizes = [8, 1], strides = [1, 1]} : vector<8x2xf32> to vector<8x1xf32>
    %cst_455 = arith.constant 0.000000e+00 : f32
    %1197 = vector.shape_cast %1195 : vector<1x512xi1> to vector<1x512xi1>
    %1198 = vector.broadcast %1197 : vector<1x512xi1> to vector<8x512xi1>
    %1199 = vector.shape_cast %1196 : vector<8x1xf32> to vector<8x1xf32>
    %1200 = vector.broadcast %1199 : vector<8x1xf32> to vector<8x512xf32>
    %1201 = vector.broadcast %cst_455 : f32 to vector<8x512xf32>
    %1202 = arith.select %1198, %1200, %1201 : vector<8x512xi1>, vector<8x512xf32>
    %c1_i32_456 = arith.constant 1 : i32
    %1203 = vector.broadcast %c1_i32_456 : i32 to vector<1x512xi32>
    %1204 = arith.cmpi eq, %1193, %1203 : vector<1x512xi32>
    %1205 = vector.extract_strided_slice %1190 {offsets = [0, 1], sizes = [8, 1], strides = [1, 1]} : vector<8x2xf32> to vector<8x1xf32>
    %1206 = vector.shape_cast %1204 : vector<1x512xi1> to vector<1x512xi1>
    %1207 = vector.broadcast %1206 : vector<1x512xi1> to vector<8x512xi1>
    %1208 = vector.shape_cast %1205 : vector<8x1xf32> to vector<8x1xf32>
    %1209 = vector.broadcast %1208 : vector<8x1xf32> to vector<8x512xf32>
    %1210 = arith.select %1207, %1209, %1202 : vector<8x512xi1>, vector<8x512xf32>
    %1211 = arith.mulf %1185, %1210 : vector<8x512xf32>
    %1212 = vector.broadcast %960 : vector<1x1xf32> to vector<1x512xf32>
    %1213 = arith.mulf %1212, %38 : vector<1x512xf32>
    %1214 = vector.broadcast %1213 : vector<1x512xf32> to vector<8x512xf32>
    %1215 = arith.addf %1211, %1214 : vector<8x512xf32>
    %1216 = vector.broadcast %36 : vector<8x1xf32> to vector<8x512xf32>
    %1217 = arith.addf %1215, %1216 : vector<8x512xf32>
    %cst_457 = arith.constant 2.000000e-01 : f32
    %1218 = vector.broadcast %cst_457 : f32 to vector<8x512xf32>
    %1219 = arith.mulf %1218, %1217 : vector<8x512xf32>
    %1220 = arith.maximumf %1217, %1219 : vector<8x512xf32>
    %cst_458 = arith.constant 1.41421354 : f32
    %1221 = vector.broadcast %cst_458 : f32 to vector<8x512xf32>
    %1222 = arith.mulf %1220, %1221 : vector<8x512xf32>
    %1223 = vector.extract_strided_slice %63 {offsets = [144, 0], sizes = [8, 2], strides = [1, 1]} : vector<160x2xf32> to vector<8x2xf32>
    %1224 = vector.extract_strided_slice %60 {offsets = [0, 4], sizes = [1, 1], strides = [1, 1]} : vector<1x8xf32> to vector<1x1xf32>
    %1225 = tpu.iota {dimensions = array<i32: 1>} : vector<1x512xi32>
    %c8_i32_459 = arith.constant 8 : i32
    %1226 = vector.broadcast %c8_i32_459 : i32 to vector<1x512xi32>
    %1227 = arith.shrsi %1225, %1226 : vector<1x512xi32>
    %c0_i32_460 = arith.constant 0 : i32
    %1228 = vector.broadcast %c0_i32_460 : i32 to vector<1x512xi32>
    %1229 = arith.cmpi eq, %1227, %1228 : vector<1x512xi32>
    %1230 = vector.extract_strided_slice %1223 {offsets = [0, 0], sizes = [8, 1], strides = [1, 1]} : vector<8x2xf32> to vector<8x1xf32>
    %cst_461 = arith.constant 0.000000e+00 : f32
    %1231 = vector.shape_cast %1229 : vector<1x512xi1> to vector<1x512xi1>
    %1232 = vector.broadcast %1231 : vector<1x512xi1> to vector<8x512xi1>
    %1233 = vector.shape_cast %1230 : vector<8x1xf32> to vector<8x1xf32>
    %1234 = vector.broadcast %1233 : vector<8x1xf32> to vector<8x512xf32>
    %1235 = vector.broadcast %cst_461 : f32 to vector<8x512xf32>
    %1236 = arith.select %1232, %1234, %1235 : vector<8x512xi1>, vector<8x512xf32>
    %c1_i32_462 = arith.constant 1 : i32
    %1237 = vector.broadcast %c1_i32_462 : i32 to vector<1x512xi32>
    %1238 = arith.cmpi eq, %1227, %1237 : vector<1x512xi32>
    %1239 = vector.extract_strided_slice %1223 {offsets = [0, 1], sizes = [8, 1], strides = [1, 1]} : vector<8x2xf32> to vector<8x1xf32>
    %1240 = vector.shape_cast %1238 : vector<1x512xi1> to vector<1x512xi1>
    %1241 = vector.broadcast %1240 : vector<1x512xi1> to vector<8x512xi1>
    %1242 = vector.shape_cast %1239 : vector<8x1xf32> to vector<8x1xf32>
    %1243 = vector.broadcast %1242 : vector<8x1xf32> to vector<8x512xf32>
    %1244 = arith.select %1241, %1243, %1236 : vector<8x512xi1>, vector<8x512xf32>
    %1245 = arith.mulf %1222, %1244 : vector<8x512xf32>
    %1246 = tpu.iota {dimensions = array<i32: 1>} : vector<1x512xi32>
    %c255_i32_463 = arith.constant 255 : i32
    %1247 = vector.broadcast %c255_i32_463 : i32 to vector<1x512xi32>
    %1248 = arith.andi %1246, %1247 : vector<1x512xi32>
    %c4_i32_464 = arith.constant 4 : i32
    %1249 = vector.broadcast %c4_i32_464 : i32 to vector<1x512xi32>
    %1250 = arith.shrsi %1248, %1249 : vector<1x512xi32>
    %c15_i32_465 = arith.constant 15 : i32
    %1251 = vector.broadcast %c15_i32_465 : i32 to vector<1x512xi32>
    %1252 = arith.andi %1248, %1251 : vector<1x512xi32>
    %c-1_i32_466 = arith.constant -1 : i32
    %1253 = vector.broadcast %c-1_i32_466 : i32 to vector<1x512xi32>
    %1254 = arith.addi %1250, %1253 : vector<1x512xi32>
    %c-1_i32_467 = arith.constant -1 : i32
    %1255 = vector.broadcast %c-1_i32_467 : i32 to vector<1x512xi32>
    %1256 = arith.addi %1252, %1255 : vector<1x512xi32>
    %c0_i32_468 = arith.constant 0 : i32
    %1257 = vector.broadcast %c0_i32_468 : i32 to vector<1x512xi32>
    %1258 = arith.cmpi sge, %1254, %1257 : vector<1x512xi32>
    %c16_i32_469 = arith.constant 16 : i32
    %1259 = vector.broadcast %c16_i32_469 : i32 to vector<1x512xi32>
    %1260 = arith.cmpi slt, %1254, %1259 : vector<1x512xi32>
    %1261 = arith.andi %1258, %1260 : vector<1x512xi1>
    %c0_i32_470 = arith.constant 0 : i32
    %1262 = vector.broadcast %c0_i32_470 : i32 to vector<1x512xi32>
    %1263 = arith.cmpi sge, %1256, %1262 : vector<1x512xi32>
    %1264 = arith.andi %1261, %1263 : vector<1x512xi1>
    %c16_i32_471 = arith.constant 16 : i32
    %1265 = vector.broadcast %c16_i32_471 : i32 to vector<1x512xi32>
    %1266 = arith.cmpi slt, %1256, %1265 : vector<1x512xi32>
    %1267 = arith.andi %1264, %1266 : vector<1x512xi1>
    %c-1_i32_472 = arith.constant -1 : i32
    %1268 = vector.broadcast %c-1_i32_472 : i32 to vector<1x512xi32>
    %1269 = arith.addi %1250, %1268 : vector<1x512xi32>
    %c0_i32_473 = arith.constant 0 : i32
    %1270 = vector.broadcast %c0_i32_473 : i32 to vector<1x512xi32>
    %1271 = arith.addi %1252, %1270 : vector<1x512xi32>
    %c0_i32_474 = arith.constant 0 : i32
    %1272 = vector.broadcast %c0_i32_474 : i32 to vector<1x512xi32>
    %1273 = arith.cmpi sge, %1269, %1272 : vector<1x512xi32>
    %c16_i32_475 = arith.constant 16 : i32
    %1274 = vector.broadcast %c16_i32_475 : i32 to vector<1x512xi32>
    %1275 = arith.cmpi slt, %1269, %1274 : vector<1x512xi32>
    %1276 = arith.andi %1273, %1275 : vector<1x512xi1>
    %c0_i32_476 = arith.constant 0 : i32
    %1277 = vector.broadcast %c0_i32_476 : i32 to vector<1x512xi32>
    %1278 = arith.cmpi sge, %1271, %1277 : vector<1x512xi32>
    %1279 = arith.andi %1276, %1278 : vector<1x512xi1>
    %c16_i32_477 = arith.constant 16 : i32
    %1280 = vector.broadcast %c16_i32_477 : i32 to vector<1x512xi32>
    %1281 = arith.cmpi slt, %1271, %1280 : vector<1x512xi32>
    %1282 = arith.andi %1279, %1281 : vector<1x512xi1>
    %c-1_i32_478 = arith.constant -1 : i32
    %1283 = vector.broadcast %c-1_i32_478 : i32 to vector<1x512xi32>
    %1284 = arith.addi %1250, %1283 : vector<1x512xi32>
    %c1_i32_479 = arith.constant 1 : i32
    %1285 = vector.broadcast %c1_i32_479 : i32 to vector<1x512xi32>
    %1286 = arith.addi %1252, %1285 : vector<1x512xi32>
    %c0_i32_480 = arith.constant 0 : i32
    %1287 = vector.broadcast %c0_i32_480 : i32 to vector<1x512xi32>
    %1288 = arith.cmpi sge, %1284, %1287 : vector<1x512xi32>
    %c16_i32_481 = arith.constant 16 : i32
    %1289 = vector.broadcast %c16_i32_481 : i32 to vector<1x512xi32>
    %1290 = arith.cmpi slt, %1284, %1289 : vector<1x512xi32>
    %1291 = arith.andi %1288, %1290 : vector<1x512xi1>
    %c0_i32_482 = arith.constant 0 : i32
    %1292 = vector.broadcast %c0_i32_482 : i32 to vector<1x512xi32>
    %1293 = arith.cmpi sge, %1286, %1292 : vector<1x512xi32>
    %1294 = arith.andi %1291, %1293 : vector<1x512xi1>
    %c16_i32_483 = arith.constant 16 : i32
    %1295 = vector.broadcast %c16_i32_483 : i32 to vector<1x512xi32>
    %1296 = arith.cmpi slt, %1286, %1295 : vector<1x512xi32>
    %1297 = arith.andi %1294, %1296 : vector<1x512xi1>
    %c0_i32_484 = arith.constant 0 : i32
    %1298 = vector.broadcast %c0_i32_484 : i32 to vector<1x512xi32>
    %1299 = arith.addi %1250, %1298 : vector<1x512xi32>
    %c-1_i32_485 = arith.constant -1 : i32
    %1300 = vector.broadcast %c-1_i32_485 : i32 to vector<1x512xi32>
    %1301 = arith.addi %1252, %1300 : vector<1x512xi32>
    %c0_i32_486 = arith.constant 0 : i32
    %1302 = vector.broadcast %c0_i32_486 : i32 to vector<1x512xi32>
    %1303 = arith.cmpi sge, %1299, %1302 : vector<1x512xi32>
    %c16_i32_487 = arith.constant 16 : i32
    %1304 = vector.broadcast %c16_i32_487 : i32 to vector<1x512xi32>
    %1305 = arith.cmpi slt, %1299, %1304 : vector<1x512xi32>
    %1306 = arith.andi %1303, %1305 : vector<1x512xi1>
    %c0_i32_488 = arith.constant 0 : i32
    %1307 = vector.broadcast %c0_i32_488 : i32 to vector<1x512xi32>
    %1308 = arith.cmpi sge, %1301, %1307 : vector<1x512xi32>
    %1309 = arith.andi %1306, %1308 : vector<1x512xi1>
    %c16_i32_489 = arith.constant 16 : i32
    %1310 = vector.broadcast %c16_i32_489 : i32 to vector<1x512xi32>
    %1311 = arith.cmpi slt, %1301, %1310 : vector<1x512xi32>
    %1312 = arith.andi %1309, %1311 : vector<1x512xi1>
    %c0_i32_490 = arith.constant 0 : i32
    %1313 = vector.broadcast %c0_i32_490 : i32 to vector<1x512xi32>
    %1314 = arith.addi %1250, %1313 : vector<1x512xi32>
    %c0_i32_491 = arith.constant 0 : i32
    %1315 = vector.broadcast %c0_i32_491 : i32 to vector<1x512xi32>
    %1316 = arith.addi %1252, %1315 : vector<1x512xi32>
    %c0_i32_492 = arith.constant 0 : i32
    %1317 = vector.broadcast %c0_i32_492 : i32 to vector<1x512xi32>
    %1318 = arith.cmpi sge, %1314, %1317 : vector<1x512xi32>
    %c16_i32_493 = arith.constant 16 : i32
    %1319 = vector.broadcast %c16_i32_493 : i32 to vector<1x512xi32>
    %1320 = arith.cmpi slt, %1314, %1319 : vector<1x512xi32>
    %1321 = arith.andi %1318, %1320 : vector<1x512xi1>
    %c0_i32_494 = arith.constant 0 : i32
    %1322 = vector.broadcast %c0_i32_494 : i32 to vector<1x512xi32>
    %1323 = arith.cmpi sge, %1316, %1322 : vector<1x512xi32>
    %1324 = arith.andi %1321, %1323 : vector<1x512xi1>
    %c16_i32_495 = arith.constant 16 : i32
    %1325 = vector.broadcast %c16_i32_495 : i32 to vector<1x512xi32>
    %1326 = arith.cmpi slt, %1316, %1325 : vector<1x512xi32>
    %1327 = arith.andi %1324, %1326 : vector<1x512xi1>
    %c0_i32_496 = arith.constant 0 : i32
    %1328 = vector.broadcast %c0_i32_496 : i32 to vector<1x512xi32>
    %1329 = arith.addi %1250, %1328 : vector<1x512xi32>
    %c1_i32_497 = arith.constant 1 : i32
    %1330 = vector.broadcast %c1_i32_497 : i32 to vector<1x512xi32>
    %1331 = arith.addi %1252, %1330 : vector<1x512xi32>
    %c0_i32_498 = arith.constant 0 : i32
    %1332 = vector.broadcast %c0_i32_498 : i32 to vector<1x512xi32>
    %1333 = arith.cmpi sge, %1329, %1332 : vector<1x512xi32>
    %c16_i32_499 = arith.constant 16 : i32
    %1334 = vector.broadcast %c16_i32_499 : i32 to vector<1x512xi32>
    %1335 = arith.cmpi slt, %1329, %1334 : vector<1x512xi32>
    %1336 = arith.andi %1333, %1335 : vector<1x512xi1>
    %c0_i32_500 = arith.constant 0 : i32
    %1337 = vector.broadcast %c0_i32_500 : i32 to vector<1x512xi32>
    %1338 = arith.cmpi sge, %1331, %1337 : vector<1x512xi32>
    %1339 = arith.andi %1336, %1338 : vector<1x512xi1>
    %c16_i32_501 = arith.constant 16 : i32
    %1340 = vector.broadcast %c16_i32_501 : i32 to vector<1x512xi32>
    %1341 = arith.cmpi slt, %1331, %1340 : vector<1x512xi32>
    %1342 = arith.andi %1339, %1341 : vector<1x512xi1>
    %c1_i32_502 = arith.constant 1 : i32
    %1343 = vector.broadcast %c1_i32_502 : i32 to vector<1x512xi32>
    %1344 = arith.addi %1250, %1343 : vector<1x512xi32>
    %c-1_i32_503 = arith.constant -1 : i32
    %1345 = vector.broadcast %c-1_i32_503 : i32 to vector<1x512xi32>
    %1346 = arith.addi %1252, %1345 : vector<1x512xi32>
    %c0_i32_504 = arith.constant 0 : i32
    %1347 = vector.broadcast %c0_i32_504 : i32 to vector<1x512xi32>
    %1348 = arith.cmpi sge, %1344, %1347 : vector<1x512xi32>
    %c16_i32_505 = arith.constant 16 : i32
    %1349 = vector.broadcast %c16_i32_505 : i32 to vector<1x512xi32>
    %1350 = arith.cmpi slt, %1344, %1349 : vector<1x512xi32>
    %1351 = arith.andi %1348, %1350 : vector<1x512xi1>
    %c0_i32_506 = arith.constant 0 : i32
    %1352 = vector.broadcast %c0_i32_506 : i32 to vector<1x512xi32>
    %1353 = arith.cmpi sge, %1346, %1352 : vector<1x512xi32>
    %1354 = arith.andi %1351, %1353 : vector<1x512xi1>
    %c16_i32_507 = arith.constant 16 : i32
    %1355 = vector.broadcast %c16_i32_507 : i32 to vector<1x512xi32>
    %1356 = arith.cmpi slt, %1346, %1355 : vector<1x512xi32>
    %1357 = arith.andi %1354, %1356 : vector<1x512xi1>
    %c1_i32_508 = arith.constant 1 : i32
    %1358 = vector.broadcast %c1_i32_508 : i32 to vector<1x512xi32>
    %1359 = arith.addi %1250, %1358 : vector<1x512xi32>
    %c0_i32_509 = arith.constant 0 : i32
    %1360 = vector.broadcast %c0_i32_509 : i32 to vector<1x512xi32>
    %1361 = arith.addi %1252, %1360 : vector<1x512xi32>
    %c0_i32_510 = arith.constant 0 : i32
    %1362 = vector.broadcast %c0_i32_510 : i32 to vector<1x512xi32>
    %1363 = arith.cmpi sge, %1359, %1362 : vector<1x512xi32>
    %c16_i32_511 = arith.constant 16 : i32
    %1364 = vector.broadcast %c16_i32_511 : i32 to vector<1x512xi32>
    %1365 = arith.cmpi slt, %1359, %1364 : vector<1x512xi32>
    %1366 = arith.andi %1363, %1365 : vector<1x512xi1>
    %c0_i32_512 = arith.constant 0 : i32
    %1367 = vector.broadcast %c0_i32_512 : i32 to vector<1x512xi32>
    %1368 = arith.cmpi sge, %1361, %1367 : vector<1x512xi32>
    %1369 = arith.andi %1366, %1368 : vector<1x512xi1>
    %c16_i32_513 = arith.constant 16 : i32
    %1370 = vector.broadcast %c16_i32_513 : i32 to vector<1x512xi32>
    %1371 = arith.cmpi slt, %1361, %1370 : vector<1x512xi32>
    %1372 = arith.andi %1369, %1371 : vector<1x512xi1>
    %c1_i32_514 = arith.constant 1 : i32
    %1373 = vector.broadcast %c1_i32_514 : i32 to vector<1x512xi32>
    %1374 = arith.addi %1250, %1373 : vector<1x512xi32>
    %c1_i32_515 = arith.constant 1 : i32
    %1375 = vector.broadcast %c1_i32_515 : i32 to vector<1x512xi32>
    %1376 = arith.addi %1252, %1375 : vector<1x512xi32>
    %c0_i32_516 = arith.constant 0 : i32
    %1377 = vector.broadcast %c0_i32_516 : i32 to vector<1x512xi32>
    %1378 = arith.cmpi sge, %1374, %1377 : vector<1x512xi32>
    %c16_i32_517 = arith.constant 16 : i32
    %1379 = vector.broadcast %c16_i32_517 : i32 to vector<1x512xi32>
    %1380 = arith.cmpi slt, %1374, %1379 : vector<1x512xi32>
    %1381 = arith.andi %1378, %1380 : vector<1x512xi1>
    %c0_i32_518 = arith.constant 0 : i32
    %1382 = vector.broadcast %c0_i32_518 : i32 to vector<1x512xi32>
    %1383 = arith.cmpi sge, %1376, %1382 : vector<1x512xi32>
    %1384 = arith.andi %1381, %1383 : vector<1x512xi1>
    %c16_i32_519 = arith.constant 16 : i32
    %1385 = vector.broadcast %c16_i32_519 : i32 to vector<1x512xi32>
    %1386 = arith.cmpi slt, %1376, %1385 : vector<1x512xi32>
    %1387 = arith.andi %1384, %1386 : vector<1x512xi1>
    %cst_520 = arith.constant 0.000000e+00 : f32
    %1388 = vector.broadcast %cst_520 : f32 to vector<8x17xf32>
    %1389 = vector.extract_strided_slice %1245 {offsets = [0, 0], sizes = [8, 495], strides = [1, 1]} : vector<8x512xf32> to vector<8x495xf32>
    %1390 = tpu.concatenate %1388, %1389 in 1 : vector<8x17xf32>, vector<8x495xf32> -> vector<8x512xf32>
    %cst_521 = arith.constant 0.000000e+00 : f32
    %1391 = vector.shape_cast %1267 : vector<1x512xi1> to vector<1x512xi1>
    %1392 = vector.broadcast %1391 : vector<1x512xi1> to vector<8x512xi1>
    %1393 = vector.broadcast %cst_521 : f32 to vector<8x512xf32>
    %1394 = arith.select %1392, %1390, %1393 : vector<8x512xi1>, vector<8x512xf32>
    %cst_522 = arith.constant 0.000000e+00 : f32
    %1395 = vector.broadcast %cst_522 : f32 to vector<8x16xf32>
    %1396 = vector.extract_strided_slice %1245 {offsets = [0, 0], sizes = [8, 496], strides = [1, 1]} : vector<8x512xf32> to vector<8x496xf32>
    %1397 = tpu.concatenate %1395, %1396 in 1 : vector<8x16xf32>, vector<8x496xf32> -> vector<8x512xf32>
    %cst_523 = arith.constant 0.000000e+00 : f32
    %1398 = vector.shape_cast %1282 : vector<1x512xi1> to vector<1x512xi1>
    %1399 = vector.broadcast %1398 : vector<1x512xi1> to vector<8x512xi1>
    %1400 = vector.broadcast %cst_523 : f32 to vector<8x512xf32>
    %1401 = arith.select %1399, %1397, %1400 : vector<8x512xi1>, vector<8x512xf32>
    %cst_524 = arith.constant 0.000000e+00 : f32
    %1402 = vector.broadcast %cst_524 : f32 to vector<8x15xf32>
    %1403 = vector.extract_strided_slice %1245 {offsets = [0, 0], sizes = [8, 497], strides = [1, 1]} : vector<8x512xf32> to vector<8x497xf32>
    %1404 = tpu.concatenate %1402, %1403 in 1 : vector<8x15xf32>, vector<8x497xf32> -> vector<8x512xf32>
    %cst_525 = arith.constant 0.000000e+00 : f32
    %1405 = vector.shape_cast %1297 : vector<1x512xi1> to vector<1x512xi1>
    %1406 = vector.broadcast %1405 : vector<1x512xi1> to vector<8x512xi1>
    %1407 = vector.broadcast %cst_525 : f32 to vector<8x512xf32>
    %1408 = arith.select %1406, %1404, %1407 : vector<8x512xi1>, vector<8x512xf32>
    %cst_526 = arith.constant 0.000000e+00 : f32
    %1409 = vector.broadcast %cst_526 : f32 to vector<8x1xf32>
    %1410 = vector.extract_strided_slice %1245 {offsets = [0, 0], sizes = [8, 511], strides = [1, 1]} : vector<8x512xf32> to vector<8x511xf32>
    %1411 = tpu.concatenate %1409, %1410 in 1 : vector<8x1xf32>, vector<8x511xf32> -> vector<8x512xf32>
    %cst_527 = arith.constant 0.000000e+00 : f32
    %1412 = vector.shape_cast %1312 : vector<1x512xi1> to vector<1x512xi1>
    %1413 = vector.broadcast %1412 : vector<1x512xi1> to vector<8x512xi1>
    %1414 = vector.broadcast %cst_527 : f32 to vector<8x512xf32>
    %1415 = arith.select %1413, %1411, %1414 : vector<8x512xi1>, vector<8x512xf32>
    %cst_528 = arith.constant 0.000000e+00 : f32
    %1416 = vector.shape_cast %1327 : vector<1x512xi1> to vector<1x512xi1>
    %1417 = vector.broadcast %1416 : vector<1x512xi1> to vector<8x512xi1>
    %1418 = vector.broadcast %cst_528 : f32 to vector<8x512xf32>
    %1419 = arith.select %1417, %1245, %1418 : vector<8x512xi1>, vector<8x512xf32>
    %1420 = vector.extract_strided_slice %1245 {offsets = [0, 1], sizes = [8, 511], strides = [1, 1]} : vector<8x512xf32> to vector<8x511xf32>
    %cst_529 = arith.constant 0.000000e+00 : f32
    %1421 = vector.broadcast %cst_529 : f32 to vector<8x1xf32>
    %1422 = tpu.concatenate %1420, %1421 in 1 : vector<8x511xf32>, vector<8x1xf32> -> vector<8x512xf32>
    %cst_530 = arith.constant 0.000000e+00 : f32
    %1423 = vector.shape_cast %1342 : vector<1x512xi1> to vector<1x512xi1>
    %1424 = vector.broadcast %1423 : vector<1x512xi1> to vector<8x512xi1>
    %1425 = vector.broadcast %cst_530 : f32 to vector<8x512xf32>
    %1426 = arith.select %1424, %1422, %1425 : vector<8x512xi1>, vector<8x512xf32>
    %1427 = vector.extract_strided_slice %1245 {offsets = [0, 15], sizes = [8, 497], strides = [1, 1]} : vector<8x512xf32> to vector<8x497xf32>
    %cst_531 = arith.constant 0.000000e+00 : f32
    %1428 = vector.broadcast %cst_531 : f32 to vector<8x15xf32>
    %1429 = tpu.concatenate %1427, %1428 in 1 : vector<8x497xf32>, vector<8x15xf32> -> vector<8x512xf32>
    %cst_532 = arith.constant 0.000000e+00 : f32
    %1430 = vector.shape_cast %1357 : vector<1x512xi1> to vector<1x512xi1>
    %1431 = vector.broadcast %1430 : vector<1x512xi1> to vector<8x512xi1>
    %1432 = vector.broadcast %cst_532 : f32 to vector<8x512xf32>
    %1433 = arith.select %1431, %1429, %1432 : vector<8x512xi1>, vector<8x512xf32>
    %1434 = vector.extract_strided_slice %1245 {offsets = [0, 16], sizes = [8, 496], strides = [1, 1]} : vector<8x512xf32> to vector<8x496xf32>
    %cst_533 = arith.constant 0.000000e+00 : f32
    %1435 = vector.broadcast %cst_533 : f32 to vector<8x16xf32>
    %1436 = tpu.concatenate %1434, %1435 in 1 : vector<8x496xf32>, vector<8x16xf32> -> vector<8x512xf32>
    %cst_534 = arith.constant 0.000000e+00 : f32
    %1437 = vector.shape_cast %1372 : vector<1x512xi1> to vector<1x512xi1>
    %1438 = vector.broadcast %1437 : vector<1x512xi1> to vector<8x512xi1>
    %1439 = vector.broadcast %cst_534 : f32 to vector<8x512xf32>
    %1440 = arith.select %1438, %1436, %1439 : vector<8x512xi1>, vector<8x512xf32>
    %1441 = vector.extract_strided_slice %1245 {offsets = [0, 17], sizes = [8, 495], strides = [1, 1]} : vector<8x512xf32> to vector<8x495xf32>
    %cst_535 = arith.constant 0.000000e+00 : f32
    %1442 = vector.broadcast %cst_535 : f32 to vector<8x17xf32>
    %1443 = tpu.concatenate %1441, %1442 in 1 : vector<8x495xf32>, vector<8x17xf32> -> vector<8x512xf32>
    %cst_536 = arith.constant 0.000000e+00 : f32
    %1444 = vector.shape_cast %1387 : vector<1x512xi1> to vector<1x512xi1>
    %1445 = vector.broadcast %1444 : vector<1x512xi1> to vector<8x512xi1>
    %1446 = vector.broadcast %cst_536 : f32 to vector<8x512xf32>
    %1447 = arith.select %1445, %1443, %1446 : vector<8x512xi1>, vector<8x512xf32>
    %1448 = tpu.concatenate %1394, %1401, %1408, %1415, %1419, %1426, %1433, %1440, %1447 in 0 : vector<8x512xf32>, vector<8x512xf32>, vector<8x512xf32>, vector<8x512xf32>, vector<8x512xf32>, vector<8x512xf32>, vector<8x512xf32>, vector<8x512xf32>, vector<8x512xf32> -> vector<72x512xf32>
    %cst_537 = arith.constant dense<0.000000e+00> : vector<8x512xf32>
    %1449 = tpu.matmul %40, %1448, %cst_537 {dimension_numbers = #tpu.dot_dimension_numbers<[1], [0], [0], [1], [0, 0, 1, 1], [], []>} : vector<8x72xf32>, vector<72x512xf32>, vector<8x512xf32> -> vector<8x512xf32>
    %1450 = arith.mulf %1223, %1223 : vector<8x2xf32>
    %cst_538 = arith.constant dense<0.000000e+00> : vector<8x2xf32>
    %1451 = tpu.matmul %42, %1450, %cst_538 {dimension_numbers = #tpu.dot_dimension_numbers<[1], [0], [0], [1], [0, 0, 1, 1], [], []>} : vector<8x8xf32>, vector<8x2xf32>, vector<8x2xf32> -> vector<8x2xf32>
    %cst_539 = arith.constant 9.99999993E-9 : f32
    %1452 = vector.broadcast %cst_539 : f32 to vector<8x2xf32>
    %1453 = arith.addf %1451, %1452 : vector<8x2xf32>
    %1454 = math.rsqrt %1453 : vector<8x2xf32>
    %1455 = tpu.iota {dimensions = array<i32: 1>} : vector<1x512xi32>
    %c8_i32_540 = arith.constant 8 : i32
    %1456 = vector.broadcast %c8_i32_540 : i32 to vector<1x512xi32>
    %1457 = arith.shrsi %1455, %1456 : vector<1x512xi32>
    %c0_i32_541 = arith.constant 0 : i32
    %1458 = vector.broadcast %c0_i32_541 : i32 to vector<1x512xi32>
    %1459 = arith.cmpi eq, %1457, %1458 : vector<1x512xi32>
    %1460 = vector.extract_strided_slice %1454 {offsets = [0, 0], sizes = [8, 1], strides = [1, 1]} : vector<8x2xf32> to vector<8x1xf32>
    %cst_542 = arith.constant 0.000000e+00 : f32
    %1461 = vector.shape_cast %1459 : vector<1x512xi1> to vector<1x512xi1>
    %1462 = vector.broadcast %1461 : vector<1x512xi1> to vector<8x512xi1>
    %1463 = vector.shape_cast %1460 : vector<8x1xf32> to vector<8x1xf32>
    %1464 = vector.broadcast %1463 : vector<8x1xf32> to vector<8x512xf32>
    %1465 = vector.broadcast %cst_542 : f32 to vector<8x512xf32>
    %1466 = arith.select %1462, %1464, %1465 : vector<8x512xi1>, vector<8x512xf32>
    %c1_i32_543 = arith.constant 1 : i32
    %1467 = vector.broadcast %c1_i32_543 : i32 to vector<1x512xi32>
    %1468 = arith.cmpi eq, %1457, %1467 : vector<1x512xi32>
    %1469 = vector.extract_strided_slice %1454 {offsets = [0, 1], sizes = [8, 1], strides = [1, 1]} : vector<8x2xf32> to vector<8x1xf32>
    %1470 = vector.shape_cast %1468 : vector<1x512xi1> to vector<1x512xi1>
    %1471 = vector.broadcast %1470 : vector<1x512xi1> to vector<8x512xi1>
    %1472 = vector.shape_cast %1469 : vector<8x1xf32> to vector<8x1xf32>
    %1473 = vector.broadcast %1472 : vector<8x1xf32> to vector<8x512xf32>
    %1474 = arith.select %1471, %1473, %1466 : vector<8x512xi1>, vector<8x512xf32>
    %1475 = arith.mulf %1449, %1474 : vector<8x512xf32>
    %1476 = vector.broadcast %1224 : vector<1x1xf32> to vector<1x512xf32>
    %1477 = arith.mulf %1476, %46 : vector<1x512xf32>
    %1478 = vector.broadcast %1477 : vector<1x512xf32> to vector<8x512xf32>
    %1479 = arith.addf %1475, %1478 : vector<8x512xf32>
    %1480 = vector.broadcast %44 : vector<8x1xf32> to vector<8x512xf32>
    %1481 = arith.addf %1479, %1480 : vector<8x512xf32>
    %cst_544 = arith.constant 2.000000e-01 : f32
    %1482 = vector.broadcast %cst_544 : f32 to vector<8x512xf32>
    %1483 = arith.mulf %1482, %1481 : vector<8x512xf32>
    %1484 = arith.maximumf %1481, %1483 : vector<8x512xf32>
    %cst_545 = arith.constant 1.41421354 : f32
    %1485 = vector.broadcast %cst_545 : f32 to vector<8x512xf32>
    %1486 = arith.mulf %1484, %1485 : vector<8x512xf32>
    %1487 = vector.extract_strided_slice %63 {offsets = [152, 0], sizes = [8, 2], strides = [1, 1]} : vector<160x2xf32> to vector<8x2xf32>
    %1488 = tpu.iota {dimensions = array<i32: 1>} : vector<1x512xi32>
    %c8_i32_546 = arith.constant 8 : i32
    %1489 = vector.broadcast %c8_i32_546 : i32 to vector<1x512xi32>
    %1490 = arith.shrsi %1488, %1489 : vector<1x512xi32>
    %c0_i32_547 = arith.constant 0 : i32
    %1491 = vector.broadcast %c0_i32_547 : i32 to vector<1x512xi32>
    %1492 = arith.cmpi eq, %1490, %1491 : vector<1x512xi32>
    %1493 = vector.extract_strided_slice %1487 {offsets = [0, 0], sizes = [8, 1], strides = [1, 1]} : vector<8x2xf32> to vector<8x1xf32>
    %cst_548 = arith.constant 0.000000e+00 : f32
    %1494 = vector.shape_cast %1492 : vector<1x512xi1> to vector<1x512xi1>
    %1495 = vector.broadcast %1494 : vector<1x512xi1> to vector<8x512xi1>
    %1496 = vector.shape_cast %1493 : vector<8x1xf32> to vector<8x1xf32>
    %1497 = vector.broadcast %1496 : vector<8x1xf32> to vector<8x512xf32>
    %1498 = vector.broadcast %cst_548 : f32 to vector<8x512xf32>
    %1499 = arith.select %1495, %1497, %1498 : vector<8x512xi1>, vector<8x512xf32>
    %c1_i32_549 = arith.constant 1 : i32
    %1500 = vector.broadcast %c1_i32_549 : i32 to vector<1x512xi32>
    %1501 = arith.cmpi eq, %1490, %1500 : vector<1x512xi32>
    %1502 = vector.extract_strided_slice %1487 {offsets = [0, 1], sizes = [8, 1], strides = [1, 1]} : vector<8x2xf32> to vector<8x1xf32>
    %1503 = vector.shape_cast %1501 : vector<1x512xi1> to vector<1x512xi1>
    %1504 = vector.broadcast %1503 : vector<1x512xi1> to vector<8x512xi1>
    %1505 = vector.shape_cast %1502 : vector<8x1xf32> to vector<8x1xf32>
    %1506 = vector.broadcast %1505 : vector<8x1xf32> to vector<8x512xf32>
    %1507 = arith.select %1504, %1506, %1499 : vector<8x512xi1>, vector<8x512xf32>
    %1508 = arith.mulf %1486, %1507 : vector<8x512xf32>
    %cst_550 = arith.constant dense<0.000000e+00> : vector<3x512xf32>
    %1509 = tpu.matmul %56, %1508, %cst_550 {dimension_numbers = #tpu.dot_dimension_numbers<[1], [0], [0], [1], [0, 0, 1, 1], [], []>} : vector<3x8xf32>, vector<8x512xf32>, vector<3x512xf32> -> vector<3x512xf32>
    %1510 = vector.broadcast %58 : vector<3x1xf32> to vector<3x512xf32>
    %1511 = arith.addf %1509, %1510 : vector<3x512xf32>
    %1512 = arith.addf %958, %1511 : vector<3x512xf32>
    %c0_551 = arith.constant 0 : index
    %c0_552 = arith.constant 0 : index
    %c0_553 = arith.constant 0 : index
    %1513 = vector.load %arg32[%c0_551, %c0_552, %c0_553] : memref<1x3x512xf32, #tpu.memory_space<vmem>>, vector<1x3x512xf32>
    %1514 = vector.shape_cast %1513 : vector<1x3x512xf32> to vector<3x512xf32>
    %1515 = vector.shape_cast %1512 : vector<3x512xf32> to vector<1x3x512xf32>
    tpu.vector_store %arg32[%c0_551, %c0_552, %c0_553], %1515 {strides = array<i32>} : memref<1x3x512xf32, #tpu.memory_space<vmem>>, vector<1x3x512xf32>,
    return
  }
  func.func @transform_0(%arg0: i32) -> (i32, i32) {
    %c0_i32 = arith.constant 0 : i32
    %c0_i32_0 = arith.constant 0 : i32
    %c0_i32_1 = arith.constant 0 : i32
    return %c0_i32, %c0_i32_0 : i32, i32
  }
  func.func @transform_1(%arg0: i32) -> (i32, i32, i32) {
    %c0_i32 = arith.constant 0 : i32
    %c0_i32_0 = arith.constant 0 : i32
    %c0_i32_1 = arith.constant 0 : i32
    return %arg0, %c0_i32, %c0_i32_0 : i32, i32, i32
  }
  func.func @transform_2(%arg0: i32) -> (i32, i32, i32) {
    %c0_i32 = arith.constant 0 : i32
    %c0_i32_0 = arith.constant 0 : i32
    %c0_i32_1 = arith.constant 0 : i32
    return %arg0, %c0_i32, %c0_i32_0 : i32, i32, i32
  }
  func.func @transform_3(%arg0: i32) -> (i32, i32, i32) {
    %c0_i32 = arith.constant 0 : i32
    %c0_i32_0 = arith.constant 0 : i32
    %c0_i32_1 = arith.constant 0 : i32
    return %arg0, %c0_i32, %c0_i32_0 : i32, i32, i32
  }
  func.func @transform_4(%arg0: i32) -> (i32, i32, i32) {
    %c0_i32 = arith.constant 0 : i32
    %c0_i32_0 = arith.constant 0 : i32
    %c0_i32_1 = arith.constant 0 : i32
    return %arg0, %c0_i32, %c0_i32_0 : i32, i32, i32
  }
  func.func @transform_5(%arg0: i32) -> (i32, i32, i32) {
    %c0_i32 = arith.constant 0 : i32
    %c0_i32_0 = arith.constant 0 : i32
    %c0_i32_1 = arith.constant 0 : i32
    return %arg0, %c0_i32, %c0_i32_0 : i32, i32, i32
  }
  func.func @transform_6(%arg0: i32) -> (i32, i32, i32) {
    %c0_i32 = arith.constant 0 : i32
    %c0_i32_0 = arith.constant 0 : i32
    %c0_i32_1 = arith.constant 0 : i32
    return %arg0, %c0_i32, %c0_i32_0 : i32, i32, i32
  }
  func.func @transform_7(%arg0: i32) -> (i32, i32, i32) {
    %c0_i32 = arith.constant 0 : i32
    %c0_i32_0 = arith.constant 0 : i32
    %c0_i32_1 = arith.constant 0 : i32
    return %arg0, %c0_i32, %c0_i32_0 : i32, i32, i32
  }
  func.func @transform_8(%arg0: i32) -> (i32, i32, i32) {
    %c0_i32 = arith.constant 0 : i32
    %c0_i32_0 = arith.constant 0 : i32
    %c0_i32_1 = arith.constant 0 : i32
    return %arg0, %c0_i32, %c0_i32_0 : i32, i32, i32
  }
  func.func @transform_9(%arg0: i32) -> (i32, i32, i32) {
    %c0_i32 = arith.constant 0 : i32
    %c0_i32_0 = arith.constant 0 : i32
    %c0_i32_1 = arith.constant 0 : i32
    return %arg0, %c0_i32, %c0_i32_0 : i32, i32, i32
  }
  func.func @transform_10(%arg0: i32) -> (i32, i32, i32) {
    %c0_i32 = arith.constant 0 : i32
    %c0_i32_0 = arith.constant 0 : i32
    %c0_i32_1 = arith.constant 0 : i32
    return %arg0, %c0_i32, %c0_i32_0 : i32, i32, i32
  }
  func.func @transform_11(%arg0: i32) -> (i32, i32, i32) {
    %c0_i32 = arith.constant 0 : i32
    %c0_i32_0 = arith.constant 0 : i32
    %c0_i32_1 = arith.constant 0 : i32
    return %arg0, %c0_i32, %c0_i32_0 : i32, i32, i32
  }
  func.func @transform_12(%arg0: i32) -> (i32, i32, i32) {
    %c0_i32 = arith.constant 0 : i32
    %c0_i32_0 = arith.constant 0 : i32
    %c0_i32_1 = arith.constant 0 : i32
    return %arg0, %c0_i32, %c0_i32_0 : i32, i32, i32
  }
  func.func @transform_13(%arg0: i32) -> (i32, i32, i32) {
    %c0_i32 = arith.constant 0 : i32
    %c0_i32_0 = arith.constant 0 : i32
    %c0_i32_1 = arith.constant 0 : i32
    return %arg0, %c0_i32, %c0_i32_0 : i32, i32, i32
  }
  func.func @transform_14(%arg0: i32) -> (i32, i32, i32) {
    %c0_i32 = arith.constant 0 : i32
    %c0_i32_0 = arith.constant 0 : i32
    %c0_i32_1 = arith.constant 0 : i32
    return %arg0, %c0_i32, %c0_i32_0 : i32, i32, i32
  }
  func.func @transform_15(%arg0: i32) -> (i32, i32, i32) {
    %c0_i32 = arith.constant 0 : i32
    %c0_i32_0 = arith.constant 0 : i32
    %c0_i32_1 = arith.constant 0 : i32
    return %arg0, %c0_i32, %c0_i32_0 : i32, i32, i32
  }
  func.func @transform_16(%arg0: i32) -> (i32, i32, i32) {
    %c0_i32 = arith.constant 0 : i32
    %c0_i32_0 = arith.constant 0 : i32
    %c0_i32_1 = arith.constant 0 : i32
    return %arg0, %c0_i32, %c0_i32_0 : i32, i32, i32
  }
  func.func @transform_17(%arg0: i32) -> (i32, i32, i32) {
    %c0_i32 = arith.constant 0 : i32
    %c0_i32_0 = arith.constant 0 : i32
    %c0_i32_1 = arith.constant 0 : i32
    return %arg0, %c0_i32, %c0_i32_0 : i32, i32, i32
  }
  func.func @transform_18(%arg0: i32) -> (i32, i32, i32) {
    %c0_i32 = arith.constant 0 : i32
    %c0_i32_0 = arith.constant 0 : i32
    %c0_i32_1 = arith.constant 0 : i32
    return %arg0, %c0_i32, %c0_i32_0 : i32, i32, i32
  }
  func.func @transform_19(%arg0: i32) -> (i32, i32, i32) {
    %c0_i32 = arith.constant 0 : i32
    %c0_i32_0 = arith.constant 0 : i32
    %c0_i32_1 = arith.constant 0 : i32
    return %arg0, %c0_i32, %c0_i32_0 : i32, i32, i32
  }
  func.func @transform_20(%arg0: i32) -> (i32, i32, i32) {
    %c0_i32 = arith.constant 0 : i32
    %c0_i32_0 = arith.constant 0 : i32
    %c0_i32_1 = arith.constant 0 : i32
    return %arg0, %c0_i32, %c0_i32_0 : i32, i32, i32
  }
  func.func @transform_21(%arg0: i32) -> (i32, i32, i32) {
    %c0_i32 = arith.constant 0 : i32
    %c0_i32_0 = arith.constant 0 : i32
    %c0_i32_1 = arith.constant 0 : i32
    return %arg0, %c0_i32, %c0_i32_0 : i32, i32, i32
  }
  func.func @transform_22(%arg0: i32) -> (i32, i32, i32) {
    %c0_i32 = arith.constant 0 : i32
    %c0_i32_0 = arith.constant 0 : i32
    %c0_i32_1 = arith.constant 0 : i32
    return %arg0, %c0_i32, %c0_i32_0 : i32, i32, i32
  }
  func.func @transform_23(%arg0: i32) -> (i32, i32, i32) {
    %c0_i32 = arith.constant 0 : i32
    %c0_i32_0 = arith.constant 0 : i32
    %c0_i32_1 = arith.constant 0 : i32
    return %arg0, %c0_i32, %c0_i32_0 : i32, i32, i32
  }
  func.func @transform_24(%arg0: i32) -> (i32, i32, i32) {
    %c0_i32 = arith.constant 0 : i32
    %c0_i32_0 = arith.constant 0 : i32
    %c0_i32_1 = arith.constant 0 : i32
    return %arg0, %c0_i32, %c0_i32_0 : i32, i32, i32
  }
  func.func @transform_25(%arg0: i32) -> (i32, i32, i32) {
    %c0_i32 = arith.constant 0 : i32
    %c0_i32_0 = arith.constant 0 : i32
    %c0_i32_1 = arith.constant 0 : i32
    return %arg0, %c0_i32, %c0_i32_0 : i32, i32, i32
  }
  func.func @transform_26(%arg0: i32) -> (i32, i32, i32) {
    %c0_i32 = arith.constant 0 : i32
    %c0_i32_0 = arith.constant 0 : i32
    %c0_i32_1 = arith.constant 0 : i32
    return %arg0, %c0_i32, %c0_i32_0 : i32, i32, i32
  }
  func.func @transform_27(%arg0: i32) -> (i32, i32, i32) {
    %c0_i32 = arith.constant 0 : i32
    %c0_i32_0 = arith.constant 0 : i32
    %c0_i32_1 = arith.constant 0 : i32
    return %arg0, %c0_i32, %c0_i32_0 : i32, i32, i32
  }
  func.func @transform_28(%arg0: i32) -> (i32, i32, i32) {
    %c0_i32 = arith.constant 0 : i32
    %c0_i32_0 = arith.constant 0 : i32
    %c0_i32_1 = arith.constant 0 : i32
    return %arg0, %c0_i32, %c0_i32_0 : i32, i32, i32
  }
  func.func @transform_29(%arg0: i32) -> (i32, i32, i32) {
    %c0_i32 = arith.constant 0 : i32
    %c0_i32_0 = arith.constant 0 : i32
    %c0_i32_1 = arith.constant 0 : i32
    return %arg0, %c0_i32, %c0_i32_0 : i32, i32, i32
  }
  func.func @transform_30(%arg0: i32) -> (i32, i32, i32) {
    %c0_i32 = arith.constant 0 : i32
    %c0_i32_0 = arith.constant 0 : i32
    %c0_i32_1 = arith.constant 0 : i32
    return %arg0, %c0_i32, %c0_i32_0 : i32, i32, i32
  }
  func.func @transform_31(%arg0: i32) -> (i32, i32, i32) {
    %c0_i32 = arith.constant 0 : i32
    %c0_i32_0 = arith.constant 0 : i32
    %c0_i32_1 = arith.constant 0 : i32
    return %arg0, %c0_i32, %c0_i32_0 : i32, i32, i32
  }
}

</mosaic_0001>

<llo_original>
// kernel: zssgan_forward.2
$region0: #{zssgan_forward.2}
  #allocation0 [shape = 'u32[]', space=smem, size = 0x4, offset = 0x4, fixed_abs, tag = 'smem constant byte address 0x4 - core index']
  #allocation1 [shape = 'u32[144,128]{1,0:T(1,128)}', space=vmem, size = 0x12000, scoped, tag = 'internal scratch']
  %s0 = inlined_call_operand.hbm [shape: f32[2,128], index: 0, kind: input, shape index: {}]
  %s1 = inlined_call_operand.hbm [shape: f32[8,128,128], index: 1, kind: input, shape index: {}]
  %s2 = inlined_call_operand.vmem [shape: f32[8,1,128], index: 2, kind: input, shape index: {}]
  %s3 = inlined_call_operand.vmem [shape: f32[2,128], index: 3, kind: output, shape index: {}]
  %s4 = sld [smem:[#allocation0]]
  $region30: #{zssgan_forward.2} parent=0
    _
  %s6 = ssub.s32 1, %s4
  %s7 = scalar_select 0, %s6, %s4
  $region1: #{zssgan_forward.2} parent=0
    #allocation2 [shape = 'u8[1024]{0}', space=vmem, size = 0x400, scoped, tag = 'input window, operand 0, single buffered']
    #allocation3 [shape = 's32[1]{0}', space=sflag, size = 0x4, scoped, tag = 'scoped memory for zssgan_forward.2']
    #allocation4 [shape = 'u8[524288]{0}', space=vmem, size = 0x80000, scoped, tag = 'input window, operand 1, single buffered']
    #allocation5 [shape = 's32[1]{0}', space=sflag, size = 0x4, scoped, tag = 'scoped memory for zssgan_forward.2']
    %8 = vsyncpa [#allocation3], 0
    %9 = vsyncpa [#allocation5], 0
    // Predicated region
    $region2: #{zssgan_forward.2} parent=1 // pred_check
      _
    $region3: #{zssgan_forward.2} parent=1 // pred_check_branch
      %11 = sbr.rel (0) target = $region5
    $region4: #{zssgan_forward.2} parent=1 // pred_region
      %s13 = ssub.s32 32, 32
      %14 = vsyncadd [#allocation3], %s13
      %s16 = sshll.u32 [#allocation2], 4
      %s17 = int_to_ptr.vmem [resolvable:$true] %s16
      %19 = dma.hbm_to_vmem [thread:$0]  %s0, 32, %s17, [#allocation3]
    $region5: #{zssgan_forward.2} parent=1 // pred_fallthru
      _
    // Predicated region
    $region6: #{zssgan_forward.2} parent=1 // pred_check
      _
    $region7: #{zssgan_forward.2} parent=1 // pred_check_branch
      %21 = sbr.rel (0) target = $region9
    $region8: #{zssgan_forward.2} parent=1 // pred_region
      %s23 = ssub.s32 16384, 16384
      %24 = vsyncadd [#allocation5], %s23
      %s25 = sshll.u32 [#allocation4], 4
      %s26 = int_to_ptr.vmem [resolvable:$true] %s25
      %31 = dma.hbm_to_vmem [thread:$0]  %s1, 16384, %s26, [#allocation5], 128, 128, 8
    $region9: #{zssgan_forward.2} parent=1 // pred_fallthru
      _
    // Predicated region
    $region10: #{zssgan_forward.2} parent=1 // pred_check
      _
    $region11: #{zssgan_forward.2} parent=1 // pred_check_branch
      %33 = sbr.rel (0) target = $region13
    $region12: #{zssgan_forward.2} parent=1 // pred_region
      _
    $region13: #{zssgan_forward.2} parent=1 // pred_fallthru
      _
    // Predicated region
    $region14: #{zssgan_forward.2} parent=1 // pred_check
      _
    $region15: #{zssgan_forward.2} parent=1 // pred_check_branch
      %35 = sbr.rel (0) target = $region17
    $region16: #{zssgan_forward.2} parent=1 // pred_region
      %36 = dma.done [#allocation3], 32
    $region17: #{zssgan_forward.2} parent=1 // pred_fallthru
      _
    // Predicated region
    $region18: #{zssgan_forward.2} parent=1 // pred_check
      _
    $region19: #{zssgan_forward.2} parent=1 // pred_check_branch
      %38 = sbr.rel (0) target = $region21
    $region20: #{zssgan_forward.2} parent=1 // pred_region
      %39 = dma.done [#allocation5], 16384
    $region21: #{zssgan_forward.2} parent=1 // pred_fallthru
      _
    %v40 = vld [vmem:[#allocation2] sm:$0x3]
    %v41 = vmul.f32 %v40, %v40
    %vm42 = vcmask 1041408
    %v43 = vsel %vm42, %v41, 0.0
    %44 = vadd.xlane.f32.xlu0 %v43
    %v45 = vpop.xlane.xlu0 %44
    %v46 = vrcp.pop 128.0
    %v47 = vmul.f32 %v45, %v46
    %v48 = vadd.f32 %v47, 1e-08
    %v49 = vrsqrt.pop %v48
    %v50 = vmul.f32 %v40, %v49
    %v51 = vld [vmem:[#allocation4] sm:$0xff]
    %v52 = vld [vmem:[#allocation4 + $0x8] sm:$0xff]
    %v53 = vld [vmem:[#allocation4 + $0x10] sm:$0xff]
    %v54 = vld [vmem:[#allocation4 + $0x18] sm:$0xff]
    %v55 = vld [vmem:[#allocation4 + $0x20] sm:$0xff]
    %v56 = vld [vmem:[#allocation4 + $0x28] sm:$0xff]
    %v57 = vld [vmem:[#allocation4 + $0x30] sm:$0xff]
    %v58 = vld [vmem:[#allocation4 + $0x38] sm:$0xff]
    %v59 = vld [vmem:[#allocation4 + $0x40] sm:$0xff]
    %v60 = vld [vmem:[#allocation4 + $0x48] sm:$0xff]
    %v61 = vld [vmem:[#allocation4 + $0x50] sm:$0xff]
    %v62 = vld [vmem:[#allocation4 + $0x58] sm:$0xff]
    %v63 = vld [vmem:[#allocation4 + $0x60] sm:$0xff]
    %v64 = vld [vmem:[#allocation4 + $0x68] sm:$0xff]
    %v65 = vld [vmem:[#allocation4 + $0x70] sm:$0xff]
    %v66 = vld [vmem:[#allocation4 + $0x78] sm:$0xff]
    %v67 = vld [vmem:[%s2] sm:$0x1]
    %v69 = vlaneseq
    %v70 = vshrl.u32 %v69, 7
    %v71 = vsub.s32 0, %v70
    %v72 = vrot.slane %v67, %v71
    %74 = vmatprep.subr.mxu0 0.0
    %75 = vmatpush1.msra.mxu0 %v66
    %76 = vmatprep.subr.mxu0 0.0
    %77 = vmatpush1.msra.mxu0 %v65
    %78 = vmatprep.subr.mxu0 0.0
    %79 = vmatpush1.msra.mxu0 %v64
    %80 = vmatprep.subr.mxu0 0.0
    %81 = vmatpush1.msra.mxu0 %v63
    %82 = vmatprep.subr.mxu0 0.0
    %83 = vmatpush1.msra.mxu0 %v62
    %84 = vmatprep.subr.mxu0 0.0
    %85 = vmatpush1.msra.mxu0 %v61
    %86 = vmatprep.subr.mxu0 0.0
    %87 = vmatpush1.msra.mxu0 %v60
    %88 = vmatprep.subr.mxu0 0.0
    %89 = vmatpush1.msra.mxu0 %v59
    %90 = vmatprep.subr.mxu0 0.0
    %91 = vmatpush1.msra.mxu0 %v58
    %92 = vmatprep.subr.mxu0 0.0
    %93 = vmatpush1.msra.mxu0 %v57
    %94 = vmatprep.subr.mxu0 0.0
    %95 = vmatpush1.msra.mxu0 %v56
    %96 = vmatprep.subr.mxu0 0.0
    %97 = vmatpush1.msra.mxu0 %v55
    %98 = vmatprep.subr.mxu0 0.0
    %99 = vmatpush1.msra.mxu0 %v54
    %100 = vmatprep.subr.mxu0 0.0
    %101 = vmatpush1.msra.mxu0 %v53
    %102 = vmatprep.subr.mxu0 0.0
    %103 = vmatpush1.msra.mxu0 %v52
    %104 = vmatprep.subr.mxu0 0.0
    %105 = vmatpush1.msra.mxu0 %v51
    %106 = vmatprep.subr.mxu0 0.0
    %107 = vmatpush2.msra.mxu0 0.0
    %108 = vmatprep.subr.mxu0 0.0
    %109 = vmatpush2.msra.mxu0 0.0
    %110 = vmatprep.subr.mxu0 0.0
    %111 = vmatpush2.msra.mxu0 0.0
    %112 = vmatprep.subr.mxu0 0.0
    %113 = vmatpush2.msra.mxu0 0.0
    %114 = vmatprep.subr.mxu0 0.0
    %115 = vmatpush2.msra.mxu0 0.0
    %116 = vmatprep.subr.mxu0 0.0
    %117 = vmatpush2.msra.mxu0 0.0
    %118 = vmatprep.subr.mxu0 0.0
    %119 = vmatpush2.msra.mxu0 0.0
    %120 = vmatprep.subr.mxu0 0.0
    %121 = vmatpush2.msra.mxu0 0.0
    %122 = vmatprep.subr.mxu0 0.0
    %123 = vmatpush2.msra.mxu0 0.0
    %124 = vmatprep.subr.mxu0 0.0
    %125 = vmatpush2.msra.mxu0 0.0
    %126 = vmatprep.subr.mxu0 0.0
    %127 = vmatpush2.msra.mxu0 0.0
    %128 = vmatprep.subr.mxu0 0.0
    %129 = vmatpush2.msra.mxu0 0.0
    %130 = vmatprep.subr.mxu0 0.0
    %131 = vmatpush2.msra.mxu0 0.0
    %132 = vmatprep.subr.mxu0 0.0
    %133 = vmatpush2.msra.mxu0 0.0
    %134 = vmatprep.subr.mxu0 0.0
    %135 = vmatpush2.msra.mxu0 0.0
    %136 = vmatprep.subr.mxu0 0.0
    %137 = vmatpush2.msra.mxu0 0.0
    %138 = vmatprep.mubr.f32.mxu0 0.0
    %139 = vmatmul.mubr.f32.gmra.mxu0 %v50
    %v140 = vpop.f32.mrf.mxu0
    %v141 = vadd.f32 %v72, %v140
    %v142 = vpop.f32.mrf.mxu0
    %143 = vdwg.mxu0
    %v144 = vmul.f32 %v141, 0.2
    %v145 = vmax.f32 %v141, %v144
    %v146 = vmul.f32 %v145, 1.4142135
    %s147 = scalar_lea.vmem [#allocation4], 128
    %v148 = vld [vmem:[%s147] sm:$0xff]
    %v149 = vld [vmem:[%s147 + $0x8] sm:$0xff]
    %v150 = vld [vmem:[%s147 + $0x10] sm:$0xff]
    %v151 = vld [vmem:[%s147 + $0x18] sm:$0xff]
    %v152 = vld [vmem:[%s147 + $0x20] sm:$0xff]
    %v153 = vld [vmem:[%s147 + $0x28] sm:$0xff]
    %v154 = vld [vmem:[%s147 + $0x30] sm:$0xff]
    %v155 = vld [vmem:[%s147 + $0x38] sm:$0xff]
    %v156 = vld [vmem:[%s147 + $0x40] sm:$0xff]
    %v157 = vld [vmem:[%s147 + $0x48] sm:$0xff]
    %v158 = vld [vmem:[%s147 + $0x50] sm:$0xff]
    %v159 = vld [vmem:[%s147 + $0x58] sm:$0xff]
    %v160 = vld [vmem:[%s147 + $0x60] sm:$0xff]
    %v161 = vld [vmem:[%s147 + $0x68] sm:$0xff]
    %v162 = vld [vmem:[%s147 + $0x70] sm:$0xff]
    %v163 = vld [vmem:[%s147 + $0x78] sm:$0xff]
    %s164 = scalar_lea.vmem %s2, 1
    %v165 = vld [vmem:[%s164] sm:$0x1]
    %v167 = vlaneseq
    %v168 = vshrl.u32 %v167, 7
    %v169 = vsub.s32 0, %v168
    %v170 = vrot.slane %v165, %v169
    %172 = vmatprep.subr.mxu0 0.0
    %173 = vmatpush1.msra.mxu0 %v163
    %174 = vmatprep.subr.mxu0 0.0
    %175 = vmatpush1.msra.mxu0 %v162
    %176 = vmatprep.subr.mxu0 0.0
    %177 = vmatpush1.msra.mxu0 %v161
    %178 = vmatprep.subr.mxu0 0.0
    %179 = vmatpush1.msra.mxu0 %v160
    %180 = vmatprep.subr.mxu0 0.0
    %181 = vmatpush1.msra.mxu0 %v159
    %182 = vmatprep.subr.mxu0 0.0
    %183 = vmatpush1.msra.mxu0 %v158
    %184 = vmatprep.subr.mxu0 0.0
    %185 = vmatpush1.msra.mxu0 %v157
    %186 = vmatprep.subr.mxu0 0.0
    %187 = vmatpush1.msra.mxu0 %v156
    %188 = vmatprep.subr.mxu0 0.0
    %189 = vmatpush1.msra.mxu0 %v155
    %190 = vmatprep.subr.mxu0 0.0
    %191 = vmatpush1.msra.mxu0 %v154
    %192 = vmatprep.subr.mxu0 0.0
    %193 = vmatpush1.msra.mxu0 %v153
    %194 = vmatprep.subr.mxu0 0.0
    %195 = vmatpush1.msra.mxu0 %v152
    %196 = vmatprep.subr.mxu0 0.0
    %197 = vmatpush1.msra.mxu0 %v151
    %198 = vmatprep.subr.mxu0 0.0
    %199 = vmatpush1.msra.mxu0 %v150
    %200 = vmatprep.subr.mxu0 0.0
    %201 = vmatpush1.msra.mxu0 %v149
    %202 = vmatprep.subr.mxu0 0.0
    %203 = vmatpush1.msra.mxu0 %v148
    %204 = vmatprep.subr.mxu0 0.0
    %205 = vmatpush2.msra.mxu0 0.0
    %206 = vmatprep.subr.mxu0 0.0
    %207 = vmatpush2.msra.mxu0 0.0
    %208 = vmatprep.subr.mxu0 0.0
    %209 = vmatpush2.msra.mxu0 0.0
    %210 = vmatprep.subr.mxu0 0.0
    %211 = vmatpush2.msra.mxu0 0.0
    %212 = vmatprep.subr.mxu0 0.0
    %213 = vmatpush2.msra.mxu0 0.0
    %214 = vmatprep.subr.mxu0 0.0
    %215 = vmatpush2.msra.mxu0 0.0
    %216 = vmatprep.subr.mxu0 0.0
    %217 = vmatpush2.msra.mxu0 0.0
    %218 = vmatprep.subr.mxu0 0.0
    %219 = vmatpush2.msra.mxu0 0.0
    %220 = vmatprep.subr.mxu0 0.0
    %221 = vmatpush2.msra.mxu0 0.0
    %222 = vmatprep.subr.mxu0 0.0
    %223 = vmatpush2.msra.mxu0 0.0
    %224 = vmatprep.subr.mxu0 0.0
    %225 = vmatpush2.msra.mxu0 0.0
    %226 = vmatprep.subr.mxu0 0.0
    %227 = vmatpush2.msra.mxu0 0.0
    %228 = vmatprep.subr.mxu0 0.0
    %229 = vmatpush2.msra.mxu0 0.0
    %230 = vmatprep.subr.mxu0 0.0
    %231 = vmatpush2.msra.mxu0 0.0
    %232 = vmatprep.subr.mxu0 0.0
    %233 = vmatpush2.msra.mxu0 0.0
    %234 = vmatprep.subr.mxu0 0.0
    %235 = vmatpush2.msra.mxu0 0.0
    %236 = vmatprep.mubr.f32.mxu0 0.0
    %237 = vmatmul.mubr.f32.gmra.mxu0 %v146
    %v238 = vpop.f32.mrf.mxu0
    %v239 = vadd.f32 %v170, %v238
    %v240 = vpop.f32.mrf.mxu0
    %241 = vdwg.mxu0
    %v242 = vmul.f32 %v239, 0.2
    %v243 = vmax.f32 %v239, %v242
    %v244 = vmul.f32 %v243, 1.4142135
    %s245 = scalar_lea.vmem [#allocation4], 256
    %v246 = vld [vmem:[%s245] sm:$0xff]
    %v247 = vld [vmem:[%s245 + $0x8] sm:$0xff]
    %v248 = vld [vmem:[%s245 + $0x10] sm:$0xff]
    %v249 = vld [vmem:[%s245 + $0x18] sm:$0xff]
    %v250 = vld [vmem:[%s245 + $0x20] sm:$0xff]
    %v251 = vld [vmem:[%s245 + $0x28] sm:$0xff]
    %v252 = vld [vmem:[%s245 + $0x30] sm:$0xff]
    %v253 = vld [vmem:[%s245 + $0x38] sm:$0xff]
    %v254 = vld [vmem:[%s245 + $0x40] sm:$0xff]
    %v255 = vld [vmem:[%s245 + $0x48] sm:$0xff]
    %v256 = vld [vmem:[%s245 + $0x50] sm:$0xff]
    %v257 = vld [vmem:[%s245 + $0x58] sm:$0xff]
    %v258 = vld [vmem:[%s245 + $0x60] sm:$0xff]
    %v259 = vld [vmem:[%s245 + $0x68] sm:$0xff]
    %v260 = vld [vmem:[%s245 + $0x70] sm:$0xff]
    %v261 = vld [vmem:[%s245 + $0x78] sm:$0xff]
    %s262 = scalar_lea.vmem %s2, 2
    %v263 = vld [vmem:[%s262] sm:$0x1]
    %v265 = vlaneseq
    %v266 = vshrl.u32 %v265, 7
    %v267 = vsub.s32 0, %v266
    %v268 = vrot.slane %v263, %v267
    %270 = vmatprep.subr.mxu0 0.0
    %271 = vmatpush1.msra.mxu0 %v261
    %272 = vmatprep.subr.mxu0 0.0
    %273 = vmatpush1.msra.mxu0 %v260
    %274 = vmatprep.subr.mxu0 0.0
    %275 = vmatpush1.msra.mxu0 %v259
    %276 = vmatprep.subr.mxu0 0.0
    %277 = vmatpush1.msra.mxu0 %v258
    %278 = vmatprep.subr.mxu0 0.0
    %279 = vmatpush1.msra.mxu0 %v257
    %280 = vmatprep.subr.mxu0 0.0
    %281 = vmatpush1.msra.mxu0 %v256
    %282 = vmatprep.subr.mxu0 0.0
    %283 = vmatpush1.msra.mxu0 %v255
    %284 = vmatprep.subr.mxu0 0.0
    %285 = vmatpush1.msra.mxu0 %v254
    %286 = vmatprep.subr.mxu0 0.0
    %287 = vmatpush1.msra.mxu0 %v253
    %288 = vmatprep.subr.mxu0 0.0
    %289 = vmatpush1.msra.mxu0 %v252
    %290 = vmatprep.subr.mxu0 0.0
    %291 = vmatpush1.msra.mxu0 %v251
    %292 = vmatprep.subr.mxu0 0.0
    %293 = vmatpush1.msra.mxu0 %v250
    %294 = vmatprep.subr.mxu0 0.0
    %295 = vmatpush1.msra.mxu0 %v249
    %296 = vmatprep.subr.mxu0 0.0
    %297 = vmatpush1.msra.mxu0 %v248
    %298 = vmatprep.subr.mxu0 0.0
    %299 = vmatpush1.msra.mxu0 %v247
    %300 = vmatprep.subr.mxu0 0.0
    %301 = vmatpush1.msra.mxu0 %v246
    %302 = vmatprep.subr.mxu0 0.0
    %303 = vmatpush2.msra.mxu0 0.0
    %304 = vmatprep.subr.mxu0 0.0
    %305 = vmatpush2.msra.mxu0 0.0
    %306 = vmatprep.subr.mxu0 0.0
    %307 = vmatpush2.msra.mxu0 0.0
    %308 = vmatprep.subr.mxu0 0.0
    %309 = vmatpush2.msra.mxu0 0.0
    %310 = vmatprep.subr.mxu0 0.0
    %311 = vmatpush2.msra.mxu0 0.0
    %312 = vmatprep.subr.mxu0 0.0
    %313 = vmatpush2.msra.mxu0 0.0
    %314 = vmatprep.subr.mxu0 0.0
    %315 = vmatpush2.msra.mxu0 0.0
    %316 = vmatprep.subr.mxu0 0.0
    %317 = vmatpush2.msra.mxu0 0.0
    %318 = vmatprep.subr.mxu0 0.0
    %319 = vmatpush2.msra.mxu0 0.0
    %320 = vmatprep.subr.mxu0 0.0
    %321 = vmatpush2.msra.mxu0 0.0
    %322 = vmatprep.subr.mxu0 0.0
    %323 = vmatpush2.msra.mxu0 0.0
    %324 = vmatprep.subr.mxu0 0.0
    %325 = vmatpush2.msra.mxu0 0.0
    %326 = vmatprep.subr.mxu0 0.0
    %327 = vmatpush2.msra.mxu0 0.0
    %328 = vmatprep.subr.mxu0 0.0
    %329 = vmatpush2.msra.mxu0 0.0
    %330 = vmatprep.subr.mxu0 0.0
    %331 = vmatpush2.msra.mxu0 0.0
    %332 = vmatprep.subr.mxu0 0.0
    %333 = vmatpush2.msra.mxu0 0.0
    %334 = vmatprep.mubr.f32.mxu0 0.0
    %335 = vmatmul.mubr.f32.gmra.mxu0 %v244
    %v336 = vpop.f32.mrf.mxu0
    %v337 = vadd.f32 %v268, %v336
    %v338 = vpop.f32.mrf.mxu0
    %339 = vdwg.mxu0
    %v340 = vmul.f32 %v337, 0.2
    %v341 = vmax.f32 %v337, %v340
    %v342 = vmul.f32 %v341, 1.4142135
    %s343 = scalar_lea.vmem [#allocation4], 384
    %v344 = vld [vmem:[%s343] sm:$0xff]
    %v345 = vld [vmem:[%s343 + $0x8] sm:$0xff]
    %v346 = vld [vmem:[%s343 + $0x10] sm:$0xff]
    %v347 = vld [vmem:[%s343 + $0x18] sm:$0xff]
    %v348 = vld [vmem:[%s343 + $0x20] sm:$0xff]
    %v349 = vld [vmem:[%s343 + $0x28] sm:$0xff]
    %v350 = vld [vmem:[%s343 + $0x30] sm:$0xff]
    %v351 = vld [vmem:[%s343 + $0x38] sm:$0xff]
    %v352 = vld [vmem:[%s343 + $0x40] sm:$0xff]
    %v353 = vld [vmem:[%s343 + $0x48] sm:$0xff]
    %v354 = vld [vmem:[%s343 + $0x50] sm:$0xff]
    %v355 = vld [vmem:[%s343 + $0x58] sm:$0xff]
    %v356 = vld [vmem:[%s343 + $0x60] sm:$0xff]
    %v357 = vld [vmem:[%s343 + $0x68] sm:$0xff]
    %v358 = vld [vmem:[%s343 + $0x70] sm:$0xff]
    %v359 = vld [vmem:[%s343 + $0x78] sm:$0xff]
    %s360 = scalar_lea.vmem %s2, 3
    %v361 = vld [vmem:[%s360] sm:$0x1]
    %v363 = vlaneseq
    %v364 = vshrl.u32 %v363, 7
    %v365 = vsub.s32 0, %v364
    %v366 = vrot.slane %v361, %v365
    %368 = vmatprep.subr.mxu0 0.0
    %369 = vmatpush1.msra.mxu0 %v359
    %370 = vmatprep.subr.mxu0 0.0
    %371 = vmatpush1.msra.mxu0 %v358
    %372 = vmatprep.subr.mxu0 0.0
    %373 = vmatpush1.msra.mxu0 %v357
    %374 = vmatprep.subr.mxu0 0.0
    %375 = vmatpush1.msra.mxu0 %v356
    %376 = vmatprep.subr.mxu0 0.0
    %377 = vmatpush1.msra.mxu0 %v355
    %378 = vmatprep.subr.mxu0 0.0
    %379 = vmatpush1.msra.mxu0 %v354
    %380 = vmatprep.subr.mxu0 0.0
    %381 = vmatpush1.msra.mxu0 %v353
    %382 = vmatprep.subr.mxu0 0.0
    %383 = vmatpush1.msra.mxu0 %v352
    %384 = vmatprep.subr.mxu0 0.0
    %385 = vmatpush1.msra.mxu0 %v351
    %386 = vmatprep.subr.mxu0 0.0
    %387 = vmatpush1.msra.mxu0 %v350
    %388 = vmatprep.subr.mxu0 0.0
    %389 = vmatpush1.msra.mxu0 %v349
    %390 = vmatprep.subr.mxu0 0.0
    %391 = vmatpush1.msra.mxu0 %v348
    %392 = vmatprep.subr.mxu0 0.0
    %393 = vmatpush1.msra.mxu0 %v347
    %394 = vmatprep.subr.mxu0 0.0
    %395 = vmatpush1.msra.mxu0 %v346
    %396 = vmatprep.subr.mxu0 0.0
    %397 = vmatpush1.msra.mxu0 %v345
    %398 = vmatprep.subr.mxu0 0.0
    %399 = vmatpush1.msra.mxu0 %v344
    %400 = vmatprep.subr.mxu0 0.0
    %401 = vmatpush2.msra.mxu0 0.0
    %402 = vmatprep.subr.mxu0 0.0
    %403 = vmatpush2.msra.mxu0 0.0
    %404 = vmatprep.subr.mxu0 0.0
    %405 = vmatpush2.msra.mxu0 0.0
    %406 = vmatprep.subr.mxu0 0.0
    %407 = vmatpush2.msra.mxu0 0.0
    %408 = vmatprep.subr.mxu0 0.0
    %409 = vmatpush2.msra.mxu0 0.0
    %410 = vmatprep.subr.mxu0 0.0
    %411 = vmatpush2.msra.mxu0 0.0
    %412 = vmatprep.subr.mxu0 0.0
    %413 = vmatpush2.msra.mxu0 0.0
    %414 = vmatprep.subr.mxu0 0.0
    %415 = vmatpush2.msra.mxu0 0.0
    %416 = vmatprep.subr.mxu0 0.0
    %417 = vmatpush2.msra.mxu0 0.0
    %418 = vmatprep.subr.mxu0 0.0
    %419 = vmatpush2.msra.mxu0 0.0
    %420 = vmatprep.subr.mxu0 0.0
    %421 = vmatpush2.msra.mxu0 0.0
    %422 = vmatprep.subr.mxu0 0.0
    %423 = vmatpush2.msra.mxu0 0.0
    %424 = vmatprep.subr.mxu0 0.0
    %425 = vmatpush2.msra.mxu0 0.0
    %426 = vmatprep.subr.mxu0 0.0
    %427 = vmatpush2.msra.mxu0 0.0
    %428 = vmatprep.subr.mxu0 0.0
    %429 = vmatpush2.msra.mxu0 0.0
    %430 = vmatprep.subr.mxu0 0.0
    %431 = vmatpush2.msra.mxu0 0.0
    %432 = vmatprep.mubr.f32.mxu0 0.0
    %433 = vmatmul.mubr.f32.gmra.mxu0 %v342
    %v434 = vpop.f32.mrf.mxu0
    %v435 = vadd.f32 %v366, %v434
    %v436 = vpop.f32.mrf.mxu0
    %437 = vdwg.mxu0
    %v438 = vmul.f32 %v435, 0.2
    %v439 = vmax.f32 %v435, %v438
    %v440 = vmul.f32 %v439, 1.4142135
    %s441 = scalar_lea.vmem [#allocation4], 512
    %v442 = vld [vmem:[%s441] sm:$0xff]
    %v443 = vld [vmem:[%s441 + $0x8] sm:$0xff]
    %v444 = vld [vmem:[%s441 + $0x10] sm:$0xff]
    %v445 = vld [vmem:[%s441 + $0x18] sm:$0xff]
    %v446 = vld [vmem:[%s441 + $0x20] sm:$0xff]
    %v447 = vld [vmem:[%s441 + $0x28] sm:$0xff]
    %v448 = vld [vmem:[%s441 + $0x30] sm:$0xff]
    %v449 = vld [vmem:[%s441 + $0x38] sm:$0xff]
    %v450 = vld [vmem:[%s441 + $0x40] sm:$0xff]
    %v451 = vld [vmem:[%s441 + $0x48] sm:$0xff]
    %v452 = vld [vmem:[%s441 + $0x50] sm:$0xff]
    %v453 = vld [vmem:[%s441 + $0x58] sm:$0xff]
    %v454 = vld [vmem:[%s441 + $0x60] sm:$0xff]
    %v455 = vld [vmem:[%s441 + $0x68] sm:$0xff]
    %v456 = vld [vmem:[%s441 + $0x70] sm:$0xff]
    %v457 = vld [vmem:[%s441 + $0x78] sm:$0xff]
    %s458 = scalar_lea.vmem %s2, 4
    %v459 = vld [vmem:[%s458] sm:$0x1]
    %v461 = vlaneseq
    %v462 = vshrl.u32 %v461, 7
    %v463 = vsub.s32 0, %v462
    %v464 = vrot.slane %v459, %v463
    %466 = vmatprep.subr.mxu0 0.0
    %467 = vmatpush1.msra.mxu0 %v457
    %468 = vmatprep.subr.mxu0 0.0
    %469 = vmatpush1.msra.mxu0 %v456
    %470 = vmatprep.subr.mxu0 0.0
    %471 = vmatpush1.msra.mxu0 %v455
    %472 = vmatprep.subr.mxu0 0.0
    %473 = vmatpush1.msra.mxu0 %v454
    %474 = vmatprep.subr.mxu0 0.0
    %475 = vmatpush1.msra.mxu0 %v453
    %476 = vmatprep.subr.mxu0 0.0
    %477 = vmatpush1.msra.mxu0 %v452
    %478 = vmatprep.subr.mxu0 0.0
    %479 = vmatpush1.msra.mxu0 %v451
    %480 = vmatprep.subr.mxu0 0.0
    %481 = vmatpush1.msra.mxu0 %v450
    %482 = vmatprep.subr.mxu0 0.0
    %483 = vmatpush1.msra.mxu0 %v449
    %484 = vmatprep.subr.mxu0 0.0
    %485 = vmatpush1.msra.mxu0 %v448
    %486 = vmatprep.subr.mxu0 0.0
    %487 = vmatpush1.msra.mxu0 %v447
    %488 = vmatprep.subr.mxu0 0.0
    %489 = vmatpush1.msra.mxu0 %v446
    %490 = vmatprep.subr.mxu0 0.0
    %491 = vmatpush1.msra.mxu0 %v445
    %492 = vmatprep.subr.mxu0 0.0
    %493 = vmatpush1.msra.mxu0 %v444
    %494 = vmatprep.subr.mxu0 0.0
    %495 = vmatpush1.msra.mxu0 %v443
    %496 = vmatprep.subr.mxu0 0.0
    %497 = vmatpush1.msra.mxu0 %v442
    %498 = vmatprep.subr.mxu0 0.0
    %499 = vmatpush2.msra.mxu0 0.0
    %500 = vmatprep.subr.mxu0 0.0
    %501 = vmatpush2.msra.mxu0 0.0
    %502 = vmatprep.subr.mxu0 0.0
    %503 = vmatpush2.msra.mxu0 0.0
    %504 = vmatprep.subr.mxu0 0.0
    %505 = vmatpush2.msra.mxu0 0.0
    %506 = vmatprep.subr.mxu0 0.0
    %507 = vmatpush2.msra.mxu0 0.0
    %508 = vmatprep.subr.mxu0 0.0
    %509 = vmatpush2.msra.mxu0 0.0
    %510 = vmatprep.subr.mxu0 0.0
    %511 = vmatpush2.msra.mxu0 0.0
    %512 = vmatprep.subr.mxu0 0.0
    %513 = vmatpush2.msra.mxu0 0.0
    %514 = vmatprep.subr.mxu0 0.0
    %515 = vmatpush2.msra.mxu0 0.0
    %516 = vmatprep.subr.mxu0 0.0
    %517 = vmatpush2.msra.mxu0 0.0
    %518 = vmatprep.subr.mxu0 0.0
    %519 = vmatpush2.msra.mxu0 0.0
    %520 = vmatprep.subr.mxu0 0.0
    %521 = vmatpush2.msra.mxu0 0.0
    %522 = vmatprep.subr.mxu0 0.0
    %523 = vmatpush2.msra.mxu0 0.0
    %524 = vmatprep.subr.mxu0 0.0
    %525 = vmatpush2.msra.mxu0 0.0
    %526 = vmatprep.subr.mxu0 0.0
    %527 = vmatpush2.msra.mxu0 0.0
    %528 = vmatprep.subr.mxu0 0.0
    %529 = vmatpush2.msra.mxu0 0.0
    %530 = vmatprep.mubr.f32.mxu0 0.0
    %531 = vmatmul.mubr.f32.gmra.mxu0 %v440
    %v532 = vpop.f32.mrf.mxu0
    %v533 = vadd.f32 %v464, %v532
    %v534 = vpop.f32.mrf.mxu0
    %535 = vdwg.mxu0
    %v536 = vmul.f32 %v533, 0.2
    %v537 = vmax.f32 %v533, %v536
    %v538 = vmul.f32 %v537, 1.4142135
    %s539 = scalar_lea.vmem [#allocation4], 640
    %v540 = vld [vmem:[%s539] sm:$0xff]
    %v541 = vld [vmem:[%s539 + $0x8] sm:$0xff]
    %v542 = vld [vmem:[%s539 + $0x10] sm:$0xff]
    %v543 = vld [vmem:[%s539 + $0x18] sm:$0xff]
    %v544 = vld [vmem:[%s539 + $0x20] sm:$0xff]
    %v545 = vld [vmem:[%s539 + $0x28] sm:$0xff]
    %v546 = vld [vmem:[%s539 + $0x30] sm:$0xff]
    %v547 = vld [vmem:[%s539 + $0x38] sm:$0xff]
    %v548 = vld [vmem:[%s539 + $0x40] sm:$0xff]
    %v549 = vld [vmem:[%s539 + $0x48] sm:$0xff]
    %v550 = vld [vmem:[%s539 + $0x50] sm:$0xff]
    %v551 = vld [vmem:[%s539 + $0x58] sm:$0xff]
    %v552 = vld [vmem:[%s539 + $0x60] sm:$0xff]
    %v553 = vld [vmem:[%s539 + $0x68] sm:$0xff]
    %v554 = vld [vmem:[%s539 + $0x70] sm:$0xff]
    %v555 = vld [vmem:[%s539 + $0x78] sm:$0xff]
    %s556 = scalar_lea.vmem %s2, 5
    %v557 = vld [vmem:[%s556] sm:$0x1]
    %v559 = vlaneseq
    %v560 = vshrl.u32 %v559, 7
    %v561 = vsub.s32 0, %v560
    %v562 = vrot.slane %v557, %v561
    %564 = vmatprep.subr.mxu0 0.0
    %565 = vmatpush1.msra.mxu0 %v555
    %566 = vmatprep.subr.mxu0 0.0
    %567 = vmatpush1.msra.mxu0 %v554
    %568 = vmatprep.subr.mxu0 0.0
    %569 = vmatpush1.msra.mxu0 %v553
    %570 = vmatprep.subr.mxu0 0.0
    %571 = vmatpush1.msra.mxu0 %v552
    %572 = vmatprep.subr.mxu0 0.0
    %573 = vmatpush1.msra.mxu0 %v551
    %574 = vmatprep.subr.mxu0 0.0
    %575 = vmatpush1.msra.mxu0 %v550
    %576 = vmatprep.subr.mxu0 0.0
    %577 = vmatpush1.msra.mxu0 %v549
    %578 = vmatprep.subr.mxu0 0.0
    %579 = vmatpush1.msra.mxu0 %v548
    %580 = vmatprep.subr.mxu0 0.0
    %581 = vmatpush1.msra.mxu0 %v547
    %582 = vmatprep.subr.mxu0 0.0
    %583 = vmatpush1.msra.mxu0 %v546
    %584 = vmatprep.subr.mxu0 0.0
    %585 = vmatpush1.msra.mxu0 %v545
    %586 = vmatprep.subr.mxu0 0.0
    %587 = vmatpush1.msra.mxu0 %v544
    %588 = vmatprep.subr.mxu0 0.0
    %589 = vmatpush1.msra.mxu0 %v543
    %590 = vmatprep.subr.mxu0 0.0
    %591 = vmatpush1.msra.mxu0 %v542
    %592 = vmatprep.subr.mxu0 0.0
    %593 = vmatpush1.msra.mxu0 %v541
    %594 = vmatprep.subr.mxu0 0.0
    %595 = vmatpush1.msra.mxu0 %v540
    %596 = vmatprep.subr.mxu0 0.0
    %597 = vmatpush2.msra.mxu0 0.0
    %598 = vmatprep.subr.mxu0 0.0
    %599 = vmatpush2.msra.mxu0 0.0
    %600 = vmatprep.subr.mxu0 0.0
    %601 = vmatpush2.msra.mxu0 0.0
    %602 = vmatprep.subr.mxu0 0.0
    %603 = vmatpush2.msra.mxu0 0.0
    %604 = vmatprep.subr.mxu0 0.0
    %605 = vmatpush2.msra.mxu0 0.0
    %606 = vmatprep.subr.mxu0 0.0
    %607 = vmatpush2.msra.mxu0 0.0
    %608 = vmatprep.subr.mxu0 0.0
    %609 = vmatpush2.msra.mxu0 0.0
    %610 = vmatprep.subr.mxu0 0.0
    %611 = vmatpush2.msra.mxu0 0.0
    %612 = vmatprep.subr.mxu0 0.0
    %613 = vmatpush2.msra.mxu0 0.0
    %614 = vmatprep.subr.mxu0 0.0
    %615 = vmatpush2.msra.mxu0 0.0
    %616 = vmatprep.subr.mxu0 0.0
    %617 = vmatpush2.msra.mxu0 0.0
    %618 = vmatprep.subr.mxu0 0.0
    %619 = vmatpush2.msra.mxu0 0.0
    %620 = vmatprep.subr.mxu0 0.0
    %621 = vmatpush2.msra.mxu0 0.0
    %622 = vmatprep.subr.mxu0 0.0
    %623 = vmatpush2.msra.mxu0 0.0
    %624 = vmatprep.subr.mxu0 0.0
    %625 = vmatpush2.msra.mxu0 0.0
    %626 = vmatprep.subr.mxu0 0.0
    %627 = vmatpush2.msra.mxu0 0.0
    %628 = vmatprep.mubr.f32.mxu0 0.0
    %629 = vmatmul.mubr.f32.gmra.mxu0 %v538
    %v630 = vpop.f32.mrf.mxu0
    %v631 = vadd.f32 %v562, %v630
    %v632 = vpop.f32.mrf.mxu0
    %633 = vdwg.mxu0
    %v634 = vmul.f32 %v631, 0.2
    %v635 = vmax.f32 %v631, %v634
    %v636 = vmul.f32 %v635, 1.4142135
    %s637 = scalar_lea.vmem [#allocation4], 768
    %v638 = vld [vmem:[%s637] sm:$0xff]
    %v639 = vld [vmem:[%s637 + $0x8] sm:$0xff]
    %v640 = vld [vmem:[%s637 + $0x10] sm:$0xff]
    %v641 = vld [vmem:[%s637 + $0x18] sm:$0xff]
    %v642 = vld [vmem:[%s637 + $0x20] sm:$0xff]
    %v643 = vld [vmem:[%s637 + $0x28] sm:$0xff]
    %v644 = vld [vmem:[%s637 + $0x30] sm:$0xff]
    %v645 = vld [vmem:[%s637 + $0x38] sm:$0xff]
    %v646 = vld [vmem:[%s637 + $0x40] sm:$0xff]
    %v647 = vld [vmem:[%s637 + $0x48] sm:$0xff]
    %v648 = vld [vmem:[%s637 + $0x50] sm:$0xff]
    %v649 = vld [vmem:[%s637 + $0x58] sm:$0xff]
    %v650 = vld [vmem:[%s637 + $0x60] sm:$0xff]
    %v651 = vld [vmem:[%s637 + $0x68] sm:$0xff]
    %v652 = vld [vmem:[%s637 + $0x70] sm:$0xff]
    %v653 = vld [vmem:[%s637 + $0x78] sm:$0xff]
    %s654 = scalar_lea.vmem %s2, 6
    %v655 = vld [vmem:[%s654] sm:$0x1]
    %v657 = vlaneseq
    %v658 = vshrl.u32 %v657, 7
    %v659 = vsub.s32 0, %v658
    %v660 = vrot.slane %v655, %v659
    %662 = vmatprep.subr.mxu0 0.0
    %663 = vmatpush1.msra.mxu0 %v653
    %664 = vmatprep.subr.mxu0 0.0
    %665 = vmatpush1.msra.mxu0 %v652
    %666 = vmatprep.subr.mxu0 0.0
    %667 = vmatpush1.msra.mxu0 %v651
    %668 = vmatprep.subr.mxu0 0.0
    %669 = vmatpush1.msra.mxu0 %v650
    %670 = vmatprep.subr.mxu0 0.0
    %671 = vmatpush1.msra.mxu0 %v649
    %672 = vmatprep.subr.mxu0 0.0
    %673 = vmatpush1.msra.mxu0 %v648
    %674 = vmatprep.subr.mxu0 0.0
    %675 = vmatpush1.msra.mxu0 %v647
    %676 = vmatprep.subr.mxu0 0.0
    %677 = vmatpush1.msra.mxu0 %v646
    %678 = vmatprep.subr.mxu0 0.0
    %679 = vmatpush1.msra.mxu0 %v645
    %680 = vmatprep.subr.mxu0 0.0
    %681 = vmatpush1.msra.mxu0 %v644
    %682 = vmatprep.subr.mxu0 0.0
    %683 = vmatpush1.msra.mxu0 %v643
    %684 = vmatprep.subr.mxu0 0.0
    %685 = vmatpush1.msra.mxu0 %v642
    %686 = vmatprep.subr.mxu0 0.0
    %687 = vmatpush1.msra.mxu0 %v641
    %688 = vmatprep.subr.mxu0 0.0
    %689 = vmatpush1.msra.mxu0 %v640
    %690 = vmatprep.subr.mxu0 0.0
    %691 = vmatpush1.msra.mxu0 %v639
    %692 = vmatprep.subr.mxu0 0.0
    %693 = vmatpush1.msra.mxu0 %v638
    %694 = vmatprep.subr.mxu0 0.0
    %695 = vmatpush2.msra.mxu0 0.0
    %696 = vmatprep.subr.mxu0 0.0
    %697 = vmatpush2.msra.mxu0 0.0
    %698 = vmatprep.subr.mxu0 0.0
    %699 = vmatpush2.msra.mxu0 0.0
    %700 = vmatprep.subr.mxu0 0.0
    %701 = vmatpush2.msra.mxu0 0.0
    %702 = vmatprep.subr.mxu0 0.0
    %703 = vmatpush2.msra.mxu0 0.0
    %704 = vmatprep.subr.mxu0 0.0
    %705 = vmatpush2.msra.mxu0 0.0
    %706 = vmatprep.subr.mxu0 0.0
    %707 = vmatpush2.msra.mxu0 0.0
    %708 = vmatprep.subr.mxu0 0.0
    %709 = vmatpush2.msra.mxu0 0.0
    %710 = vmatprep.subr.mxu0 0.0
    %711 = vmatpush2.msra.mxu0 0.0
    %712 = vmatprep.subr.mxu0 0.0
    %713 = vmatpush2.msra.mxu0 0.0
    %714 = vmatprep.subr.mxu0 0.0
    %715 = vmatpush2.msra.mxu0 0.0
    %716 = vmatprep.subr.mxu0 0.0
    %717 = vmatpush2.msra.mxu0 0.0
    %718 = vmatprep.subr.mxu0 0.0
    %719 = vmatpush2.msra.mxu0 0.0
    %720 = vmatprep.subr.mxu0 0.0
    %721 = vmatpush2.msra.mxu0 0.0
    %722 = vmatprep.subr.mxu0 0.0
    %723 = vmatpush2.msra.mxu0 0.0
    %724 = vmatprep.subr.mxu0 0.0
    %725 = vmatpush2.msra.mxu0 0.0
    %726 = vmatprep.mubr.f32.mxu0 0.0
    %727 = vmatmul.mubr.f32.gmra.mxu0 %v636
    %v728 = vpop.f32.mrf.mxu0
    %v729 = vadd.f32 %v660, %v728
    %v730 = vpop.f32.mrf.mxu0
    %731 = vdwg.mxu0
    %v732 = vmul.f32 %v729, 0.2
    %v733 = vmax.f32 %v729, %v732
    %v734 = vmul.f32 %v733, 1.4142135
    %s735 = scalar_lea.vmem [#allocation4], 896
    %v736 = vld [vmem:[%s735] sm:$0xff]
    %v737 = vld [vmem:[%s735 + $0x8] sm:$0xff]
    %v738 = vld [vmem:[%s735 + $0x10] sm:$0xff]
    %v739 = vld [vmem:[%s735 + $0x18] sm:$0xff]
    %v740 = vld [vmem:[%s735 + $0x20] sm:$0xff]
    %v741 = vld [vmem:[%s735 + $0x28] sm:$0xff]
    %v742 = vld [vmem:[%s735 + $0x30] sm:$0xff]
    %v743 = vld [vmem:[%s735 + $0x38] sm:$0xff]
    %v744 = vld [vmem:[%s735 + $0x40] sm:$0xff]
    %v745 = vld [vmem:[%s735 + $0x48] sm:$0xff]
    %v746 = vld [vmem:[%s735 + $0x50] sm:$0xff]
    %v747 = vld [vmem:[%s735 + $0x58] sm:$0xff]
    %v748 = vld [vmem:[%s735 + $0x60] sm:$0xff]
    %v749 = vld [vmem:[%s735 + $0x68] sm:$0xff]
    %v750 = vld [vmem:[%s735 + $0x70] sm:$0xff]
    %v751 = vld [vmem:[%s735 + $0x78] sm:$0xff]
    %s752 = scalar_lea.vmem %s2, 7
    %v753 = vld [vmem:[%s752] sm:$0x1]
    %v755 = vlaneseq
    %v756 = vshrl.u32 %v755, 7
    %v757 = vsub.s32 0, %v756
    %v758 = vrot.slane %v753, %v757
    %760 = vmatprep.subr.mxu0 0.0
    %761 = vmatpush1.msra.mxu0 %v751
    %762 = vmatprep.subr.mxu0 0.0
    %763 = vmatpush1.msra.mxu0 %v750
    %764 = vmatprep.subr.mxu0 0.0
    %765 = vmatpush1.msra.mxu0 %v749
    %766 = vmatprep.subr.mxu0 0.0
    %767 = vmatpush1.msra.mxu0 %v748
    %768 = vmatprep.subr.mxu0 0.0
    %769 = vmatpush1.msra.mxu0 %v747
    %770 = vmatprep.subr.mxu0 0.0
    %771 = vmatpush1.msra.mxu0 %v746
    %772 = vmatprep.subr.mxu0 0.0
    %773 = vmatpush1.msra.mxu0 %v745
    %774 = vmatprep.subr.mxu0 0.0
    %775 = vmatpush1.msra.mxu0 %v744
    %776 = vmatprep.subr.mxu0 0.0
    %777 = vmatpush1.msra.mxu0 %v743
    %778 = vmatprep.subr.mxu0 0.0
    %779 = vmatpush1.msra.mxu0 %v742
    %780 = vmatprep.subr.mxu0 0.0
    %781 = vmatpush1.msra.mxu0 %v741
    %782 = vmatprep.subr.mxu0 0.0
    %783 = vmatpush1.msra.mxu0 %v740
    %784 = vmatprep.subr.mxu0 0.0
    %785 = vmatpush1.msra.mxu0 %v739
    %786 = vmatprep.subr.mxu0 0.0
    %787 = vmatpush1.msra.mxu0 %v738
    %788 = vmatprep.subr.mxu0 0.0
    %789 = vmatpush1.msra.mxu0 %v737
    %790 = vmatprep.subr.mxu0 0.0
    %791 = vmatpush1.msra.mxu0 %v736
    %792 = vmatprep.subr.mxu0 0.0
    %793 = vmatpush2.msra.mxu0 0.0
    %794 = vmatprep.subr.mxu0 0.0
    %795 = vmatpush2.msra.mxu0 0.0
    %796 = vmatprep.subr.mxu0 0.0
    %797 = vmatpush2.msra.mxu0 0.0
    %798 = vmatprep.subr.mxu0 0.0
    %799 = vmatpush2.msra.mxu0 0.0
    %800 = vmatprep.subr.mxu0 0.0
    %801 = vmatpush2.msra.mxu0 0.0
    %802 = vmatprep.subr.mxu0 0.0
    %803 = vmatpush2.msra.mxu0 0.0
    %804 = vmatprep.subr.mxu0 0.0
    %805 = vmatpush2.msra.mxu0 0.0
    %806 = vmatprep.subr.mxu0 0.0
    %807 = vmatpush2.msra.mxu0 0.0
    %808 = vmatprep.subr.mxu0 0.0
    %809 = vmatpush2.msra.mxu0 0.0
    %810 = vmatprep.subr.mxu0 0.0
    %811 = vmatpush2.msra.mxu0 0.0
    %812 = vmatprep.subr.mxu0 0.0
    %813 = vmatpush2.msra.mxu0 0.0
    %814 = vmatprep.subr.mxu0 0.0
    %815 = vmatpush2.msra.mxu0 0.0
    %816 = vmatprep.subr.mxu0 0.0
    %817 = vmatpush2.msra.mxu0 0.0
    %818 = vmatprep.subr.mxu0 0.0
    %819 = vmatpush2.msra.mxu0 0.0
    %820 = vmatprep.subr.mxu0 0.0
    %821 = vmatpush2.msra.mxu0 0.0
    %822 = vmatprep.subr.mxu0 0.0
    %823 = vmatpush2.msra.mxu0 0.0
    %824 = vmatprep.mubr.f32.mxu0 0.0
    %825 = vmatmul.mubr.f32.gmra.mxu0 %v734
    %v826 = vpop.f32.mrf.mxu0
    %v827 = vadd.f32 %v758, %v826
    %v828 = vpop.f32.mrf.mxu0
    %829 = vdwg.mxu0
    %v830 = vmul.f32 %v827, 0.2
    %v831 = vmax.f32 %v827, %v830
    %v832 = vmul.f32 %v831, 1.4142135
    %833 = vst [vmem:[%s3] sm:$0x3] %v832
    // Predicated region
    $region22: #{zssgan_forward.2} parent=1 // pred_check
      _
    $region23: #{zssgan_forward.2} parent=1 // pred_check_branch
      %835 = sbr.rel (0) target = $region25
    $region24: #{zssgan_forward.2} parent=1 // pred_region
      _
    $region25: #{zssgan_forward.2} parent=1 // pred_fallthru
      _
    // Predicated region
    $region26: #{zssgan_forward.2} parent=1 // pred_check
      _
    $region27: #{zssgan_forward.2} parent=1 // pred_check_branch
      %837 = sbr.rel (0) target = $region29
    $region28: #{zssgan_forward.2} parent=1 // pred_region
      _
    $region29: #{zssgan_forward.2} parent=1 // pred_fallthru
      _
    %838 = vsyncpa [#allocation3], 1
    %839 = vsyncpa [#allocation5], 1

// kernel: zssgan_forward.3
$region0: #{zssgan_forward.3}
  #allocation0 [shape = 'u32[]', space=smem, size = 0x4, offset = 0x4, fixed_abs, tag = 'smem constant byte address 0x4 - core index']
  #allocation1 [shape = 'u32[144,128]{1,0:T(1,128)}', space=vmem, size = 0x12000, scoped, tag = 'internal scratch']
  %s0 = inlined_call_operand.smem [shape: u32[32], index: -1, kind: input, shape index: {}]
  %s1 = sld [smem:[%s0]]
  %s2 = scalar_lea.smem %s0, 1
  %s3 = sld [smem:[%s2]]
  %s4 = scalar_lea.smem %s0, 2
  %s5 = sld [smem:[%s4]]
  %s6 = scalar_lea.smem %s0, 3
  %s7 = sld [smem:[%s6]]
  %s8 = scalar_lea.smem %s0, 4
  %s9 = sld [smem:[%s8]]
  %s10 = scalar_lea.smem %s0, 5
  %s11 = sld [smem:[%s10]]
  %s12 = scalar_lea.smem %s0, 6
  %s13 = sld [smem:[%s12]]
  %s14 = scalar_lea.smem %s0, 7
  %s15 = sld [smem:[%s14]]
  %s16 = scalar_lea.smem %s0, 8
  %s17 = sld [smem:[%s16]]
  %s18 = scalar_lea.smem %s0, 9
  %s19 = sld [smem:[%s18]]
  %s20 = scalar_lea.smem %s0, 10
  %s21 = sld [smem:[%s20]]
  %s22 = scalar_lea.smem %s0, 11
  %s23 = sld [smem:[%s22]]
  %s24 = scalar_lea.smem %s0, 12
  %s25 = sld [smem:[%s24]]
  %s26 = scalar_lea.smem %s0, 13
  %s27 = sld [smem:[%s26]]
  %s28 = scalar_lea.smem %s0, 14
  %s29 = sld [smem:[%s28]]
  %s30 = scalar_lea.smem %s0, 15
  %s31 = sld [smem:[%s30]]
  %s32 = scalar_lea.smem %s0, 16
  %s33 = sld [smem:[%s32]]
  %s34 = scalar_lea.smem %s0, 17
  %s35 = sld [smem:[%s34]]
  %s36 = scalar_lea.smem %s0, 18
  %s37 = sld [smem:[%s36]]
  %s38 = scalar_lea.smem %s0, 19
  %s39 = sld [smem:[%s38]]
  %s40 = scalar_lea.smem %s0, 20
  %s41 = sld [smem:[%s40]]
  %s42 = scalar_lea.smem %s0, 21
  %s43 = sld [smem:[%s42]]
  %s44 = scalar_lea.smem %s0, 22
  %s45 = sld [smem:[%s44]]
  %s46 = scalar_lea.smem %s0, 23
  %s47 = sld [smem:[%s46]]
  %s48 = scalar_lea.smem %s0, 24
  %s49 = sld [smem:[%s48]]
  %s50 = scalar_lea.smem %s0, 25
  %s51 = sld [smem:[%s50]]
  %s52 = scalar_lea.smem %s0, 26
  %s53 = sld [smem:[%s52]]
  %s54 = scalar_lea.smem %s0, 27
  %s55 = sld [smem:[%s54]]
  %s56 = scalar_lea.smem %s0, 28
  %s57 = sld [smem:[%s56]]
  %s58 = scalar_lea.smem %s0, 29
  %s59 = sld [smem:[%s58]]
  %s60 = scalar_lea.smem %s0, 30
  %s61 = sld [smem:[%s60]]
  %s62 = scalar_lea.smem %s0, 31
  %s63 = sld [smem:[%s62]]
  %s64 = sld [smem:[#allocation0]]
  $region157: #{zssgan_forward.3} parent=0
    _
  %s66 = ssub.s32 1, %s64
  %s67 = scalar_select 0, %s66, %s64
  loop: start=0, step=1, limit=4
  $region2: #{zssgan_forward.3} parent=0 // loop_pre_header
    _
  $region3: #{zssgan_forward.3} parent=0 // loop_header
    %s69 = sphi 0, %s73
    %p70 = scmp.ge.s32.totalorder %s69, 4
    %s77 = sphi 0, %s77
    %s79 = sphi 0, %s77
    %s80 = sphi 0, %s79
    %s94 = sphi 0, %s80
    %s100 = sphi 0, %s102
    %s103 = sphi 0, %s100
    %s104 = sphi 0, %s103
    %s120 = sphi 0, %s104
    %s126 = sphi 0, %s128
    %s129 = sphi 0, %s126
    %s130 = sphi 0, %s129
    %s146 = sphi 0, %s130
    %s152 = sphi 0, %s154
    %s155 = sphi 0, %s152
    %s156 = sphi 0, %s155
    %s172 = sphi 0, %s156
    %s178 = sphi 0, %s180
    %s181 = sphi 0, %s178
    %s182 = sphi 0, %s181
    %s198 = sphi 0, %s182
    %s204 = sphi 0, %s206
    %s207 = sphi 0, %s204
    %s208 = sphi 0, %s207
    %s224 = sphi 0, %s208
    %s230 = sphi 0, %s232
    %s233 = sphi 0, %s230
    %s234 = sphi 0, %s233
    %s250 = sphi 0, %s234
    %s256 = sphi 0, %s258
    %s259 = sphi 0, %s256
    %s260 = sphi 0, %s259
    %s276 = sphi 0, %s260
    %s282 = sphi 0, %s284
    %s285 = sphi 0, %s282
    %s286 = sphi 0, %s285
    %s302 = sphi 0, %s286
    %s308 = sphi 0, %s310
    %s311 = sphi 0, %s308
    %s312 = sphi 0, %s311
    %s328 = sphi 0, %s312
    %s334 = sphi 0, %s336
    %s337 = sphi 0, %s334
    %s338 = sphi 0, %s337
    %s354 = sphi 0, %s338
    %s360 = sphi 0, %s362
    %s363 = sphi 0, %s360
    %s364 = sphi 0, %s363
    %s380 = sphi 0, %s364
    %s386 = sphi 0, %s388
    %s389 = sphi 0, %s386
    %s390 = sphi 0, %s389
    %s406 = sphi 0, %s390
    %s412 = sphi 0, %s414
    %s415 = sphi 0, %s412
    %s416 = sphi 0, %s415
    %s432 = sphi 0, %s416
    %s438 = sphi 0, %s440
    %s441 = sphi 0, %s438
    %s442 = sphi 0, %s441
    %s458 = sphi 0, %s442
    %s464 = sphi 0, %s466
    %s467 = sphi 0, %s464
    %s468 = sphi 0, %s467
    %s484 = sphi 0, %s468
    %s490 = sphi 0, %s492
    %s493 = sphi 0, %s490
    %s494 = sphi 0, %s493
    %s510 = sphi 0, %s494
    %s516 = sphi 0, %s518
    %s519 = sphi 0, %s516
    %s520 = sphi 0, %s519
    %s536 = sphi 0, %s520
    %s542 = sphi 0, %s544
    %s545 = sphi 0, %s542
    %s546 = sphi 0, %s545
    %s562 = sphi 0, %s546
    %s568 = sphi 0, %s570
    %s571 = sphi 0, %s568
    %s572 = sphi 0, %s571
    %s588 = sphi 0, %s572
    %s594 = sphi 0, %s596
    %s597 = sphi 0, %s594
    %s598 = sphi 0, %s597
    %s614 = sphi 0, %s598
    %s620 = sphi 0, %s622
    %s623 = sphi 0, %s620
    %s624 = sphi 0, %s623
    %s640 = sphi 0, %s624
    %s646 = sphi 0, %s648
    %s649 = sphi 0, %s646
    %s650 = sphi 0, %s649
    %s666 = sphi 0, %s650
    %s672 = sphi 0, %s674
    %s675 = sphi 0, %s672
    %s676 = sphi 0, %s675
    %s692 = sphi 0, %s676
    %s698 = sphi 0, %s700
    %s701 = sphi 0, %s698
    %s702 = sphi 0, %s701
    %s718 = sphi 0, %s702
    %s724 = sphi 0, %s726
    %s727 = sphi 0, %s724
    %s728 = sphi 0, %s727
    %s744 = sphi 0, %s728
    %s750 = sphi 0, %s752
    %s753 = sphi 0, %s750
    %s754 = sphi 0, %s753
    %s770 = sphi 0, %s754
    %s776 = sphi 0, %s778
    %s779 = sphi 0, %s776
    %s780 = sphi 0, %s779
    %s796 = sphi 0, %s780
    %s802 = sphi 0, %s804
    %s805 = sphi 0, %s802
    %s806 = sphi 0, %s805
    %s822 = sphi 0, %s806
    %s828 = sphi 0, %s830
    %s831 = sphi 0, %s828
    %s832 = sphi 0, %s831
    %s848 = sphi 0, %s832
    %s854 = sphi 0, %s856
    %s857 = sphi 0, %s854
    %s858 = sphi 0, %s857
    %s874 = sphi 0, %s858
    %s880 = sphi 0, %s882
    %s883 = sphi 0, %s880
    %s884 = sphi 0, %s883
    %s900 = sphi 0, %s884
  $region4: #{zssgan_forward.3} parent=0 // loop_header_branch
    %72 = sbr.rel (%p70) target = $region8
  $region5: #{zssgan_forward.3} parent=0 // loop_body
    %s74 = ssub.s32 %s69, 1
    %s75 = ssub.s32 %s69, 2
    %s76 = sadd.s32 %s69, 1
    %s78 = sadd.s32 %s77, 1
    %p81 = scmp.eq.s32.totalorder %s69, 1
    %p82 = scmp.ne.s32.totalorder %s77, %s79
    %p83 = scmp.eq.s32.totalorder %s69, 0
    %p84 = por %p82, %p83
    %p85 = scmp.ne.s32.totalorder %s77, %s79
    %p86 = scmp.eq.s32.totalorder %s74, 1
    %p87 = por %p85, %p86
    %p88 = scmp.ne.s32.totalorder %s79, %s80
    %p89 = scmp.eq.s32.totalorder %s74, 0
    %p90 = por %p88, %p89
    %p91 = scmp.ne.s32.totalorder %s79, %s80
    %p92 = scmp.eq.s32.totalorder %s75, 1
    %p93 = por %p91, %p92
    %p95 = scmp.ne.s32.totalorder %s80, %s94
    %p96 = scmp.eq.s32.totalorder %s75, 0
    %p97 = por %p95, %p96
    %s98 = ssub.s32 %s69, %s76
    %p99 = scmp.eq.s32.totalorder %s98, 0
    %s101 = sadd.s32 %s100, 1
    %s102 = scalar_select %p99, %s100, %s101
    %p105 = pneg %p99
    %p106 = scmp.eq.s32.totalorder %s69, 1
    %p107 = por %p105, %p106
    %p108 = scmp.ne.s32.totalorder %s100, %s103
    %p109 = scmp.eq.s32.totalorder %s69, 0
    %p110 = por %p108, %p109
    %p111 = scmp.ne.s32.totalorder %s100, %s103
    %p112 = scmp.eq.s32.totalorder %s74, 1
    %p113 = por %p111, %p112
    %p114 = scmp.ne.s32.totalorder %s103, %s104
    %p115 = scmp.eq.s32.totalorder %s74, 0
    %p116 = por %p114, %p115
    %p117 = scmp.ne.s32.totalorder %s103, %s104
    %p118 = scmp.eq.s32.totalorder %s75, 1
    %p119 = por %p117, %p118
    %p121 = scmp.ne.s32.totalorder %s104, %s120
    %p122 = scmp.eq.s32.totalorder %s75, 0
    %p123 = por %p121, %p122
    %s124 = ssub.s32 %s69, %s76
    %p125 = scmp.eq.s32.totalorder %s124, 0
    %s127 = sadd.s32 %s126, 1
    %s128 = scalar_select %p125, %s126, %s127
    %p131 = pneg %p125
    %p132 = scmp.eq.s32.totalorder %s69, 1
    %p133 = por %p131, %p132
    %p134 = scmp.ne.s32.totalorder %s126, %s129
    %p135 = scmp.eq.s32.totalorder %s69, 0
    %p136 = por %p134, %p135
    %p137 = scmp.ne.s32.totalorder %s126, %s129
    %p138 = scmp.eq.s32.totalorder %s74, 1
    %p139 = por %p137, %p138
    %p140 = scmp.ne.s32.totalorder %s129, %s130
    %p141 = scmp.eq.s32.totalorder %s74, 0
    %p142 = por %p140, %p141
    %p143 = scmp.ne.s32.totalorder %s129, %s130
    %p144 = scmp.eq.s32.totalorder %s75, 1
    %p145 = por %p143, %p144
    %p147 = scmp.ne.s32.totalorder %s130, %s146
    %p148 = scmp.eq.s32.totalorder %s75, 0
    %p149 = por %p147, %p148
    %s150 = ssub.s32 %s69, %s76
    %p151 = scmp.eq.s32.totalorder %s150, 0
    %s153 = sadd.s32 %s152, 1
    %s154 = scalar_select %p151, %s152, %s153
    %p157 = pneg %p151
    %p158 = scmp.eq.s32.totalorder %s69, 1
    %p159 = por %p157, %p158
    %p160 = scmp.ne.s32.totalorder %s152, %s155
    %p161 = scmp.eq.s32.totalorder %s69, 0
    %p162 = por %p160, %p161
    %p163 = scmp.ne.s32.totalorder %s152, %s155
    %p164 = scmp.eq.s32.totalorder %s74, 1
    %p165 = por %p163, %p164
    %p166 = scmp.ne.s32.totalorder %s155, %s156
    %p167 = scmp.eq.s32.totalorder %s74, 0
    %p168 = por %p166, %p167
    %p169 = scmp.ne.s32.totalorder %s155, %s156
    %p170 = scmp.eq.s32.totalorder %s75, 1
    %p171 = por %p169, %p170
    %p173 = scmp.ne.s32.totalorder %s156, %s172
    %p174 = scmp.eq.s32.totalorder %s75, 0
    %p175 = por %p173, %p174
    %s176 = ssub.s32 %s69, %s76
    %p177 = scmp.eq.s32.totalorder %s176, 0
    %s179 = sadd.s32 %s178, 1
    %s180 = scalar_select %p177, %s178, %s179
    %p183 = pneg %p177
    %p184 = scmp.eq.s32.totalorder %s69, 1
    %p185 = por %p183, %p184
    %p186 = scmp.ne.s32.totalorder %s178, %s181
    %p187 = scmp.eq.s32.totalorder %s69, 0
    %p188 = por %p186, %p187
    %p189 = scmp.ne.s32.totalorder %s178, %s181
    %p190 = scmp.eq.s32.totalorder %s74, 1
    %p191 = por %p189, %p190
    %p192 = scmp.ne.s32.totalorder %s181, %s182
    %p193 = scmp.eq.s32.totalorder %s74, 0
    %p194 = por %p192, %p193
    %p195 = scmp.ne.s32.totalorder %s181, %s182
    %p196 = scmp.eq.s32.totalorder %s75, 1
    %p197 = por %p195, %p196
    %p199 = scmp.ne.s32.totalorder %s182, %s198
    %p200 = scmp.eq.s32.totalorder %s75, 0
    %p201 = por %p199, %p200
    %s202 = ssub.s32 %s69, %s76
    %p203 = scmp.eq.s32.totalorder %s202, 0
    %s205 = sadd.s32 %s204, 1
    %s206 = scalar_select %p203, %s204, %s205
    %p209 = pneg %p203
    %p210 = scmp.eq.s32.totalorder %s69, 1
    %p211 = por %p209, %p210
    %p212 = scmp.ne.s32.totalorder %s204, %s207
    %p213 = scmp.eq.s32.totalorder %s69, 0
    %p214 = por %p212, %p213
    %p215 = scmp.ne.s32.totalorder %s204, %s207
    %p216 = scmp.eq.s32.totalorder %s74, 1
    %p217 = por %p215, %p216
    %p218 = scmp.ne.s32.totalorder %s207, %s208
    %p219 = scmp.eq.s32.totalorder %s74, 0
    %p220 = por %p218, %p219
    %p221 = scmp.ne.s32.totalorder %s207, %s208
    %p222 = scmp.eq.s32.totalorder %s75, 1
    %p223 = por %p221, %p222
    %p225 = scmp.ne.s32.totalorder %s208, %s224
    %p226 = scmp.eq.s32.totalorder %s75, 0
    %p227 = por %p225, %p226
    %s228 = ssub.s32 %s69, %s76
    %p229 = scmp.eq.s32.totalorder %s228, 0
    %s231 = sadd.s32 %s230, 1
    %s232 = scalar_select %p229, %s230, %s231
    %p235 = pneg %p229
    %p236 = scmp.eq.s32.totalorder %s69, 1
    %p237 = por %p235, %p236
    %p238 = scmp.ne.s32.totalorder %s230, %s233
    %p239 = scmp.eq.s32.totalorder %s69, 0
    %p240 = por %p238, %p239
    %p241 = scmp.ne.s32.totalorder %s230, %s233
    %p242 = scmp.eq.s32.totalorder %s74, 1
    %p243 = por %p241, %p242
    %p244 = scmp.ne.s32.totalorder %s233, %s234
    %p245 = scmp.eq.s32.totalorder %s74, 0
    %p246 = por %p244, %p245
    %p247 = scmp.ne.s32.totalorder %s233, %s234
    %p248 = scmp.eq.s32.totalorder %s75, 1
    %p249 = por %p247, %p248
    %p251 = scmp.ne.s32.totalorder %s234, %s250
    %p252 = scmp.eq.s32.totalorder %s75, 0
    %p253 = por %p251, %p252
    %s254 = ssub.s32 %s69, %s76
    %p255 = scmp.eq.s32.totalorder %s254, 0
    %s257 = sadd.s32 %s256, 1
    %s258 = scalar_select %p255, %s256, %s257
    %p261 = pneg %p255
    %p262 = scmp.eq.s32.totalorder %s69, 1
    %p263 = por %p261, %p262
    %p264 = scmp.ne.s32.totalorder %s256, %s259
    %p265 = scmp.eq.s32.totalorder %s69, 0
    %p266 = por %p264, %p265
    %p267 = scmp.ne.s32.totalorder %s256, %s259
    %p268 = scmp.eq.s32.totalorder %s74, 1
    %p269 = por %p267, %p268
    %p270 = scmp.ne.s32.totalorder %s259, %s260
    %p271 = scmp.eq.s32.totalorder %s74, 0
    %p272 = por %p270, %p271
    %p273 = scmp.ne.s32.totalorder %s259, %s260
    %p274 = scmp.eq.s32.totalorder %s75, 1
    %p275 = por %p273, %p274
    %p277 = scmp.ne.s32.totalorder %s260, %s276
    %p278 = scmp.eq.s32.totalorder %s75, 0
    %p279 = por %p277, %p278
    %s280 = ssub.s32 %s69, %s76
    %p281 = scmp.eq.s32.totalorder %s280, 0
    %s283 = sadd.s32 %s282, 1
    %s284 = scalar_select %p281, %s282, %s283
    %p287 = pneg %p281
    %p288 = scmp.eq.s32.totalorder %s69, 1
    %p289 = por %p287, %p288
    %p290 = scmp.ne.s32.totalorder %s282, %s285
    %p291 = scmp.eq.s32.totalorder %s69, 0
    %p292 = por %p290, %p291
    %p293 = scmp.ne.s32.totalorder %s282, %s285
    %p294 = scmp.eq.s32.totalorder %s74, 1
    %p295 = por %p293, %p294
    %p296 = scmp.ne.s32.totalorder %s285, %s286
    %p297 = scmp.eq.s32.totalorder %s74, 0
    %p298 = por %p296, %p297
    %p299 = scmp.ne.s32.totalorder %s285, %s286
    %p300 = scmp.eq.s32.totalorder %s75, 1
    %p301 = por %p299, %p300
    %p303 = scmp.ne.s32.totalorder %s286, %s302
    %p304 = scmp.eq.s32.totalorder %s75, 0
    %p305 = por %p303, %p304
    %s306 = ssub.s32 %s69, %s76
    %p307 = scmp.eq.s32.totalorder %s306, 0
    %s309 = sadd.s32 %s308, 1
    %s310 = scalar_select %p307, %s308, %s309
    %p313 = pneg %p307
    %p314 = scmp.eq.s32.totalorder %s69, 1
    %p315 = por %p313, %p314
    %p316 = scmp.ne.s32.totalorder %s308, %s311
    %p317 = scmp.eq.s32.totalorder %s69, 0
    %p318 = por %p316, %p317
    %p319 = scmp.ne.s32.totalorder %s308, %s311
    %p320 = scmp.eq.s32.totalorder %s74, 1
    %p321 = por %p319, %p320
    %p322 = scmp.ne.s32.totalorder %s311, %s312
    %p323 = scmp.eq.s32.totalorder %s74, 0
    %p324 = por %p322, %p323
    %p325 = scmp.ne.s32.totalorder %s311, %s312
    %p326 = scmp.eq.s32.totalorder %s75, 1
    %p327 = por %p325, %p326
    %p329 = scmp.ne.s32.totalorder %s312, %s328
    %p330 = scmp.eq.s32.totalorder %s75, 0
    %p331 = por %p329, %p330
    %s332 = ssub.s32 %s69, %s76
    %p333 = scmp.eq.s32.totalorder %s332, 0
    %s335 = sadd.s32 %s334, 1
    %s336 = scalar_select %p333, %s334, %s335
    %p339 = pneg %p333
    %p340 = scmp.eq.s32.totalorder %s69, 1
    %p341 = por %p339, %p340
    %p342 = scmp.ne.s32.totalorder %s334, %s337
    %p343 = scmp.eq.s32.totalorder %s69, 0
    %p344 = por %p342, %p343
    %p345 = scmp.ne.s32.totalorder %s334, %s337
    %p346 = scmp.eq.s32.totalorder %s74, 1
    %p347 = por %p345, %p346
    %p348 = scmp.ne.s32.totalorder %s337, %s338
    %p349 = scmp.eq.s32.totalorder %s74, 0
    %p350 = por %p348, %p349
    %p351 = scmp.ne.s32.totalorder %s337, %s338
    %p352 = scmp.eq.s32.totalorder %s75, 1
    %p353 = por %p351, %p352
    %p355 = scmp.ne.s32.totalorder %s338, %s354
    %p356 = scmp.eq.s32.totalorder %s75, 0
    %p357 = por %p355, %p356
    %s358 = ssub.s32 %s69, %s76
    %p359 = scmp.eq.s32.totalorder %s358, 0
    %s361 = sadd.s32 %s360, 1
    %s362 = scalar_select %p359, %s360, %s361
    %p365 = pneg %p359
    %p366 = scmp.eq.s32.totalorder %s69, 1
    %p367 = por %p365, %p366
    %p368 = scmp.ne.s32.totalorder %s360, %s363
    %p369 = scmp.eq.s32.totalorder %s69, 0
    %p370 = por %p368, %p369
    %p371 = scmp.ne.s32.totalorder %s360, %s363
    %p372 = scmp.eq.s32.totalorder %s74, 1
    %p373 = por %p371, %p372
    %p374 = scmp.ne.s32.totalorder %s363, %s364
    %p375 = scmp.eq.s32.totalorder %s74, 0
    %p376 = por %p374, %p375
    %p377 = scmp.ne.s32.totalorder %s363, %s364
    %p378 = scmp.eq.s32.totalorder %s75, 1
    %p379 = por %p377, %p378
    %p381 = scmp.ne.s32.totalorder %s364, %s380
    %p382 = scmp.eq.s32.totalorder %s75, 0
    %p383 = por %p381, %p382
    %s384 = ssub.s32 %s69, %s76
    %p385 = scmp.eq.s32.totalorder %s384, 0
    %s387 = sadd.s32 %s386, 1
    %s388 = scalar_select %p385, %s386, %s387
    %p391 = pneg %p385
    %p392 = scmp.eq.s32.totalorder %s69, 1
    %p393 = por %p391, %p392
    %p394 = scmp.ne.s32.totalorder %s386, %s389
    %p395 = scmp.eq.s32.totalorder %s69, 0
    %p396 = por %p394, %p395
    %p397 = scmp.ne.s32.totalorder %s386, %s389
    %p398 = scmp.eq.s32.totalorder %s74, 1
    %p399 = por %p397, %p398
    %p400 = scmp.ne.s32.totalorder %s389, %s390
    %p401 = scmp.eq.s32.totalorder %s74, 0
    %p402 = por %p400, %p401
    %p403 = scmp.ne.s32.totalorder %s389, %s390
    %p404 = scmp.eq.s32.totalorder %s75, 1
    %p405 = por %p403, %p404
    %p407 = scmp.ne.s32.totalorder %s390, %s406
    %p408 = scmp.eq.s32.totalorder %s75, 0
    %p409 = por %p407, %p408
    %s410 = ssub.s32 %s69, %s76
    %p411 = scmp.eq.s32.totalorder %s410, 0
    %s413 = sadd.s32 %s412, 1
    %s414 = scalar_select %p411, %s412, %s413
    %p417 = pneg %p411
    %p418 = scmp.eq.s32.totalorder %s69, 1
    %p419 = por %p417, %p418
    %p420 = scmp.ne.s32.totalorder %s412, %s415
    %p421 = scmp.eq.s32.totalorder %s69, 0
    %p422 = por %p420, %p421
    %p423 = scmp.ne.s32.totalorder %s412, %s415
    %p424 = scmp.eq.s32.totalorder %s74, 1
    %p425 = por %p423, %p424
    %p426 = scmp.ne.s32.totalorder %s415, %s416
    %p427 = scmp.eq.s32.totalorder %s74, 0
    %p428 = por %p426, %p427
    %p429 = scmp.ne.s32.totalorder %s415, %s416
    %p430 = scmp.eq.s32.totalorder %s75, 1
    %p431 = por %p429, %p430
    %p433 = scmp.ne.s32.totalorder %s416, %s432
    %p434 = scmp.eq.s32.totalorder %s75, 0
    %p435 = por %p433, %p434
    %s436 = ssub.s32 %s69, %s76
    %p437 = scmp.eq.s32.totalorder %s436, 0
    %s439 = sadd.s32 %s438, 1
    %s440 = scalar_select %p437, %s438, %s439
    %p443 = pneg %p437
    %p444 = scmp.eq.s32.totalorder %s69, 1
    %p445 = por %p443, %p444
    %p446 = scmp.ne.s32.totalorder %s438, %s441
    %p447 = scmp.eq.s32.totalorder %s69, 0
    %p448 = por %p446, %p447
    %p449 = scmp.ne.s32.totalorder %s438, %s441
    %p450 = scmp.eq.s32.totalorder %s74, 1
    %p451 = por %p449, %p450
    %p452 = scmp.ne.s32.totalorder %s441, %s442
    %p453 = scmp.eq.s32.totalorder %s74, 0
    %p454 = por %p452, %p453
    %p455 = scmp.ne.s32.totalorder %s441, %s442
    %p456 = scmp.eq.s32.totalorder %s75, 1
    %p457 = por %p455, %p456
    %p459 = scmp.ne.s32.totalorder %s442, %s458
    %p460 = scmp.eq.s32.totalorder %s75, 0
    %p461 = por %p459, %p460
    %s462 = ssub.s32 %s69, %s76
    %p463 = scmp.eq.s32.totalorder %s462, 0
    %s465 = sadd.s32 %s464, 1
    %s466 = scalar_select %p463, %s464, %s465
    %p469 = pneg %p463
    %p470 = scmp.eq.s32.totalorder %s69, 1
    %p471 = por %p469, %p470
    %p472 = scmp.ne.s32.totalorder %s464, %s467
    %p473 = scmp.eq.s32.totalorder %s69, 0
    %p474 = por %p472, %p473
    %p475 = scmp.ne.s32.totalorder %s464, %s467
    %p476 = scmp.eq.s32.totalorder %s74, 1
    %p477 = por %p475, %p476
    %p478 = scmp.ne.s32.totalorder %s467, %s468
    %p479 = scmp.eq.s32.totalorder %s74, 0
    %p480 = por %p478, %p479
    %p481 = scmp.ne.s32.totalorder %s467, %s468
    %p482 = scmp.eq.s32.totalorder %s75, 1
    %p483 = por %p481, %p482
    %p485 = scmp.ne.s32.totalorder %s468, %s484
    %p486 = scmp.eq.s32.totalorder %s75, 0
    %p487 = por %p485, %p486
    %s488 = ssub.s32 %s69, %s76
    %p489 = scmp.eq.s32.totalorder %s488, 0
    %s491 = sadd.s32 %s490, 1
    %s492 = scalar_select %p489, %s490, %s491
    %p495 = pneg %p489
    %p496 = scmp.eq.s32.totalorder %s69, 1
    %p497 = por %p495, %p496
    %p498 = scmp.ne.s32.totalorder %s490, %s493
    %p499 = scmp.eq.s32.totalorder %s69, 0
    %p500 = por %p498, %p499
    %p501 = scmp.ne.s32.totalorder %s490, %s493
    %p502 = scmp.eq.s32.totalorder %s74, 1
    %p503 = por %p501, %p502
    %p504 = scmp.ne.s32.totalorder %s493, %s494
    %p505 = scmp.eq.s32.totalorder %s74, 0
    %p506 = por %p504, %p505
    %p507 = scmp.ne.s32.totalorder %s493, %s494
    %p508 = scmp.eq.s32.totalorder %s75, 1
    %p509 = por %p507, %p508
    %p511 = scmp.ne.s32.totalorder %s494, %s510
    %p512 = scmp.eq.s32.totalorder %s75, 0
    %p513 = por %p511, %p512
    %s514 = ssub.s32 %s69, %s76
    %p515 = scmp.eq.s32.totalorder %s514, 0
    %s517 = sadd.s32 %s516, 1
    %s518 = scalar_select %p515, %s516, %s517
    %p521 = pneg %p515
    %p522 = scmp.eq.s32.totalorder %s69, 1
    %p523 = por %p521, %p522
    %p524 = scmp.ne.s32.totalorder %s516, %s519
    %p525 = scmp.eq.s32.totalorder %s69, 0
    %p526 = por %p524, %p525
    %p527 = scmp.ne.s32.totalorder %s516, %s519
    %p528 = scmp.eq.s32.totalorder %s74, 1
    %p529 = por %p527, %p528
    %p530 = scmp.ne.s32.totalorder %s519, %s520
    %p531 = scmp.eq.s32.totalorder %s74, 0
    %p532 = por %p530, %p531
    %p533 = scmp.ne.s32.totalorder %s519, %s520
    %p534 = scmp.eq.s32.totalorder %s75, 1
    %p535 = por %p533, %p534
    %p537 = scmp.ne.s32.totalorder %s520, %s536
    %p538 = scmp.eq.s32.totalorder %s75, 0
    %p539 = por %p537, %p538
    %s540 = ssub.s32 %s69, %s76
    %p541 = scmp.eq.s32.totalorder %s540, 0
    %s543 = sadd.s32 %s542, 1
    %s544 = scalar_select %p541, %s542, %s543
    %p547 = pneg %p541
    %p548 = scmp.eq.s32.totalorder %s69, 1
    %p549 = por %p547, %p548
    %p550 = scmp.ne.s32.totalorder %s542, %s545
    %p551 = scmp.eq.s32.totalorder %s69, 0
    %p552 = por %p550, %p551
    %p553 = scmp.ne.s32.totalorder %s542, %s545
    %p554 = scmp.eq.s32.totalorder %s74, 1
    %p555 = por %p553, %p554
    %p556 = scmp.ne.s32.totalorder %s545, %s546
    %p557 = scmp.eq.s32.totalorder %s74, 0
    %p558 = por %p556, %p557
    %p559 = scmp.ne.s32.totalorder %s545, %s546
    %p560 = scmp.eq.s32.totalorder %s75, 1
    %p561 = por %p559, %p560
    %p563 = scmp.ne.s32.totalorder %s546, %s562
    %p564 = scmp.eq.s32.totalorder %s75, 0
    %p565 = por %p563, %p564
    %s566 = ssub.s32 %s69, %s76
    %p567 = scmp.eq.s32.totalorder %s566, 0
    %s569 = sadd.s32 %s568, 1
    %s570 = scalar_select %p567, %s568, %s569
    %p573 = pneg %p567
    %p574 = scmp.eq.s32.totalorder %s69, 1
    %p575 = por %p573, %p574
    %p576 = scmp.ne.s32.totalorder %s568, %s571
    %p577 = scmp.eq.s32.totalorder %s69, 0
    %p578 = por %p576, %p577
    %p579 = scmp.ne.s32.totalorder %s568, %s571
    %p580 = scmp.eq.s32.totalorder %s74, 1
    %p581 = por %p579, %p580
    %p582 = scmp.ne.s32.totalorder %s571, %s572
    %p583 = scmp.eq.s32.totalorder %s74, 0
    %p584 = por %p582, %p583
    %p585 = scmp.ne.s32.totalorder %s571, %s572
    %p586 = scmp.eq.s32.totalorder %s75, 1
    %p587 = por %p585, %p586
    %p589 = scmp.ne.s32.totalorder %s572, %s588
    %p590 = scmp.eq.s32.totalorder %s75, 0
    %p591 = por %p589, %p590
    %s592 = ssub.s32 %s69, %s76
    %p593 = scmp.eq.s32.totalorder %s592, 0
    %s595 = sadd.s32 %s594, 1
    %s596 = scalar_select %p593, %s594, %s595
    %p599 = pneg %p593
    %p600 = scmp.eq.s32.totalorder %s69, 1
    %p601 = por %p599, %p600
    %p602 = scmp.ne.s32.totalorder %s594, %s597
    %p603 = scmp.eq.s32.totalorder %s69, 0
    %p604 = por %p602, %p603
    %p605 = scmp.ne.s32.totalorder %s594, %s597
    %p606 = scmp.eq.s32.totalorder %s74, 1
    %p607 = por %p605, %p606
    %p608 = scmp.ne.s32.totalorder %s597, %s598
    %p609 = scmp.eq.s32.totalorder %s74, 0
    %p610 = por %p608, %p609
    %p611 = scmp.ne.s32.totalorder %s597, %s598
    %p612 = scmp.eq.s32.totalorder %s75, 1
    %p613 = por %p611, %p612
    %p615 = scmp.ne.s32.totalorder %s598, %s614
    %p616 = scmp.eq.s32.totalorder %s75, 0
    %p617 = por %p615, %p616
    %s618 = ssub.s32 %s69, %s76
    %p619 = scmp.eq.s32.totalorder %s618, 0
    %s621 = sadd.s32 %s620, 1
    %s622 = scalar_select %p619, %s620, %s621
    %p625 = pneg %p619
    %p626 = scmp.eq.s32.totalorder %s69, 1
    %p627 = por %p625, %p626
    %p628 = scmp.ne.s32.totalorder %s620, %s623
    %p629 = scmp.eq.s32.totalorder %s69, 0
    %p630 = por %p628, %p629
    %p631 = scmp.ne.s32.totalorder %s620, %s623
    %p632 = scmp.eq.s32.totalorder %s74, 1
    %p633 = por %p631, %p632
    %p634 = scmp.ne.s32.totalorder %s623, %s624
    %p635 = scmp.eq.s32.totalorder %s74, 0
    %p636 = por %p634, %p635
    %p637 = scmp.ne.s32.totalorder %s623, %s624
    %p638 = scmp.eq.s32.totalorder %s75, 1
    %p639 = por %p637, %p638
    %p641 = scmp.ne.s32.totalorder %s624, %s640
    %p642 = scmp.eq.s32.totalorder %s75, 0
    %p643 = por %p641, %p642
    %s644 = ssub.s32 %s69, %s76
    %p645 = scmp.eq.s32.totalorder %s644, 0
    %s647 = sadd.s32 %s646, 1
    %s648 = scalar_select %p645, %s646, %s647
    %p651 = pneg %p645
    %p652 = scmp.eq.s32.totalorder %s69, 1
    %p653 = por %p651, %p652
    %p654 = scmp.ne.s32.totalorder %s646, %s649
    %p655 = scmp.eq.s32.totalorder %s69, 0
    %p656 = por %p654, %p655
    %p657 = scmp.ne.s32.totalorder %s646, %s649
    %p658 = scmp.eq.s32.totalorder %s74, 1
    %p659 = por %p657, %p658
    %p660 = scmp.ne.s32.totalorder %s649, %s650
    %p661 = scmp.eq.s32.totalorder %s74, 0
    %p662 = por %p660, %p661
    %p663 = scmp.ne.s32.totalorder %s649, %s650
    %p664 = scmp.eq.s32.totalorder %s75, 1
    %p665 = por %p663, %p664
    %p667 = scmp.ne.s32.totalorder %s650, %s666
    %p668 = scmp.eq.s32.totalorder %s75, 0
    %p669 = por %p667, %p668
    %s670 = ssub.s32 %s69, %s76
    %p671 = scmp.eq.s32.totalorder %s670, 0
    %s673 = sadd.s32 %s672, 1
    %s674 = scalar_select %p671, %s672, %s673
    %p677 = pneg %p671
    %p678 = scmp.eq.s32.totalorder %s69, 1
    %p679 = por %p677, %p678
    %p680 = scmp.ne.s32.totalorder %s672, %s675
    %p681 = scmp.eq.s32.totalorder %s69, 0
    %p682 = por %p680, %p681
    %p683 = scmp.ne.s32.totalorder %s672, %s675
    %p684 = scmp.eq.s32.totalorder %s74, 1
    %p685 = por %p683, %p684
    %p686 = scmp.ne.s32.totalorder %s675, %s676
    %p687 = scmp.eq.s32.totalorder %s74, 0
    %p688 = por %p686, %p687
    %p689 = scmp.ne.s32.totalorder %s675, %s676
    %p690 = scmp.eq.s32.totalorder %s75, 1
    %p691 = por %p689, %p690
    %p693 = scmp.ne.s32.totalorder %s676, %s692
    %p694 = scmp.eq.s32.totalorder %s75, 0
    %p695 = por %p693, %p694
    %s696 = ssub.s32 %s69, %s76
    %p697 = scmp.eq.s32.totalorder %s696, 0
    %s699 = sadd.s32 %s698, 1
    %s700 = scalar_select %p697, %s698, %s699
    %p703 = pneg %p697
    %p704 = scmp.eq.s32.totalorder %s69, 1
    %p705 = por %p703, %p704
    %p706 = scmp.ne.s32.totalorder %s698, %s701
    %p707 = scmp.eq.s32.totalorder %s69, 0
    %p708 = por %p706, %p707
    %p709 = scmp.ne.s32.totalorder %s698, %s701
    %p710 = scmp.eq.s32.totalorder %s74, 1
    %p711 = por %p709, %p710
    %p712 = scmp.ne.s32.totalorder %s701, %s702
    %p713 = scmp.eq.s32.totalorder %s74, 0
    %p714 = por %p712, %p713
    %p715 = scmp.ne.s32.totalorder %s701, %s702
    %p716 = scmp.eq.s32.totalorder %s75, 1
    %p717 = por %p715, %p716
    %p719 = scmp.ne.s32.totalorder %s702, %s718
    %p720 = scmp.eq.s32.totalorder %s75, 0
    %p721 = por %p719, %p720
    %s722 = ssub.s32 %s69, %s76
    %p723 = scmp.eq.s32.totalorder %s722, 0
    %s725 = sadd.s32 %s724, 1
    %s726 = scalar_select %p723, %s724, %s725
    %p729 = pneg %p723
    %p730 = scmp.eq.s32.totalorder %s69, 1
    %p731 = por %p729, %p730
    %p732 = scmp.ne.s32.totalorder %s724, %s727
    %p733 = scmp.eq.s32.totalorder %s69, 0
    %p734 = por %p732, %p733
    %p735 = scmp.ne.s32.totalorder %s724, %s727
    %p736 = scmp.eq.s32.totalorder %s74, 1
    %p737 = por %p735, %p736
    %p738 = scmp.ne.s32.totalorder %s727, %s728
    %p739 = scmp.eq.s32.totalorder %s74, 0
    %p740 = por %p738, %p739
    %p741 = scmp.ne.s32.totalorder %s727, %s728
    %p742 = scmp.eq.s32.totalorder %s75, 1
    %p743 = por %p741, %p742
    %p745 = scmp.ne.s32.totalorder %s728, %s744
    %p746 = scmp.eq.s32.totalorder %s75, 0
    %p747 = por %p745, %p746
    %s748 = ssub.s32 %s69, %s76
    %p749 = scmp.eq.s32.totalorder %s748, 0
    %s751 = sadd.s32 %s750, 1
    %s752 = scalar_select %p749, %s750, %s751
    %p755 = pneg %p749
    %p756 = scmp.eq.s32.totalorder %s69, 1
    %p757 = por %p755, %p756
    %p758 = scmp.ne.s32.totalorder %s750, %s753
    %p759 = scmp.eq.s32.totalorder %s69, 0
    %p760 = por %p758, %p759
    %p761 = scmp.ne.s32.totalorder %s750, %s753
    %p762 = scmp.eq.s32.totalorder %s74, 1
    %p763 = por %p761, %p762
    %p764 = scmp.ne.s32.totalorder %s753, %s754
    %p765 = scmp.eq.s32.totalorder %s74, 0
    %p766 = por %p764, %p765
    %p767 = scmp.ne.s32.totalorder %s753, %s754
    %p768 = scmp.eq.s32.totalorder %s75, 1
    %p769 = por %p767, %p768
    %p771 = scmp.ne.s32.totalorder %s754, %s770
    %p772 = scmp.eq.s32.totalorder %s75, 0
    %p773 = por %p771, %p772
    %s774 = ssub.s32 %s69, %s76
    %p775 = scmp.eq.s32.totalorder %s774, 0
    %s777 = sadd.s32 %s776, 1
    %s778 = scalar_select %p775, %s776, %s777
    %p781 = pneg %p775
    %p782 = scmp.eq.s32.totalorder %s69, 1
    %p783 = por %p781, %p782
    %p784 = scmp.ne.s32.totalorder %s776, %s779
    %p785 = scmp.eq.s32.totalorder %s69, 0
    %p786 = por %p784, %p785
    %p787 = scmp.ne.s32.totalorder %s776, %s779
    %p788 = scmp.eq.s32.totalorder %s74, 1
    %p789 = por %p787, %p788
    %p790 = scmp.ne.s32.totalorder %s779, %s780
    %p791 = scmp.eq.s32.totalorder %s74, 0
    %p792 = por %p790, %p791
    %p793 = scmp.ne.s32.totalorder %s779, %s780
    %p794 = scmp.eq.s32.totalorder %s75, 1
    %p795 = por %p793, %p794
    %p797 = scmp.ne.s32.totalorder %s780, %s796
    %p798 = scmp.eq.s32.totalorder %s75, 0
    %p799 = por %p797, %p798
    %s800 = ssub.s32 %s69, %s76
    %p801 = scmp.eq.s32.totalorder %s800, 0
    %s803 = sadd.s32 %s802, 1
    %s804 = scalar_select %p801, %s802, %s803
    %p807 = pneg %p801
    %p808 = scmp.eq.s32.totalorder %s69, 1
    %p809 = por %p807, %p808
    %p810 = scmp.ne.s32.totalorder %s802, %s805
    %p811 = scmp.eq.s32.totalorder %s69, 0
    %p812 = por %p810, %p811
    %p813 = scmp.ne.s32.totalorder %s802, %s805
    %p814 = scmp.eq.s32.totalorder %s74, 1
    %p815 = por %p813, %p814
    %p816 = scmp.ne.s32.totalorder %s805, %s806
    %p817 = scmp.eq.s32.totalorder %s74, 0
    %p818 = por %p816, %p817
    %p819 = scmp.ne.s32.totalorder %s805, %s806
    %p820 = scmp.eq.s32.totalorder %s75, 1
    %p821 = por %p819, %p820
    %p823 = scmp.ne.s32.totalorder %s806, %s822
    %p824 = scmp.eq.s32.totalorder %s75, 0
    %p825 = por %p823, %p824
    %s826 = ssub.s32 %s69, %s76
    %p827 = scmp.eq.s32.totalorder %s826, 0
    %s829 = sadd.s32 %s828, 1
    %s830 = scalar_select %p827, %s828, %s829
    %p833 = pneg %p827
    %p834 = scmp.eq.s32.totalorder %s69, 1
    %p835 = por %p833, %p834
    %p836 = scmp.ne.s32.totalorder %s828, %s831
    %p837 = scmp.eq.s32.totalorder %s69, 0
    %p838 = por %p836, %p837
    %p839 = scmp.ne.s32.totalorder %s828, %s831
    %p840 = scmp.eq.s32.totalorder %s74, 1
    %p841 = por %p839, %p840
    %p842 = scmp.ne.s32.totalorder %s831, %s832
    %p843 = scmp.eq.s32.totalorder %s74, 0
    %p844 = por %p842, %p843
    %p845 = scmp.ne.s32.totalorder %s831, %s832
    %p846 = scmp.eq.s32.totalorder %s75, 1
    %p847 = por %p845, %p846
    %p849 = scmp.ne.s32.totalorder %s832, %s848
    %p850 = scmp.eq.s32.totalorder %s75, 0
    %p851 = por %p849, %p850
    %s852 = ssub.s32 %s69, %s76
    %p853 = scmp.eq.s32.totalorder %s852, 0
    %s855 = sadd.s32 %s854, 1
    %s856 = scalar_select %p853, %s854, %s855
    %p859 = pneg %p853
    %p860 = scmp.eq.s32.totalorder %s69, 1
    %p861 = por %p859, %p860
    %p862 = scmp.ne.s32.totalorder %s854, %s857
    %p863 = scmp.eq.s32.totalorder %s69, 0
    %p864 = por %p862, %p863
    %p865 = scmp.ne.s32.totalorder %s854, %s857
    %p866 = scmp.eq.s32.totalorder %s74, 1
    %p867 = por %p865, %p866
    %p868 = scmp.ne.s32.totalorder %s857, %s858
    %p869 = scmp.eq.s32.totalorder %s74, 0
    %p870 = por %p868, %p869
    %p871 = scmp.ne.s32.totalorder %s857, %s858
    %p872 = scmp.eq.s32.totalorder %s75, 1
    %p873 = por %p871, %p872
    %p875 = scmp.ne.s32.totalorder %s858, %s874
    %p876 = scmp.eq.s32.totalorder %s75, 0
    %p877 = por %p875, %p876
    %s878 = ssub.s32 %s69, %s76
    %p879 = scmp.eq.s32.totalorder %s878, 0
    %s881 = sadd.s32 %s880, 1
    %s882 = scalar_select %p879, %s880, %s881
    %p885 = pneg %p879
    %p886 = scmp.eq.s32.totalorder %s69, 1
    %p887 = por %p885, %p886
    %p888 = scmp.ne.s32.totalorder %s880, %s883
    %p889 = scmp.eq.s32.totalorder %s69, 0
    %p890 = por %p888, %p889
    %p891 = scmp.ne.s32.totalorder %s880, %s883
    %p892 = scmp.eq.s32.totalorder %s74, 1
    %p893 = por %p891, %p892
    %p894 = scmp.ne.s32.totalorder %s883, %s884
    %p895 = scmp.eq.s32.totalorder %s74, 0
    %p896 = por %p894, %p895
    %p897 = scmp.ne.s32.totalorder %s883, %s884
    %p898 = scmp.eq.s32.totalorder %s75, 1
    %p899 = por %p897, %p898
    %p901 = scmp.ne.s32.totalorder %s884, %s900
    %p902 = scmp.eq.s32.totalorder %s75, 0
    %p903 = por %p901, %p902
    %p904 = scmp.le.s32.totalorder 1, %s69
    %p905 = scmp.lt.s32.totalorder %s69, 3
    %p906 = pnand %p904, %p905
    %p907 = pneg %p906
    // Predicated region
    $region9: #{zssgan_forward.3} parent=5 // pred_check
      _
    $region10: #{zssgan_forward.3} parent=5 // pred_check_branch
      %909 = sbr.rel (%p906) target = $region12
    $region11: #{zssgan_forward.3} parent=5 // pred_region
      %s910 = ssub.s32 %s69, 1
      // Predicated region
      $region13: #{zssgan_forward.3} parent=11 // pred_check
        %p911 = pneg %p90
      $region14: #{zssgan_forward.3} parent=11 // pred_check_branch
        %913 = sbr.rel (%p911) target = $region16
      $region15: #{zssgan_forward.3} parent=11 // pred_region
        _
      $region16: #{zssgan_forward.3} parent=11 // pred_fallthru
        _
    $region12: #{zssgan_forward.3} parent=5 // pred_fallthru
      _
    %p914 = scmp.lt.s32.totalorder %s69, 2
    // Predicated region
    $region17: #{zssgan_forward.3} parent=5 // pred_check
      %p915 = pneg %p914
    $region18: #{zssgan_forward.3} parent=5 // pred_check_branch
      %917 = sbr.rel (%p915) target = $region20
    $region19: #{zssgan_forward.3} parent=5 // pred_region
      // Predicated region
      $region21: #{zssgan_forward.3} parent=19 // pred_check
        %p918 = pneg %p110
      $region22: #{zssgan_forward.3} parent=19 // pred_check_branch
        %920 = sbr.rel (%p918) target = $region24
      $region23: #{zssgan_forward.3} parent=19 // pred_region
        %p921 = scmp.lt.s32.totalorder %s69, 1
        %s922 = scalar_select %p921, %s69, 1
        %s923 = smul.addr %s922, 20
        %s924 = smul.addr %s923, 8
        %s925 = scalar_lea.vmem %s3, %s924
      $region24: #{zssgan_forward.3} parent=19 // pred_fallthru
        _
      // Predicated region
      $region25: #{zssgan_forward.3} parent=19 // pred_check
        %p926 = pneg %p136
      $region26: #{zssgan_forward.3} parent=19 // pred_check_branch
        %928 = sbr.rel (%p926) target = $region28
      $region27: #{zssgan_forward.3} parent=19 // pred_region
        %p929 = scmp.lt.s32.totalorder %s69, 1
        %s930 = scalar_select %p929, %s69, 1
        %s931 = smul.addr %s930, 20
        %s932 = smul.addr %s931, 8
        %s933 = scalar_lea.vmem %s5, %s932
      $region28: #{zssgan_forward.3} parent=19 // pred_fallthru
        _
      // Predicated region
      $region29: #{zssgan_forward.3} parent=19 // pred_check
        %p934 = pneg %p162
      $region30: #{zssgan_forward.3} parent=19 // pred_check_branch
        %936 = sbr.rel (%p934) target = $region32
      $region31: #{zssgan_forward.3} parent=19 // pred_region
        %p937 = scmp.lt.s32.totalorder %s69, 1
        %s938 = scalar_select %p937, %s69, 1
        %s939 = smul.addr %s938, 4
        %s940 = smul.addr %s939, 8
        %s941 = scalar_lea.vmem %s7, %s940
      $region32: #{zssgan_forward.3} parent=19 // pred_fallthru
        _
      // Predicated region
      $region33: #{zssgan_forward.3} parent=19 // pred_check
        %p942 = pneg %p188
      $region34: #{zssgan_forward.3} parent=19 // pred_check_branch
        %944 = sbr.rel (%p942) target = $region36
      $region35: #{zssgan_forward.3} parent=19 // pred_region
        %p945 = scmp.lt.s32.totalorder %s69, 1
        %s946 = scalar_select %p945, %s69, 1
        %s947 = smul.addr %s946, 12
        %s948 = smul.addr %s947, 8
        %s949 = scalar_lea.vmem %s9, %s948
      $region36: #{zssgan_forward.3} parent=19 // pred_fallthru
        _
      // Predicated region
      $region37: #{zssgan_forward.3} parent=19 // pred_check
        %p950 = pneg %p214
      $region38: #{zssgan_forward.3} parent=19 // pred_check_branch
        %952 = sbr.rel (%p950) target = $region40
      $region39: #{zssgan_forward.3} parent=19 // pred_region
        %p953 = scmp.lt.s32.totalorder %s69, 1
        %s954 = scalar_select %p953, %s69, 1
        %s955 = smul.addr %s954, 4
        %s956 = smul.addr %s955, 8
        %s957 = scalar_lea.vmem %s11, %s956
      $region40: #{zssgan_forward.3} parent=19 // pred_fallthru
        _
      // Predicated region
      $region41: #{zssgan_forward.3} parent=19 // pred_check
        %p958 = pneg %p240
      $region42: #{zssgan_forward.3} parent=19 // pred_check_branch
        %960 = sbr.rel (%p958) target = $region44
      $region43: #{zssgan_forward.3} parent=19 // pred_region
        %p961 = scmp.lt.s32.totalorder %s69, 1
        %s962 = scalar_select %p961, %s69, 1
        %s963 = smul.addr %s962, 4
        %s964 = smul.addr %s963, 8
        %s965 = scalar_lea.vmem %s13, %s964
      $region44: #{zssgan_forward.3} parent=19 // pred_fallthru
        _
      // Predicated region
      $region45: #{zssgan_forward.3} parent=19 // pred_check
        %p966 = pneg %p266
      $region46: #{zssgan_forward.3} parent=19 // pred_check_branch
        %968 = sbr.rel (%p966) target = $region48
      $region47: #{zssgan_forward.3} parent=19 // pred_region
        %p969 = scmp.lt.s32.totalorder %s69, 1
        %s970 = scalar_select %p969, %s69, 1
        %s971 = scalar_lea.vmem %s15, %s970
      $region48: #{zssgan_forward.3} parent=19 // pred_fallthru
        _
      // Predicated region
      $region49: #{zssgan_forward.3} parent=19 // pred_check
        %p972 = pneg %p292
      $region50: #{zssgan_forward.3} parent=19 // pred_check_branch
        %974 = sbr.rel (%p972) target = $region52
      $region51: #{zssgan_forward.3} parent=19 // pred_region
        %p975 = scmp.lt.s32.totalorder %s69, 1
        %s976 = scalar_select %p975, %s69, 1
        %s977 = smul.addr %s976, 6
        %s978 = smul.addr %s977, 8
        %s979 = scalar_lea.vmem %s17, %s978
      $region52: #{zssgan_forward.3} parent=19 // pred_fallthru
        _
      // Predicated region
      $region53: #{zssgan_forward.3} parent=19 // pred_check
        %p980 = pneg %p318
      $region54: #{zssgan_forward.3} parent=19 // pred_check_branch
        %982 = sbr.rel (%p980) target = $region56
      $region55: #{zssgan_forward.3} parent=19 // pred_region
        %p983 = scmp.lt.s32.totalorder %s69, 1
        %s984 = scalar_select %p983, %s69, 1
        %s985 = smul.addr %s984, 2
        %s986 = smul.addr %s985, 8
        %s987 = scalar_lea.vmem %s19, %s986
      $region56: #{zssgan_forward.3} parent=19 // pred_fallthru
        _
      // Predicated region
      $region57: #{zssgan_forward.3} parent=19 // pred_check
        %p988 = pneg %p344
      $region58: #{zssgan_forward.3} parent=19 // pred_check_branch
        %990 = sbr.rel (%p988) target = $region60
      $region59: #{zssgan_forward.3} parent=19 // pred_region
        %p991 = scmp.lt.s32.totalorder %s69, 1
        %s992 = scalar_select %p991, %s69, 1
        %s993 = smul.addr %s992, 2
        %s994 = smul.addr %s993, 8
        %s995 = scalar_lea.vmem %s21, %s994
      $region60: #{zssgan_forward.3} parent=19 // pred_fallthru
        _
      // Predicated region
      $region61: #{zssgan_forward.3} parent=19 // pred_check
        %p996 = pneg %p370
      $region62: #{zssgan_forward.3} parent=19 // pred_check_branch
        %998 = sbr.rel (%p996) target = $region64
      $region63: #{zssgan_forward.3} parent=19 // pred_region
        %p999 = scmp.lt.s32.totalorder %s69, 1
        %s1000 = scalar_select %p999, %s69, 1
        %s1001 = scalar_lea.vmem %s23, %s1000
      $region64: #{zssgan_forward.3} parent=19 // pred_fallthru
        _
      // Predicated region
      $region65: #{zssgan_forward.3} parent=19 // pred_check
        %p1002 = pneg %p396
      $region66: #{zssgan_forward.3} parent=19 // pred_check_branch
        %1004 = sbr.rel (%p1002) target = $region68
      $region67: #{zssgan_forward.3} parent=19 // pred_region
        %p1005 = scmp.lt.s32.totalorder %s69, 1
        %s1006 = scalar_select %p1005, %s69, 1
        %s1007 = smul.addr %s1006, 4
        %s1008 = smul.addr %s1007, 8
        %s1009 = scalar_lea.vmem %s25, %s1008
      $region68: #{zssgan_forward.3} parent=19 // pred_fallthru
        _
      // Predicated region
      $region69: #{zssgan_forward.3} parent=19 // pred_check
        %p1010 = pneg %p422
      $region70: #{zssgan_forward.3} parent=19 // pred_check_branch
        %1012 = sbr.rel (%p1010) target = $region72
      $region71: #{zssgan_forward.3} parent=19 // pred_region
        %p1013 = scmp.lt.s32.totalorder %s69, 1
        %s1014 = scalar_select %p1013, %s69, 1
        %s1015 = smul.addr %s1014, 2
        %s1016 = smul.addr %s1015, 8
        %s1017 = scalar_lea.vmem %s27, %s1016
      $region72: #{zssgan_forward.3} parent=19 // pred_fallthru
        _
      // Predicated region
      $region73: #{zssgan_forward.3} parent=19 // pred_check
        %p1018 = pneg %p448
      $region74: #{zssgan_forward.3} parent=19 // pred_check_branch
        %1020 = sbr.rel (%p1018) target = $region76
      $region75: #{zssgan_forward.3} parent=19 // pred_region
        %p1021 = scmp.lt.s32.totalorder %s69, 1
        %s1022 = scalar_select %p1021, %s69, 1
        %s1023 = smul.addr %s1022, 2
        %s1024 = smul.addr %s1023, 8
        %s1025 = scalar_lea.vmem %s29, %s1024
      $region76: #{zssgan_forward.3} parent=19 // pred_fallthru
        _
      // Predicated region
      $region77: #{zssgan_forward.3} parent=19 // pred_check
        %p1026 = pneg %p474
      $region78: #{zssgan_forward.3} parent=19 // pred_check_branch
        %1028 = sbr.rel (%p1026) target = $region80
      $region79: #{zssgan_forward.3} parent=19 // pred_region
        %p1029 = scmp.lt.s32.totalorder %s69, 1
        %s1030 = scalar_select %p1029, %s69, 1
        %s1031 = scalar_lea.vmem %s31, %s1030
      $region80: #{zssgan_forward.3} parent=19 // pred_fallthru
        _
      // Predicated region
      $region81: #{zssgan_forward.3} parent=19 // pred_check
        %p1032 = pneg %p500
      $region82: #{zssgan_forward.3} parent=19 // pred_check_branch
        %1034 = sbr.rel (%p1032) target = $region84
      $region83: #{zssgan_forward.3} parent=19 // pred_region
        %p1035 = scmp.lt.s32.totalorder %s69, 1
        %s1036 = scalar_select %p1035, %s69, 1
        %s1037 = smul.addr %s1036, 2
        %s1038 = smul.addr %s1037, 8
        %s1039 = scalar_lea.vmem %s33, %s1038
      $region84: #{zssgan_forward.3} parent=19 // pred_fallthru
        _
      // Predicated region
      $region85: #{zssgan_forward.3} parent=19 // pred_check
        %p1040 = pneg %p526
      $region86: #{zssgan_forward.3} parent=19 // pred_check_branch
        %1042 = sbr.rel (%p1040) target = $region88
      $region87: #{zssgan_forward.3} parent=19 // pred_region
        %p1043 = scmp.lt.s32.totalorder %s69, 1
        %s1044 = scalar_select %p1043, %s69, 1
        %s1045 = smul.addr %s1044, 8
        %s1046 = scalar_lea.vmem %s35, %s1045
      $region88: #{zssgan_forward.3} parent=19 // pred_fallthru
        _
      // Predicated region
      $region89: #{zssgan_forward.3} parent=19 // pred_check
        %p1047 = pneg %p552
      $region90: #{zssgan_forward.3} parent=19 // pred_check_branch
        %1049 = sbr.rel (%p1047) target = $region92
      $region91: #{zssgan_forward.3} parent=19 // pred_region
        %p1050 = scmp.lt.s32.totalorder %s69, 1
        %s1051 = scalar_select %p1050, %s69, 1
        %s1052 = smul.addr %s1051, 8
        %s1053 = scalar_lea.vmem %s37, %s1052
      $region92: #{zssgan_forward.3} parent=19 // pred_fallthru
        _
      // Predicated region
      $region93: #{zssgan_forward.3} parent=19 // pred_check
        %p1054 = pneg %p578
      $region94: #{zssgan_forward.3} parent=19 // pred_check_branch
        %1056 = sbr.rel (%p1054) target = $region96
      $region95: #{zssgan_forward.3} parent=19 // pred_region
        %p1057 = scmp.lt.s32.totalorder %s69, 1
        %s1058 = scalar_select %p1057, %s69, 1
        %s1059 = smul.addr %s1058, 4
        %s1060 = scalar_lea.vmem %s39, %s1059
      $region96: #{zssgan_forward.3} parent=19 // pred_fallthru
        _
      // Predicated region
      $region97: #{zssgan_forward.3} parent=19 // pred_check
        %p1061 = pneg %p604
      $region98: #{zssgan_forward.3} parent=19 // pred_check_branch
        %1063 = sbr.rel (%p1061) target = $region100
      $region99: #{zssgan_forward.3} parent=19 // pred_region
        %p1064 = scmp.lt.s32.totalorder %s69, 1
        %s1065 = scalar_select %p1064, %s69, 1
        %s1066 = smul.addr %s1065, 8
        %s1067 = scalar_lea.vmem %s41, %s1066
      $region100: #{zssgan_forward.3} parent=19 // pred_fallthru
        _
      // Predicated region
      $region101: #{zssgan_forward.3} parent=19 // pred_check
        %p1068 = pneg %p630
      $region102: #{zssgan_forward.3} parent=19 // pred_check_branch
        %1070 = sbr.rel (%p1068) target = $region104
      $region103: #{zssgan_forward.3} parent=19 // pred_region
        %p1071 = scmp.lt.s32.totalorder %s69, 1
        %s1072 = scalar_select %p1071, %s69, 1
        %s1073 = smul.addr %s1072, 8
        %s1074 = scalar_lea.vmem %s43, %s1073
      $region104: #{zssgan_forward.3} parent=19 // pred_fallthru
        _
      // Predicated region
      $region105: #{zssgan_forward.3} parent=19 // pred_check
        %p1075 = pneg %p656
      $region106: #{zssgan_forward.3} parent=19 // pred_check_branch
        %1077 = sbr.rel (%p1075) target = $region108
      $region107: #{zssgan_forward.3} parent=19 // pred_region
        %p1078 = scmp.lt.s32.totalorder %s69, 1
        %s1079 = scalar_select %p1078, %s69, 1
        %s1080 = smul.addr %s1079, 8
        %s1081 = scalar_lea.vmem %s45, %s1080
      $region108: #{zssgan_forward.3} parent=19 // pred_fallthru
        _
      // Predicated region
      $region109: #{zssgan_forward.3} parent=19 // pred_check
        %p1082 = pneg %p682
      $region110: #{zssgan_forward.3} parent=19 // pred_check_branch
        %1084 = sbr.rel (%p1082) target = $region112
      $region111: #{zssgan_forward.3} parent=19 // pred_region
        %p1085 = scmp.lt.s32.totalorder %s69, 1
        %s1086 = scalar_select %p1085, %s69, 1
        %s1087 = smul.addr %s1086, 4
        %s1088 = scalar_lea.vmem %s47, %s1087
      $region112: #{zssgan_forward.3} parent=19 // pred_fallthru
        _
      // Predicated region
      $region113: #{zssgan_forward.3} parent=19 // pred_check
        %p1089 = pneg %p708
      $region114: #{zssgan_forward.3} parent=19 // pred_check_branch
        %1091 = sbr.rel (%p1089) target = $region116
      $region115: #{zssgan_forward.3} parent=19 // pred_region
        %p1092 = scmp.lt.s32.totalorder %s69, 1
        %s1093 = scalar_select %p1092, %s69, 1
        %s1094 = smul.addr %s1093, 4
        %s1095 = scalar_lea.vmem %s49, %s1094
      $region116: #{zssgan_forward.3} parent=19 // pred_fallthru
        _
      // Predicated region
      $region117: #{zssgan_forward.3} parent=19 // pred_check
        %p1096 = pneg %p734
      $region118: #{zssgan_forward.3} parent=19 // pred_check_branch
        %1098 = sbr.rel (%p1096) target = $region120
      $region119: #{zssgan_forward.3} parent=19 // pred_region
        %p1099 = scmp.lt.s32.totalorder %s69, 1
        %s1100 = scalar_select %p1099, %s69, 1
        %s1101 = smul.addr %s1100, 4
        %s1102 = scalar_lea.vmem %s51, %s1101
      $region120: #{zssgan_forward.3} parent=19 // pred_fallthru
        _
      // Predicated region
      $region121: #{zssgan_forward.3} parent=19 // pred_check
        %p1103 = pneg %p760
      $region122: #{zssgan_forward.3} parent=19 // pred_check_branch
        %1105 = sbr.rel (%p1103) target = $region124
      $region123: #{zssgan_forward.3} parent=19 // pred_region
        %p1106 = scmp.lt.s32.totalorder %s69, 1
        %s1107 = scalar_select %p1106, %s69, 1
        %s1108 = smul.addr %s1107, 4
        %s1109 = scalar_lea.vmem %s53, %s1108
      $region124: #{zssgan_forward.3} parent=19 // pred_fallthru
        _
      // Predicated region
      $region125: #{zssgan_forward.3} parent=19 // pred_check
        %p1110 = pneg %p786
      $region126: #{zssgan_forward.3} parent=19 // pred_check_branch
        %1112 = sbr.rel (%p1110) target = $region128
      $region127: #{zssgan_forward.3} parent=19 // pred_region
        %p1113 = scmp.lt.s32.totalorder %s69, 1
        %s1114 = scalar_select %p1113, %s69, 1
        %s1115 = smul.addr %s1114, 4
        %s1116 = scalar_lea.vmem %s55, %s1115
      $region128: #{zssgan_forward.3} parent=19 // pred_fallthru
        _
      // Predicated region
      $region129: #{zssgan_forward.3} parent=19 // pred_check
        %p1117 = pneg %p812
      $region130: #{zssgan_forward.3} parent=19 // pred_check_branch
        %1119 = sbr.rel (%p1117) target = $region132
      $region131: #{zssgan_forward.3} parent=19 // pred_region
        %p1120 = scmp.lt.s32.totalorder %s69, 1
        %s1121 = scalar_select %p1120, %s69, 1
        %s1122 = smul.addr %s1121, 4
        %s1123 = scalar_lea.vmem %s57, %s1122
      $region132: #{zssgan_forward.3} parent=19 // pred_fallthru
        _
      // Predicated region
      $region133: #{zssgan_forward.3} parent=19 // pred_check
        %p1124 = pneg %p838
      $region134: #{zssgan_forward.3} parent=19 // pred_check_branch
        %1126 = sbr.rel (%p1124) target = $region136
      $region135: #{zssgan_forward.3} parent=19 // pred_region
        %p1127 = scmp.lt.s32.totalorder %s69, 1
        %s1128 = scalar_select %p1127, %s69, 1
        %s1129 = smul.addr %s1128, 4
        %s1130 = scalar_lea.vmem %s59, %s1129
      $region136: #{zssgan_forward.3} parent=19 // pred_fallthru
        _
      // Predicated region
      $region137: #{zssgan_forward.3} parent=19 // pred_check
        %p1131 = pneg %p864
      $region138: #{zssgan_forward.3} parent=19 // pred_check_branch
        %1133 = sbr.rel (%p1131) target = $region140
      $region139: #{zssgan_forward.3} parent=19 // pred_region
        %p1134 = scmp.lt.s32.totalorder %s69, 1
        %s1135 = scalar_select %p1134, %s69, 1
        %s1136 = scalar_lea.vmem %s61, %s1135
      $region140: #{zssgan_forward.3} parent=19 // pred_fallthru
        _
    $region20: #{zssgan_forward.3} parent=5 // pred_fallthru
      _
    %p1137 = scmp.le.s32.totalorder 1, %s69
    %p1138 = scmp.lt.s32.totalorder %s69, 3
    %p1139 = pnand %p1137, %p1138
    %p1140 = pneg %p1139
    // Predicated region
    $region141: #{zssgan_forward.3} parent=5 // pred_check
      _
    $region142: #{zssgan_forward.3} parent=5 // pred_check_branch
      %1142 = sbr.rel (%p1139) target = $region144
    $region143: #{zssgan_forward.3} parent=5 // pred_region
      %s1143 = ssub.s32 %s69, 1
      %p1144 = pneg %p90
      %p1145 = pneg %p87
      %p1146 = scmp.lt.s32.totalorder %s74, 1
      %s1147 = scalar_select %p1146, %s74, 1
      %s1148 = smul.addr %s1147, 20
      %s1149 = smul.addr %s1148, 8
      %s1150 = scalar_lea.vmem %s3, %s1149
      %p1151 = pneg %p116
      %p1152 = pneg %p113
      %p1153 = scmp.lt.s32.totalorder %s74, 1
      %s1154 = scalar_select %p1153, %s74, 1
      %s1155 = smul.addr %s1154, 20
      %s1156 = smul.addr %s1155, 8
      %s1157 = scalar_lea.vmem %s5, %s1156
      %p1158 = pneg %p142
      %p1159 = pneg %p139
      %p1160 = scmp.lt.s32.totalorder %s74, 1
      %s1161 = scalar_select %p1160, %s74, 1
      %s1162 = smul.addr %s1161, 4
      %s1163 = smul.addr %s1162, 8
      %s1164 = scalar_lea.vmem %s7, %s1163
      %p1165 = pneg %p168
      %p1166 = pneg %p165
      %p1167 = scmp.lt.s32.totalorder %s74, 1
      %s1168 = scalar_select %p1167, %s74, 1
      %s1169 = smul.addr %s1168, 12
      %s1170 = smul.addr %s1169, 8
      %s1171 = scalar_lea.vmem %s9, %s1170
      %p1172 = pneg %p194
      %p1173 = pneg %p191
      %p1174 = scmp.lt.s32.totalorder %s74, 1
      %s1175 = scalar_select %p1174, %s74, 1
      %s1176 = smul.addr %s1175, 4
      %s1177 = smul.addr %s1176, 8
      %s1178 = scalar_lea.vmem %s11, %s1177
      %p1179 = pneg %p220
      %p1180 = pneg %p217
      %p1181 = scmp.lt.s32.totalorder %s74, 1
      %s1182 = scalar_select %p1181, %s74, 1
      %s1183 = smul.addr %s1182, 4
      %s1184 = smul.addr %s1183, 8
      %s1185 = scalar_lea.vmem %s13, %s1184
      %p1186 = pneg %p246
      %p1187 = pneg %p243
      %p1188 = scmp.lt.s32.totalorder %s74, 1
      %s1189 = scalar_select %p1188, %s74, 1
      %s1190 = scalar_lea.vmem %s15, %s1189
      %p1191 = pneg %p272
      %p1192 = pneg %p269
      %p1193 = scmp.lt.s32.totalorder %s74, 1
      %s1194 = scalar_select %p1193, %s74, 1
      %s1195 = smul.addr %s1194, 6
      %s1196 = smul.addr %s1195, 8
      %s1197 = scalar_lea.vmem %s17, %s1196
      %p1198 = pneg %p298
      %p1199 = pneg %p295
      %p1200 = scmp.lt.s32.totalorder %s74, 1
      %s1201 = scalar_select %p1200, %s74, 1
      %s1202 = smul.addr %s1201, 2
      %s1203 = smul.addr %s1202, 8
      %s1204 = scalar_lea.vmem %s19, %s1203
      %p1205 = pneg %p324
      %p1206 = pneg %p321
      %p1207 = scmp.lt.s32.totalorder %s74, 1
      %s1208 = scalar_select %p1207, %s74, 1
      %s1209 = smul.addr %s1208, 2
      %s1210 = smul.addr %s1209, 8
      %s1211 = scalar_lea.vmem %s21, %s1210
      %p1212 = pneg %p350
      %p1213 = pneg %p347
      %p1214 = scmp.lt.s32.totalorder %s74, 1
      %s1215 = scalar_select %p1214, %s74, 1
      %s1216 = scalar_lea.vmem %s23, %s1215
      %p1217 = pneg %p376
      %p1218 = pneg %p373
      %p1219 = scmp.lt.s32.totalorder %s74, 1
      %s1220 = scalar_select %p1219, %s74, 1
      %s1221 = smul.addr %s1220, 4
      %s1222 = smul.addr %s1221, 8
      %s1223 = scalar_lea.vmem %s25, %s1222
      %p1224 = pneg %p402
      %p1225 = pneg %p399
      %p1226 = scmp.lt.s32.totalorder %s74, 1
      %s1227 = scalar_select %p1226, %s74, 1
      %s1228 = smul.addr %s1227, 2
      %s1229 = smul.addr %s1228, 8
      %s1230 = scalar_lea.vmem %s27, %s1229
      %p1231 = pneg %p428
      %p1232 = pneg %p425
      %p1233 = scmp.lt.s32.totalorder %s74, 1
      %s1234 = scalar_select %p1233, %s74, 1
      %s1235 = smul.addr %s1234, 2
      %s1236 = smul.addr %s1235, 8
      %s1237 = scalar_lea.vmem %s29, %s1236
      %p1238 = pneg %p454
      %p1239 = pneg %p451
      %p1240 = scmp.lt.s32.totalorder %s74, 1
      %s1241 = scalar_select %p1240, %s74, 1
      %s1242 = scalar_lea.vmem %s31, %s1241
      %p1243 = pneg %p480
      %p1244 = pneg %p477
      %p1245 = scmp.lt.s32.totalorder %s74, 1
      %s1246 = scalar_select %p1245, %s74, 1
      %s1247 = smul.addr %s1246, 2
      %s1248 = smul.addr %s1247, 8
      %s1249 = scalar_lea.vmem %s33, %s1248
      %p1250 = pneg %p506
      %p1251 = pneg %p503
      %p1252 = scmp.lt.s32.totalorder %s74, 1
      %s1253 = scalar_select %p1252, %s74, 1
      %s1254 = smul.addr %s1253, 8
      %s1255 = scalar_lea.vmem %s35, %s1254
      %p1256 = pneg %p532
      %p1257 = pneg %p529
      %p1258 = scmp.lt.s32.totalorder %s74, 1
      %s1259 = scalar_select %p1258, %s74, 1
      %s1260 = smul.addr %s1259, 8
      %s1261 = scalar_lea.vmem %s37, %s1260
      %p1262 = pneg %p558
      %p1263 = pneg %p555
      %p1264 = scmp.lt.s32.totalorder %s74, 1
      %s1265 = scalar_select %p1264, %s74, 1
      %s1266 = smul.addr %s1265, 4
      %s1267 = scalar_lea.vmem %s39, %s1266
      %p1268 = pneg %p584
      %p1269 = pneg %p581
      %p1270 = scmp.lt.s32.totalorder %s74, 1
      %s1271 = scalar_select %p1270, %s74, 1
      %s1272 = smul.addr %s1271, 8
      %s1273 = scalar_lea.vmem %s41, %s1272
      %p1274 = pneg %p610
      %p1275 = pneg %p607
      %p1276 = scmp.lt.s32.totalorder %s74, 1
      %s1277 = scalar_select %p1276, %s74, 1
      %s1278 = smul.addr %s1277, 8
      %s1279 = scalar_lea.vmem %s43, %s1278
      %p1280 = pneg %p636
      %p1281 = pneg %p633
      %p1282 = scmp.lt.s32.totalorder %s74, 1
      %s1283 = scalar_select %p1282, %s74, 1
      %s1284 = smul.addr %s1283, 8
      %s1285 = scalar_lea.vmem %s45, %s1284
      %p1286 = pneg %p662
      %p1287 = pneg %p659
      %p1288 = scmp.lt.s32.totalorder %s74, 1
      %s1289 = scalar_select %p1288, %s74, 1
      %s1290 = smul.addr %s1289, 4
      %s1291 = scalar_lea.vmem %s47, %s1290
      %p1292 = pneg %p688
      %p1293 = pneg %p685
      %p1294 = scmp.lt.s32.totalorder %s74, 1
      %s1295 = scalar_select %p1294, %s74, 1
      %s1296 = smul.addr %s1295, 4
      %s1297 = scalar_lea.vmem %s49, %s1296
      %p1298 = pneg %p714
      %p1299 = pneg %p711
      %p1300 = scmp.lt.s32.totalorder %s74, 1
      %s1301 = scalar_select %p1300, %s74, 1
      %s1302 = smul.addr %s1301, 4
      %s1303 = scalar_lea.vmem %s51, %s1302
      %p1304 = pneg %p740
      %p1305 = pneg %p737
      %p1306 = scmp.lt.s32.totalorder %s74, 1
      %s1307 = scalar_select %p1306, %s74, 1
      %s1308 = smul.addr %s1307, 4
      %s1309 = scalar_lea.vmem %s53, %s1308
      %p1310 = pneg %p766
      %p1311 = pneg %p763
      %p1312 = scmp.lt.s32.totalorder %s74, 1
      %s1313 = scalar_select %p1312, %s74, 1
      %s1314 = smul.addr %s1313, 4
      %s1315 = scalar_lea.vmem %s55, %s1314
      %p1316 = pneg %p792
      %p1317 = pneg %p789
      %p1318 = scmp.lt.s32.totalorder %s74, 1
      %s1319 = scalar_select %p1318, %s74, 1
      %s1320 = smul.addr %s1319, 4
      %s1321 = scalar_lea.vmem %s57, %s1320
      %p1322 = pneg %p818
      %p1323 = pneg %p815
      %p1324 = scmp.lt.s32.totalorder %s74, 1
      %s1325 = scalar_select %p1324, %s74, 1
      %s1326 = smul.addr %s1325, 4
      %s1327 = scalar_lea.vmem %s59, %s1326
      %p1328 = pneg %p844
      %p1329 = pneg %p841
      %p1330 = scmp.lt.s32.totalorder %s74, 1
      %s1331 = scalar_select %p1330, %s74, 1
      %s1332 = scalar_lea.vmem %s61, %s1331
      %p1333 = pneg %p870
      %p1334 = pneg %p867
      %p1335 = pneg %p896
      %p1336 = pneg %p893
      %p1337 = scmp.lt.s32.totalorder %s74, 1
      %s1338 = scalar_select %p1337, %s74, 1
      %s1339 = smul.addr %s1338, 4
      %s1340 = smul.addr %s1339, 4
      %s1341 = scalar_lea.vmem %s63, %s1340
      %p1342 = scmp.lt.s32.totalorder %s74, 1
      %s1343 = scalar_select %p1342, %s74, 1
      %s1344 = smul.addr %s1343, 20
      %s1345 = smul.addr %s1344, 8
      %s1346 = scalar_lea.vmem %s3, %s1345
      %p1347 = scmp.lt.s32.totalorder %s74, 1
      %s1348 = scalar_select %p1347, %s74, 1
      %s1349 = smul.addr %s1348, 20
      %s1350 = smul.addr %s1349, 8
      %s1351 = scalar_lea.vmem %s5, %s1350
      %p1352 = scmp.lt.s32.totalorder %s74, 1
      %s1353 = scalar_select %p1352, %s74, 1
      %s1354 = smul.addr %s1353, 4
      %s1355 = smul.addr %s1354, 8
      %s1356 = scalar_lea.vmem %s7, %s1355
      %p1357 = scmp.lt.s32.totalorder %s74, 1
      %s1358 = scalar_select %p1357, %s74, 1
      %s1359 = smul.addr %s1358, 12
      %s1360 = smul.addr %s1359, 8
      %s1361 = scalar_lea.vmem %s9, %s1360
      %p1362 = scmp.lt.s32.totalorder %s74, 1
      %s1363 = scalar_select %p1362, %s74, 1
      %s1364 = smul.addr %s1363, 4
      %s1365 = smul.addr %s1364, 8
      %s1366 = scalar_lea.vmem %s11, %s1365
      %p1367 = scmp.lt.s32.totalorder %s74, 1
      %s1368 = scalar_select %p1367, %s74, 1
      %s1369 = smul.addr %s1368, 4
      %s1370 = smul.addr %s1369, 8
      %s1371 = scalar_lea.vmem %s13, %s1370
      %p1372 = scmp.lt.s32.totalorder %s74, 1
      %s1373 = scalar_select %p1372, %s74, 1
      %s1374 = scalar_lea.vmem %s15, %s1373
      %p1375 = scmp.lt.s32.totalorder %s74, 1
      %s1376 = scalar_select %p1375, %s74, 1
      %s1377 = smul.addr %s1376, 6
      %s1378 = smul.addr %s1377, 8
      %s1379 = scalar_lea.vmem %s17, %s1378
      %p1380 = scmp.lt.s32.totalorder %s74, 1
      %s1381 = scalar_select %p1380, %s74, 1
      %s1382 = smul.addr %s1381, 2
      %s1383 = smul.addr %s1382, 8
      %s1384 = scalar_lea.vmem %s19, %s1383
      %p1385 = scmp.lt.s32.totalorder %s74, 1
      %s1386 = scalar_select %p1385, %s74, 1
      %s1387 = smul.addr %s1386, 2
      %s1388 = smul.addr %s1387, 8
      %s1389 = scalar_lea.vmem %s21, %s1388
      %p1390 = scmp.lt.s32.totalorder %s74, 1
      %s1391 = scalar_select %p1390, %s74, 1
      %s1392 = scalar_lea.vmem %s23, %s1391
      %p1393 = scmp.lt.s32.totalorder %s74, 1
      %s1394 = scalar_select %p1393, %s74, 1
      %s1395 = smul.addr %s1394, 4
      %s1396 = smul.addr %s1395, 8
      %s1397 = scalar_lea.vmem %s25, %s1396
      %p1398 = scmp.lt.s32.totalorder %s74, 1
      %s1399 = scalar_select %p1398, %s74, 1
      %s1400 = smul.addr %s1399, 2
      %s1401 = smul.addr %s1400, 8
      %s1402 = scalar_lea.vmem %s27, %s1401
      %p1403 = scmp.lt.s32.totalorder %s74, 1
      %s1404 = scalar_select %p1403, %s74, 1
      %s1405 = smul.addr %s1404, 2
      %s1406 = smul.addr %s1405, 8
      %s1407 = scalar_lea.vmem %s29, %s1406
      %p1408 = scmp.lt.s32.totalorder %s74, 1
      %s1409 = scalar_select %p1408, %s74, 1
      %s1410 = scalar_lea.vmem %s31, %s1409
      %p1411 = scmp.lt.s32.totalorder %s74, 1
      %s1412 = scalar_select %p1411, %s74, 1
      %s1413 = smul.addr %s1412, 2
      %s1414 = smul.addr %s1413, 8
      %s1415 = scalar_lea.vmem %s33, %s1414
      %p1416 = scmp.lt.s32.totalorder %s74, 1
      %s1417 = scalar_select %p1416, %s74, 1
      %s1418 = smul.addr %s1417, 8
      %s1419 = scalar_lea.vmem %s35, %s1418
      %p1420 = scmp.lt.s32.totalorder %s74, 1
      %s1421 = scalar_select %p1420, %s74, 1
      %s1422 = smul.addr %s1421, 8
      %s1423 = scalar_lea.vmem %s37, %s1422
      %p1424 = scmp.lt.s32.totalorder %s74, 1
      %s1425 = scalar_select %p1424, %s74, 1
      %s1426 = smul.addr %s1425, 4
      %s1427 = scalar_lea.vmem %s39, %s1426
      %p1428 = scmp.lt.s32.totalorder %s74, 1
      %s1429 = scalar_select %p1428, %s74, 1
      %s1430 = smul.addr %s1429, 8
      %s1431 = scalar_lea.vmem %s41, %s1430
      %p1432 = scmp.lt.s32.totalorder %s74, 1
      %s1433 = scalar_select %p1432, %s74, 1
      %s1434 = smul.addr %s1433, 8
      %s1435 = scalar_lea.vmem %s43, %s1434
      %p1436 = scmp.lt.s32.totalorder %s74, 1
      %s1437 = scalar_select %p1436, %s74, 1
      %s1438 = smul.addr %s1437, 8
      %s1439 = scalar_lea.vmem %s45, %s1438
      %p1440 = scmp.lt.s32.totalorder %s74, 1
      %s1441 = scalar_select %p1440, %s74, 1
      %s1442 = smul.addr %s1441, 4
      %s1443 = scalar_lea.vmem %s47, %s1442
      %p1444 = scmp.lt.s32.totalorder %s74, 1
      %s1445 = scalar_select %p1444, %s74, 1
      %s1446 = smul.addr %s1445, 4
      %s1447 = scalar_lea.vmem %s49, %s1446
      %p1448 = scmp.lt.s32.totalorder %s74, 1
      %s1449 = scalar_select %p1448, %s74, 1
      %s1450 = smul.addr %s1449, 4
      %s1451 = scalar_lea.vmem %s51, %s1450
      %p1452 = scmp.lt.s32.totalorder %s74, 1
      %s1453 = scalar_select %p1452, %s74, 1
      %s1454 = smul.addr %s1453, 4
      %s1455 = scalar_lea.vmem %s53, %s1454
      %p1456 = scmp.lt.s32.totalorder %s74, 1
      %s1457 = scalar_select %p1456, %s74, 1
      %s1458 = smul.addr %s1457, 4
      %s1459 = scalar_lea.vmem %s55, %s1458
      %p1460 = scmp.lt.s32.totalorder %s74, 1
      %s1461 = scalar_select %p1460, %s74, 1
      %s1462 = smul.addr %s1461, 4
      %s1463 = scalar_lea.vmem %s57, %s1462
      %p1464 = scmp.lt.s32.totalorder %s74, 1
      %s1465 = scalar_select %p1464, %s74, 1
      %s1466 = smul.addr %s1465, 4
      %s1467 = scalar_lea.vmem %s59, %s1466
      %p1468 = scmp.lt.s32.totalorder %s74, 1
      %s1469 = scalar_select %p1468, %s74, 1
      %s1470 = scalar_lea.vmem %s61, %s1469
      %p1471 = scmp.lt.s32.totalorder %s74, 1
      %s1472 = scalar_select %p1471, %s74, 1
      %s1473 = smul.addr %s1472, 4
      %s1474 = smul.addr %s1473, 4
      %s1475 = scalar_lea.vmem %s63, %s1474
      %v1476 = vld [vmem:[%s1] sm:$0xff]
      %v1477 = vld [vmem:[%s1 + $0x8] sm:$0xff]
      %v1478 = vld [vmem:[%s1 + $0x10] sm:$0xff]
      %v1479 = vld [vmem:[%s1 + $0x18] sm:$0xff]
      %v1480 = vld [vmem:[%s1 + $0x20] sm:$0xff]
      %v1481 = vld [vmem:[%s1 + $0x28] sm:$0xff]
      %v1482 = vld [vmem:[%s1 + $0x30] sm:$0xff]
      %v1483 = vld [vmem:[%s1 + $0x38] sm:$0xff]
      %v1484 = vld [vmem:[%s1 + $0x40] sm:$0xff]
      %v1485 = vld [vmem:[%s1 + $0x48] sm:$0xff]
      %v1486 = vld [vmem:[%s1 + $0x50] sm:$0xff]
      %v1487 = vld [vmem:[%s1 + $0x58] sm:$0xff]
      %v1488 = vld [vmem:[%s1 + $0x60] sm:$0xff]
      %v1489 = vld [vmem:[%s1 + $0x68] sm:$0xff]
      %v1490 = vld [vmem:[%s1 + $0x70] sm:$0xff]
      %v1491 = vld [vmem:[%s1 + $0x78] sm:$0xff]
      %v1492 = vld [vmem:[%s1346] sm:$0xff]
      %v1493 = vld [vmem:[%s1346 + $0x8] sm:$0xff]
      %v1494 = vld [vmem:[%s1346 + $0x10] sm:$0xff]
      %v1495 = vld [vmem:[%s1346 + $0x18] sm:$0xff]
      %v1496 = vld [vmem:[%s1346 + $0x20] sm:$0xff]
      %v1497 = vld [vmem:[%s1346 + $0x28] sm:$0xff]
      %v1498 = vld [vmem:[%s1346 + $0x30] sm:$0xff]
      %v1499 = vld [vmem:[%s1346 + $0x38] sm:$0xff]
      %v1500 = vld [vmem:[%s1346 + $0x40] sm:$0xff]
      %v1501 = vld [vmem:[%s1346 + $0x48] sm:$0xff]
      %v1502 = vld [vmem:[%s1346 + $0x50] sm:$0xff]
      %v1503 = vld [vmem:[%s1346 + $0x58] sm:$0xff]
      %v1504 = vld [vmem:[%s1346 + $0x60] sm:$0xff]
      %v1505 = vld [vmem:[%s1346 + $0x68] sm:$0xff]
      %v1506 = vld [vmem:[%s1346 + $0x70] sm:$0xff]
      %v1507 = vld [vmem:[%s1346 + $0x78] sm:$0xff]
      %v1508 = vld [vmem:[%s1346 + $0x80] sm:$0xff]
      %v1509 = vld [vmem:[%s1346 + $0x88] sm:$0xff]
      %v1510 = vld [vmem:[%s1346 + $0x90] sm:$0xff]
      %v1511 = vld [vmem:[%s1346 + $0x98] sm:$0xff]
      %v1512 = vld [vmem:[%s1351] sm:$0xff]
      %v1513 = vld [vmem:[%s1351 + $0x8] sm:$0xff]
      %v1514 = vld [vmem:[%s1351 + $0x10] sm:$0xff]
      %v1515 = vld [vmem:[%s1351 + $0x18] sm:$0xff]
      %v1516 = vld [vmem:[%s1351 + $0x20] sm:$0xff]
      %v1517 = vld [vmem:[%s1351 + $0x28] sm:$0xff]
      %v1518 = vld [vmem:[%s1351 + $0x30] sm:$0xff]
      %v1519 = vld [vmem:[%s1351 + $0x38] sm:$0xff]
      %v1520 = vld [vmem:[%s1351 + $0x40] sm:$0xff]
      %v1521 = vld [vmem:[%s1351 + $0x48] sm:$0xff]
      %v1522 = vld [vmem:[%s1351 + $0x50] sm:$0xff]
      %v1523 = vld [vmem:[%s1351 + $0x58] sm:$0xff]
      %v1524 = vld [vmem:[%s1351 + $0x60] sm:$0xff]
      %v1525 = vld [vmem:[%s1351 + $0x68] sm:$0xff]
      %v1526 = vld [vmem:[%s1351 + $0x70] sm:$0xff]
      %v1527 = vld [vmem:[%s1351 + $0x78] sm:$0xff]
      %v1528 = vld [vmem:[%s1351 + $0x80] sm:$0xff]
      %v1529 = vld [vmem:[%s1351 + $0x88] sm:$0xff]
      %v1530 = vld [vmem:[%s1351 + $0x90] sm:$0xff]
      %v1531 = vld [vmem:[%s1351 + $0x98] sm:$0xff]
      %v1532 = vld [vmem:[%s1356] sm:$0xff]
      %v1533 = vld [vmem:[%s1356 + $0x8] sm:$0xff]
      %v1534 = vld [vmem:[%s1356 + $0x10] sm:$0xff]
      %v1535 = vld [vmem:[%s1356 + $0x18] sm:$0xff]
      %v1536 = vld [vmem:[%s1361] sm:$0xff]
      %v1537 = vld [vmem:[%s1361 + $0x8] sm:$0xff]
      %v1538 = vld [vmem:[%s1361 + $0x10] sm:$0xff]
      %v1539 = vld [vmem:[%s1361 + $0x18] sm:$0xff]
      %v1540 = vld [vmem:[%s1361 + $0x20] sm:$0xff]
      %v1541 = vld [vmem:[%s1361 + $0x28] sm:$0xff]
      %v1542 = vld [vmem:[%s1361 + $0x30] sm:$0xff]
      %v1543 = vld [vmem:[%s1361 + $0x38] sm:$0xff]
      %v1544 = vld [vmem:[%s1361 + $0x40] sm:$0xff]
      %v1545 = vld [vmem:[%s1361 + $0x48] sm:$0xff]
      %v1546 = vld [vmem:[%s1361 + $0x50] sm:$0xff]
      %v1547 = vld [vmem:[%s1361 + $0x58] sm:$0xff]
      %v1548 = vld [vmem:[%s1366] sm:$0xff]
      %v1549 = vld [vmem:[%s1366 + $0x8] sm:$0xff]
      %v1550 = vld [vmem:[%s1366 + $0x10] sm:$0xff]
      %v1551 = vld [vmem:[%s1366 + $0x18] sm:$0xff]
      %v1552 = vld [vmem:[%s1371] sm:$0xff]
      %v1553 = vld [vmem:[%s1371 + $0x8] sm:$0xff]
      %v1554 = vld [vmem:[%s1371 + $0x10] sm:$0xff]
      %v1555 = vld [vmem:[%s1371 + $0x18] sm:$0xff]
      %v1556 = vld [vmem:[%s1374] sm:$0x1]
      %v1557 = vld [vmem:[%s1379] sm:$0xff]
      %v1558 = vld [vmem:[%s1379 + $0x8] sm:$0xff]
      %v1559 = vld [vmem:[%s1379 + $0x10] sm:$0xff]
      %v1560 = vld [vmem:[%s1379 + $0x18] sm:$0xff]
      %v1561 = vld [vmem:[%s1379 + $0x20] sm:$0xff]
      %v1562 = vld [vmem:[%s1379 + $0x28] sm:$0xff]
      %v1563 = vld [vmem:[%s1384] sm:$0xff]
      %v1564 = vld [vmem:[%s1384 + $0x8] sm:$0xff]
      %v1565 = vld [vmem:[%s1389] sm:$0xff]
      %v1566 = vld [vmem:[%s1389 + $0x8] sm:$0xff]
      %v1567 = vld [vmem:[%s1392] sm:$0x1]
      %v1568 = vld [vmem:[%s1397] sm:$0xff]
      %v1569 = vld [vmem:[%s1397 + $0x8] sm:$0xff]
      %v1570 = vld [vmem:[%s1397 + $0x10] sm:$0xff]
      %v1571 = vld [vmem:[%s1397 + $0x18] sm:$0xff]
      %v1572 = vld [vmem:[%s1402] sm:$0xff]
      %v1573 = vld [vmem:[%s1402 + $0x8] sm:$0xff]
      %v1574 = vld [vmem:[%s1407] sm:$0xff]
      %v1575 = vld [vmem:[%s1407 + $0x8] sm:$0xff]
      %v1576 = vld [vmem:[%s1410] sm:$0x1]
      %v1577 = vld [vmem:[%s1415] sm:$0xff]
      %v1578 = vld [vmem:[%s1415 + $0x8] sm:$0xff]
      %v1579 = vld [vmem:[%s1419] sm:$0xff]
      %v1580 = vld [vmem:[%s1423] sm:$0xff]
      %v1581 = vld [vmem:[%s1427] sm:$0xf]
      %v1582 = vld [vmem:[%s1431] sm:$0xff]
      %v1583 = vld [vmem:[%s1435] sm:$0xff]
      %v1584 = vld [vmem:[%s1439] sm:$0xff]
      %v1585 = vld [vmem:[%s1443] sm:$0xf]
      %v1586 = vld [vmem:[%s1447] sm:$0x7]
      %v1587 = vld [vmem:[%s1451] sm:$0x7]
      %v1588 = vld [vmem:[%s1455] sm:$0x7]
      %v1589 = vld [vmem:[%s1459] sm:$0x7]
      %v1590 = vld [vmem:[%s1463] sm:$0x7]
      %v1591 = vld [vmem:[%s1467] sm:$0x7]
      %v1592 = vld [vmem:[%s1470] sm:$0x1]
      %1594 = vset.pattern.permute.xlu0 0
      %1595 = vperm.xlu0 %1594, %v1512
      %v1596 = vpop.permute.xlu0 %1595
      %1599 = vset.pattern.permute.xlu0 0
      %1600 = vperm.xlu0 %1599, %v1513
      %v1601 = vpop.permute.xlu0 %1600
      %1604 = vset.pattern.permute.xlu0 0
      %1605 = vperm.xlu0 %1604, %v1514
      %v1606 = vpop.permute.xlu0 %1605
      %1609 = vset.pattern.permute.xlu0 0
      %1610 = vperm.xlu0 %1609, %v1515
      %v1611 = vpop.permute.xlu0 %1610
      %1614 = vset.pattern.permute.xlu0 0
      %1615 = vperm.xlu0 %1614, %v1516
      %v1616 = vpop.permute.xlu0 %1615
      %1619 = vset.pattern.permute.xlu0 0
      %1620 = vperm.xlu0 %1619, %v1517
      %v1621 = vpop.permute.xlu0 %1620
      %1624 = vset.pattern.permute.xlu0 0
      %1625 = vperm.xlu0 %1624, %v1518
      %v1626 = vpop.permute.xlu0 %1625
      %1629 = vset.pattern.permute.xlu0 0
      %1630 = vperm.xlu0 %1629, %v1519
      %v1631 = vpop.permute.xlu0 %1630
      %1634 = vset.pattern.permute.xlu0 0
      %1635 = vperm.xlu0 %1634, %v1520
      %v1636 = vpop.permute.xlu0 %1635
      %1639 = vset.pattern.permute.xlu0 0
      %1640 = vperm.xlu0 %1639, %v1521
      %v1641 = vpop.permute.xlu0 %1640
      %1644 = vset.pattern.permute.xlu0 0
      %1645 = vperm.xlu0 %1644, %v1522
      %v1646 = vpop.permute.xlu0 %1645
      %1649 = vset.pattern.permute.xlu0 0
      %1650 = vperm.xlu0 %1649, %v1523
      %v1651 = vpop.permute.xlu0 %1650
      %1654 = vset.pattern.permute.xlu0 0
      %1655 = vperm.xlu0 %1654, %v1524
      %v1656 = vpop.permute.xlu0 %1655
      %1659 = vset.pattern.permute.xlu0 0
      %1660 = vperm.xlu0 %1659, %v1525
      %v1661 = vpop.permute.xlu0 %1660
      %1664 = vset.pattern.permute.xlu0 0
      %1665 = vperm.xlu0 %1664, %v1526
      %v1666 = vpop.permute.xlu0 %1665
      %1669 = vset.pattern.permute.xlu0 0
      %1670 = vperm.xlu0 %1669, %v1527
      %v1671 = vpop.permute.xlu0 %1670
      %1674 = vset.pattern.permute.xlu0 0
      %1675 = vperm.xlu0 %1674, %v1528
      %v1676 = vpop.permute.xlu0 %1675
      %1679 = vset.pattern.permute.xlu0 0
      %1680 = vperm.xlu0 %1679, %v1529
      %v1681 = vpop.permute.xlu0 %1680
      %1684 = vset.pattern.permute.xlu0 0
      %1685 = vperm.xlu0 %1684, %v1530
      %v1686 = vpop.permute.xlu0 %1685
      %1689 = vset.pattern.permute.xlu0 0
      %1690 = vperm.xlu0 %1689, %v1531
      %v1691 = vpop.permute.xlu0 %1690
      %1693 = vmatprep.subr.mxu0 0.0
      %1694 = vmatpush1.msra.mxu0 %v1491
      %1695 = vmatprep.subr.mxu0 0.0
      %1696 = vmatpush1.msra.mxu0 %v1490
      %1697 = vmatprep.subr.mxu0 0.0
      %1698 = vmatpush1.msra.mxu0 %v1489
      %1699 = vmatprep.subr.mxu0 0.0
      %1700 = vmatpush1.msra.mxu0 %v1488
      %1701 = vmatprep.subr.mxu0 0.0
      %1702 = vmatpush1.msra.mxu0 %v1487
      %1703 = vmatprep.subr.mxu0 0.0
      %1704 = vmatpush1.msra.mxu0 %v1486
      %1705 = vmatprep.subr.mxu0 0.0
      %1706 = vmatpush1.msra.mxu0 %v1485
      %1707 = vmatprep.subr.mxu0 0.0
      %1708 = vmatpush1.msra.mxu0 %v1484
      %1709 = vmatprep.subr.mxu0 0.0
      %1710 = vmatpush1.msra.mxu0 %v1483
      %1711 = vmatprep.subr.mxu0 0.0
      %1712 = vmatpush1.msra.mxu0 %v1482
      %1713 = vmatprep.subr.mxu0 0.0
      %1714 = vmatpush1.msra.mxu0 %v1481
      %1715 = vmatprep.subr.mxu0 0.0
      %1716 = vmatpush1.msra.mxu0 %v1480
      %1717 = vmatprep.subr.mxu0 0.0
      %1718 = vmatpush1.msra.mxu0 %v1479
      %1719 = vmatprep.subr.mxu0 0.0
      %1720 = vmatpush1.msra.mxu0 %v1478
      %1721 = vmatprep.subr.mxu0 0.0
      %1722 = vmatpush1.msra.mxu0 %v1477
      %1723 = vmatprep.subr.mxu0 0.0
      %1724 = vmatpush1.msra.mxu0 %v1476
      %1725 = vmatprep.subr.mxu0 0.0
      %1726 = vmatpush2.msra.mxu0 0.0
      %1727 = vmatprep.subr.mxu0 0.0
      %1728 = vmatpush2.msra.mxu0 0.0
      %1729 = vmatprep.subr.mxu0 0.0
      %1730 = vmatpush2.msra.mxu0 0.0
      %1731 = vmatprep.subr.mxu0 0.0
      %1732 = vmatpush2.msra.mxu0 0.0
      %1733 = vmatprep.subr.mxu0 0.0
      %1734 = vmatpush2.msra.mxu0 0.0
      %1735 = vmatprep.subr.mxu0 0.0
      %1736 = vmatpush2.msra.mxu0 0.0
      %1737 = vmatprep.subr.mxu0 0.0
      %1738 = vmatpush2.msra.mxu0 0.0
      %1739 = vmatprep.subr.mxu0 0.0
      %1740 = vmatpush2.msra.mxu0 0.0
      %1741 = vmatprep.subr.mxu0 0.0
      %1742 = vmatpush2.msra.mxu0 0.0
      %1743 = vmatprep.subr.mxu0 0.0
      %1744 = vmatpush2.msra.mxu0 0.0
      %1745 = vmatprep.subr.mxu0 0.0
      %1746 = vmatpush2.msra.mxu0 0.0
      %1747 = vmatprep.subr.mxu0 0.0
      %1748 = vmatpush2.msra.mxu0 0.0
      %1749 = vmatprep.subr.mxu0 0.0
      %1750 = vmatpush2.msra.mxu0 0.0
      %1751 = vmatprep.subr.mxu0 0.0
      %1752 = vmatpush2.msra.mxu0 0.0
      %1753 = vmatprep.subr.mxu0 0.0
      %1754 = vmatpush2.msra.mxu0 0.0
      %1755 = vmatprep.subr.mxu0 0.0
      %1756 = vmatpush2.msra.mxu0 0.0
      %1757 = vmatprep.mubr.f32.mxu0 0.0
      %1758 = vmatmul.mubr.f32.gmra.mxu0 %v1492
      %v1759 = vpop.f32.mrf.mxu0
      %v1760 = vadd.f32 %v1596, %v1759
      %v1761 = vpop.f32.mrf.mxu0
      %1762 = vmatprep.mubr.f32.mxu0 0.0
      %1763 = vmatmul.mubr.f32.gmra.mxu0 %v1493
      %v1764 = vpop.f32.mrf.mxu0
      %v1765 = vadd.f32 %v1601, %v1764
      %v1766 = vpop.f32.mrf.mxu0
      %1767 = vmatprep.mubr.f32.mxu0 0.0
      %1768 = vmatmul.mubr.f32.gmra.mxu0 %v1494
      %v1769 = vpop.f32.mrf.mxu0
      %v1770 = vadd.f32 %v1606, %v1769
      %v1771 = vpop.f32.mrf.mxu0
      %1772 = vmatprep.mubr.f32.mxu0 0.0
      %1773 = vmatmul.mubr.f32.gmra.mxu0 %v1495
      %v1774 = vpop.f32.mrf.mxu0
      %v1775 = vadd.f32 %v1611, %v1774
      %v1776 = vpop.f32.mrf.mxu0
      %1777 = vmatprep.mubr.f32.mxu0 0.0
      %1778 = vmatmul.mubr.f32.gmra.mxu0 %v1496
      %v1779 = vpop.f32.mrf.mxu0
      %v1780 = vadd.f32 %v1616, %v1779
      %v1781 = vpop.f32.mrf.mxu0
      %1782 = vmatprep.mubr.f32.mxu0 0.0
      %1783 = vmatmul.mubr.f32.gmra.mxu0 %v1497
      %v1784 = vpop.f32.mrf.mxu0
      %v1785 = vadd.f32 %v1621, %v1784
      %v1786 = vpop.f32.mrf.mxu0
      %1787 = vmatprep.mubr.f32.mxu0 0.0
      %1788 = vmatmul.mubr.f32.gmra.mxu0 %v1498
      %v1789 = vpop.f32.mrf.mxu0
      %v1790 = vadd.f32 %v1626, %v1789
      %v1791 = vpop.f32.mrf.mxu0
      %1792 = vmatprep.mubr.f32.mxu0 0.0
      %1793 = vmatmul.mubr.f32.gmra.mxu0 %v1499
      %v1794 = vpop.f32.mrf.mxu0
      %v1795 = vadd.f32 %v1631, %v1794
      %v1796 = vpop.f32.mrf.mxu0
      %1797 = vmatprep.mubr.f32.mxu0 0.0
      %1798 = vmatmul.mubr.f32.gmra.mxu0 %v1500
      %v1799 = vpop.f32.mrf.mxu0
      %v1800 = vadd.f32 %v1636, %v1799
      %v1801 = vpop.f32.mrf.mxu0
      %1802 = vmatprep.mubr.f32.mxu0 0.0
      %1803 = vmatmul.mubr.f32.gmra.mxu0 %v1501
      %v1804 = vpop.f32.mrf.mxu0
      %v1805 = vadd.f32 %v1641, %v1804
      %v1806 = vpop.f32.mrf.mxu0
      %1807 = vmatprep.mubr.f32.mxu0 0.0
      %1808 = vmatmul.mubr.f32.gmra.mxu0 %v1502
      %v1809 = vpop.f32.mrf.mxu0
      %v1810 = vadd.f32 %v1646, %v1809
      %v1811 = vpop.f32.mrf.mxu0
      %1812 = vmatprep.mubr.f32.mxu0 0.0
      %1813 = vmatmul.mubr.f32.gmra.mxu0 %v1503
      %v1814 = vpop.f32.mrf.mxu0
      %v1815 = vadd.f32 %v1651, %v1814
      %v1816 = vpop.f32.mrf.mxu0
      %1817 = vmatprep.mubr.f32.mxu0 0.0
      %1818 = vmatmul.mubr.f32.gmra.mxu0 %v1504
      %v1819 = vpop.f32.mrf.mxu0
      %v1820 = vadd.f32 %v1656, %v1819
      %v1821 = vpop.f32.mrf.mxu0
      %1822 = vmatprep.mubr.f32.mxu0 0.0
      %1823 = vmatmul.mubr.f32.gmra.mxu0 %v1505
      %v1824 = vpop.f32.mrf.mxu0
      %v1825 = vadd.f32 %v1661, %v1824
      %v1826 = vpop.f32.mrf.mxu0
      %1827 = vmatprep.mubr.f32.mxu0 0.0
      %1828 = vmatmul.mubr.f32.gmra.mxu0 %v1506
      %v1829 = vpop.f32.mrf.mxu0
      %v1830 = vadd.f32 %v1666, %v1829
      %v1831 = vpop.f32.mrf.mxu0
      %1832 = vmatprep.mubr.f32.mxu0 0.0
      %1833 = vmatmul.mubr.f32.gmra.mxu0 %v1507
      %v1834 = vpop.f32.mrf.mxu0
      %v1835 = vadd.f32 %v1671, %v1834
      %v1836 = vpop.f32.mrf.mxu0
      %1837 = vmatprep.mubr.f32.mxu0 0.0
      %1838 = vmatmul.mubr.f32.gmra.mxu0 %v1508
      %v1839 = vpop.f32.mrf.mxu0
      %v1840 = vadd.f32 %v1676, %v1839
      %v1841 = vpop.f32.mrf.mxu0
      %1842 = vmatprep.mubr.f32.mxu0 0.0
      %1843 = vmatmul.mubr.f32.gmra.mxu0 %v1509
      %v1844 = vpop.f32.mrf.mxu0
      %v1845 = vadd.f32 %v1681, %v1844
      %v1846 = vpop.f32.mrf.mxu0
      %1847 = vmatprep.mubr.f32.mxu0 0.0
      %1848 = vmatmul.mubr.f32.gmra.mxu0 %v1510
      %v1849 = vpop.f32.mrf.mxu0
      %v1850 = vadd.f32 %v1686, %v1849
      %v1851 = vpop.f32.mrf.mxu0
      %1852 = vmatprep.mubr.f32.mxu0 0.0
      %1853 = vmatmul.mubr.f32.gmra.mxu0 %v1511
      %v1854 = vpop.f32.mrf.mxu0
      %v1855 = vadd.f32 %v1691, %v1854
      %v1856 = vpop.f32.mrf.mxu0
      %1857 = vdwg.mxu0
      %v1858 = vlaneseq
      %v1859 = vand.u32 %v1858, 127
      %v1860 = vshra.s32 %v1859, 4
      %vm1861 = vcmp.eq.s32.totalorder %v1860, 0
      %v1862 = vsel %vm1861, 1, 0
      %vm1863 = vcmp.eq.s32.totalorder %v1862, 1
      %1865 = vset.pattern.permute.xlu0 0
      %1866 = vperm.xlu0 %1865, %v1760
      %v1867 = vpop.permute.xlu0 %1866
      %1870 = vset.pattern.permute.xlu0 0
      %1871 = vperm.xlu0 %1870, %v1765
      %v1872 = vpop.permute.xlu0 %1871
      %1875 = vset.pattern.permute.xlu0 0
      %1876 = vperm.xlu0 %1875, %v1770
      %v1877 = vpop.permute.xlu0 %1876
      %1880 = vset.pattern.permute.xlu0 0
      %1881 = vperm.xlu0 %1880, %v1775
      %v1882 = vpop.permute.xlu0 %1881
      %v1884 = vsel %vm1863, %v1867, 0.0
      %v1885 = vsel %vm1863, %v1872, 0.0
      %v1886 = vsel %vm1863, %v1877, 0.0
      %v1887 = vsel %vm1863, %v1882, 0.0
      %vm1888 = vcmp.eq.s32.totalorder %v1860, 1
      %v1889 = vsel %vm1888, 1, 0
      %vm1890 = vcmp.eq.s32.totalorder %v1889, 1
      %1891 = vset.pattern.permute.xlu0 1
      %1892 = vperm.xlu0 %1891, %v1760
      %v1893 = vpop.permute.xlu0 %1892
      %1895 = vset.pattern.permute.xlu0 1
      %1896 = vperm.xlu0 %1895, %v1765
      %v1897 = vpop.permute.xlu0 %1896
      %1899 = vset.pattern.permute.xlu0 1
      %1900 = vperm.xlu0 %1899, %v1770
      %v1901 = vpop.permute.xlu0 %1900
      %1903 = vset.pattern.permute.xlu0 1
      %1904 = vperm.xlu0 %1903, %v1775
      %v1905 = vpop.permute.xlu0 %1904
      %v1907 = vsel %vm1890, %v1893, %v1884
      %v1908 = vsel %vm1890, %v1897, %v1885
      %v1909 = vsel %vm1890, %v1901, %v1886
      %v1910 = vsel %vm1890, %v1905, %v1887
      %v1911 = vmul.f32 %v1532, %v1907
      %v1912 = vmul.f32 %v1533, %v1908
      %v1913 = vmul.f32 %v1534, %v1909
      %v1914 = vmul.f32 %v1535, %v1910
      %v1915 = vand.u32 %v1859, 15
      %v1916 = vshra.s32 %v1915, 2
      %v1917 = vand.u32 %v1915, 3
      %v1918 = vadd.s32 %v1916, 4294967295
      %v1919 = vadd.s32 %v1917, 4294967295
      %vm1920 = vcmp.ge.s32.totalorder %v1918, 0
      %vm1921 = vcmp.lt.s32.totalorder %v1918, 4
      %vm1922 = vmand %vm1920, %vm1921
      %vm1923 = vcmp.ge.s32.totalorder %v1919, 0
      %vm1924 = vmand %vm1922, %vm1923
      %vm1925 = vcmp.lt.s32.totalorder %v1919, 4
      %vm1926 = vmand %vm1924, %vm1925
      %vm1927 = vcmp.ge.s32.totalorder %v1917, 0
      %vm1928 = vmand %vm1922, %vm1927
      %vm1929 = vcmp.lt.s32.totalorder %v1917, 4
      %vm1930 = vmand %vm1928, %vm1929
      %v1931 = vadd.s32 %v1917, 1
      %vm1932 = vcmp.ge.s32.totalorder %v1931, 0
      %vm1933 = vmand %vm1922, %vm1932
      %vm1934 = vcmp.lt.s32.totalorder %v1931, 4
      %vm1935 = vmand %vm1933, %vm1934
      %vm1936 = vcmp.ge.s32.totalorder %v1916, 0
      %vm1937 = vcmp.lt.s32.totalorder %v1916, 4
      %vm1938 = vmand %vm1936, %vm1937
      %vm1939 = vmand %vm1938, %vm1923
      %vm1940 = vmand %vm1939, %vm1925
      %vm1941 = vmand %vm1938, %vm1927
      %vm1942 = vmand %vm1941, %vm1929
      %vm1943 = vmand %vm1938, %vm1932
      %vm1944 = vmand %vm1943, %vm1934
      %v1945 = vadd.s32 %v1916, 1
      %vm1946 = vcmp.ge.s32.totalorder %v1945, 0
      %vm1947 = vcmp.lt.s32.totalorder %v1945, 4
      %vm1948 = vmand %vm1946, %vm1947
      %vm1949 = vmand %vm1948, %vm1923
      %vm1950 = vmand %vm1949, %vm1925
      %vm1951 = vmand %vm1948, %vm1927
      %vm1952 = vmand %vm1951, %vm1929
      %vm1953 = vmand %vm1948, %vm1932
      %vm1954 = vmand %vm1953, %vm1934
      %1959 = vrot.lane.b32.xlu0 %v1911, 5
      %v1960 = vpop.permute.xlu0 %1959
      %1961 = vrot.lane.b32.xlu0 %v1912, 5
      %v1962 = vpop.permute.xlu0 %1961
      %1963 = vrot.lane.b32.xlu0 %v1913, 5
      %v1964 = vpop.permute.xlu0 %1963
      %1965 = vrot.lane.b32.xlu0 %v1914, 5
      %v1966 = vpop.permute.xlu0 %1965
      %vm1971 = vcmask 39936
      %v1972 = vsel %vm1971, 0.0, %v1960
      %v1973 = vsel %vm1971, 0.0, %v1962
      %v1974 = vsel %vm1971, 0.0, %v1964
      %v1975 = vsel %vm1971, 0.0, %v1966
      %v1976 = vsel %vm1926, 1, 0
      %vm1977 = vcmp.eq.s32.totalorder %v1976, 1
      %v1978 = vsel %vm1977, %v1972, 0.0
      %v1979 = vsel %vm1977, %v1973, 0.0
      %v1980 = vsel %vm1977, %v1974, 0.0
      %v1981 = vsel %vm1977, %v1975, 0.0
      %1982 = vrot.lane.b32.xlu0 %v1911, 4
      %v1983 = vpop.permute.xlu0 %1982
      %1984 = vrot.lane.b32.xlu0 %v1912, 4
      %v1985 = vpop.permute.xlu0 %1984
      %1986 = vrot.lane.b32.xlu0 %v1913, 4
      %v1987 = vpop.permute.xlu0 %1986
      %1988 = vrot.lane.b32.xlu0 %v1914, 4
      %v1989 = vpop.permute.xlu0 %1988
      %vm1994 = vcmask 31744
      %v1995 = vsel %vm1994, 0.0, %v1983
      %v1996 = vsel %vm1994, 0.0, %v1985
      %v1997 = vsel %vm1994, 0.0, %v1987
      %v1998 = vsel %vm1994, 0.0, %v1989
      %v1999 = vsel %vm1930, 1, 0
      %vm2000 = vcmp.eq.s32.totalorder %v1999, 1
      %v2001 = vsel %vm2000, %v1995, 0.0
      %v2002 = vsel %vm2000, %v1996, 0.0
      %v2003 = vsel %vm2000, %v1997, 0.0
      %v2004 = vsel %vm2000, %v1998, 0.0
      %2005 = vrot.lane.b32.xlu0 %v1911, 3
      %v2006 = vpop.permute.xlu0 %2005
      %2007 = vrot.lane.b32.xlu0 %v1912, 3
      %v2008 = vpop.permute.xlu0 %2007
      %2009 = vrot.lane.b32.xlu0 %v1913, 3
      %v2010 = vpop.permute.xlu0 %2009
      %2011 = vrot.lane.b32.xlu0 %v1914, 3
      %v2012 = vpop.permute.xlu0 %2011
      %vm2017 = vcmask 23552
      %v2018 = vsel %vm2017, 0.0, %v2006
      %v2019 = vsel %vm2017, 0.0, %v2008
      %v2020 = vsel %vm2017, 0.0, %v2010
      %v2021 = vsel %vm2017, 0.0, %v2012
      %v2022 = vsel %vm1935, 1, 0
      %vm2023 = vcmp.eq.s32.totalorder %v2022, 1
      %v2024 = vsel %vm2023, %v2018, 0.0
      %v2025 = vsel %vm2023, %v2019, 0.0
      %v2026 = vsel %vm2023, %v2020, 0.0
      %v2027 = vsel %vm2023, %v2021, 0.0
      %2028 = vrot.lane.b32.xlu0 %v1911, 1
      %v2029 = vpop.permute.xlu0 %2028
      %2030 = vrot.lane.b32.xlu0 %v1912, 1
      %v2031 = vpop.permute.xlu0 %2030
      %2032 = vrot.lane.b32.xlu0 %v1913, 1
      %v2033 = vpop.permute.xlu0 %2032
      %2034 = vrot.lane.b32.xlu0 %v1914, 1
      %v2035 = vpop.permute.xlu0 %2034
      %vm2040 = vcmask 7168
      %v2041 = vsel %vm2040, 0.0, %v2029
      %v2042 = vsel %vm2040, 0.0, %v2031
      %v2043 = vsel %vm2040, 0.0, %v2033
      %v2044 = vsel %vm2040, 0.0, %v2035
      %v2045 = vsel %vm1940, 1, 0
      %vm2046 = vcmp.eq.s32.totalorder %v2045, 1
      %v2047 = vsel %vm2046, %v2041, 0.0
      %v2048 = vsel %vm2046, %v2042, 0.0
      %v2049 = vsel %vm2046, %v2043, 0.0
      %v2050 = vsel %vm2046, %v2044, 0.0
      %v2051 = vsel %vm1942, 1, 0
      %vm2052 = vcmp.eq.s32.totalorder %v2051, 1
      %v2053 = vsel %vm2052, %v1911, 0.0
      %v2054 = vsel %vm2052, %v1912, 0.0
      %v2055 = vsel %vm2052, %v1913, 0.0
      %v2056 = vsel %vm2052, %v1914, 0.0
      %2057 = vrot.lane.b32.xlu0 %v1911, 127
      %v2058 = vpop.permute.xlu0 %2057
      %2059 = vrot.lane.b32.xlu0 %v1912, 127
      %v2060 = vpop.permute.xlu0 %2059
      %2061 = vrot.lane.b32.xlu0 %v1913, 127
      %v2062 = vpop.permute.xlu0 %2061
      %2063 = vrot.lane.b32.xlu0 %v1914, 127
      %v2064 = vpop.permute.xlu0 %2063
      %vm2069 = vcmask 252928
      %v2070 = vsel %vm2069, %v2058, 0.0
      %v2071 = vsel %vm2069, %v2060, 0.0
      %v2072 = vsel %vm2069, %v2062, 0.0
      %v2073 = vsel %vm2069, %v2064, 0.0
      %v2074 = vsel %vm1944, 1, 0
      %vm2075 = vcmp.eq.s32.totalorder %v2074, 1
      %v2076 = vsel %vm2075, %v2070, 0.0
      %v2077 = vsel %vm2075, %v2071, 0.0
      %v2078 = vsel %vm2075, %v2072, 0.0
      %v2079 = vsel %vm2075, %v2073, 0.0
      %2080 = vrot.lane.b32.xlu0 %v1911, 125
      %v2081 = vpop.permute.xlu0 %2080
      %2082 = vrot.lane.b32.xlu0 %v1912, 125
      %v2083 = vpop.permute.xlu0 %2082
      %2084 = vrot.lane.b32.xlu0 %v1913, 125
      %v2085 = vpop.permute.xlu0 %2084
      %2086 = vrot.lane.b32.xlu0 %v1914, 125
      %v2087 = vpop.permute.xlu0 %2086
      %vm2092 = vcmask 236544
      %v2093 = vsel %vm2092, %v2081, 0.0
      %v2094 = vsel %vm2092, %v2083, 0.0
      %v2095 = vsel %vm2092, %v2085, 0.0
      %v2096 = vsel %vm2092, %v2087, 0.0
      %v2097 = vsel %vm1950, 1, 0
      %vm2098 = vcmp.eq.s32.totalorder %v2097, 1
      %v2099 = vsel %vm2098, %v2093, 0.0
      %v2100 = vsel %vm2098, %v2094, 0.0
      %v2101 = vsel %vm2098, %v2095, 0.0
      %v2102 = vsel %vm2098, %v2096, 0.0
      %2103 = vrot.lane.b32.xlu0 %v1911, 124
      %v2104 = vpop.permute.xlu0 %2103
      %2105 = vrot.lane.b32.xlu0 %v1912, 124
      %v2106 = vpop.permute.xlu0 %2105
      %2107 = vrot.lane.b32.xlu0 %v1913, 124
      %v2108 = vpop.permute.xlu0 %2107
      %2109 = vrot.lane.b32.xlu0 %v1914, 124
      %v2110 = vpop.permute.xlu0 %2109
      %vm2115 = vcmask 228352
      %v2116 = vsel %vm2115, %v2104, 0.0
      %v2117 = vsel %vm2115, %v2106, 0.0
      %v2118 = vsel %vm2115, %v2108, 0.0
      %v2119 = vsel %vm2115, %v2110, 0.0
      %v2120 = vsel %vm1952, 1, 0
      %vm2121 = vcmp.eq.s32.totalorder %v2120, 1
      %v2122 = vsel %vm2121, %v2116, 0.0
      %v2123 = vsel %vm2121, %v2117, 0.0
      %v2124 = vsel %vm2121, %v2118, 0.0
      %v2125 = vsel %vm2121, %v2119, 0.0
      %2126 = vrot.lane.b32.xlu0 %v1911, 123
      %v2127 = vpop.permute.xlu0 %2126
      %2128 = vrot.lane.b32.xlu0 %v1912, 123
      %v2129 = vpop.permute.xlu0 %2128
      %2130 = vrot.lane.b32.xlu0 %v1913, 123
      %v2131 = vpop.permute.xlu0 %2130
      %2132 = vrot.lane.b32.xlu0 %v1914, 123
      %v2133 = vpop.permute.xlu0 %2132
      %vm2138 = vcmask 220160
      %v2139 = vsel %vm2138, %v2127, 0.0
      %v2140 = vsel %vm2138, %v2129, 0.0
      %v2141 = vsel %vm2138, %v2131, 0.0
      %v2142 = vsel %vm2138, %v2133, 0.0
      %v2143 = vsel %vm1954, 1, 0
      %vm2144 = vcmp.eq.s32.totalorder %v2143, 1
      %v2145 = vsel %vm2144, %v2139, 0.0
      %v2146 = vsel %vm2144, %v2140, 0.0
      %v2147 = vsel %vm2144, %v2141, 0.0
      %v2148 = vsel %vm2144, %v2142, 0.0
      %vm2149 = vcmask 261120
      %v2151 = vsel %vm2149, %v1538, 0
      %v2154 = vsel %vm2149, %v1541, 0
      %v2157 = vsel %vm2149, %v1544, 0
      %v2160 = vsel %vm2149, %v1547, 0
      %2162 = vmatprep.subr.mxu0 0.0
      %2163 = vmatpush1.msra.mxu0 %v2050
      %2164 = vmatprep.subr.mxu0 0.0
      %2165 = vmatpush1.msra.mxu0 %v2049
      %2166 = vmatprep.subr.mxu0 0.0
      %2167 = vmatpush1.msra.mxu0 %v2048
      %2168 = vmatprep.subr.mxu0 0.0
      %2169 = vmatpush1.msra.mxu0 %v2047
      %2170 = vmatprep.subr.mxu0 0.0
      %2171 = vmatpush1.msra.mxu0 %v2027
      %2172 = vmatprep.subr.mxu0 0.0
      %2173 = vmatpush1.msra.mxu0 %v2026
      %2174 = vmatprep.subr.mxu0 0.0
      %2175 = vmatpush1.msra.mxu0 %v2025
      %2176 = vmatprep.subr.mxu0 0.0
      %2177 = vmatpush1.msra.mxu0 %v2024
      %2178 = vmatprep.subr.mxu0 0.0
      %2179 = vmatpush1.msra.mxu0 %v2004
      %2180 = vmatprep.subr.mxu0 0.0
      %2181 = vmatpush1.msra.mxu0 %v2003
      %2182 = vmatprep.subr.mxu0 0.0
      %2183 = vmatpush1.msra.mxu0 %v2002
      %2184 = vmatprep.subr.mxu0 0.0
      %2185 = vmatpush1.msra.mxu0 %v2001
      %2186 = vmatprep.subr.mxu0 0.0
      %2187 = vmatpush1.msra.mxu0 %v1981
      %2188 = vmatprep.subr.mxu0 0.0
      %2189 = vmatpush1.msra.mxu0 %v1980
      %2190 = vmatprep.subr.mxu0 0.0
      %2191 = vmatpush1.msra.mxu0 %v1979
      %2192 = vmatprep.subr.mxu0 0.0
      %2193 = vmatpush1.msra.mxu0 %v1978
      %2194 = vmatprep.subr.mxu0 0.0
      %2195 = vmatpush2.msra.mxu0 %v2125
      %2196 = vmatprep.subr.mxu0 0.0
      %2197 = vmatpush2.msra.mxu0 %v2124
      %2198 = vmatprep.subr.mxu0 0.0
      %2199 = vmatpush2.msra.mxu0 %v2123
      %2200 = vmatprep.subr.mxu0 0.0
      %2201 = vmatpush2.msra.mxu0 %v2122
      %2202 = vmatprep.subr.mxu0 0.0
      %2203 = vmatpush2.msra.mxu0 %v2102
      %2204 = vmatprep.subr.mxu0 0.0
      %2205 = vmatpush2.msra.mxu0 %v2101
      %2206 = vmatprep.subr.mxu0 0.0
      %2207 = vmatpush2.msra.mxu0 %v2100
      %2208 = vmatprep.subr.mxu0 0.0
      %2209 = vmatpush2.msra.mxu0 %v2099
      %2210 = vmatprep.subr.mxu0 0.0
      %2211 = vmatpush2.msra.mxu0 %v2079
      %2212 = vmatprep.subr.mxu0 0.0
      %2213 = vmatpush2.msra.mxu0 %v2078
      %2214 = vmatprep.subr.mxu0 0.0
      %2215 = vmatpush2.msra.mxu0 %v2077
      %2216 = vmatprep.subr.mxu0 0.0
      %2217 = vmatpush2.msra.mxu0 %v2076
      %2218 = vmatprep.subr.mxu0 0.0
      %2219 = vmatpush2.msra.mxu0 %v2056
      %2220 = vmatprep.subr.mxu0 0.0
      %2221 = vmatpush2.msra.mxu0 %v2055
      %2222 = vmatprep.subr.mxu0 0.0
      %2223 = vmatpush2.msra.mxu0 %v2054
      %2224 = vmatprep.subr.mxu0 0.0
      %2225 = vmatpush2.msra.mxu0 %v2053
      %2226 = vmatprep.mubr.f32.mxu0 %v1537
      %2227 = vmatmul.mubr.f32.gmra.mxu0 %v1536
      %v2228 = vpop.f32.mrf.mxu0
      %v2229 = vadd.f32 0.0, %v2228
      %v2230 = vpop.f32.mrf.mxu0
      %2231 = vmatprep.mubr.f32.mxu0 %v1540
      %2232 = vmatmul.mubr.f32.gmra.mxu0 %v1539
      %v2233 = vpop.f32.mrf.mxu0
      %v2234 = vadd.f32 0.0, %v2233
      %v2235 = vpop.f32.mrf.mxu0
      %2236 = vmatprep.mubr.f32.mxu0 %v1543
      %2237 = vmatmul.mubr.f32.gmra.mxu0 %v1542
      %v2238 = vpop.f32.mrf.mxu0
      %v2239 = vadd.f32 0.0, %v2238
      %v2240 = vpop.f32.mrf.mxu0
      %2241 = vmatprep.mubr.f32.mxu0 %v1546
      %2242 = vmatmul.mubr.f32.gmra.mxu0 %v1545
      %v2243 = vpop.f32.mrf.mxu0
      %v2244 = vadd.f32 0.0, %v2243
      %v2245 = vpop.f32.mrf.mxu0
      %2246 = vdwg.mxu0
      %2247 = vmatprep.subr.mxu0 0.0
      %2248 = vmatpush1.msra.mxu0 0.0
      %2249 = vmatprep.subr.mxu0 0.0
      %2250 = vmatpush1.msra.mxu0 0.0
      %2251 = vmatprep.subr.mxu0 0.0
      %2252 = vmatpush1.msra.mxu0 0.0
      %2253 = vmatprep.subr.mxu0 0.0
      %2254 = vmatpush1.msra.mxu0 0.0
      %2255 = vmatprep.subr.mxu0 0.0
      %2256 = vmatpush1.msra.mxu0 0.0
      %2257 = vmatprep.subr.mxu0 0.0
      %2258 = vmatpush1.msra.mxu0 0.0
      %2259 = vmatprep.subr.mxu0 0.0
      %2260 = vmatpush1.msra.mxu0 0.0
      %2261 = vmatprep.subr.mxu0 0.0
      %2262 = vmatpush1.msra.mxu0 0.0
      %2263 = vmatprep.subr.mxu0 0.0
      %2264 = vmatpush1.msra.mxu0 0.0
      %2265 = vmatprep.subr.mxu0 0.0
      %2266 = vmatpush1.msra.mxu0 0.0
      %2267 = vmatprep.subr.mxu0 0.0
      %2268 = vmatpush1.msra.mxu0 0.0
      %2269 = vmatprep.subr.mxu0 0.0
      %2270 = vmatpush1.msra.mxu0 0.0
      %2271 = vmatprep.subr.mxu0 0.0
      %2272 = vmatpush1.msra.mxu0 %v2148
      %2273 = vmatprep.subr.mxu0 0.0
      %2274 = vmatpush1.msra.mxu0 %v2147
      %2275 = vmatprep.subr.mxu0 0.0
      %2276 = vmatpush1.msra.mxu0 %v2146
      %2277 = vmatprep.subr.mxu0 0.0
      %2278 = vmatpush1.msra.mxu0 %v2145
      %2279 = vmatprep.subr.mxu0 0.0
      %2280 = vmatpush2.msra.mxu0 0.0
      %2281 = vmatprep.subr.mxu0 0.0
      %2282 = vmatpush2.msra.mxu0 0.0
      %2283 = vmatprep.subr.mxu0 0.0
      %2284 = vmatpush2.msra.mxu0 0.0
      %2285 = vmatprep.subr.mxu0 0.0
      %2286 = vmatpush2.msra.mxu0 0.0
      %2287 = vmatprep.subr.mxu0 0.0
      %2288 = vmatpush2.msra.mxu0 0.0
      %2289 = vmatprep.subr.mxu0 0.0
      %2290 = vmatpush2.msra.mxu0 0.0
      %2291 = vmatprep.subr.mxu0 0.0
      %2292 = vmatpush2.msra.mxu0 0.0
      %2293 = vmatprep.subr.mxu0 0.0
      %2294 = vmatpush2.msra.mxu0 0.0
      %2295 = vmatprep.subr.mxu0 0.0
      %2296 = vmatpush2.msra.mxu0 0.0
      %2297 = vmatprep.subr.mxu0 0.0
      %2298 = vmatpush2.msra.mxu0 0.0
      %2299 = vmatprep.subr.mxu0 0.0
      %2300 = vmatpush2.msra.mxu0 0.0
      %2301 = vmatprep.subr.mxu0 0.0
      %2302 = vmatpush2.msra.mxu0 0.0
      %2303 = vmatprep.subr.mxu0 0.0
      %2304 = vmatpush2.msra.mxu0 0.0
      %2305 = vmatprep.subr.mxu0 0.0
      %2306 = vmatpush2.msra.mxu0 0.0
      %2307 = vmatprep.subr.mxu0 0.0
      %2308 = vmatpush2.msra.mxu0 0.0
      %2309 = vmatprep.subr.mxu0 0.0
      %2310 = vmatpush2.msra.mxu0 0.0
      %2311 = vmatprep.mubr.f32.mxu0 0.0
      %2312 = vmatmul.mubr.f32.gmra.mxu0 %v2151
      %v2313 = vpop.f32.mrf.mxu0
      %v2314 = vadd.f32 %v2229, %v2313
      %v2315 = vpop.f32.mrf.mxu0
      %2316 = vmatprep.mubr.f32.mxu0 0.0
      %2317 = vmatmul.mubr.f32.gmra.mxu0 %v2154
      %v2318 = vpop.f32.mrf.mxu0
      %v2319 = vadd.f32 %v2234, %v2318
      %v2320 = vpop.f32.mrf.mxu0
      %2321 = vmatprep.mubr.f32.mxu0 0.0
      %2322 = vmatmul.mubr.f32.gmra.mxu0 %v2157
      %v2323 = vpop.f32.mrf.mxu0
      %v2324 = vadd.f32 %v2239, %v2323
      %v2325 = vpop.f32.mrf.mxu0
      %2326 = vmatprep.mubr.f32.mxu0 0.0
      %2327 = vmatmul.mubr.f32.gmra.mxu0 %v2160
      %v2328 = vpop.f32.mrf.mxu0
      %v2329 = vadd.f32 %v2244, %v2328
      %v2330 = vpop.f32.mrf.mxu0
      %2331 = vdwg.mxu0
      %v2332 = vmul.f32 %v1760, %v1760
      %v2333 = vmul.f32 %v1765, %v1765
      %v2334 = vmul.f32 %v1770, %v1770
      %v2335 = vmul.f32 %v1775, %v1775
      %v2337 = vsel %vm2149, %v1548, 0
      %v2340 = vsel %vm2149, %v1549, 0
      %v2343 = vsel %vm2149, %v1550, 0
      %v2346 = vsel %vm2149, %v1551, 0
      %2348 = vmatprep.subr.mxu0 0.0
      %2349 = vmatpush1.msra.mxu0 0.0
      %2350 = vmatprep.subr.mxu0 0.0
      %2351 = vmatpush1.msra.mxu0 0.0
      %2352 = vmatprep.subr.mxu0 0.0
      %2353 = vmatpush1.msra.mxu0 0.0
      %2354 = vmatprep.subr.mxu0 0.0
      %2355 = vmatpush1.msra.mxu0 0.0
      %2356 = vmatprep.subr.mxu0 0.0
      %2357 = vmatpush1.msra.mxu0 0.0
      %2358 = vmatprep.subr.mxu0 0.0
      %2359 = vmatpush1.msra.mxu0 0.0
      %2360 = vmatprep.subr.mxu0 0.0
      %2361 = vmatpush1.msra.mxu0 0.0
      %2362 = vmatprep.subr.mxu0 0.0
      %2363 = vmatpush1.msra.mxu0 0.0
      %2364 = vmatprep.subr.mxu0 0.0
      %2365 = vmatpush1.msra.mxu0 0.0
      %2366 = vmatprep.subr.mxu0 0.0
      %2367 = vmatpush1.msra.mxu0 0.0
      %2368 = vmatprep.subr.mxu0 0.0
      %2369 = vmatpush1.msra.mxu0 0.0
      %2370 = vmatprep.subr.mxu0 0.0
      %2371 = vmatpush1.msra.mxu0 0.0
      %2372 = vmatprep.subr.mxu0 0.0
      %2373 = vmatpush1.msra.mxu0 %v2335
      %2374 = vmatprep.subr.mxu0 0.0
      %2375 = vmatpush1.msra.mxu0 %v2334
      %2376 = vmatprep.subr.mxu0 0.0
      %2377 = vmatpush1.msra.mxu0 %v2333
      %2378 = vmatprep.subr.mxu0 0.0
      %2379 = vmatpush1.msra.mxu0 %v2332
      %2380 = vmatprep.subr.mxu0 0.0
      %2381 = vmatpush2.msra.mxu0 0.0
      %2382 = vmatprep.subr.mxu0 0.0
      %2383 = vmatpush2.msra.mxu0 0.0
      %2384 = vmatprep.subr.mxu0 0.0
      %2385 = vmatpush2.msra.mxu0 0.0
      %2386 = vmatprep.subr.mxu0 0.0
      %2387 = vmatpush2.msra.mxu0 0.0
      %2388 = vmatprep.subr.mxu0 0.0
      %2389 = vmatpush2.msra.mxu0 0.0
      %2390 = vmatprep.subr.mxu0 0.0
      %2391 = vmatpush2.msra.mxu0 0.0
      %2392 = vmatprep.subr.mxu0 0.0
      %2393 = vmatpush2.msra.mxu0 0.0
      %2394 = vmatprep.subr.mxu0 0.0
      %2395 = vmatpush2.msra.mxu0 0.0
      %2396 = vmatprep.subr.mxu0 0.0
      %2397 = vmatpush2.msra.mxu0 0.0
      %2398 = vmatprep.subr.mxu0 0.0
      %2399 = vmatpush2.msra.mxu0 0.0
      %2400 = vmatprep.subr.mxu0 0.0
      %2401 = vmatpush2.msra.mxu0 0.0
      %2402 = vmatprep.subr.mxu0 0.0
      %2403 = vmatpush2.msra.mxu0 0.0
      %2404 = vmatprep.subr.mxu0 0.0
      %2405 = vmatpush2.msra.mxu0 0.0
      %2406 = vmatprep.subr.mxu0 0.0
      %2407 = vmatpush2.msra.mxu0 0.0
      %2408 = vmatprep.subr.mxu0 0.0
      %2409 = vmatpush2.msra.mxu0 0.0
      %2410 = vmatprep.subr.mxu0 0.0
      %2411 = vmatpush2.msra.mxu0 0.0
      %2412 = vmatprep.mubr.f32.mxu0 0.0
      %2413 = vmatmul.mubr.f32.gmra.mxu0 %v2337
      %v2414 = vpop.f32.mrf.mxu0
      %v2415 = vadd.f32 1e-08, %v2414
      %v2416 = vpop.f32.mrf.mxu0
      %2417 = vmatprep.mubr.f32.mxu0 0.0
      %2418 = vmatmul.mubr.f32.gmra.mxu0 %v2340
      %v2419 = vpop.f32.mrf.mxu0
      %v2420 = vadd.f32 1e-08, %v2419
      %v2421 = vpop.f32.mrf.mxu0
      %2422 = vmatprep.mubr.f32.mxu0 0.0
      %2423 = vmatmul.mubr.f32.gmra.mxu0 %v2343
      %v2424 = vpop.f32.mrf.mxu0
      %v2425 = vadd.f32 1e-08, %v2424
      %v2426 = vpop.f32.mrf.mxu0
      %2427 = vmatprep.mubr.f32.mxu0 0.0
      %2428 = vmatmul.mubr.f32.gmra.mxu0 %v2346
      %v2429 = vpop.f32.mrf.mxu0
      %v2430 = vadd.f32 1e-08, %v2429
      %v2431 = vpop.f32.mrf.mxu0
      %2432 = vdwg.mxu0
      %v2433 = vrsqrt.pop %v2415
      %v2434 = vrsqrt.pop %v2420
      %v2435 = vrsqrt.pop %v2425
      %v2436 = vrsqrt.pop %v2430
      %2438 = vset.pattern.permute.xlu0 0
      %2439 = vperm.xlu0 %2438, %v2433
      %v2440 = vpop.permute.xlu0 %2439
      %2443 = vset.pattern.permute.xlu0 0
      %2444 = vperm.xlu0 %2443, %v2434
      %v2445 = vpop.permute.xlu0 %2444
      %2448 = vset.pattern.permute.xlu0 0
      %2449 = vperm.xlu0 %2448, %v2435
      %v2450 = vpop.permute.xlu0 %2449
      %2453 = vset.pattern.permute.xlu0 0
      %2454 = vperm.xlu0 %2453, %v2436
      %v2455 = vpop.permute.xlu0 %2454
      %v2457 = vsel %vm1863, %v2440, 0.0
      %v2458 = vsel %vm1863, %v2445, 0.0
      %v2459 = vsel %vm1863, %v2450, 0.0
      %v2460 = vsel %vm1863, %v2455, 0.0
      %2461 = vset.pattern.permute.xlu0 1
      %2462 = vperm.xlu0 %2461, %v2433
      %v2463 = vpop.permute.xlu0 %2462
      %2465 = vset.pattern.permute.xlu0 1
      %2466 = vperm.xlu0 %2465, %v2434
      %v2467 = vpop.permute.xlu0 %2466
      %2469 = vset.pattern.permute.xlu0 1
      %2470 = vperm.xlu0 %2469, %v2435
      %v2471 = vpop.permute.xlu0 %2470
      %2473 = vset.pattern.permute.xlu0 1
      %2474 = vperm.xlu0 %2473, %v2436
      %v2475 = vpop.permute.xlu0 %2474
      %v2477 = vsel %vm1890, %v2463, %v2457
      %v2478 = vsel %vm1890, %v2467, %v2458
      %v2479 = vsel %vm1890, %v2471, %v2459
      %v2480 = vsel %vm1890, %v2475, %v2460
      %v2481 = vmul.f32 %v2314, %v2477
      %v2482 = vmul.f32 %v2319, %v2478
      %v2483 = vmul.f32 %v2324, %v2479
      %v2484 = vmul.f32 %v2329, %v2480
      %2486 = vset.pattern.permute.xlu0 0
      %2487 = vperm.xlu0 %2486, %v1592
      %v2488 = vpop.permute.xlu0 %2487
      %v2490 = vlaneseq
      %v2491 = vshrl.u32 %v2490, 7
      %v2492 = vsub.s32 0, %v2491
      %v2493 = vrot.slane %v2488, %v2492
      %v2494 = vmul.f32 %v2493, %v1556
      %v2496 = vlaneseq
      %v2497 = vshrl.u32 %v2496, 7
      %v2498 = vsub.s32 0, %v2497
      %v2499 = vrot.slane %v2494, %v2498
      %v2501 = vadd.f32 %v2481, %v2499
      %v2502 = vadd.f32 %v2482, %v2499
      %v2503 = vadd.f32 %v2483, %v2499
      %v2504 = vadd.f32 %v2484, %v2499
      %2506 = vset.pattern.permute.xlu0 0
      %2507 = vperm.xlu0 %2506, %v1552
      %v2508 = vpop.permute.xlu0 %2507
      %2511 = vset.pattern.permute.xlu0 0
      %2512 = vperm.xlu0 %2511, %v1553
      %v2513 = vpop.permute.xlu0 %2512
      %2516 = vset.pattern.permute.xlu0 0
      %2517 = vperm.xlu0 %2516, %v1554
      %v2518 = vpop.permute.xlu0 %2517
      %2521 = vset.pattern.permute.xlu0 0
      %2522 = vperm.xlu0 %2521, %v1555
      %v2523 = vpop.permute.xlu0 %2522
      %v2525 = vadd.f32 %v2501, %v2508
      %v2526 = vadd.f32 %v2502, %v2513
      %v2527 = vadd.f32 %v2503, %v2518
      %v2528 = vadd.f32 %v2504, %v2523
      %v2529 = vmul.f32 %v2525, 0.2
      %v2530 = vmul.f32 %v2526, 0.2
      %v2531 = vmul.f32 %v2527, 0.2
      %v2532 = vmul.f32 %v2528, 0.2
      %v2533 = vmax.f32 %v2525, %v2529
      %v2534 = vmax.f32 %v2526, %v2530
      %v2535 = vmax.f32 %v2527, %v2531
      %v2536 = vmax.f32 %v2528, %v2532
      %v2537 = vmul.f32 %v2533, 1.4142135
      %v2538 = vmul.f32 %v2534, 1.4142135
      %v2539 = vmul.f32 %v2535, 1.4142135
      %v2540 = vmul.f32 %v2536, 1.4142135
      %2542 = vset.pattern.permute.xlu0 0
      %2543 = vperm.xlu0 %2542, %v1780
      %v2544 = vpop.permute.xlu0 %2543
      %2547 = vset.pattern.permute.xlu0 0
      %2548 = vperm.xlu0 %2547, %v1785
      %v2549 = vpop.permute.xlu0 %2548
      %2552 = vset.pattern.permute.xlu0 0
      %2553 = vperm.xlu0 %2552, %v1790
      %v2554 = vpop.permute.xlu0 %2553
      %2557 = vset.pattern.permute.xlu0 0
      %2558 = vperm.xlu0 %2557, %v1795
      %v2559 = vpop.permute.xlu0 %2558
      %v2561 = vsel %vm1863, %v2544, 0.0
      %v2562 = vsel %vm1863, %v2549, 0.0
      %v2563 = vsel %vm1863, %v2554, 0.0
      %v2564 = vsel %vm1863, %v2559, 0.0
      %2565 = vset.pattern.permute.xlu0 1
      %2566 = vperm.xlu0 %2565, %v1780
      %v2567 = vpop.permute.xlu0 %2566
      %2569 = vset.pattern.permute.xlu0 1
      %2570 = vperm.xlu0 %2569, %v1785
      %v2571 = vpop.permute.xlu0 %2570
      %2573 = vset.pattern.permute.xlu0 1
      %2574 = vperm.xlu0 %2573, %v1790
      %v2575 = vpop.permute.xlu0 %2574
      %2577 = vset.pattern.permute.xlu0 1
      %2578 = vperm.xlu0 %2577, %v1795
      %v2579 = vpop.permute.xlu0 %2578
      %v2581 = vsel %vm1890, %v2567, %v2561
      %v2582 = vsel %vm1890, %v2571, %v2562
      %v2583 = vsel %vm1890, %v2575, %v2563
      %v2584 = vsel %vm1890, %v2579, %v2564
      %v2585 = vmul.f32 %v2537, %v2581
      %v2586 = vmul.f32 %v2538, %v2582
      %v2587 = vmul.f32 %v2539, %v2583
      %v2588 = vmul.f32 %v2540, %v2584
      %2590 = vset.pattern.permute.xlu0 0
      %2591 = vperm.xlu0 %2590, %v1587
      %v2592 = vpop.permute.xlu0 %2591
      %v2595 = vsel %vm2149, %v1586, 0
      %2597 = vmatprep.subr.mxu0 0.0
      %2598 = vmatpush1.msra.mxu0 0.0
      %2599 = vmatprep.subr.mxu0 0.0
      %2600 = vmatpush1.msra.mxu0 0.0
      %2601 = vmatprep.subr.mxu0 0.0
      %2602 = vmatpush1.msra.mxu0 0.0
      %2603 = vmatprep.subr.mxu0 0.0
      %2604 = vmatpush1.msra.mxu0 0.0
      %2605 = vmatprep.subr.mxu0 0.0
      %2606 = vmatpush1.msra.mxu0 0.0
      %2607 = vmatprep.subr.mxu0 0.0
      %2608 = vmatpush1.msra.mxu0 0.0
      %2609 = vmatprep.subr.mxu0 0.0
      %2610 = vmatpush1.msra.mxu0 0.0
      %2611 = vmatprep.subr.mxu0 0.0
      %2612 = vmatpush1.msra.mxu0 0.0
      %2613 = vmatprep.subr.mxu0 0.0
      %2614 = vmatpush1.msra.mxu0 0.0
      %2615 = vmatprep.subr.mxu0 0.0
      %2616 = vmatpush1.msra.mxu0 0.0
      %2617 = vmatprep.subr.mxu0 0.0
      %2618 = vmatpush1.msra.mxu0 0.0
      %2619 = vmatprep.subr.mxu0 0.0
      %2620 = vmatpush1.msra.mxu0 0.0
      %2621 = vmatprep.subr.mxu0 0.0
      %2622 = vmatpush1.msra.mxu0 %v2588
      %2623 = vmatprep.subr.mxu0 0.0
      %2624 = vmatpush1.msra.mxu0 %v2587
      %2625 = vmatprep.subr.mxu0 0.0
      %2626 = vmatpush1.msra.mxu0 %v2586
      %2627 = vmatprep.subr.mxu0 0.0
      %2628 = vmatpush1.msra.mxu0 %v2585
      %2629 = vmatprep.subr.mxu0 0.0
      %2630 = vmatpush2.msra.mxu0 0.0
      %2631 = vmatprep.subr.mxu0 0.0
      %2632 = vmatpush2.msra.mxu0 0.0
      %2633 = vmatprep.subr.mxu0 0.0
      %2634 = vmatpush2.msra.mxu0 0.0
      %2635 = vmatprep.subr.mxu0 0.0
      %2636 = vmatpush2.msra.mxu0 0.0
      %2637 = vmatprep.subr.mxu0 0.0
      %2638 = vmatpush2.msra.mxu0 0.0
      %2639 = vmatprep.subr.mxu0 0.0
      %2640 = vmatpush2.msra.mxu0 0.0
      %2641 = vmatprep.subr.mxu0 0.0
      %2642 = vmatpush2.msra.mxu0 0.0
      %2643 = vmatprep.subr.mxu0 0.0
      %2644 = vmatpush2.msra.mxu0 0.0
      %2645 = vmatprep.subr.mxu0 0.0
      %2646 = vmatpush2.msra.mxu0 0.0
      %2647 = vmatprep.subr.mxu0 0.0
      %2648 = vmatpush2.msra.mxu0 0.0
      %2649 = vmatprep.subr.mxu0 0.0
      %2650 = vmatpush2.msra.mxu0 0.0
      %2651 = vmatprep.subr.mxu0 0.0
      %2652 = vmatpush2.msra.mxu0 0.0
      %2653 = vmatprep.subr.mxu0 0.0
      %2654 = vmatpush2.msra.mxu0 0.0
      %2655 = vmatprep.subr.mxu0 0.0
      %2656 = vmatpush2.msra.mxu0 0.0
      %2657 = vmatprep.subr.mxu0 0.0
      %2658 = vmatpush2.msra.mxu0 0.0
      %2659 = vmatprep.subr.mxu0 0.0
      %2660 = vmatpush2.msra.mxu0 0.0
      %2661 = vmatprep.mubr.f32.mxu0 0.0
      %2662 = vmatmul.mubr.f32.gmra.mxu0 %v2595
      %v2663 = vpop.f32.mrf.mxu0
      %v2664 = vadd.f32 %v2592, %v2663
      %v2665 = vpop.f32.mrf.mxu0
      %2666 = vdwg.mxu0
      %v2667 = vlaneseq
      %v2668 = vshrl.u32 %v2667, 7
      %v2669 = vadd.s32 %v2668, 8
      %v2670 = vadd.s32 %v2668, 16
      %v2671 = vadd.s32 %v2668, 24
      %v2672 = vshra.s32 %v1859, 6
      %v2673 = vand.u32 %v1859, 63
      %v2674 = vshra.s32 %v2673, 3
      %v2675 = vand.u32 %v2673, 7
      %v2676 = vmul.u32 %v2672, 16
      %v2677 = vshra.s32 %v2674, 1
      %v2678 = vmul.u32 %v2677, 4
      %v2679 = vadd.s32 %v2676, %v2678
      %v2680 = vshra.s32 %v2675, 1
      %v2681 = vadd.s32 %v2679, %v2680
      %vm2682 = vcmp.eq.s32.totalorder %v2668, %v2681
      %vm2683 = vcmp.eq.s32.totalorder %v2669, %v2681
      %vm2684 = vcmp.eq.s32.totalorder %v2670, %v2681
      %vm2685 = vcmp.eq.s32.totalorder %v2671, %v2681
      %v2686 = vsel %vm2682, 1.0, 0.0
      %v2687 = vsel %vm2683, 1.0, 0.0
      %v2688 = vsel %vm2684, 1.0, 0.0
      %v2689 = vsel %vm2685, 1.0, 0.0
      %v2691 = vsel %vm2149, %v2537, 0
      %v2694 = vsel %vm2149, %v2538, 0
      %v2697 = vsel %vm2149, %v2539, 0
      %v2700 = vsel %vm2149, %v2540, 0
      %2702 = vmatprep.subr.mxu0 0.0
      %2703 = vmatpush1.msra.mxu0 0.0
      %2704 = vmatprep.subr.mxu0 0.0
      %2705 = vmatpush1.msra.mxu0 0.0
      %2706 = vmatprep.subr.mxu0 0.0
      %2707 = vmatpush1.msra.mxu0 0.0
      %2708 = vmatprep.subr.mxu0 0.0
      %2709 = vmatpush1.msra.mxu0 0.0
      %2710 = vmatprep.subr.mxu0 0.0
      %2711 = vmatpush1.msra.mxu0 0.0
      %2712 = vmatprep.subr.mxu0 0.0
      %2713 = vmatpush1.msra.mxu0 0.0
      %2714 = vmatprep.subr.mxu0 0.0
      %2715 = vmatpush1.msra.mxu0 0.0
      %2716 = vmatprep.subr.mxu0 0.0
      %2717 = vmatpush1.msra.mxu0 0.0
      %2718 = vmatprep.subr.mxu0 0.0
      %2719 = vmatpush1.msra.mxu0 0.0
      %2720 = vmatprep.subr.mxu0 0.0
      %2721 = vmatpush1.msra.mxu0 0.0
      %2722 = vmatprep.subr.mxu0 0.0
      %2723 = vmatpush1.msra.mxu0 0.0
      %2724 = vmatprep.subr.mxu0 0.0
      %2725 = vmatpush1.msra.mxu0 0.0
      %2726 = vmatprep.subr.mxu0 0.0
      %2727 = vmatpush1.msra.mxu0 %v2689
      %2728 = vmatprep.subr.mxu0 0.0
      %2729 = vmatpush1.msra.mxu0 %v2688
      %2730 = vmatprep.subr.mxu0 0.0
      %2731 = vmatpush1.msra.mxu0 %v2687
      %2732 = vmatprep.subr.mxu0 0.0
      %2733 = vmatpush1.msra.mxu0 %v2686
      %2734 = vmatprep.subr.mxu0 0.0
      %2735 = vmatpush2.msra.mxu0 0.0
      %2736 = vmatprep.subr.mxu0 0.0
      %2737 = vmatpush2.msra.mxu0 0.0
      %2738 = vmatprep.subr.mxu0 0.0
      %2739 = vmatpush2.msra.mxu0 0.0
      %2740 = vmatprep.subr.mxu0 0.0
      %2741 = vmatpush2.msra.mxu0 0.0
      %2742 = vmatprep.subr.mxu0 0.0
      %2743 = vmatpush2.msra.mxu0 0.0
      %2744 = vmatprep.subr.mxu0 0.0
      %2745 = vmatpush2.msra.mxu0 0.0
      %2746 = vmatprep.subr.mxu0 0.0
      %2747 = vmatpush2.msra.mxu0 0.0
      %2748 = vmatprep.subr.mxu0 0.0
      %2749 = vmatpush2.msra.mxu0 0.0
      %2750 = vmatprep.subr.mxu0 0.0
      %2751 = vmatpush2.msra.mxu0 0.0
      %2752 = vmatprep.subr.mxu0 0.0
      %2753 = vmatpush2.msra.mxu0 0.0
      %2754 = vmatprep.subr.mxu0 0.0
      %2755 = vmatpush2.msra.mxu0 0.0
      %2756 = vmatprep.subr.mxu0 0.0
      %2757 = vmatpush2.msra.mxu0 0.0
      %2758 = vmatprep.subr.mxu0 0.0
      %2759 = vmatpush2.msra.mxu0 0.0
      %2760 = vmatprep.subr.mxu0 0.0
      %2761 = vmatpush2.msra.mxu0 0.0
      %2762 = vmatprep.subr.mxu0 0.0
      %2763 = vmatpush2.msra.mxu0 0.0
      %2764 = vmatprep.subr.mxu0 0.0
      %2765 = vmatpush2.msra.mxu0 0.0
      %2766 = vmatprep.mubr.f32.mxu0 0.0
      %2767 = vmatmul.mubr.f32.gmra.mxu0 %v2691
      %v2768 = vpop.f32.mrf.mxu0
      %v2769 = vadd.f32 0.0, %v2768
      %v2770 = vpop.f32.mrf.mxu0
      %2771 = vmatprep.mubr.f32.mxu0 0.0
      %2772 = vmatmul.mubr.f32.gmra.mxu0 %v2694
      %v2773 = vpop.f32.mrf.mxu0
      %v2774 = vadd.f32 0.0, %v2773
      %v2775 = vpop.f32.mrf.mxu0
      %2776 = vmatprep.mubr.f32.mxu0 0.0
      %2777 = vmatmul.mubr.f32.gmra.mxu0 %v2697
      %v2778 = vpop.f32.mrf.mxu0
      %v2779 = vadd.f32 0.0, %v2778
      %v2780 = vpop.f32.mrf.mxu0
      %2781 = vmatprep.mubr.f32.mxu0 0.0
      %2782 = vmatmul.mubr.f32.gmra.mxu0 %v2700
      %v2783 = vpop.f32.mrf.mxu0
      %v2784 = vadd.f32 0.0, %v2783
      %v2785 = vpop.f32.mrf.mxu0
      %2786 = vdwg.mxu0
      %vm2787 = vcmp.eq.s32.totalorder %v2672, 0
      %v2788 = vsel %vm2787, 1, 0
      %vm2789 = vcmp.eq.s32.totalorder %v2788, 1
      %2791 = vset.pattern.permute.xlu0 0
      %2792 = vperm.xlu0 %2791, %v1800
      %v2793 = vpop.permute.xlu0 %2792
      %2796 = vset.pattern.permute.xlu0 0
      %2797 = vperm.xlu0 %2796, %v1805
      %v2798 = vpop.permute.xlu0 %2797
      %2801 = vset.pattern.permute.xlu0 0
      %2802 = vperm.xlu0 %2801, %v1810
      %v2803 = vpop.permute.xlu0 %2802
      %2806 = vset.pattern.permute.xlu0 0
      %2807 = vperm.xlu0 %2806, %v1815
      %v2808 = vpop.permute.xlu0 %2807
      %v2810 = vsel %vm2789, %v2793, 0.0
      %v2811 = vsel %vm2789, %v2798, 0.0
      %v2812 = vsel %vm2789, %v2803, 0.0
      %v2813 = vsel %vm2789, %v2808, 0.0
      %vm2814 = vcmp.eq.s32.totalorder %v2672, 1
      %v2815 = vsel %vm2814, 1, 0
      %vm2816 = vcmp.eq.s32.totalorder %v2815, 1
      %2817 = vset.pattern.permute.xlu0 1
      %2818 = vperm.xlu0 %2817, %v1800
      %v2819 = vpop.permute.xlu0 %2818
      %2821 = vset.pattern.permute.xlu0 1
      %2822 = vperm.xlu0 %2821, %v1805
      %v2823 = vpop.permute.xlu0 %2822
      %2825 = vset.pattern.permute.xlu0 1
      %2826 = vperm.xlu0 %2825, %v1810
      %v2827 = vpop.permute.xlu0 %2826
      %2829 = vset.pattern.permute.xlu0 1
      %2830 = vperm.xlu0 %2829, %v1815
      %v2831 = vpop.permute.xlu0 %2830
      %v2833 = vsel %vm2816, %v2819, %v2810
      %v2834 = vsel %vm2816, %v2823, %v2811
      %v2835 = vsel %vm2816, %v2827, %v2812
      %v2836 = vsel %vm2816, %v2831, %v2813
      %v2837 = vmul.f32 %v2769, %v2833
      %v2838 = vmul.f32 %v2774, %v2834
      %v2839 = vmul.f32 %v2779, %v2835
      %v2840 = vmul.f32 %v2784, %v2836
      %v2841 = vadd.s32 %v2674, 4294967295
      %v2842 = vadd.s32 %v2675, 4294967295
      %vm2843 = vcmp.ge.s32.totalorder %v2841, 0
      %vm2844 = vcmp.lt.s32.totalorder %v2841, 8
      %vm2845 = vmand %vm2843, %vm2844
      %vm2846 = vcmp.ge.s32.totalorder %v2842, 0
      %vm2847 = vmand %vm2845, %vm2846
      %vm2848 = vcmp.lt.s32.totalorder %v2842, 8
      %vm2849 = vmand %vm2847, %vm2848
      %vm2850 = vcmp.ge.s32.totalorder %v2675, 0
      %vm2851 = vmand %vm2845, %vm2850
      %vm2852 = vcmp.lt.s32.totalorder %v2675, 8
      %vm2853 = vmand %vm2851, %vm2852
      %v2854 = vadd.s32 %v2675, 1
      %vm2855 = vcmp.ge.s32.totalorder %v2854, 0
      %vm2856 = vmand %vm2845, %vm2855
      %vm2857 = vcmp.lt.s32.totalorder %v2854, 8
      %vm2858 = vmand %vm2856, %vm2857
      %vm2859 = vcmp.ge.s32.totalorder %v2674, 0
      %vm2860 = vcmp.lt.s32.totalorder %v2674, 8
      %vm2861 = vmand %vm2859, %vm2860
      %vm2862 = vmand %vm2861, %vm2846
      %vm2863 = vmand %vm2862, %vm2848
      %vm2864 = vmand %vm2861, %vm2850
      %vm2865 = vmand %vm2864, %vm2852
      %vm2866 = vmand %vm2861, %vm2855
      %vm2867 = vmand %vm2866, %vm2857
      %v2868 = vadd.s32 %v2674, 1
      %vm2869 = vcmp.ge.s32.totalorder %v2868, 0
      %vm2870 = vcmp.lt.s32.totalorder %v2868, 8
      %vm2871 = vmand %vm2869, %vm2870
      %vm2872 = vmand %vm2871, %vm2846
      %vm2873 = vmand %vm2872, %vm2848
      %vm2874 = vmand %vm2871, %vm2850
      %vm2875 = vmand %vm2874, %vm2852
      %vm2876 = vmand %vm2871, %vm2855
      %vm2877 = vmand %vm2876, %vm2857
      %2882 = vrot.lane.b32.xlu0 %v2837, 9
      %v2883 = vpop.permute.xlu0 %2882
      %2884 = vrot.lane.b32.xlu0 %v2838, 9
      %v2885 = vpop.permute.xlu0 %2884
      %2886 = vrot.lane.b32.xlu0 %v2839, 9
      %v2887 = vpop.permute.xlu0 %2886
      %2888 = vrot.lane.b32.xlu0 %v2840, 9
      %v2889 = vpop.permute.xlu0 %2888
      %vm2894 = vcmask 72704
      %v2895 = vsel %vm2894, 0.0, %v2883
      %v2896 = vsel %vm2894, 0.0, %v2885
      %v2897 = vsel %vm2894, 0.0, %v2887
      %v2898 = vsel %vm2894, 0.0, %v2889
      %v2899 = vsel %vm2849, 1, 0
      %vm2900 = vcmp.eq.s32.totalorder %v2899, 1
      %v2901 = vsel %vm2900, %v2895, 0.0
      %v2902 = vsel %vm2900, %v2896, 0.0
      %v2903 = vsel %vm2900, %v2897, 0.0
      %v2904 = vsel %vm2900, %v2898, 0.0
      %2905 = vrot.lane.b32.xlu0 %v2837, 8
      %v2906 = vpop.permute.xlu0 %2905
      %2907 = vrot.lane.b32.xlu0 %v2838, 8
      %v2908 = vpop.permute.xlu0 %2907
      %2909 = vrot.lane.b32.xlu0 %v2839, 8
      %v2910 = vpop.permute.xlu0 %2909
      %2911 = vrot.lane.b32.xlu0 %v2840, 8
      %v2912 = vpop.permute.xlu0 %2911
      %vm2917 = vcmask 64512
      %v2918 = vsel %vm2917, 0.0, %v2906
      %v2919 = vsel %vm2917, 0.0, %v2908
      %v2920 = vsel %vm2917, 0.0, %v2910
      %v2921 = vsel %vm2917, 0.0, %v2912
      %v2922 = vsel %vm2853, 1, 0
      %vm2923 = vcmp.eq.s32.totalorder %v2922, 1
      %v2924 = vsel %vm2923, %v2918, 0.0
      %v2925 = vsel %vm2923, %v2919, 0.0
      %v2926 = vsel %vm2923, %v2920, 0.0
      %v2927 = vsel %vm2923, %v2921, 0.0
      %2928 = vrot.lane.b32.xlu0 %v2837, 7
      %v2929 = vpop.permute.xlu0 %2928
      %2930 = vrot.lane.b32.xlu0 %v2838, 7
      %v2931 = vpop.permute.xlu0 %2930
      %2932 = vrot.lane.b32.xlu0 %v2839, 7
      %v2933 = vpop.permute.xlu0 %2932
      %2934 = vrot.lane.b32.xlu0 %v2840, 7
      %v2935 = vpop.permute.xlu0 %2934
      %vm2940 = vcmask 56320
      %v2941 = vsel %vm2940, 0.0, %v2929
      %v2942 = vsel %vm2940, 0.0, %v2931
      %v2943 = vsel %vm2940, 0.0, %v2933
      %v2944 = vsel %vm2940, 0.0, %v2935
      %v2945 = vsel %vm2858, 1, 0
      %vm2946 = vcmp.eq.s32.totalorder %v2945, 1
      %v2947 = vsel %vm2946, %v2941, 0.0
      %v2948 = vsel %vm2946, %v2942, 0.0
      %v2949 = vsel %vm2946, %v2943, 0.0
      %v2950 = vsel %vm2946, %v2944, 0.0
      %2951 = vrot.lane.b32.xlu0 %v2837, 1
      %v2952 = vpop.permute.xlu0 %2951
      %2953 = vrot.lane.b32.xlu0 %v2838, 1
      %v2954 = vpop.permute.xlu0 %2953
      %2955 = vrot.lane.b32.xlu0 %v2839, 1
      %v2956 = vpop.permute.xlu0 %2955
      %2957 = vrot.lane.b32.xlu0 %v2840, 1
      %v2958 = vpop.permute.xlu0 %2957
      %v2963 = vsel %vm2040, 0.0, %v2952
      %v2964 = vsel %vm2040, 0.0, %v2954
      %v2965 = vsel %vm2040, 0.0, %v2956
      %v2966 = vsel %vm2040, 0.0, %v2958
      %v2967 = vsel %vm2863, 1, 0
      %vm2968 = vcmp.eq.s32.totalorder %v2967, 1
      %v2969 = vsel %vm2968, %v2963, 0.0
      %v2970 = vsel %vm2968, %v2964, 0.0
      %v2971 = vsel %vm2968, %v2965, 0.0
      %v2972 = vsel %vm2968, %v2966, 0.0
      %v2973 = vsel %vm2865, 1, 0
      %vm2974 = vcmp.eq.s32.totalorder %v2973, 1
      %v2975 = vsel %vm2974, %v2837, 0.0
      %v2976 = vsel %vm2974, %v2838, 0.0
      %v2977 = vsel %vm2974, %v2839, 0.0
      %v2978 = vsel %vm2974, %v2840, 0.0
      %2979 = vrot.lane.b32.xlu0 %v2837, 127
      %v2980 = vpop.permute.xlu0 %2979
      %2981 = vrot.lane.b32.xlu0 %v2838, 127
      %v2982 = vpop.permute.xlu0 %2981
      %2983 = vrot.lane.b32.xlu0 %v2839, 127
      %v2984 = vpop.permute.xlu0 %2983
      %2985 = vrot.lane.b32.xlu0 %v2840, 127
      %v2986 = vpop.permute.xlu0 %2985
      %vm2991 = vcmask 1039360
      %v2992 = vsel %vm2991, %v2980, 0.0
      %v2993 = vsel %vm2991, %v2982, 0.0
      %v2994 = vsel %vm2991, %v2984, 0.0
      %v2995 = vsel %vm2991, %v2986, 0.0
      %v2996 = vsel %vm2867, 1, 0
      %vm2997 = vcmp.eq.s32.totalorder %v2996, 1
      %v2998 = vsel %vm2997, %v2992, 0.0
      %v2999 = vsel %vm2997, %v2993, 0.0
      %v3000 = vsel %vm2997, %v2994, 0.0
      %v3001 = vsel %vm2997, %v2995, 0.0
      %3002 = vrot.lane.b32.xlu0 %v2837, 121
      %v3003 = vpop.permute.xlu0 %3002
      %3004 = vrot.lane.b32.xlu0 %v2838, 121
      %v3005 = vpop.permute.xlu0 %3004
      %3006 = vrot.lane.b32.xlu0 %v2839, 121
      %v3007 = vpop.permute.xlu0 %3006
      %3008 = vrot.lane.b32.xlu0 %v2840, 121
      %v3009 = vpop.permute.xlu0 %3008
      %vm3014 = vcmask 990208
      %v3015 = vsel %vm3014, %v3003, 0.0
      %v3016 = vsel %vm3014, %v3005, 0.0
      %v3017 = vsel %vm3014, %v3007, 0.0
      %v3018 = vsel %vm3014, %v3009, 0.0
      %v3019 = vsel %vm2873, 1, 0
      %vm3020 = vcmp.eq.s32.totalorder %v3019, 1
      %v3021 = vsel %vm3020, %v3015, 0.0
      %v3022 = vsel %vm3020, %v3016, 0.0
      %v3023 = vsel %vm3020, %v3017, 0.0
      %v3024 = vsel %vm3020, %v3018, 0.0
      %3025 = vrot.lane.b32.xlu0 %v2837, 120
      %v3026 = vpop.permute.xlu0 %3025
      %3027 = vrot.lane.b32.xlu0 %v2838, 120
      %v3028 = vpop.permute.xlu0 %3027
      %3029 = vrot.lane.b32.xlu0 %v2839, 120
      %v3030 = vpop.permute.xlu0 %3029
      %3031 = vrot.lane.b32.xlu0 %v2840, 120
      %v3032 = vpop.permute.xlu0 %3031
      %vm3037 = vcmask 982016
      %v3038 = vsel %vm3037, %v3026, 0.0
      %v3039 = vsel %vm3037, %v3028, 0.0
      %v3040 = vsel %vm3037, %v3030, 0.0
      %v3041 = vsel %vm3037, %v3032, 0.0
      %v3042 = vsel %vm2875, 1, 0
      %vm3043 = vcmp.eq.s32.totalorder %v3042, 1
      %v3044 = vsel %vm3043, %v3038, 0.0
      %v3045 = vsel %vm3043, %v3039, 0.0
      %v3046 = vsel %vm3043, %v3040, 0.0
      %v3047 = vsel %vm3043, %v3041, 0.0
      %3048 = vrot.lane.b32.xlu0 %v2837, 119
      %v3049 = vpop.permute.xlu0 %3048
      %3050 = vrot.lane.b32.xlu0 %v2838, 119
      %v3051 = vpop.permute.xlu0 %3050
      %3052 = vrot.lane.b32.xlu0 %v2839, 119
      %v3053 = vpop.permute.xlu0 %3052
      %3054 = vrot.lane.b32.xlu0 %v2840, 119
      %v3055 = vpop.permute.xlu0 %3054
      %vm3060 = vcmask 973824
      %v3061 = vsel %vm3060, %v3049, 0.0
      %v3062 = vsel %vm3060, %v3051, 0.0
      %v3063 = vsel %vm3060, %v3053, 0.0
      %v3064 = vsel %vm3060, %v3055, 0.0
      %v3065 = vsel %vm2877, 1, 0
      %vm3066 = vcmp.eq.s32.totalorder %v3065, 1
      %v3067 = vsel %vm3066, %v3061, 0.0
      %v3068 = vsel %vm3066, %v3062, 0.0
      %v3069 = vsel %vm3066, %v3063, 0.0
      %v3070 = vsel %vm3066, %v3064, 0.0
      %v3072 = vsel %vm2149, %v1559, 0
      %v3075 = vsel %vm2149, %v1562, 0
      %3077 = vmatprep.subr.mxu0 0.0
      %3078 = vmatpush1.msra.mxu0 %v2972
      %3079 = vmatprep.subr.mxu0 0.0
      %3080 = vmatpush1.msra.mxu0 %v2971
      %3081 = vmatprep.subr.mxu0 0.0
      %3082 = vmatpush1.msra.mxu0 %v2970
      %3083 = vmatprep.subr.mxu0 0.0
      %3084 = vmatpush1.msra.mxu0 %v2969
      %3085 = vmatprep.subr.mxu0 0.0
      %3086 = vmatpush1.msra.mxu0 %v2950
      %3087 = vmatprep.subr.mxu0 0.0
      %3088 = vmatpush1.msra.mxu0 %v2949
      %3089 = vmatprep.subr.mxu0 0.0
      %3090 = vmatpush1.msra.mxu0 %v2948
      %3091 = vmatprep.subr.mxu0 0.0
      %3092 = vmatpush1.msra.mxu0 %v2947
      %3093 = vmatprep.subr.mxu0 0.0
      %3094 = vmatpush1.msra.mxu0 %v2927
      %3095 = vmatprep.subr.mxu0 0.0
      %3096 = vmatpush1.msra.mxu0 %v2926
      %3097 = vmatprep.subr.mxu0 0.0
      %3098 = vmatpush1.msra.mxu0 %v2925
      %3099 = vmatprep.subr.mxu0 0.0
      %3100 = vmatpush1.msra.mxu0 %v2924
      %3101 = vmatprep.subr.mxu0 0.0
      %3102 = vmatpush1.msra.mxu0 %v2904
      %3103 = vmatprep.subr.mxu0 0.0
      %3104 = vmatpush1.msra.mxu0 %v2903
      %3105 = vmatprep.subr.mxu0 0.0
      %3106 = vmatpush1.msra.mxu0 %v2902
      %3107 = vmatprep.subr.mxu0 0.0
      %3108 = vmatpush1.msra.mxu0 %v2901
      %3109 = vmatprep.subr.mxu0 0.0
      %3110 = vmatpush2.msra.mxu0 %v3047
      %3111 = vmatprep.subr.mxu0 0.0
      %3112 = vmatpush2.msra.mxu0 %v3046
      %3113 = vmatprep.subr.mxu0 0.0
      %3114 = vmatpush2.msra.mxu0 %v3045
      %3115 = vmatprep.subr.mxu0 0.0
      %3116 = vmatpush2.msra.mxu0 %v3044
      %3117 = vmatprep.subr.mxu0 0.0
      %3118 = vmatpush2.msra.mxu0 %v3024
      %3119 = vmatprep.subr.mxu0 0.0
      %3120 = vmatpush2.msra.mxu0 %v3023
      %3121 = vmatprep.subr.mxu0 0.0
      %3122 = vmatpush2.msra.mxu0 %v3022
      %3123 = vmatprep.subr.mxu0 0.0
      %3124 = vmatpush2.msra.mxu0 %v3021
      %3125 = vmatprep.subr.mxu0 0.0
      %3126 = vmatpush2.msra.mxu0 %v3001
      %3127 = vmatprep.subr.mxu0 0.0
      %3128 = vmatpush2.msra.mxu0 %v3000
      %3129 = vmatprep.subr.mxu0 0.0
      %3130 = vmatpush2.msra.mxu0 %v2999
      %3131 = vmatprep.subr.mxu0 0.0
      %3132 = vmatpush2.msra.mxu0 %v2998
      %3133 = vmatprep.subr.mxu0 0.0
      %3134 = vmatpush2.msra.mxu0 %v2978
      %3135 = vmatprep.subr.mxu0 0.0
      %3136 = vmatpush2.msra.mxu0 %v2977
      %3137 = vmatprep.subr.mxu0 0.0
      %3138 = vmatpush2.msra.mxu0 %v2976
      %3139 = vmatprep.subr.mxu0 0.0
      %3140 = vmatpush2.msra.mxu0 %v2975
      %3141 = vmatprep.mubr.f32.mxu0 %v1558
      %3142 = vmatmul.mubr.f32.gmra.mxu0 %v1557
      %v3143 = vpop.f32.mrf.mxu0
      %v3144 = vadd.f32 0.0, %v3143
      %v3145 = vpop.f32.mrf.mxu0
      %3146 = vmatprep.mubr.f32.mxu0 %v1561
      %3147 = vmatmul.mubr.f32.gmra.mxu0 %v1560
      %v3148 = vpop.f32.mrf.mxu0
      %v3149 = vadd.f32 0.0, %v3148
      %v3150 = vpop.f32.mrf.mxu0
      %3151 = vdwg.mxu0
      %3152 = vmatprep.subr.mxu0 0.0
      %3153 = vmatpush1.msra.mxu0 0.0
      %3154 = vmatprep.subr.mxu0 0.0
      %3155 = vmatpush1.msra.mxu0 0.0
      %3156 = vmatprep.subr.mxu0 0.0
      %3157 = vmatpush1.msra.mxu0 0.0
      %3158 = vmatprep.subr.mxu0 0.0
      %3159 = vmatpush1.msra.mxu0 0.0
      %3160 = vmatprep.subr.mxu0 0.0
      %3161 = vmatpush1.msra.mxu0 0.0
      %3162 = vmatprep.subr.mxu0 0.0
      %3163 = vmatpush1.msra.mxu0 0.0
      %3164 = vmatprep.subr.mxu0 0.0
      %3165 = vmatpush1.msra.mxu0 0.0
      %3166 = vmatprep.subr.mxu0 0.0
      %3167 = vmatpush1.msra.mxu0 0.0
      %3168 = vmatprep.subr.mxu0 0.0
      %3169 = vmatpush1.msra.mxu0 0.0
      %3170 = vmatprep.subr.mxu0 0.0
      %3171 = vmatpush1.msra.mxu0 0.0
      %3172 = vmatprep.subr.mxu0 0.0
      %3173 = vmatpush1.msra.mxu0 0.0
      %3174 = vmatprep.subr.mxu0 0.0
      %3175 = vmatpush1.msra.mxu0 0.0
      %3176 = vmatprep.subr.mxu0 0.0
      %3177 = vmatpush1.msra.mxu0 %v3070
      %3178 = vmatprep.subr.mxu0 0.0
      %3179 = vmatpush1.msra.mxu0 %v3069
      %3180 = vmatprep.subr.mxu0 0.0
      %3181 = vmatpush1.msra.mxu0 %v3068
      %3182 = vmatprep.subr.mxu0 0.0
      %3183 = vmatpush1.msra.mxu0 %v3067
      %3184 = vmatprep.subr.mxu0 0.0
      %3185 = vmatpush2.msra.mxu0 0.0
      %3186 = vmatprep.subr.mxu0 0.0
      %3187 = vmatpush2.msra.mxu0 0.0
      %3188 = vmatprep.subr.mxu0 0.0
      %3189 = vmatpush2.msra.mxu0 0.0
      %3190 = vmatprep.subr.mxu0 0.0
      %3191 = vmatpush2.msra.mxu0 0.0
      %3192 = vmatprep.subr.mxu0 0.0
      %3193 = vmatpush2.msra.mxu0 0.0
      %3194 = vmatprep.subr.mxu0 0.0
      %3195 = vmatpush2.msra.mxu0 0.0
      %3196 = vmatprep.subr.mxu0 0.0
      %3197 = vmatpush2.msra.mxu0 0.0
      %3198 = vmatprep.subr.mxu0 0.0
      %3199 = vmatpush2.msra.mxu0 0.0
      %3200 = vmatprep.subr.mxu0 0.0
      %3201 = vmatpush2.msra.mxu0 0.0
      %3202 = vmatprep.subr.mxu0 0.0
      %3203 = vmatpush2.msra.mxu0 0.0
      %3204 = vmatprep.subr.mxu0 0.0
      %3205 = vmatpush2.msra.mxu0 0.0
      %3206 = vmatprep.subr.mxu0 0.0
      %3207 = vmatpush2.msra.mxu0 0.0
      %3208 = vmatprep.subr.mxu0 0.0
      %3209 = vmatpush2.msra.mxu0 0.0
      %3210 = vmatprep.subr.mxu0 0.0
      %3211 = vmatpush2.msra.mxu0 0.0
      %3212 = vmatprep.subr.mxu0 0.0
      %3213 = vmatpush2.msra.mxu0 0.0
      %3214 = vmatprep.subr.mxu0 0.0
      %3215 = vmatpush2.msra.mxu0 0.0
      %3216 = vmatprep.mubr.f32.mxu0 0.0
      %3217 = vmatmul.mubr.f32.gmra.mxu0 %v3072
      %v3218 = vpop.f32.mrf.mxu0
      %v3219 = vadd.f32 %v3144, %v3218
      %v3220 = vpop.f32.mrf.mxu0
      %3221 = vmatprep.mubr.f32.mxu0 0.0
      %3222 = vmatmul.mubr.f32.gmra.mxu0 %v3075
      %v3223 = vpop.f32.mrf.mxu0
      %v3224 = vadd.f32 %v3149, %v3223
      %v3225 = vpop.f32.mrf.mxu0
      %3226 = vdwg.mxu0
      %v3227 = vmul.f32 %v1800, %v1800
      %v3228 = vmul.f32 %v1805, %v1805
      %v3229 = vmul.f32 %v1810, %v1810
      %v3230 = vmul.f32 %v1815, %v1815
      %v3232 = vsel %vm2149, %v1563, 0
      %v3235 = vsel %vm2149, %v1564, 0
      %3237 = vmatprep.subr.mxu0 0.0
      %3238 = vmatpush1.msra.mxu0 0.0
      %3239 = vmatprep.subr.mxu0 0.0
      %3240 = vmatpush1.msra.mxu0 0.0
      %3241 = vmatprep.subr.mxu0 0.0
      %3242 = vmatpush1.msra.mxu0 0.0
      %3243 = vmatprep.subr.mxu0 0.0
      %3244 = vmatpush1.msra.mxu0 0.0
      %3245 = vmatprep.subr.mxu0 0.0
      %3246 = vmatpush1.msra.mxu0 0.0
      %3247 = vmatprep.subr.mxu0 0.0
      %3248 = vmatpush1.msra.mxu0 0.0
      %3249 = vmatprep.subr.mxu0 0.0
      %3250 = vmatpush1.msra.mxu0 0.0
      %3251 = vmatprep.subr.mxu0 0.0
      %3252 = vmatpush1.msra.mxu0 0.0
      %3253 = vmatprep.subr.mxu0 0.0
      %3254 = vmatpush1.msra.mxu0 0.0
      %3255 = vmatprep.subr.mxu0 0.0
      %3256 = vmatpush1.msra.mxu0 0.0
      %3257 = vmatprep.subr.mxu0 0.0
      %3258 = vmatpush1.msra.mxu0 0.0
      %3259 = vmatprep.subr.mxu0 0.0
      %3260 = vmatpush1.msra.mxu0 0.0
      %3261 = vmatprep.subr.mxu0 0.0
      %3262 = vmatpush1.msra.mxu0 %v3230
      %3263 = vmatprep.subr.mxu0 0.0
      %3264 = vmatpush1.msra.mxu0 %v3229
      %3265 = vmatprep.subr.mxu0 0.0
      %3266 = vmatpush1.msra.mxu0 %v3228
      %3267 = vmatprep.subr.mxu0 0.0
      %3268 = vmatpush1.msra.mxu0 %v3227
      %3269 = vmatprep.subr.mxu0 0.0
      %3270 = vmatpush2.msra.mxu0 0.0
      %3271 = vmatprep.subr.mxu0 0.0
      %3272 = vmatpush2.msra.mxu0 0.0
      %3273 = vmatprep.subr.mxu0 0.0
      %3274 = vmatpush2.msra.mxu0 0.0
      %3275 = vmatprep.subr.mxu0 0.0
      %3276 = vmatpush2.msra.mxu0 0.0
      %3277 = vmatprep.subr.mxu0 0.0
      %3278 = vmatpush2.msra.mxu0 0.0
      %3279 = vmatprep.subr.mxu0 0.0
      %3280 = vmatpush2.msra.mxu0 0.0
      %3281 = vmatprep.subr.mxu0 0.0
      %3282 = vmatpush2.msra.mxu0 0.0
      %3283 = vmatprep.subr.mxu0 0.0
      %3284 = vmatpush2.msra.mxu0 0.0
      %3285 = vmatprep.subr.mxu0 0.0
      %3286 = vmatpush2.msra.mxu0 0.0
      %3287 = vmatprep.subr.mxu0 0.0
      %3288 = vmatpush2.msra.mxu0 0.0
      %3289 = vmatprep.subr.mxu0 0.0
      %3290 = vmatpush2.msra.mxu0 0.0
      %3291 = vmatprep.subr.mxu0 0.0
      %3292 = vmatpush2.msra.mxu0 0.0
      %3293 = vmatprep.subr.mxu0 0.0
      %3294 = vmatpush2.msra.mxu0 0.0
      %3295 = vmatprep.subr.mxu0 0.0
      %3296 = vmatpush2.msra.mxu0 0.0
      %3297 = vmatprep.subr.mxu0 0.0
      %3298 = vmatpush2.msra.mxu0 0.0
      %3299 = vmatprep.subr.mxu0 0.0
      %3300 = vmatpush2.msra.mxu0 0.0
      %3301 = vmatprep.mubr.f32.mxu0 0.0
      %3302 = vmatmul.mubr.f32.gmra.mxu0 %v3232
      %v3303 = vpop.f32.mrf.mxu0
      %v3304 = vadd.f32 1e-08, %v3303
      %v3305 = vpop.f32.mrf.mxu0
      %3306 = vmatprep.mubr.f32.mxu0 0.0
      %3307 = vmatmul.mubr.f32.gmra.mxu0 %v3235
      %v3308 = vpop.f32.mrf.mxu0
      %v3309 = vadd.f32 1e-08, %v3308
      %v3310 = vpop.f32.mrf.mxu0
      %3311 = vdwg.mxu0
      %v3312 = vrsqrt.pop %v3304
      %v3313 = vrsqrt.pop %v3309
      %3315 = vset.pattern.permute.xlu0 0
      %3316 = vperm.xlu0 %3315, %v3312
      %v3317 = vpop.permute.xlu0 %3316
      %3320 = vset.pattern.permute.xlu0 0
      %3321 = vperm.xlu0 %3320, %v3313
      %v3322 = vpop.permute.xlu0 %3321
      %v3324 = vsel %vm2789, %v3317, 0.0
      %v3325 = vsel %vm2789, %v3322, 0.0
      %3326 = vset.pattern.permute.xlu0 1
      %3327 = vperm.xlu0 %3326, %v3312
      %v3328 = vpop.permute.xlu0 %3327
      %3330 = vset.pattern.permute.xlu0 1
      %3331 = vperm.xlu0 %3330, %v3313
      %v3332 = vpop.permute.xlu0 %3331
      %v3334 = vsel %vm2816, %v3328, %v3324
      %v3335 = vsel %vm2816, %v3332, %v3325
      %v3336 = vmul.f32 %v3219, %v3334
      %v3337 = vmul.f32 %v3224, %v3335
      %3338 = vset.pattern.permute.xlu0 1
      %3339 = vperm.xlu0 %3338, %v1592
      %v3340 = vpop.permute.xlu0 %3339
      %v3342 = vlaneseq
      %v3343 = vshrl.u32 %v3342, 7
      %v3344 = vsub.s32 0, %v3343
      %v3345 = vrot.slane %v3340, %v3344
      %v3346 = vmul.f32 %v3345, %v1567
      %v3348 = vlaneseq
      %v3349 = vshrl.u32 %v3348, 7
      %v3350 = vsub.s32 0, %v3349
      %v3351 = vrot.slane %v3346, %v3350
      %v3353 = vadd.f32 %v3336, %v3351
      %v3354 = vadd.f32 %v3337, %v3351
      %3356 = vset.pattern.permute.xlu0 0
      %3357 = vperm.xlu0 %3356, %v1565
      %v3358 = vpop.permute.xlu0 %3357
      %3361 = vset.pattern.permute.xlu0 0
      %3362 = vperm.xlu0 %3361, %v1566
      %v3363 = vpop.permute.xlu0 %3362
      %v3365 = vadd.f32 %v3353, %v3358
      %v3366 = vadd.f32 %v3354, %v3363
      %v3367 = vmul.f32 %v3365, 0.2
      %v3368 = vmul.f32 %v3366, 0.2
      %v3369 = vmax.f32 %v3365, %v3367
      %v3370 = vmax.f32 %v3366, %v3368
      %v3371 = vmul.f32 %v3369, 1.4142135
      %v3372 = vmul.f32 %v3370, 1.4142135
      %3374 = vset.pattern.permute.xlu0 0
      %3375 = vperm.xlu0 %3374, %v1820
      %v3376 = vpop.permute.xlu0 %3375
      %3379 = vset.pattern.permute.xlu0 0
      %3380 = vperm.xlu0 %3379, %v1825
      %v3381 = vpop.permute.xlu0 %3380
      %v3383 = vsel %vm2789, %v3376, 0.0
      %v3384 = vsel %vm2789, %v3381, 0.0
      %3385 = vset.pattern.permute.xlu0 1
      %3386 = vperm.xlu0 %3385, %v1820
      %v3387 = vpop.permute.xlu0 %3386
      %3389 = vset.pattern.permute.xlu0 1
      %3390 = vperm.xlu0 %3389, %v1825
      %v3391 = vpop.permute.xlu0 %3390
      %v3393 = vsel %vm2816, %v3387, %v3383
      %v3394 = vsel %vm2816, %v3391, %v3384
      %v3395 = vmul.f32 %v3371, %v3393
      %v3396 = vmul.f32 %v3372, %v3394
      %3399 = vrot.lane.b32.xlu0 %v3395, 9
      %v3400 = vpop.permute.xlu0 %3399
      %3401 = vrot.lane.b32.xlu0 %v3396, 9
      %v3402 = vpop.permute.xlu0 %3401
      %v3405 = vsel %vm2894, 0.0, %v3400
      %v3406 = vsel %vm2894, 0.0, %v3402
      %v3407 = vsel %vm2900, %v3405, 0.0
      %v3408 = vsel %vm2900, %v3406, 0.0
      %3409 = vrot.lane.b32.xlu0 %v3395, 8
      %v3410 = vpop.permute.xlu0 %3409
      %3411 = vrot.lane.b32.xlu0 %v3396, 8
      %v3412 = vpop.permute.xlu0 %3411
      %v3415 = vsel %vm2917, 0.0, %v3410
      %v3416 = vsel %vm2917, 0.0, %v3412
      %v3417 = vsel %vm2923, %v3415, 0.0
      %v3418 = vsel %vm2923, %v3416, 0.0
      %3419 = vrot.lane.b32.xlu0 %v3395, 7
      %v3420 = vpop.permute.xlu0 %3419
      %3421 = vrot.lane.b32.xlu0 %v3396, 7
      %v3422 = vpop.permute.xlu0 %3421
      %v3425 = vsel %vm2940, 0.0, %v3420
      %v3426 = vsel %vm2940, 0.0, %v3422
      %v3427 = vsel %vm2946, %v3425, 0.0
      %v3428 = vsel %vm2946, %v3426, 0.0
      %3429 = vrot.lane.b32.xlu0 %v3395, 1
      %v3430 = vpop.permute.xlu0 %3429
      %3431 = vrot.lane.b32.xlu0 %v3396, 1
      %v3432 = vpop.permute.xlu0 %3431
      %v3435 = vsel %vm2040, 0.0, %v3430
      %v3436 = vsel %vm2040, 0.0, %v3432
      %v3437 = vsel %vm2968, %v3435, 0.0
      %v3438 = vsel %vm2968, %v3436, 0.0
      %v3439 = vsel %vm2974, %v3395, 0.0
      %v3440 = vsel %vm2974, %v3396, 0.0
      %3441 = vrot.lane.b32.xlu0 %v3395, 127
      %v3442 = vpop.permute.xlu0 %3441
      %3443 = vrot.lane.b32.xlu0 %v3396, 127
      %v3444 = vpop.permute.xlu0 %3443
      %v3447 = vsel %vm2991, %v3442, 0.0
      %v3448 = vsel %vm2991, %v3444, 0.0
      %v3449 = vsel %vm2997, %v3447, 0.0
      %v3450 = vsel %vm2997, %v3448, 0.0
      %3451 = vrot.lane.b32.xlu0 %v3395, 121
      %v3452 = vpop.permute.xlu0 %3451
      %3453 = vrot.lane.b32.xlu0 %v3396, 121
      %v3454 = vpop.permute.xlu0 %3453
      %v3457 = vsel %vm3014, %v3452, 0.0
      %v3458 = vsel %vm3014, %v3454, 0.0
      %v3459 = vsel %vm3020, %v3457, 0.0
      %v3460 = vsel %vm3020, %v3458, 0.0
      %3461 = vrot.lane.b32.xlu0 %v3395, 120
      %v3462 = vpop.permute.xlu0 %3461
      %3463 = vrot.lane.b32.xlu0 %v3396, 120
      %v3464 = vpop.permute.xlu0 %3463
      %v3467 = vsel %vm3037, %v3462, 0.0
      %v3468 = vsel %vm3037, %v3464, 0.0
      %v3469 = vsel %vm3043, %v3467, 0.0
      %v3470 = vsel %vm3043, %v3468, 0.0
      %3471 = vrot.lane.b32.xlu0 %v3395, 119
      %v3472 = vpop.permute.xlu0 %3471
      %3473 = vrot.lane.b32.xlu0 %v3396, 119
      %v3474 = vpop.permute.xlu0 %3473
      %v3477 = vsel %vm3060, %v3472, 0.0
      %v3478 = vsel %vm3060, %v3474, 0.0
      %v3479 = vsel %vm3066, %v3477, 0.0
      %v3480 = vsel %vm3066, %v3478, 0.0
      %vm3481 = vcmask 130048
      %v3483 = vsel %vm3481, %v1569, 0
      %v3486 = vsel %vm3481, %v1571, 0
      %3488 = vmatprep.subr.mxu0 0.0
      %3489 = vmatpush1.msra.mxu0 %v3470
      %3490 = vmatprep.subr.mxu0 0.0
      %3491 = vmatpush1.msra.mxu0 %v3469
      %3492 = vmatprep.subr.mxu0 0.0
      %3493 = vmatpush1.msra.mxu0 %v3460
      %3494 = vmatprep.subr.mxu0 0.0
      %3495 = vmatpush1.msra.mxu0 %v3459
      %3496 = vmatprep.subr.mxu0 0.0
      %3497 = vmatpush1.msra.mxu0 %v3450
      %3498 = vmatprep.subr.mxu0 0.0
      %3499 = vmatpush1.msra.mxu0 %v3449
      %3500 = vmatprep.subr.mxu0 0.0
      %3501 = vmatpush1.msra.mxu0 %v3440
      %3502 = vmatprep.subr.mxu0 0.0
      %3503 = vmatpush1.msra.mxu0 %v3439
      %3504 = vmatprep.subr.mxu0 0.0
      %3505 = vmatpush1.msra.mxu0 %v3438
      %3506 = vmatprep.subr.mxu0 0.0
      %3507 = vmatpush1.msra.mxu0 %v3437
      %3508 = vmatprep.subr.mxu0 0.0
      %3509 = vmatpush1.msra.mxu0 %v3428
      %3510 = vmatprep.subr.mxu0 0.0
      %3511 = vmatpush1.msra.mxu0 %v3427
      %3512 = vmatprep.subr.mxu0 0.0
      %3513 = vmatpush1.msra.mxu0 %v3418
      %3514 = vmatprep.subr.mxu0 0.0
      %3515 = vmatpush1.msra.mxu0 %v3417
      %3516 = vmatprep.subr.mxu0 0.0
      %3517 = vmatpush1.msra.mxu0 %v3408
      %3518 = vmatprep.subr.mxu0 0.0
      %3519 = vmatpush1.msra.mxu0 %v3407
      %3520 = vmatprep.subr.mxu0 0.0
      %3521 = vmatpush2.msra.mxu0 0.0
      %3522 = vmatprep.subr.mxu0 0.0
      %3523 = vmatpush2.msra.mxu0 0.0
      %3524 = vmatprep.subr.mxu0 0.0
      %3525 = vmatpush2.msra.mxu0 0.0
      %3526 = vmatprep.subr.mxu0 0.0
      %3527 = vmatpush2.msra.mxu0 0.0
      %3528 = vmatprep.subr.mxu0 0.0
      %3529 = vmatpush2.msra.mxu0 0.0
      %3530 = vmatprep.subr.mxu0 0.0
      %3531 = vmatpush2.msra.mxu0 0.0
      %3532 = vmatprep.subr.mxu0 0.0
      %3533 = vmatpush2.msra.mxu0 0.0
      %3534 = vmatprep.subr.mxu0 0.0
      %3535 = vmatpush2.msra.mxu0 0.0
      %3536 = vmatprep.subr.mxu0 0.0
      %3537 = vmatpush2.msra.mxu0 0.0
      %3538 = vmatprep.subr.mxu0 0.0
      %3539 = vmatpush2.msra.mxu0 0.0
      %3540 = vmatprep.subr.mxu0 0.0
      %3541 = vmatpush2.msra.mxu0 0.0
      %3542 = vmatprep.subr.mxu0 0.0
      %3543 = vmatpush2.msra.mxu0 0.0
      %3544 = vmatprep.subr.mxu0 0.0
      %3545 = vmatpush2.msra.mxu0 0.0
      %3546 = vmatprep.subr.mxu0 0.0
      %3547 = vmatpush2.msra.mxu0 0.0
      %3548 = vmatprep.subr.mxu0 0.0
      %3549 = vmatpush2.msra.mxu0 %v3480
      %3550 = vmatprep.subr.mxu0 0.0
      %3551 = vmatpush2.msra.mxu0 %v3479
      %3552 = vmatprep.mubr.f32.mxu0 %v3483
      %3553 = vmatmul.mubr.f32.gmra.mxu0 %v1568
      %v3554 = vpop.f32.mrf.mxu0
      %v3555 = vadd.f32 0.0, %v3554
      %v3556 = vpop.f32.mrf.mxu0
      %3557 = vmatprep.mubr.f32.mxu0 %v3486
      %3558 = vmatmul.mubr.f32.gmra.mxu0 %v1570
      %v3559 = vpop.f32.mrf.mxu0
      %v3560 = vadd.f32 0.0, %v3559
      %v3561 = vpop.f32.mrf.mxu0
      %3562 = vdwg.mxu0
      %v3563 = vmul.f32 %v1820, %v1820
      %v3564 = vmul.f32 %v1825, %v1825
      %v3566 = vsel %vm3481, %v1572, 0
      %v3569 = vsel %vm3481, %v1573, 0
      %3571 = vmatprep.subr.mxu0 0.0
      %3572 = vmatpush1.msra.mxu0 0.0
      %3573 = vmatprep.subr.mxu0 0.0
      %3574 = vmatpush1.msra.mxu0 0.0
      %3575 = vmatprep.subr.mxu0 0.0
      %3576 = vmatpush1.msra.mxu0 0.0
      %3577 = vmatprep.subr.mxu0 0.0
      %3578 = vmatpush1.msra.mxu0 0.0
      %3579 = vmatprep.subr.mxu0 0.0
      %3580 = vmatpush1.msra.mxu0 0.0
      %3581 = vmatprep.subr.mxu0 0.0
      %3582 = vmatpush1.msra.mxu0 0.0
      %3583 = vmatprep.subr.mxu0 0.0
      %3584 = vmatpush1.msra.mxu0 0.0
      %3585 = vmatprep.subr.mxu0 0.0
      %3586 = vmatpush1.msra.mxu0 0.0
      %3587 = vmatprep.subr.mxu0 0.0
      %3588 = vmatpush1.msra.mxu0 0.0
      %3589 = vmatprep.subr.mxu0 0.0
      %3590 = vmatpush1.msra.mxu0 0.0
      %3591 = vmatprep.subr.mxu0 0.0
      %3592 = vmatpush1.msra.mxu0 0.0
      %3593 = vmatprep.subr.mxu0 0.0
      %3594 = vmatpush1.msra.mxu0 0.0
      %3595 = vmatprep.subr.mxu0 0.0
      %3596 = vmatpush1.msra.mxu0 0.0
      %3597 = vmatprep.subr.mxu0 0.0
      %3598 = vmatpush1.msra.mxu0 0.0
      %3599 = vmatprep.subr.mxu0 0.0
      %3600 = vmatpush1.msra.mxu0 %v3564
      %3601 = vmatprep.subr.mxu0 0.0
      %3602 = vmatpush1.msra.mxu0 %v3563
      %3603 = vmatprep.subr.mxu0 0.0
      %3604 = vmatpush2.msra.mxu0 0.0
      %3605 = vmatprep.subr.mxu0 0.0
      %3606 = vmatpush2.msra.mxu0 0.0
      %3607 = vmatprep.subr.mxu0 0.0
      %3608 = vmatpush2.msra.mxu0 0.0
      %3609 = vmatprep.subr.mxu0 0.0
      %3610 = vmatpush2.msra.mxu0 0.0
      %3611 = vmatprep.subr.mxu0 0.0
      %3612 = vmatpush2.msra.mxu0 0.0
      %3613 = vmatprep.subr.mxu0 0.0
      %3614 = vmatpush2.msra.mxu0 0.0
      %3615 = vmatprep.subr.mxu0 0.0
      %3616 = vmatpush2.msra.mxu0 0.0
      %3617 = vmatprep.subr.mxu0 0.0
      %3618 = vmatpush2.msra.mxu0 0.0
      %3619 = vmatprep.subr.mxu0 0.0
      %3620 = vmatpush2.msra.mxu0 0.0
      %3621 = vmatprep.subr.mxu0 0.0
      %3622 = vmatpush2.msra.mxu0 0.0
      %3623 = vmatprep.subr.mxu0 0.0
      %3624 = vmatpush2.msra.mxu0 0.0
      %3625 = vmatprep.subr.mxu0 0.0
      %3626 = vmatpush2.msra.mxu0 0.0
      %3627 = vmatprep.subr.mxu0 0.0
      %3628 = vmatpush2.msra.mxu0 0.0
      %3629 = vmatprep.subr.mxu0 0.0
      %3630 = vmatpush2.msra.mxu0 0.0
      %3631 = vmatprep.subr.mxu0 0.0
      %3632 = vmatpush2.msra.mxu0 0.0
      %3633 = vmatprep.subr.mxu0 0.0
      %3634 = vmatpush2.msra.mxu0 0.0
      %3635 = vmatprep.mubr.f32.mxu0 0.0
      %3636 = vmatmul.mubr.f32.gmra.mxu0 %v3566
      %v3637 = vpop.f32.mrf.mxu0
      %v3638 = vadd.f32 1e-08, %v3637
      %v3639 = vpop.f32.mrf.mxu0
      %3640 = vmatprep.mubr.f32.mxu0 0.0
      %3641 = vmatmul.mubr.f32.gmra.mxu0 %v3569
      %v3642 = vpop.f32.mrf.mxu0
      %v3643 = vadd.f32 1e-08, %v3642
      %v3644 = vpop.f32.mrf.mxu0
      %3645 = vdwg.mxu0
      %v3646 = vrsqrt.pop %v3638
      %v3647 = vrsqrt.pop %v3643
      %3649 = vset.pattern.permute.xlu0 0
      %3650 = vperm.xlu0 %3649, %v3646
      %v3651 = vpop.permute.xlu0 %3650
      %3654 = vset.pattern.permute.xlu0 0
      %3655 = vperm.xlu0 %3654, %v3647
      %v3656 = vpop.permute.xlu0 %3655
      %v3658 = vsel %vm2789, %v3651, 0.0
      %v3659 = vsel %vm2789, %v3656, 0.0
      %3660 = vset.pattern.permute.xlu0 1
      %3661 = vperm.xlu0 %3660, %v3646
      %v3662 = vpop.permute.xlu0 %3661
      %3664 = vset.pattern.permute.xlu0 1
      %3665 = vperm.xlu0 %3664, %v3647
      %v3666 = vpop.permute.xlu0 %3665
      %v3668 = vsel %vm2816, %v3662, %v3658
      %v3669 = vsel %vm2816, %v3666, %v3659
      %v3670 = vmul.f32 %v3555, %v3668
      %v3671 = vmul.f32 %v3560, %v3669
      %3672 = vset.pattern.permute.xlu0 2
      %3673 = vperm.xlu0 %3672, %v1592
      %v3674 = vpop.permute.xlu0 %3673
      %v3676 = vlaneseq
      %v3677 = vshrl.u32 %v3676, 7
      %v3678 = vsub.s32 0, %v3677
      %v3679 = vrot.slane %v3674, %v3678
      %v3680 = vmul.f32 %v3679, %v1576
      %v3682 = vlaneseq
      %v3683 = vshrl.u32 %v3682, 7
      %v3684 = vsub.s32 0, %v3683
      %v3685 = vrot.slane %v3680, %v3684
      %v3687 = vadd.f32 %v3670, %v3685
      %v3688 = vadd.f32 %v3671, %v3685
      %3690 = vset.pattern.permute.xlu0 0
      %3691 = vperm.xlu0 %3690, %v1574
      %v3692 = vpop.permute.xlu0 %3691
      %3695 = vset.pattern.permute.xlu0 0
      %3696 = vperm.xlu0 %3695, %v1575
      %v3697 = vpop.permute.xlu0 %3696
      %v3699 = vadd.f32 %v3687, %v3692
      %v3700 = vadd.f32 %v3688, %v3697
      %v3701 = vmul.f32 %v3699, 0.2
      %v3702 = vmul.f32 %v3700, 0.2
      %v3703 = vmax.f32 %v3699, %v3701
      %v3704 = vmax.f32 %v3700, %v3702
      %v3705 = vmul.f32 %v3703, 1.4142135
      %v3706 = vmul.f32 %v3704, 1.4142135
      %3708 = vset.pattern.permute.xlu0 0
      %3709 = vperm.xlu0 %3708, %v1830
      %v3710 = vpop.permute.xlu0 %3709
      %3713 = vset.pattern.permute.xlu0 0
      %3714 = vperm.xlu0 %3713, %v1835
      %v3715 = vpop.permute.xlu0 %3714
      %v3717 = vsel %vm2789, %v3710, 0.0
      %v3718 = vsel %vm2789, %v3715, 0.0
      %3719 = vset.pattern.permute.xlu0 1
      %3720 = vperm.xlu0 %3719, %v1830
      %v3721 = vpop.permute.xlu0 %3720
      %3723 = vset.pattern.permute.xlu0 1
      %3724 = vperm.xlu0 %3723, %v1835
      %v3725 = vpop.permute.xlu0 %3724
      %v3727 = vsel %vm2816, %v3721, %v3717
      %v3728 = vsel %vm2816, %v3725, %v3718
      %v3729 = vmul.f32 %v3705, %v3727
      %v3730 = vmul.f32 %v3706, %v3728
      %3732 = vset.pattern.permute.xlu0 0
      %3733 = vperm.xlu0 %3732, %v1589
      %v3734 = vpop.permute.xlu0 %3733
      %v3737 = vsel %vm3481, %v1588, 0
      %3739 = vmatprep.subr.mxu0 0.0
      %3740 = vmatpush1.msra.mxu0 0.0
      %3741 = vmatprep.subr.mxu0 0.0
      %3742 = vmatpush1.msra.mxu0 0.0
      %3743 = vmatprep.subr.mxu0 0.0
      %3744 = vmatpush1.msra.mxu0 0.0
      %3745 = vmatprep.subr.mxu0 0.0
      %3746 = vmatpush1.msra.mxu0 0.0
      %3747 = vmatprep.subr.mxu0 0.0
      %3748 = vmatpush1.msra.mxu0 0.0
      %3749 = vmatprep.subr.mxu0 0.0
      %3750 = vmatpush1.msra.mxu0 0.0
      %3751 = vmatprep.subr.mxu0 0.0
      %3752 = vmatpush1.msra.mxu0 0.0
      %3753 = vmatprep.subr.mxu0 0.0
      %3754 = vmatpush1.msra.mxu0 0.0
      %3755 = vmatprep.subr.mxu0 0.0
      %3756 = vmatpush1.msra.mxu0 0.0
      %3757 = vmatprep.subr.mxu0 0.0
      %3758 = vmatpush1.msra.mxu0 0.0
      %3759 = vmatprep.subr.mxu0 0.0
      %3760 = vmatpush1.msra.mxu0 0.0
      %3761 = vmatprep.subr.mxu0 0.0
      %3762 = vmatpush1.msra.mxu0 0.0
      %3763 = vmatprep.subr.mxu0 0.0
      %3764 = vmatpush1.msra.mxu0 0.0
      %3765 = vmatprep.subr.mxu0 0.0
      %3766 = vmatpush1.msra.mxu0 0.0
      %3767 = vmatprep.subr.mxu0 0.0
      %3768 = vmatpush1.msra.mxu0 %v3730
      %3769 = vmatprep.subr.mxu0 0.0
      %3770 = vmatpush1.msra.mxu0 %v3729
      %3771 = vmatprep.subr.mxu0 0.0
      %3772 = vmatpush2.msra.mxu0 0.0
      %3773 = vmatprep.subr.mxu0 0.0
      %3774 = vmatpush2.msra.mxu0 0.0
      %3775 = vmatprep.subr.mxu0 0.0
      %3776 = vmatpush2.msra.mxu0 0.0
      %3777 = vmatprep.subr.mxu0 0.0
      %3778 = vmatpush2.msra.mxu0 0.0
      %3779 = vmatprep.subr.mxu0 0.0
      %3780 = vmatpush2.msra.mxu0 0.0
      %3781 = vmatprep.subr.mxu0 0.0
      %3782 = vmatpush2.msra.mxu0 0.0
      %3783 = vmatprep.subr.mxu0 0.0
      %3784 = vmatpush2.msra.mxu0 0.0
      %3785 = vmatprep.subr.mxu0 0.0
      %3786 = vmatpush2.msra.mxu0 0.0
      %3787 = vmatprep.subr.mxu0 0.0
      %3788 = vmatpush2.msra.mxu0 0.0
      %3789 = vmatprep.subr.mxu0 0.0
      %3790 = vmatpush2.msra.mxu0 0.0
      %3791 = vmatprep.subr.mxu0 0.0
      %3792 = vmatpush2.msra.mxu0 0.0
      %3793 = vmatprep.subr.mxu0 0.0
      %3794 = vmatpush2.msra.mxu0 0.0
      %3795 = vmatprep.subr.mxu0 0.0
      %3796 = vmatpush2.msra.mxu0 0.0
      %3797 = vmatprep.subr.mxu0 0.0
      %3798 = vmatpush2.msra.mxu0 0.0
      %3799 = vmatprep.subr.mxu0 0.0
      %3800 = vmatpush2.msra.mxu0 0.0
      %3801 = vmatprep.subr.mxu0 0.0
      %3802 = vmatpush2.msra.mxu0 0.0
      %3803 = vmatprep.mubr.f32.mxu0 0.0
      %3804 = vmatmul.mubr.f32.gmra.mxu0 %v3737
      %v3805 = vpop.f32.mrf.mxu0
      %v3806 = vadd.f32 %v3734, %v3805
      %v3807 = vpop.f32.mrf.mxu0
      %3808 = vdwg.mxu0
      %v3810 = vsel %vm2149, %v2664, 0
      %3812 = vmatprep.subr.mxu0 0.0
      %3813 = vmatpush1.msra.mxu0 0.0
      %3814 = vmatprep.subr.mxu0 0.0
      %3815 = vmatpush1.msra.mxu0 0.0
      %3816 = vmatprep.subr.mxu0 0.0
      %3817 = vmatpush1.msra.mxu0 0.0
      %3818 = vmatprep.subr.mxu0 0.0
      %3819 = vmatpush1.msra.mxu0 0.0
      %3820 = vmatprep.subr.mxu0 0.0
      %3821 = vmatpush1.msra.mxu0 0.0
      %3822 = vmatprep.subr.mxu0 0.0
      %3823 = vmatpush1.msra.mxu0 0.0
      %3824 = vmatprep.subr.mxu0 0.0
      %3825 = vmatpush1.msra.mxu0 0.0
      %3826 = vmatprep.subr.mxu0 0.0
      %3827 = vmatpush1.msra.mxu0 0.0
      %3828 = vmatprep.subr.mxu0 0.0
      %3829 = vmatpush1.msra.mxu0 0.0
      %3830 = vmatprep.subr.mxu0 0.0
      %3831 = vmatpush1.msra.mxu0 0.0
      %3832 = vmatprep.subr.mxu0 0.0
      %3833 = vmatpush1.msra.mxu0 0.0
      %3834 = vmatprep.subr.mxu0 0.0
      %3835 = vmatpush1.msra.mxu0 0.0
      %3836 = vmatprep.subr.mxu0 0.0
      %3837 = vmatpush1.msra.mxu0 %v2689
      %3838 = vmatprep.subr.mxu0 0.0
      %3839 = vmatpush1.msra.mxu0 %v2688
      %3840 = vmatprep.subr.mxu0 0.0
      %3841 = vmatpush1.msra.mxu0 %v2687
      %3842 = vmatprep.subr.mxu0 0.0
      %3843 = vmatpush1.msra.mxu0 %v2686
      %3844 = vmatprep.subr.mxu0 0.0
      %3845 = vmatpush2.msra.mxu0 0.0
      %3846 = vmatprep.subr.mxu0 0.0
      %3847 = vmatpush2.msra.mxu0 0.0
      %3848 = vmatprep.subr.mxu0 0.0
      %3849 = vmatpush2.msra.mxu0 0.0
      %3850 = vmatprep.subr.mxu0 0.0
      %3851 = vmatpush2.msra.mxu0 0.0
      %3852 = vmatprep.subr.mxu0 0.0
      %3853 = vmatpush2.msra.mxu0 0.0
      %3854 = vmatprep.subr.mxu0 0.0
      %3855 = vmatpush2.msra.mxu0 0.0
      %3856 = vmatprep.subr.mxu0 0.0
      %3857 = vmatpush2.msra.mxu0 0.0
      %3858 = vmatprep.subr.mxu0 0.0
      %3859 = vmatpush2.msra.mxu0 0.0
      %3860 = vmatprep.subr.mxu0 0.0
      %3861 = vmatpush2.msra.mxu0 0.0
      %3862 = vmatprep.subr.mxu0 0.0
      %3863 = vmatpush2.msra.mxu0 0.0
      %3864 = vmatprep.subr.mxu0 0.0
      %3865 = vmatpush2.msra.mxu0 0.0
      %3866 = vmatprep.subr.mxu0 0.0
      %3867 = vmatpush2.msra.mxu0 0.0
      %3868 = vmatprep.subr.mxu0 0.0
      %3869 = vmatpush2.msra.mxu0 0.0
      %3870 = vmatprep.subr.mxu0 0.0
      %3871 = vmatpush2.msra.mxu0 0.0
      %3872 = vmatprep.subr.mxu0 0.0
      %3873 = vmatpush2.msra.mxu0 0.0
      %3874 = vmatprep.subr.mxu0 0.0
      %3875 = vmatpush2.msra.mxu0 0.0
      %3876 = vmatprep.mubr.f32.mxu0 0.0
      %3877 = vmatmul.mubr.f32.gmra.mxu0 %v3810
      %v3878 = vpop.f32.mrf.mxu0
      %v3879 = vadd.f32 %v3806, %v3878
      %v3880 = vpop.f32.mrf.mxu0
      %3881 = vdwg.mxu0
      %v3882 = vadd.s32 %v2668, 32
      %v3883 = vadd.s32 %v2668, 40
      %v3884 = vadd.s32 %v2668, 48
      %v3885 = vadd.s32 %v2668, 56
      %v3886 = vadd.s32 %v2668, 64
      %v3887 = vadd.s32 %v2668, 72
      %v3888 = vadd.s32 %v2668, 80
      %v3889 = vadd.s32 %v2668, 88
      %v3890 = vadd.s32 %v2668, 96
      %v3891 = vadd.s32 %v2668, 104
      %v3892 = vadd.s32 %v2668, 112
      %v3893 = vadd.s32 %v2668, 120
      %v3894 = vadd.s32 %v1859, 128
      %v3895 = vadd.s32 %v1859, 256
      %v3896 = vadd.s32 %v1859, 384
      %v3897 = vshra.s32 %v1859, 8
      %v3898 = vshra.s32 %v3894, 8
      %v3899 = vshra.s32 %v3895, 8
      %v3900 = vshra.s32 %v3896, 8
      %v3901 = vand.u32 %v1859, 255
      %v3902 = vand.u32 %v3894, 255
      %v3903 = vand.u32 %v3895, 255
      %v3904 = vand.u32 %v3896, 255
      %v3905 = vshra.s32 %v3901, 4
      %v3906 = vshra.s32 %v3902, 4
      %v3907 = vshra.s32 %v3903, 4
      %v3908 = vshra.s32 %v3904, 4
      %v3909 = vand.u32 %v3901, 15
      %v3910 = vand.u32 %v3902, 15
      %v3911 = vand.u32 %v3903, 15
      %v3912 = vand.u32 %v3904, 15
      %v3913 = vmul.u32 %v3897, 64
      %v3914 = vmul.u32 %v3898, 64
      %v3915 = vmul.u32 %v3899, 64
      %v3916 = vmul.u32 %v3900, 64
      %v3917 = vshra.s32 %v3905, 1
      %v3918 = vshra.s32 %v3906, 1
      %v3919 = vshra.s32 %v3907, 1
      %v3920 = vshra.s32 %v3908, 1
      %v3921 = vmul.u32 %v3917, 8
      %v3922 = vmul.u32 %v3918, 8
      %v3923 = vmul.u32 %v3919, 8
      %v3924 = vmul.u32 %v3920, 8
      %v3925 = vadd.s32 %v3913, %v3921
      %v3926 = vadd.s32 %v3914, %v3922
      %v3927 = vadd.s32 %v3915, %v3923
      %v3928 = vadd.s32 %v3916, %v3924
      %v3929 = vshra.s32 %v3909, 1
      %v3930 = vshra.s32 %v3910, 1
      %v3931 = vshra.s32 %v3911, 1
      %v3932 = vshra.s32 %v3912, 1
      %v3933 = vadd.s32 %v3925, %v3929
      %v3934 = vadd.s32 %v3926, %v3930
      %v3935 = vadd.s32 %v3927, %v3931
      %v3936 = vadd.s32 %v3928, %v3932
      %vm3937 = vcmp.eq.s32.totalorder %v2668, %v3933
      %vm3938 = vcmp.eq.s32.totalorder %v2668, %v3934
      %vm3939 = vcmp.eq.s32.totalorder %v2668, %v3935
      %vm3940 = vcmp.eq.s32.totalorder %v2668, %v3936
      %vm3941 = vcmp.eq.s32.totalorder %v2669, %v3933
      %vm3942 = vcmp.eq.s32.totalorder %v2669, %v3934
      %vm3943 = vcmp.eq.s32.totalorder %v2669, %v3935
      %vm3944 = vcmp.eq.s32.totalorder %v2669, %v3936
      %vm3945 = vcmp.eq.s32.totalorder %v2670, %v3933
      %vm3946 = vcmp.eq.s32.totalorder %v2670, %v3934
      %vm3947 = vcmp.eq.s32.totalorder %v2670, %v3935
      %vm3948 = vcmp.eq.s32.totalorder %v2670, %v3936
      %vm3949 = vcmp.eq.s32.totalorder %v2671, %v3933
      %vm3950 = vcmp.eq.s32.totalorder %v2671, %v3934
      %vm3951 = vcmp.eq.s32.totalorder %v2671, %v3935
      %vm3952 = vcmp.eq.s32.totalorder %v2671, %v3936
      %vm3953 = vcmp.eq.s32.totalorder %v3882, %v3933
      %vm3954 = vcmp.eq.s32.totalorder %v3882, %v3934
      %vm3955 = vcmp.eq.s32.totalorder %v3882, %v3935
      %vm3956 = vcmp.eq.s32.totalorder %v3882, %v3936
      %vm3957 = vcmp.eq.s32.totalorder %v3883, %v3933
      %vm3958 = vcmp.eq.s32.totalorder %v3883, %v3934
      %vm3959 = vcmp.eq.s32.totalorder %v3883, %v3935
      %vm3960 = vcmp.eq.s32.totalorder %v3883, %v3936
      %vm3961 = vcmp.eq.s32.totalorder %v3884, %v3933
      %vm3962 = vcmp.eq.s32.totalorder %v3884, %v3934
      %vm3963 = vcmp.eq.s32.totalorder %v3884, %v3935
      %vm3964 = vcmp.eq.s32.totalorder %v3884, %v3936
      %vm3965 = vcmp.eq.s32.totalorder %v3885, %v3933
      %vm3966 = vcmp.eq.s32.totalorder %v3885, %v3934
      %vm3967 = vcmp.eq.s32.totalorder %v3885, %v3935
      %vm3968 = vcmp.eq.s32.totalorder %v3885, %v3936
      %vm3969 = vcmp.eq.s32.totalorder %v3886, %v3933
      %vm3970 = vcmp.eq.s32.totalorder %v3886, %v3934
      %vm3971 = vcmp.eq.s32.totalorder %v3886, %v3935
      %vm3972 = vcmp.eq.s32.totalorder %v3886, %v3936
      %vm3973 = vcmp.eq.s32.totalorder %v3887, %v3933
      %vm3974 = vcmp.eq.s32.totalorder %v3887, %v3934
      %vm3975 = vcmp.eq.s32.totalorder %v3887, %v3935
      %vm3976 = vcmp.eq.s32.totalorder %v3887, %v3936
      %vm3977 = vcmp.eq.s32.totalorder %v3888, %v3933
      %vm3978 = vcmp.eq.s32.totalorder %v3888, %v3934
      %vm3979 = vcmp.eq.s32.totalorder %v3888, %v3935
      %vm3980 = vcmp.eq.s32.totalorder %v3888, %v3936
      %vm3981 = vcmp.eq.s32.totalorder %v3889, %v3933
      %vm3982 = vcmp.eq.s32.totalorder %v3889, %v3934
      %vm3983 = vcmp.eq.s32.totalorder %v3889, %v3935
      %vm3984 = vcmp.eq.s32.totalorder %v3889, %v3936
      %vm3985 = vcmp.eq.s32.totalorder %v3890, %v3933
      %vm3986 = vcmp.eq.s32.totalorder %v3890, %v3934
      %vm3987 = vcmp.eq.s32.totalorder %v3890, %v3935
      %vm3988 = vcmp.eq.s32.totalorder %v3890, %v3936
      %vm3989 = vcmp.eq.s32.totalorder %v3891, %v3933
      %vm3990 = vcmp.eq.s32.totalorder %v3891, %v3934
      %vm3991 = vcmp.eq.s32.totalorder %v3891, %v3935
      %vm3992 = vcmp.eq.s32.totalorder %v3891, %v3936
      %vm3993 = vcmp.eq.s32.totalorder %v3892, %v3933
      %vm3994 = vcmp.eq.s32.totalorder %v3892, %v3934
      %vm3995 = vcmp.eq.s32.totalorder %v3892, %v3935
      %vm3996 = vcmp.eq.s32.totalorder %v3892, %v3936
      %vm3997 = vcmp.eq.s32.totalorder %v3893, %v3933
      %vm3998 = vcmp.eq.s32.totalorder %v3893, %v3934
      %vm3999 = vcmp.eq.s32.totalorder %v3893, %v3935
      %vm4000 = vcmp.eq.s32.totalorder %v3893, %v3936
      %v4001 = vsel %vm3937, 1.0, 0.0
      %v4002 = vsel %vm3938, 1.0, 0.0
      %v4003 = vsel %vm3939, 1.0, 0.0
      %v4004 = vsel %vm3940, 1.0, 0.0
      %v4005 = vsel %vm3941, 1.0, 0.0
      %v4006 = vsel %vm3942, 1.0, 0.0
      %v4007 = vsel %vm3943, 1.0, 0.0
      %v4008 = vsel %vm3944, 1.0, 0.0
      %v4009 = vsel %vm3945, 1.0, 0.0
      %v4010 = vsel %vm3946, 1.0, 0.0
      %v4011 = vsel %vm3947, 1.0, 0.0
      %v4012 = vsel %vm3948, 1.0, 0.0
      %v4013 = vsel %vm3949, 1.0, 0.0
      %v4014 = vsel %vm3950, 1.0, 0.0
      %v4015 = vsel %vm3951, 1.0, 0.0
      %v4016 = vsel %vm3952, 1.0, 0.0
      %v4017 = vsel %vm3953, 1.0, 0.0
      %v4018 = vsel %vm3954, 1.0, 0.0
      %v4019 = vsel %vm3955, 1.0, 0.0
      %v4020 = vsel %vm3956, 1.0, 0.0
      %v4021 = vsel %vm3957, 1.0, 0.0
      %v4022 = vsel %vm3958, 1.0, 0.0
      %v4023 = vsel %vm3959, 1.0, 0.0
      %v4024 = vsel %vm3960, 1.0, 0.0
      %v4025 = vsel %vm3961, 1.0, 0.0
      %v4026 = vsel %vm3962, 1.0, 0.0
      %v4027 = vsel %vm3963, 1.0, 0.0
      %v4028 = vsel %vm3964, 1.0, 0.0
      %v4029 = vsel %vm3965, 1.0, 0.0
      %v4030 = vsel %vm3966, 1.0, 0.0
      %v4031 = vsel %vm3967, 1.0, 0.0
      %v4032 = vsel %vm3968, 1.0, 0.0
      %v4033 = vsel %vm3969, 1.0, 0.0
      %v4034 = vsel %vm3970, 1.0, 0.0
      %v4035 = vsel %vm3971, 1.0, 0.0
      %v4036 = vsel %vm3972, 1.0, 0.0
      %v4037 = vsel %vm3973, 1.0, 0.0
      %v4038 = vsel %vm3974, 1.0, 0.0
      %v4039 = vsel %vm3975, 1.0, 0.0
      %v4040 = vsel %vm3976, 1.0, 0.0
      %v4041 = vsel %vm3977, 1.0, 0.0
      %v4042 = vsel %vm3978, 1.0, 0.0
      %v4043 = vsel %vm3979, 1.0, 0.0
      %v4044 = vsel %vm3980, 1.0, 0.0
      %v4045 = vsel %vm3981, 1.0, 0.0
      %v4046 = vsel %vm3982, 1.0, 0.0
      %v4047 = vsel %vm3983, 1.0, 0.0
      %v4048 = vsel %vm3984, 1.0, 0.0
      %v4049 = vsel %vm3985, 1.0, 0.0
      %v4050 = vsel %vm3986, 1.0, 0.0
      %v4051 = vsel %vm3987, 1.0, 0.0
      %v4052 = vsel %vm3988, 1.0, 0.0
      %v4053 = vsel %vm3989, 1.0, 0.0
      %v4054 = vsel %vm3990, 1.0, 0.0
      %v4055 = vsel %vm3991, 1.0, 0.0
      %v4056 = vsel %vm3992, 1.0, 0.0
      %v4057 = vsel %vm3993, 1.0, 0.0
      %v4058 = vsel %vm3994, 1.0, 0.0
      %v4059 = vsel %vm3995, 1.0, 0.0
      %v4060 = vsel %vm3996, 1.0, 0.0
      %v4061 = vsel %vm3997, 1.0, 0.0
      %v4062 = vsel %vm3998, 1.0, 0.0
      %v4063 = vsel %vm3999, 1.0, 0.0
      %v4064 = vsel %vm4000, 1.0, 0.0
      %4065 = vmatprep.subr.mxu0 %v4062
      %4066 = vmatpush1.msra.mxu0 %v4061
      %4067 = vmatprep.subr.mxu0 %v4058
      %4068 = vmatpush1.msra.mxu0 %v4057
      %4069 = vmatprep.subr.mxu0 %v4054
      %4070 = vmatpush1.msra.mxu0 %v4053
      %4071 = vmatprep.subr.mxu0 %v4050
      %4072 = vmatpush1.msra.mxu0 %v4049
      %4073 = vmatprep.subr.mxu0 %v4046
      %4074 = vmatpush1.msra.mxu0 %v4045
      %4075 = vmatprep.subr.mxu0 %v4042
      %4076 = vmatpush1.msra.mxu0 %v4041
      %4077 = vmatprep.subr.mxu0 %v4038
      %4078 = vmatpush1.msra.mxu0 %v4037
      %4079 = vmatprep.subr.mxu0 %v4034
      %4080 = vmatpush1.msra.mxu0 %v4033
      %4081 = vmatprep.subr.mxu0 %v4030
      %4082 = vmatpush1.msra.mxu0 %v4029
      %4083 = vmatprep.subr.mxu0 %v4026
      %4084 = vmatpush1.msra.mxu0 %v4025
      %4085 = vmatprep.subr.mxu0 %v4022
      %4086 = vmatpush1.msra.mxu0 %v4021
      %4087 = vmatprep.subr.mxu0 %v4018
      %4088 = vmatpush1.msra.mxu0 %v4017
      %4089 = vmatprep.subr.mxu0 %v4014
      %4090 = vmatpush1.msra.mxu0 %v4013
      %4091 = vmatprep.subr.mxu0 %v4010
      %4092 = vmatpush1.msra.mxu0 %v4009
      %4093 = vmatprep.subr.mxu0 %v4006
      %4094 = vmatpush1.msra.mxu0 %v4005
      %4095 = vmatprep.subr.mxu0 %v4002
      %4096 = vmatpush1.msra.mxu0 %v4001
      %4097 = vmatprep.subr.mxu0 0.0
      %4098 = vmatpush2.msra.mxu0 0.0
      %4099 = vmatprep.subr.mxu0 0.0
      %4100 = vmatpush2.msra.mxu0 0.0
      %4101 = vmatprep.subr.mxu0 0.0
      %4102 = vmatpush2.msra.mxu0 0.0
      %4103 = vmatprep.subr.mxu0 0.0
      %4104 = vmatpush2.msra.mxu0 0.0
      %4105 = vmatprep.subr.mxu0 0.0
      %4106 = vmatpush2.msra.mxu0 0.0
      %4107 = vmatprep.subr.mxu0 0.0
      %4108 = vmatpush2.msra.mxu0 0.0
      %4109 = vmatprep.subr.mxu0 0.0
      %4110 = vmatpush2.msra.mxu0 0.0
      %4111 = vmatprep.subr.mxu0 0.0
      %4112 = vmatpush2.msra.mxu0 0.0
      %4113 = vmatprep.subr.mxu0 0.0
      %4114 = vmatpush2.msra.mxu0 0.0
      %4115 = vmatprep.subr.mxu0 0.0
      %4116 = vmatpush2.msra.mxu0 0.0
      %4117 = vmatprep.subr.mxu0 0.0
      %4118 = vmatpush2.msra.mxu0 0.0
      %4119 = vmatprep.subr.mxu0 0.0
      %4120 = vmatpush2.msra.mxu0 0.0
      %4121 = vmatprep.subr.mxu0 0.0
      %4122 = vmatpush2.msra.mxu0 0.0
      %4123 = vmatprep.subr.mxu0 0.0
      %4124 = vmatpush2.msra.mxu0 0.0
      %4125 = vmatprep.subr.mxu0 0.0
      %4126 = vmatpush2.msra.mxu0 0.0
      %4127 = vmatprep.subr.mxu0 0.0
      %4128 = vmatpush2.msra.mxu0 0.0
      %4129 = vmatprep.mubr.f32.mxu0 0.0
      %4130 = vmatmul.mubr.f32.gmra.mxu0 %v3705
      %v4131 = vpop.f32.mrf.mxu0
      %v4132 = vadd.f32 0.0, %v4131
      %v4133 = vpop.f32.mrf.mxu0
      %v4134 = vadd.f32 0.0, %v4133
      %4135 = vmatprep.mubr.f32.mxu0 0.0
      %4136 = vmatmul.mubr.f32.gmra.mxu0 %v3706
      %v4137 = vpop.f32.mrf.mxu0
      %v4138 = vadd.f32 0.0, %v4137
      %v4139 = vpop.f32.mrf.mxu0
      %v4140 = vadd.f32 0.0, %v4139
      %4141 = vdwg.mxu0
      %4142 = vmatprep.subr.mxu0 %v4064
      %4143 = vmatpush1.msra.mxu0 %v4063
      %4144 = vmatprep.subr.mxu0 %v4060
      %4145 = vmatpush1.msra.mxu0 %v4059
      %4146 = vmatprep.subr.mxu0 %v4056
      %4147 = vmatpush1.msra.mxu0 %v4055
      %4148 = vmatprep.subr.mxu0 %v4052
      %4149 = vmatpush1.msra.mxu0 %v4051
      %4150 = vmatprep.subr.mxu0 %v4048
      %4151 = vmatpush1.msra.mxu0 %v4047
      %4152 = vmatprep.subr.mxu0 %v4044
      %4153 = vmatpush1.msra.mxu0 %v4043
      %4154 = vmatprep.subr.mxu0 %v4040
      %4155 = vmatpush1.msra.mxu0 %v4039
      %4156 = vmatprep.subr.mxu0 %v4036
      %4157 = vmatpush1.msra.mxu0 %v4035
      %4158 = vmatprep.subr.mxu0 %v4032
      %4159 = vmatpush1.msra.mxu0 %v4031
      %4160 = vmatprep.subr.mxu0 %v4028
      %4161 = vmatpush1.msra.mxu0 %v4027
      %4162 = vmatprep.subr.mxu0 %v4024
      %4163 = vmatpush1.msra.mxu0 %v4023
      %4164 = vmatprep.subr.mxu0 %v4020
      %4165 = vmatpush1.msra.mxu0 %v4019
      %4166 = vmatprep.subr.mxu0 %v4016
      %4167 = vmatpush1.msra.mxu0 %v4015
      %4168 = vmatprep.subr.mxu0 %v4012
      %4169 = vmatpush1.msra.mxu0 %v4011
      %4170 = vmatprep.subr.mxu0 %v4008
      %4171 = vmatpush1.msra.mxu0 %v4007
      %4172 = vmatprep.subr.mxu0 %v4004
      %4173 = vmatpush1.msra.mxu0 %v4003
      %4174 = vmatprep.subr.mxu0 0.0
      %4175 = vmatpush2.msra.mxu0 0.0
      %4176 = vmatprep.subr.mxu0 0.0
      %4177 = vmatpush2.msra.mxu0 0.0
      %4178 = vmatprep.subr.mxu0 0.0
      %4179 = vmatpush2.msra.mxu0 0.0
      %4180 = vmatprep.subr.mxu0 0.0
      %4181 = vmatpush2.msra.mxu0 0.0
      %4182 = vmatprep.subr.mxu0 0.0
      %4183 = vmatpush2.msra.mxu0 0.0
      %4184 = vmatprep.subr.mxu0 0.0
      %4185 = vmatpush2.msra.mxu0 0.0
      %4186 = vmatprep.subr.mxu0 0.0
      %4187 = vmatpush2.msra.mxu0 0.0
      %4188 = vmatprep.subr.mxu0 0.0
      %4189 = vmatpush2.msra.mxu0 0.0
      %4190 = vmatprep.subr.mxu0 0.0
      %4191 = vmatpush2.msra.mxu0 0.0
      %4192 = vmatprep.subr.mxu0 0.0
      %4193 = vmatpush2.msra.mxu0 0.0
      %4194 = vmatprep.subr.mxu0 0.0
      %4195 = vmatpush2.msra.mxu0 0.0
      %4196 = vmatprep.subr.mxu0 0.0
      %4197 = vmatpush2.msra.mxu0 0.0
      %4198 = vmatprep.subr.mxu0 0.0
      %4199 = vmatpush2.msra.mxu0 0.0
      %4200 = vmatprep.subr.mxu0 0.0
      %4201 = vmatpush2.msra.mxu0 0.0
      %4202 = vmatprep.subr.mxu0 0.0
      %4203 = vmatpush2.msra.mxu0 0.0
      %4204 = vmatprep.subr.mxu0 0.0
      %4205 = vmatpush2.msra.mxu0 0.0
      %4206 = vmatprep.mubr.f32.mxu0 0.0
      %4207 = vmatmul.mubr.f32.gmra.mxu0 %v3705
      %v4208 = vpop.f32.mrf.mxu0
      %v4209 = vadd.f32 0.0, %v4208
      %v4210 = vpop.f32.mrf.mxu0
      %v4211 = vadd.f32 0.0, %v4210
      %4212 = vmatprep.mubr.f32.mxu0 0.0
      %4213 = vmatmul.mubr.f32.gmra.mxu0 %v3706
      %v4214 = vpop.f32.mrf.mxu0
      %v4215 = vadd.f32 0.0, %v4214
      %v4216 = vpop.f32.mrf.mxu0
      %v4217 = vadd.f32 0.0, %v4216
      %4218 = vdwg.mxu0
      %vm4219 = vcmp.eq.s32.totalorder %v3897, 0
      %vm4220 = vcmp.eq.s32.totalorder %v3898, 0
      %vm4221 = vcmp.eq.s32.totalorder %v3899, 0
      %vm4222 = vcmp.eq.s32.totalorder %v3900, 0
      %v4223 = vsel %vm4219, 1, 0
      %v4224 = vsel %vm4220, 1, 0
      %v4225 = vsel %vm4221, 1, 0
      %v4226 = vsel %vm4222, 1, 0
      %vm4227 = vcmp.eq.s32.totalorder %v4223, 1
      %vm4228 = vcmp.eq.s32.totalorder %v4224, 1
      %vm4229 = vcmp.eq.s32.totalorder %v4225, 1
      %vm4230 = vcmp.eq.s32.totalorder %v4226, 1
      %4232 = vset.pattern.permute.xlu0 0
      %4233 = vperm.xlu0 %4232, %v1840
      %v4234 = vpop.permute.xlu0 %4233
      %4237 = vset.pattern.permute.xlu0 0
      %4238 = vperm.xlu0 %4237, %v1845
      %v4239 = vpop.permute.xlu0 %4238
      %v4241 = vsel %vm4227, %v4234, 0.0
      %v4242 = vsel %vm4228, %v4234, 0.0
      %v4243 = vsel %vm4229, %v4234, 0.0
      %v4244 = vsel %vm4230, %v4234, 0.0
      %v4245 = vsel %vm4227, %v4239, 0.0
      %v4246 = vsel %vm4228, %v4239, 0.0
      %v4247 = vsel %vm4229, %v4239, 0.0
      %v4248 = vsel %vm4230, %v4239, 0.0
      %vm4249 = vcmp.eq.s32.totalorder %v3897, 1
      %vm4250 = vcmp.eq.s32.totalorder %v3898, 1
      %vm4251 = vcmp.eq.s32.totalorder %v3899, 1
      %vm4252 = vcmp.eq.s32.totalorder %v3900, 1
      %v4253 = vsel %vm4249, 1, 0
      %v4254 = vsel %vm4250, 1, 0
      %v4255 = vsel %vm4251, 1, 0
      %v4256 = vsel %vm4252, 1, 0
      %vm4257 = vcmp.eq.s32.totalorder %v4253, 1
      %vm4258 = vcmp.eq.s32.totalorder %v4254, 1
      %vm4259 = vcmp.eq.s32.totalorder %v4255, 1
      %vm4260 = vcmp.eq.s32.totalorder %v4256, 1
      %4261 = vset.pattern.permute.xlu0 1
      %4262 = vperm.xlu0 %4261, %v1840
      %v4263 = vpop.permute.xlu0 %4262
      %4265 = vset.pattern.permute.xlu0 1
      %4266 = vperm.xlu0 %4265, %v1845
      %v4267 = vpop.permute.xlu0 %4266
      %v4269 = vsel %vm4257, %v4263, %v4241
      %v4270 = vsel %vm4258, %v4263, %v4242
      %v4271 = vsel %vm4259, %v4263, %v4243
      %v4272 = vsel %vm4260, %v4263, %v4244
      %v4273 = vsel %vm4257, %v4267, %v4245
      %v4274 = vsel %vm4258, %v4267, %v4246
      %v4275 = vsel %vm4259, %v4267, %v4247
      %v4276 = vsel %vm4260, %v4267, %v4248
      %v4277 = vmul.f32 %v4132, %v4269
      %v4278 = vmul.f32 %v4134, %v4270
      %v4279 = vmul.f32 %v4209, %v4271
      %v4280 = vmul.f32 %v4211, %v4272
      %v4281 = vmul.f32 %v4138, %v4273
      %v4282 = vmul.f32 %v4140, %v4274
      %v4283 = vmul.f32 %v4215, %v4275
      %v4284 = vmul.f32 %v4217, %v4276
      %v4285 = vadd.s32 %v3905, 4294967295
      %v4286 = vadd.s32 %v3906, 4294967295
      %v4287 = vadd.s32 %v3907, 4294967295
      %v4288 = vadd.s32 %v3908, 4294967295
      %v4289 = vadd.s32 %v3909, 4294967295
      %v4290 = vadd.s32 %v3910, 4294967295
      %v4291 = vadd.s32 %v3911, 4294967295
      %v4292 = vadd.s32 %v3912, 4294967295
      %vm4293 = vcmp.ge.s32.totalorder %v4285, 0
      %vm4294 = vcmp.ge.s32.totalorder %v4286, 0
      %vm4295 = vcmp.ge.s32.totalorder %v4287, 0
      %vm4296 = vcmp.ge.s32.totalorder %v4288, 0
      %vm4297 = vcmp.lt.s32.totalorder %v4285, 16
      %vm4298 = vcmp.lt.s32.totalorder %v4286, 16
      %vm4299 = vcmp.lt.s32.totalorder %v4287, 16
      %vm4300 = vcmp.lt.s32.totalorder %v4288, 16
      %vm4301 = vmand %vm4293, %vm4297
      %vm4302 = vmand %vm4294, %vm4298
      %vm4303 = vmand %vm4295, %vm4299
      %vm4304 = vmand %vm4296, %vm4300
      %vm4305 = vcmp.ge.s32.totalorder %v4289, 0
      %vm4306 = vcmp.ge.s32.totalorder %v4290, 0
      %vm4307 = vcmp.ge.s32.totalorder %v4291, 0
      %vm4308 = vcmp.ge.s32.totalorder %v4292, 0
      %vm4309 = vmand %vm4301, %vm4305
      %vm4310 = vmand %vm4302, %vm4306
      %vm4311 = vmand %vm4303, %vm4307
      %vm4312 = vmand %vm4304, %vm4308
      %vm4313 = vcmp.lt.s32.totalorder %v4289, 16
      %vm4314 = vcmp.lt.s32.totalorder %v4290, 16
      %vm4315 = vcmp.lt.s32.totalorder %v4291, 16
      %vm4316 = vcmp.lt.s32.totalorder %v4292, 16
      %vm4317 = vmand %vm4309, %vm4313
      %vm4318 = vmand %vm4310, %vm4314
      %vm4319 = vmand %vm4311, %vm4315
      %vm4320 = vmand %vm4312, %vm4316
      %vm4321 = vcmp.ge.s32.totalorder %v3909, 0
      %vm4322 = vcmp.ge.s32.totalorder %v3910, 0
      %vm4323 = vcmp.ge.s32.totalorder %v3911, 0
      %vm4324 = vcmp.ge.s32.totalorder %v3912, 0
      %vm4325 = vmand %vm4301, %vm4321
      %vm4326 = vmand %vm4302, %vm4322
      %vm4327 = vmand %vm4303, %vm4323
      %vm4328 = vmand %vm4304, %vm4324
      %vm4329 = vcmp.lt.s32.totalorder %v3909, 16
      %vm4330 = vcmp.lt.s32.totalorder %v3910, 16
      %vm4331 = vcmp.lt.s32.totalorder %v3911, 16
      %vm4332 = vcmp.lt.s32.totalorder %v3912, 16
      %vm4333 = vmand %vm4325, %vm4329
      %vm4334 = vmand %vm4326, %vm4330
      %vm4335 = vmand %vm4327, %vm4331
      %vm4336 = vmand %vm4328, %vm4332
      %v4337 = vadd.s32 %v3909, 1
      %v4338 = vadd.s32 %v3910, 1
      %v4339 = vadd.s32 %v3911, 1
      %v4340 = vadd.s32 %v3912, 1
      %vm4341 = vcmp.ge.s32.totalorder %v4337, 0
      %vm4342 = vcmp.ge.s32.totalorder %v4338, 0
      %vm4343 = vcmp.ge.s32.totalorder %v4339, 0
      %vm4344 = vcmp.ge.s32.totalorder %v4340, 0
      %vm4345 = vmand %vm4301, %vm4341
      %vm4346 = vmand %vm4302, %vm4342
      %vm4347 = vmand %vm4303, %vm4343
      %vm4348 = vmand %vm4304, %vm4344
      %vm4349 = vcmp.lt.s32.totalorder %v4337, 16
      %vm4350 = vcmp.lt.s32.totalorder %v4338, 16
      %vm4351 = vcmp.lt.s32.totalorder %v4339, 16
      %vm4352 = vcmp.lt.s32.totalorder %v4340, 16
      %vm4353 = vmand %vm4345, %vm4349
      %vm4354 = vmand %vm4346, %vm4350
      %vm4355 = vmand %vm4347, %vm4351
      %vm4356 = vmand %vm4348, %vm4352
      %vm4357 = vcmp.ge.s32.totalorder %v3905, 0
      %vm4358 = vcmp.ge.s32.totalorder %v3906, 0
      %vm4359 = vcmp.ge.s32.totalorder %v3907, 0
      %vm4360 = vcmp.ge.s32.totalorder %v3908, 0
      %vm4361 = vcmp.lt.s32.totalorder %v3905, 16
      %vm4362 = vcmp.lt.s32.totalorder %v3906, 16
      %vm4363 = vcmp.lt.s32.totalorder %v3907, 16
      %vm4364 = vcmp.lt.s32.totalorder %v3908, 16
      %vm4365 = vmand %vm4357, %vm4361
      %vm4366 = vmand %vm4358, %vm4362
      %vm4367 = vmand %vm4359, %vm4363
      %vm4368 = vmand %vm4360, %vm4364
      %vm4369 = vmand %vm4365, %vm4305
      %vm4370 = vmand %vm4366, %vm4306
      %vm4371 = vmand %vm4367, %vm4307
      %vm4372 = vmand %vm4368, %vm4308
      %vm4373 = vmand %vm4369, %vm4313
      %vm4374 = vmand %vm4370, %vm4314
      %vm4375 = vmand %vm4371, %vm4315
      %vm4376 = vmand %vm4372, %vm4316
      %vm4377 = vmand %vm4365, %vm4321
      %vm4378 = vmand %vm4366, %vm4322
      %vm4379 = vmand %vm4367, %vm4323
      %vm4380 = vmand %vm4368, %vm4324
      %vm4381 = vmand %vm4377, %vm4329
      %vm4382 = vmand %vm4378, %vm4330
      %vm4383 = vmand %vm4379, %vm4331
      %vm4384 = vmand %vm4380, %vm4332
      %vm4385 = vmand %vm4365, %vm4341
      %vm4386 = vmand %vm4366, %vm4342
      %vm4387 = vmand %vm4367, %vm4343
      %vm4388 = vmand %vm4368, %vm4344
      %vm4389 = vmand %vm4385, %vm4349
      %vm4390 = vmand %vm4386, %vm4350
      %vm4391 = vmand %vm4387, %vm4351
      %vm4392 = vmand %vm4388, %vm4352
      %v4393 = vadd.s32 %v3905, 1
      %v4394 = vadd.s32 %v3906, 1
      %v4395 = vadd.s32 %v3907, 1
      %v4396 = vadd.s32 %v3908, 1
      %vm4397 = vcmp.ge.s32.totalorder %v4393, 0
      %vm4398 = vcmp.ge.s32.totalorder %v4394, 0
      %vm4399 = vcmp.ge.s32.totalorder %v4395, 0
      %vm4400 = vcmp.ge.s32.totalorder %v4396, 0
      %vm4401 = vcmp.lt.s32.totalorder %v4393, 16
      %vm4402 = vcmp.lt.s32.totalorder %v4394, 16
      %vm4403 = vcmp.lt.s32.totalorder %v4395, 16
      %vm4404 = vcmp.lt.s32.totalorder %v4396, 16
      %vm4405 = vmand %vm4397, %vm4401
      %vm4406 = vmand %vm4398, %vm4402
      %vm4407 = vmand %vm4399, %vm4403
      %vm4408 = vmand %vm4400, %vm4404
      %vm4409 = vmand %vm4405, %vm4305
      %vm4410 = vmand %vm4406, %vm4306
      %vm4411 = vmand %vm4407, %vm4307
      %vm4412 = vmand %vm4408, %vm4308
      %vm4413 = vmand %vm4409, %vm4313
      %vm4414 = vmand %vm4410, %vm4314
      %vm4415 = vmand %vm4411, %vm4315
      %vm4416 = vmand %vm4412, %vm4316
      %vm4417 = vmand %vm4405, %vm4321
      %vm4418 = vmand %vm4406, %vm4322
      %vm4419 = vmand %vm4407, %vm4323
      %vm4420 = vmand %vm4408, %vm4324
      %vm4421 = vmand %vm4417, %vm4329
      %vm4422 = vmand %vm4418, %vm4330
      %vm4423 = vmand %vm4419, %vm4331
      %vm4424 = vmand %vm4420, %vm4332
      %vm4425 = vmand %vm4405, %vm4341
      %vm4426 = vmand %vm4406, %vm4342
      %vm4427 = vmand %vm4407, %vm4343
      %vm4428 = vmand %vm4408, %vm4344
      %vm4429 = vmand %vm4425, %vm4349
      %vm4430 = vmand %vm4426, %vm4350
      %vm4431 = vmand %vm4427, %vm4351
      %vm4432 = vmand %vm4428, %vm4352
      %4441 = vrot.lane.b32.xlu0 %v4277, 17
      %v4442 = vpop.permute.xlu0 %4441
      %4443 = vrot.lane.b32.xlu0 %v4278, 17
      %v4444 = vpop.permute.xlu0 %4443
      %4445 = vrot.lane.b32.xlu0 %v4279, 17
      %v4446 = vpop.permute.xlu0 %4445
      %4447 = vrot.lane.b32.xlu0 %v4280, 17
      %v4448 = vpop.permute.xlu0 %4447
      %4449 = vrot.lane.b32.xlu0 %v4281, 17
      %v4450 = vpop.permute.xlu0 %4449
      %4451 = vrot.lane.b32.xlu0 %v4282, 17
      %v4452 = vpop.permute.xlu0 %4451
      %4453 = vrot.lane.b32.xlu0 %v4283, 17
      %v4454 = vpop.permute.xlu0 %4453
      %4455 = vrot.lane.b32.xlu0 %v4284, 17
      %v4456 = vpop.permute.xlu0 %4455
      %vm4457 = vcmask 138240
      %v4458 = vsel %vm4457, %v4442, %v4444
      %v4459 = vsel %vm4457, %v4444, %v4446
      %v4460 = vsel %vm4457, %v4446, %v4448
      %v4461 = vsel %vm4457, %v4450, %v4452
      %v4462 = vsel %vm4457, %v4452, %v4454
      %v4463 = vsel %vm4457, %v4454, %v4456
      %v4472 = vsel %vm4457, 0.0, %v4442
      %v4473 = vsel %vm4457, 0.0, %v4450
      %v4474 = vsel %vm4317, 1, 0
      %v4475 = vsel %vm4318, 1, 0
      %v4476 = vsel %vm4319, 1, 0
      %v4477 = vsel %vm4320, 1, 0
      %vm4478 = vcmp.eq.s32.totalorder %v4474, 1
      %vm4479 = vcmp.eq.s32.totalorder %v4475, 1
      %vm4480 = vcmp.eq.s32.totalorder %v4476, 1
      %vm4481 = vcmp.eq.s32.totalorder %v4477, 1
      %v4482 = vsel %vm4478, %v4472, 0.0
      %v4483 = vsel %vm4479, %v4458, 0.0
      %v4484 = vsel %vm4480, %v4459, 0.0
      %v4485 = vsel %vm4481, %v4460, 0.0
      %v4486 = vsel %vm4478, %v4473, 0.0
      %v4487 = vsel %vm4479, %v4461, 0.0
      %v4488 = vsel %vm4480, %v4462, 0.0
      %v4489 = vsel %vm4481, %v4463, 0.0
      %4490 = vrot.lane.b32.xlu0 %v4277, 16
      %v4491 = vpop.permute.xlu0 %4490
      %4492 = vrot.lane.b32.xlu0 %v4278, 16
      %v4493 = vpop.permute.xlu0 %4492
      %4494 = vrot.lane.b32.xlu0 %v4279, 16
      %v4495 = vpop.permute.xlu0 %4494
      %4496 = vrot.lane.b32.xlu0 %v4280, 16
      %v4497 = vpop.permute.xlu0 %4496
      %4498 = vrot.lane.b32.xlu0 %v4281, 16
      %v4499 = vpop.permute.xlu0 %4498
      %4500 = vrot.lane.b32.xlu0 %v4282, 16
      %v4501 = vpop.permute.xlu0 %4500
      %4502 = vrot.lane.b32.xlu0 %v4283, 16
      %v4503 = vpop.permute.xlu0 %4502
      %4504 = vrot.lane.b32.xlu0 %v4284, 16
      %v4505 = vpop.permute.xlu0 %4504
      %v4506 = vsel %vm3481, %v4491, %v4493
      %v4507 = vsel %vm3481, %v4493, %v4495
      %v4508 = vsel %vm3481, %v4495, %v4497
      %v4509 = vsel %vm3481, %v4499, %v4501
      %v4510 = vsel %vm3481, %v4501, %v4503
      %v4511 = vsel %vm3481, %v4503, %v4505
      %v4520 = vsel %vm3481, 0.0, %v4491
      %v4521 = vsel %vm3481, 0.0, %v4499
      %v4522 = vsel %vm4333, 1, 0
      %v4523 = vsel %vm4334, 1, 0
      %v4524 = vsel %vm4335, 1, 0
      %v4525 = vsel %vm4336, 1, 0
      %vm4526 = vcmp.eq.s32.totalorder %v4522, 1
      %vm4527 = vcmp.eq.s32.totalorder %v4523, 1
      %vm4528 = vcmp.eq.s32.totalorder %v4524, 1
      %vm4529 = vcmp.eq.s32.totalorder %v4525, 1
      %v4530 = vsel %vm4526, %v4520, 0.0
      %v4531 = vsel %vm4527, %v4506, 0.0
      %v4532 = vsel %vm4528, %v4507, 0.0
      %v4533 = vsel %vm4529, %v4508, 0.0
      %v4534 = vsel %vm4526, %v4521, 0.0
      %v4535 = vsel %vm4527, %v4509, 0.0
      %v4536 = vsel %vm4528, %v4510, 0.0
      %v4537 = vsel %vm4529, %v4511, 0.0
      %4538 = vrot.lane.b32.xlu0 %v4277, 15
      %v4539 = vpop.permute.xlu0 %4538
      %4540 = vrot.lane.b32.xlu0 %v4278, 15
      %v4541 = vpop.permute.xlu0 %4540
      %4542 = vrot.lane.b32.xlu0 %v4279, 15
      %v4543 = vpop.permute.xlu0 %4542
      %4544 = vrot.lane.b32.xlu0 %v4280, 15
      %v4545 = vpop.permute.xlu0 %4544
      %4546 = vrot.lane.b32.xlu0 %v4281, 15
      %v4547 = vpop.permute.xlu0 %4546
      %4548 = vrot.lane.b32.xlu0 %v4282, 15
      %v4549 = vpop.permute.xlu0 %4548
      %4550 = vrot.lane.b32.xlu0 %v4283, 15
      %v4551 = vpop.permute.xlu0 %4550
      %4552 = vrot.lane.b32.xlu0 %v4284, 15
      %v4553 = vpop.permute.xlu0 %4552
      %vm4554 = vcmask 121856
      %v4555 = vsel %vm4554, %v4539, %v4541
      %v4556 = vsel %vm4554, %v4541, %v4543
      %v4557 = vsel %vm4554, %v4543, %v4545
      %v4558 = vsel %vm4554, %v4547, %v4549
      %v4559 = vsel %vm4554, %v4549, %v4551
      %v4560 = vsel %vm4554, %v4551, %v4553
      %v4569 = vsel %vm4554, 0.0, %v4539
      %v4570 = vsel %vm4554, 0.0, %v4547
      %v4571 = vsel %vm4353, 1, 0
      %v4572 = vsel %vm4354, 1, 0
      %v4573 = vsel %vm4355, 1, 0
      %v4574 = vsel %vm4356, 1, 0
      %vm4575 = vcmp.eq.s32.totalorder %v4571, 1
      %vm4576 = vcmp.eq.s32.totalorder %v4572, 1
      %vm4577 = vcmp.eq.s32.totalorder %v4573, 1
      %vm4578 = vcmp.eq.s32.totalorder %v4574, 1
      %v4579 = vsel %vm4575, %v4569, 0.0
      %v4580 = vsel %vm4576, %v4555, 0.0
      %v4581 = vsel %vm4577, %v4556, 0.0
      %v4582 = vsel %vm4578, %v4557, 0.0
      %v4583 = vsel %vm4575, %v4570, 0.0
      %v4584 = vsel %vm4576, %v4558, 0.0
      %v4585 = vsel %vm4577, %v4559, 0.0
      %v4586 = vsel %vm4578, %v4560, 0.0
      %4587 = vrot.lane.b32.xlu0 %v4277, 1
      %v4588 = vpop.permute.xlu0 %4587
      %4589 = vrot.lane.b32.xlu0 %v4278, 1
      %v4590 = vpop.permute.xlu0 %4589
      %4591 = vrot.lane.b32.xlu0 %v4279, 1
      %v4592 = vpop.permute.xlu0 %4591
      %4593 = vrot.lane.b32.xlu0 %v4280, 1
      %v4594 = vpop.permute.xlu0 %4593
      %4595 = vrot.lane.b32.xlu0 %v4281, 1
      %v4596 = vpop.permute.xlu0 %4595
      %4597 = vrot.lane.b32.xlu0 %v4282, 1
      %v4598 = vpop.permute.xlu0 %4597
      %4599 = vrot.lane.b32.xlu0 %v4283, 1
      %v4600 = vpop.permute.xlu0 %4599
      %4601 = vrot.lane.b32.xlu0 %v4284, 1
      %v4602 = vpop.permute.xlu0 %4601
      %v4603 = vsel %vm2040, %v4588, %v4590
      %v4604 = vsel %vm2040, %v4590, %v4592
      %v4605 = vsel %vm2040, %v4592, %v4594
      %v4606 = vsel %vm2040, %v4596, %v4598
      %v4607 = vsel %vm2040, %v4598, %v4600
      %v4608 = vsel %vm2040, %v4600, %v4602
      %v4617 = vsel %vm2040, 0.0, %v4588
      %v4618 = vsel %vm2040, 0.0, %v4596
      %v4619 = vsel %vm4373, 1, 0
      %v4620 = vsel %vm4374, 1, 0
      %v4621 = vsel %vm4375, 1, 0
      %v4622 = vsel %vm4376, 1, 0
      %vm4623 = vcmp.eq.s32.totalorder %v4619, 1
      %vm4624 = vcmp.eq.s32.totalorder %v4620, 1
      %vm4625 = vcmp.eq.s32.totalorder %v4621, 1
      %vm4626 = vcmp.eq.s32.totalorder %v4622, 1
      %v4627 = vsel %vm4623, %v4617, 0.0
      %v4628 = vsel %vm4624, %v4603, 0.0
      %v4629 = vsel %vm4625, %v4604, 0.0
      %v4630 = vsel %vm4626, %v4605, 0.0
      %v4631 = vsel %vm4623, %v4618, 0.0
      %v4632 = vsel %vm4624, %v4606, 0.0
      %v4633 = vsel %vm4625, %v4607, 0.0
      %v4634 = vsel %vm4626, %v4608, 0.0
      %v4635 = vsel %vm4381, 1, 0
      %v4636 = vsel %vm4382, 1, 0
      %v4637 = vsel %vm4383, 1, 0
      %v4638 = vsel %vm4384, 1, 0
      %vm4639 = vcmp.eq.s32.totalorder %v4635, 1
      %vm4640 = vcmp.eq.s32.totalorder %v4636, 1
      %vm4641 = vcmp.eq.s32.totalorder %v4637, 1
      %vm4642 = vcmp.eq.s32.totalorder %v4638, 1
      %v4643 = vsel %vm4639, %v4277, 0.0
      %v4644 = vsel %vm4640, %v4278, 0.0
      %v4645 = vsel %vm4641, %v4279, 0.0
      %v4646 = vsel %vm4642, %v4280, 0.0
      %v4647 = vsel %vm4639, %v4281, 0.0
      %v4648 = vsel %vm4640, %v4282, 0.0
      %v4649 = vsel %vm4641, %v4283, 0.0
      %v4650 = vsel %vm4642, %v4284, 0.0
      %4651 = vrot.lane.b32.xlu0 %v4277, 127
      %v4652 = vpop.permute.xlu0 %4651
      %4653 = vrot.lane.b32.xlu0 %v4278, 127
      %v4654 = vpop.permute.xlu0 %4653
      %4655 = vrot.lane.b32.xlu0 %v4279, 127
      %v4656 = vpop.permute.xlu0 %4655
      %4657 = vrot.lane.b32.xlu0 %v4280, 127
      %v4658 = vpop.permute.xlu0 %4657
      %4659 = vrot.lane.b32.xlu0 %v4281, 127
      %v4660 = vpop.permute.xlu0 %4659
      %4661 = vrot.lane.b32.xlu0 %v4282, 127
      %v4662 = vpop.permute.xlu0 %4661
      %4663 = vrot.lane.b32.xlu0 %v4283, 127
      %v4664 = vpop.permute.xlu0 %4663
      %4665 = vrot.lane.b32.xlu0 %v4284, 127
      %v4666 = vpop.permute.xlu0 %4665
      %v4667 = vsel %vm2991, %v4652, %v4654
      %v4668 = vsel %vm2991, %v4654, %v4656
      %v4669 = vsel %vm2991, %v4656, %v4658
      %v4670 = vsel %vm2991, %v4660, %v4662
      %v4671 = vsel %vm2991, %v4662, %v4664
      %v4672 = vsel %vm2991, %v4664, %v4666
      %v4681 = vsel %vm2991, %v4658, 0.0
      %v4682 = vsel %vm2991, %v4666, 0.0
      %v4683 = vsel %vm4389, 1, 0
      %v4684 = vsel %vm4390, 1, 0
      %v4685 = vsel %vm4391, 1, 0
      %v4686 = vsel %vm4392, 1, 0
      %vm4687 = vcmp.eq.s32.totalorder %v4683, 1
      %vm4688 = vcmp.eq.s32.totalorder %v4684, 1
      %vm4689 = vcmp.eq.s32.totalorder %v4685, 1
      %vm4690 = vcmp.eq.s32.totalorder %v4686, 1
      %v4691 = vsel %vm4687, %v4667, 0.0
      %v4692 = vsel %vm4688, %v4668, 0.0
      %v4693 = vsel %vm4689, %v4669, 0.0
      %v4694 = vsel %vm4690, %v4681, 0.0
      %v4695 = vsel %vm4687, %v4670, 0.0
      %v4696 = vsel %vm4688, %v4671, 0.0
      %v4697 = vsel %vm4689, %v4672, 0.0
      %v4698 = vsel %vm4690, %v4682, 0.0
      %4699 = vrot.lane.b32.xlu0 %v4277, 113
      %v4700 = vpop.permute.xlu0 %4699
      %4701 = vrot.lane.b32.xlu0 %v4278, 113
      %v4702 = vpop.permute.xlu0 %4701
      %4703 = vrot.lane.b32.xlu0 %v4279, 113
      %v4704 = vpop.permute.xlu0 %4703
      %4705 = vrot.lane.b32.xlu0 %v4280, 113
      %v4706 = vpop.permute.xlu0 %4705
      %4707 = vrot.lane.b32.xlu0 %v4281, 113
      %v4708 = vpop.permute.xlu0 %4707
      %4709 = vrot.lane.b32.xlu0 %v4282, 113
      %v4710 = vpop.permute.xlu0 %4709
      %4711 = vrot.lane.b32.xlu0 %v4283, 113
      %v4712 = vpop.permute.xlu0 %4711
      %4713 = vrot.lane.b32.xlu0 %v4284, 113
      %v4714 = vpop.permute.xlu0 %4713
      %vm4715 = vcmask 924672
      %v4716 = vsel %vm4715, %v4700, %v4702
      %v4717 = vsel %vm4715, %v4702, %v4704
      %v4718 = vsel %vm4715, %v4704, %v4706
      %v4719 = vsel %vm4715, %v4708, %v4710
      %v4720 = vsel %vm4715, %v4710, %v4712
      %v4721 = vsel %vm4715, %v4712, %v4714
      %v4730 = vsel %vm4715, %v4706, 0.0
      %v4731 = vsel %vm4715, %v4714, 0.0
      %v4732 = vsel %vm4413, 1, 0
      %v4733 = vsel %vm4414, 1, 0
      %v4734 = vsel %vm4415, 1, 0
      %v4735 = vsel %vm4416, 1, 0
      %vm4736 = vcmp.eq.s32.totalorder %v4732, 1
      %vm4737 = vcmp.eq.s32.totalorder %v4733, 1
      %vm4738 = vcmp.eq.s32.totalorder %v4734, 1
      %vm4739 = vcmp.eq.s32.totalorder %v4735, 1
      %v4740 = vsel %vm4736, %v4716, 0.0
      %v4741 = vsel %vm4737, %v4717, 0.0
      %v4742 = vsel %vm4738, %v4718, 0.0
      %v4743 = vsel %vm4739, %v4730, 0.0
      %v4744 = vsel %vm4736, %v4719, 0.0
      %v4745 = vsel %vm4737, %v4720, 0.0
      %v4746 = vsel %vm4738, %v4721, 0.0
      %v4747 = vsel %vm4739, %v4731, 0.0
      %4748 = vrot.lane.b32.xlu0 %v4277, 112
      %v4749 = vpop.permute.xlu0 %4748
      %4750 = vrot.lane.b32.xlu0 %v4278, 112
      %v4751 = vpop.permute.xlu0 %4750
      %4752 = vrot.lane.b32.xlu0 %v4279, 112
      %v4753 = vpop.permute.xlu0 %4752
      %4754 = vrot.lane.b32.xlu0 %v4280, 112
      %v4755 = vpop.permute.xlu0 %4754
      %4756 = vrot.lane.b32.xlu0 %v4281, 112
      %v4757 = vpop.permute.xlu0 %4756
      %4758 = vrot.lane.b32.xlu0 %v4282, 112
      %v4759 = vpop.permute.xlu0 %4758
      %4760 = vrot.lane.b32.xlu0 %v4283, 112
      %v4761 = vpop.permute.xlu0 %4760
      %4762 = vrot.lane.b32.xlu0 %v4284, 112
      %v4763 = vpop.permute.xlu0 %4762
      %vm4764 = vcmask 916480
      %v4765 = vsel %vm4764, %v4749, %v4751
      %v4766 = vsel %vm4764, %v4751, %v4753
      %v4767 = vsel %vm4764, %v4753, %v4755
      %v4768 = vsel %vm4764, %v4757, %v4759
      %v4769 = vsel %vm4764, %v4759, %v4761
      %v4770 = vsel %vm4764, %v4761, %v4763
      %v4779 = vsel %vm4764, %v4755, 0.0
      %v4780 = vsel %vm4764, %v4763, 0.0
      %v4781 = vsel %vm4421, 1, 0
      %v4782 = vsel %vm4422, 1, 0
      %v4783 = vsel %vm4423, 1, 0
      %v4784 = vsel %vm4424, 1, 0
      %vm4785 = vcmp.eq.s32.totalorder %v4781, 1
      %vm4786 = vcmp.eq.s32.totalorder %v4782, 1
      %vm4787 = vcmp.eq.s32.totalorder %v4783, 1
      %vm4788 = vcmp.eq.s32.totalorder %v4784, 1
      %v4789 = vsel %vm4785, %v4765, 0.0
      %v4790 = vsel %vm4786, %v4766, 0.0
      %v4791 = vsel %vm4787, %v4767, 0.0
      %v4792 = vsel %vm4788, %v4779, 0.0
      %v4793 = vsel %vm4785, %v4768, 0.0
      %v4794 = vsel %vm4786, %v4769, 0.0
      %v4795 = vsel %vm4787, %v4770, 0.0
      %v4796 = vsel %vm4788, %v4780, 0.0
      %4797 = vrot.lane.b32.xlu0 %v4277, 111
      %v4798 = vpop.permute.xlu0 %4797
      %4799 = vrot.lane.b32.xlu0 %v4278, 111
      %v4800 = vpop.permute.xlu0 %4799
      %4801 = vrot.lane.b32.xlu0 %v4279, 111
      %v4802 = vpop.permute.xlu0 %4801
      %4803 = vrot.lane.b32.xlu0 %v4280, 111
      %v4804 = vpop.permute.xlu0 %4803
      %4805 = vrot.lane.b32.xlu0 %v4281, 111
      %v4806 = vpop.permute.xlu0 %4805
      %4807 = vrot.lane.b32.xlu0 %v4282, 111
      %v4808 = vpop.permute.xlu0 %4807
      %4809 = vrot.lane.b32.xlu0 %v4283, 111
      %v4810 = vpop.permute.xlu0 %4809
      %4811 = vrot.lane.b32.xlu0 %v4284, 111
      %v4812 = vpop.permute.xlu0 %4811
      %vm4813 = vcmask 908288
      %v4814 = vsel %vm4813, %v4798, %v4800
      %v4815 = vsel %vm4813, %v4800, %v4802
      %v4816 = vsel %vm4813, %v4802, %v4804
      %v4817 = vsel %vm4813, %v4806, %v4808
      %v4818 = vsel %vm4813, %v4808, %v4810
      %v4819 = vsel %vm4813, %v4810, %v4812
      %v4828 = vsel %vm4813, %v4804, 0.0
      %v4829 = vsel %vm4813, %v4812, 0.0
      %v4830 = vsel %vm4429, 1, 0
      %v4831 = vsel %vm4430, 1, 0
      %v4832 = vsel %vm4431, 1, 0
      %v4833 = vsel %vm4432, 1, 0
      %vm4834 = vcmp.eq.s32.totalorder %v4830, 1
      %vm4835 = vcmp.eq.s32.totalorder %v4831, 1
      %vm4836 = vcmp.eq.s32.totalorder %v4832, 1
      %vm4837 = vcmp.eq.s32.totalorder %v4833, 1
      %v4838 = vsel %vm4834, %v4814, 0.0
      %v4839 = vsel %vm4835, %v4815, 0.0
      %v4840 = vsel %vm4836, %v4816, 0.0
      %v4841 = vsel %vm4837, %v4828, 0.0
      %v4842 = vsel %vm4834, %v4817, 0.0
      %v4843 = vsel %vm4835, %v4818, 0.0
      %v4844 = vsel %vm4836, %v4819, 0.0
      %v4845 = vsel %vm4837, %v4829, 0.0
      %v4847 = vsel %vm3481, %v1578, 0
      %4849 = vmatprep.subr.mxu0 %v4794
      %4850 = vmatpush1.msra.mxu0 %v4793
      %4851 = vmatprep.subr.mxu0 %v4790
      %4852 = vmatpush1.msra.mxu0 %v4789
      %4853 = vmatprep.subr.mxu0 %v4745
      %4854 = vmatpush1.msra.mxu0 %v4744
      %4855 = vmatprep.subr.mxu0 %v4741
      %4856 = vmatpush1.msra.mxu0 %v4740
      %4857 = vmatprep.subr.mxu0 %v4696
      %4858 = vmatpush1.msra.mxu0 %v4695
      %4859 = vmatprep.subr.mxu0 %v4692
      %4860 = vmatpush1.msra.mxu0 %v4691
      %4861 = vmatprep.subr.mxu0 %v4648
      %4862 = vmatpush1.msra.mxu0 %v4647
      %4863 = vmatprep.subr.mxu0 %v4644
      %4864 = vmatpush1.msra.mxu0 %v4643
      %4865 = vmatprep.subr.mxu0 %v4632
      %4866 = vmatpush1.msra.mxu0 %v4631
      %4867 = vmatprep.subr.mxu0 %v4628
      %4868 = vmatpush1.msra.mxu0 %v4627
      %4869 = vmatprep.subr.mxu0 %v4584
      %4870 = vmatpush1.msra.mxu0 %v4583
      %4871 = vmatprep.subr.mxu0 %v4580
      %4872 = vmatpush1.msra.mxu0 %v4579
      %4873 = vmatprep.subr.mxu0 %v4535
      %4874 = vmatpush1.msra.mxu0 %v4534
      %4875 = vmatprep.subr.mxu0 %v4531
      %4876 = vmatpush1.msra.mxu0 %v4530
      %4877 = vmatprep.subr.mxu0 %v4487
      %4878 = vmatpush1.msra.mxu0 %v4486
      %4879 = vmatprep.subr.mxu0 %v4483
      %4880 = vmatpush1.msra.mxu0 %v4482
      %4881 = vmatprep.subr.mxu0 0.0
      %4882 = vmatpush2.msra.mxu0 0.0
      %4883 = vmatprep.subr.mxu0 0.0
      %4884 = vmatpush2.msra.mxu0 0.0
      %4885 = vmatprep.subr.mxu0 0.0
      %4886 = vmatpush2.msra.mxu0 0.0
      %4887 = vmatprep.subr.mxu0 0.0
      %4888 = vmatpush2.msra.mxu0 0.0
      %4889 = vmatprep.subr.mxu0 0.0
      %4890 = vmatpush2.msra.mxu0 0.0
      %4891 = vmatprep.subr.mxu0 0.0
      %4892 = vmatpush2.msra.mxu0 0.0
      %4893 = vmatprep.subr.mxu0 0.0
      %4894 = vmatpush2.msra.mxu0 0.0
      %4895 = vmatprep.subr.mxu0 0.0
      %4896 = vmatpush2.msra.mxu0 0.0
      %4897 = vmatprep.subr.mxu0 0.0
      %4898 = vmatpush2.msra.mxu0 0.0
      %4899 = vmatprep.subr.mxu0 0.0
      %4900 = vmatpush2.msra.mxu0 0.0
      %4901 = vmatprep.subr.mxu0 0.0
      %4902 = vmatpush2.msra.mxu0 0.0
      %4903 = vmatprep.subr.mxu0 0.0
      %4904 = vmatpush2.msra.mxu0 0.0
      %4905 = vmatprep.subr.mxu0 0.0
      %4906 = vmatpush2.msra.mxu0 0.0
      %4907 = vmatprep.subr.mxu0 0.0
      %4908 = vmatpush2.msra.mxu0 0.0
      %4909 = vmatprep.subr.mxu0 %v4843
      %4910 = vmatpush2.msra.mxu0 %v4842
      %4911 = vmatprep.subr.mxu0 %v4839
      %4912 = vmatpush2.msra.mxu0 %v4838
      %4913 = vmatprep.mubr.f32.mxu0 %v4847
      %4914 = vmatmul.mubr.f32.gmra.mxu0 %v1577
      %v4915 = vpop.f32.mrf.mxu0
      %v4916 = vadd.f32 0.0, %v4915
      %v4917 = vpop.f32.mrf.mxu0
      %v4918 = vadd.f32 0.0, %v4917
      %4919 = vdwg.mxu0
      %4920 = vmatprep.subr.mxu0 %v4796
      %4921 = vmatpush1.msra.mxu0 %v4795
      %4922 = vmatprep.subr.mxu0 %v4792
      %4923 = vmatpush1.msra.mxu0 %v4791
      %4924 = vmatprep.subr.mxu0 %v4747
      %4925 = vmatpush1.msra.mxu0 %v4746
      %4926 = vmatprep.subr.mxu0 %v4743
      %4927 = vmatpush1.msra.mxu0 %v4742
      %4928 = vmatprep.subr.mxu0 %v4698
      %4929 = vmatpush1.msra.mxu0 %v4697
      %4930 = vmatprep.subr.mxu0 %v4694
      %4931 = vmatpush1.msra.mxu0 %v4693
      %4932 = vmatprep.subr.mxu0 %v4650
      %4933 = vmatpush1.msra.mxu0 %v4649
      %4934 = vmatprep.subr.mxu0 %v4646
      %4935 = vmatpush1.msra.mxu0 %v4645
      %4936 = vmatprep.subr.mxu0 %v4634
      %4937 = vmatpush1.msra.mxu0 %v4633
      %4938 = vmatprep.subr.mxu0 %v4630
      %4939 = vmatpush1.msra.mxu0 %v4629
      %4940 = vmatprep.subr.mxu0 %v4586
      %4941 = vmatpush1.msra.mxu0 %v4585
      %4942 = vmatprep.subr.mxu0 %v4582
      %4943 = vmatpush1.msra.mxu0 %v4581
      %4944 = vmatprep.subr.mxu0 %v4537
      %4945 = vmatpush1.msra.mxu0 %v4536
      %4946 = vmatprep.subr.mxu0 %v4533
      %4947 = vmatpush1.msra.mxu0 %v4532
      %4948 = vmatprep.subr.mxu0 %v4489
      %4949 = vmatpush1.msra.mxu0 %v4488
      %4950 = vmatprep.subr.mxu0 %v4485
      %4951 = vmatpush1.msra.mxu0 %v4484
      %4952 = vmatprep.subr.mxu0 0.0
      %4953 = vmatpush2.msra.mxu0 0.0
      %4954 = vmatprep.subr.mxu0 0.0
      %4955 = vmatpush2.msra.mxu0 0.0
      %4956 = vmatprep.subr.mxu0 0.0
      %4957 = vmatpush2.msra.mxu0 0.0
      %4958 = vmatprep.subr.mxu0 0.0
      %4959 = vmatpush2.msra.mxu0 0.0
      %4960 = vmatprep.subr.mxu0 0.0
      %4961 = vmatpush2.msra.mxu0 0.0
      %4962 = vmatprep.subr.mxu0 0.0
      %4963 = vmatpush2.msra.mxu0 0.0
      %4964 = vmatprep.subr.mxu0 0.0
      %4965 = vmatpush2.msra.mxu0 0.0
      %4966 = vmatprep.subr.mxu0 0.0
      %4967 = vmatpush2.msra.mxu0 0.0
      %4968 = vmatprep.subr.mxu0 0.0
      %4969 = vmatpush2.msra.mxu0 0.0
      %4970 = vmatprep.subr.mxu0 0.0
      %4971 = vmatpush2.msra.mxu0 0.0
      %4972 = vmatprep.subr.mxu0 0.0
      %4973 = vmatpush2.msra.mxu0 0.0
      %4974 = vmatprep.subr.mxu0 0.0
      %4975 = vmatpush2.msra.mxu0 0.0
      %4976 = vmatprep.subr.mxu0 0.0
      %4977 = vmatpush2.msra.mxu0 0.0
      %4978 = vmatprep.subr.mxu0 0.0
      %4979 = vmatpush2.msra.mxu0 0.0
      %4980 = vmatprep.subr.mxu0 %v4845
      %4981 = vmatpush2.msra.mxu0 %v4844
      %4982 = vmatprep.subr.mxu0 %v4841
      %4983 = vmatpush2.msra.mxu0 %v4840
      %4984 = vmatprep.mubr.f32.mxu0 %v4847
      %4985 = vmatmul.mubr.f32.gmra.mxu0 %v1577
      %v4986 = vpop.f32.mrf.mxu0
      %v4987 = vadd.f32 0.0, %v4986
      %v4988 = vpop.f32.mrf.mxu0
      %v4989 = vadd.f32 0.0, %v4988
      %4990 = vdwg.mxu0
      %v4991 = vmul.f32 %v1840, %v1840
      %v4992 = vmul.f32 %v1845, %v1845
      %v4994 = vsel %vm3481, %v1579, 0
      %4996 = vmatprep.subr.mxu0 0.0
      %4997 = vmatpush1.msra.mxu0 0.0
      %4998 = vmatprep.subr.mxu0 0.0
      %4999 = vmatpush1.msra.mxu0 0.0
      %5000 = vmatprep.subr.mxu0 0.0
      %5001 = vmatpush1.msra.mxu0 0.0
      %5002 = vmatprep.subr.mxu0 0.0
      %5003 = vmatpush1.msra.mxu0 0.0
      %5004 = vmatprep.subr.mxu0 0.0
      %5005 = vmatpush1.msra.mxu0 0.0
      %5006 = vmatprep.subr.mxu0 0.0
      %5007 = vmatpush1.msra.mxu0 0.0
      %5008 = vmatprep.subr.mxu0 0.0
      %5009 = vmatpush1.msra.mxu0 0.0
      %5010 = vmatprep.subr.mxu0 0.0
      %5011 = vmatpush1.msra.mxu0 0.0
      %5012 = vmatprep.subr.mxu0 0.0
      %5013 = vmatpush1.msra.mxu0 0.0
      %5014 = vmatprep.subr.mxu0 0.0
      %5015 = vmatpush1.msra.mxu0 0.0
      %5016 = vmatprep.subr.mxu0 0.0
      %5017 = vmatpush1.msra.mxu0 0.0
      %5018 = vmatprep.subr.mxu0 0.0
      %5019 = vmatpush1.msra.mxu0 0.0
      %5020 = vmatprep.subr.mxu0 0.0
      %5021 = vmatpush1.msra.mxu0 0.0
      %5022 = vmatprep.subr.mxu0 0.0
      %5023 = vmatpush1.msra.mxu0 0.0
      %5024 = vmatprep.subr.mxu0 0.0
      %5025 = vmatpush1.msra.mxu0 %v4992
      %5026 = vmatprep.subr.mxu0 0.0
      %5027 = vmatpush1.msra.mxu0 %v4991
      %5028 = vmatprep.subr.mxu0 0.0
      %5029 = vmatpush2.msra.mxu0 0.0
      %5030 = vmatprep.subr.mxu0 0.0
      %5031 = vmatpush2.msra.mxu0 0.0
      %5032 = vmatprep.subr.mxu0 0.0
      %5033 = vmatpush2.msra.mxu0 0.0
      %5034 = vmatprep.subr.mxu0 0.0
      %5035 = vmatpush2.msra.mxu0 0.0
      %5036 = vmatprep.subr.mxu0 0.0
      %5037 = vmatpush2.msra.mxu0 0.0
      %5038 = vmatprep.subr.mxu0 0.0
      %5039 = vmatpush2.msra.mxu0 0.0
      %5040 = vmatprep.subr.mxu0 0.0
      %5041 = vmatpush2.msra.mxu0 0.0
      %5042 = vmatprep.subr.mxu0 0.0
      %5043 = vmatpush2.msra.mxu0 0.0
      %5044 = vmatprep.subr.mxu0 0.0
      %5045 = vmatpush2.msra.mxu0 0.0
      %5046 = vmatprep.subr.mxu0 0.0
      %5047 = vmatpush2.msra.mxu0 0.0
      %5048 = vmatprep.subr.mxu0 0.0
      %5049 = vmatpush2.msra.mxu0 0.0
      %5050 = vmatprep.subr.mxu0 0.0
      %5051 = vmatpush2.msra.mxu0 0.0
      %5052 = vmatprep.subr.mxu0 0.0
      %5053 = vmatpush2.msra.mxu0 0.0
      %5054 = vmatprep.subr.mxu0 0.0
      %5055 = vmatpush2.msra.mxu0 0.0
      %5056 = vmatprep.subr.mxu0 0.0
      %5057 = vmatpush2.msra.mxu0 0.0
      %5058 = vmatprep.subr.mxu0 0.0
      %5059 = vmatpush2.msra.mxu0 0.0
      %5060 = vmatprep.mubr.f32.mxu0 0.0
      %5061 = vmatmul.mubr.f32.gmra.mxu0 %v4994
      %v5062 = vpop.f32.mrf.mxu0
      %v5063 = vadd.f32 1e-08, %v5062
      %v5064 = vpop.f32.mrf.mxu0
      %5065 = vdwg.mxu0
      %v5066 = vrsqrt.pop %v5063
      %5068 = vset.pattern.permute.xlu0 0
      %5069 = vperm.xlu0 %5068, %v5066
      %v5070 = vpop.permute.xlu0 %5069
      %v5072 = vsel %vm4227, %v5070, 0.0
      %v5073 = vsel %vm4228, %v5070, 0.0
      %v5074 = vsel %vm4229, %v5070, 0.0
      %v5075 = vsel %vm4230, %v5070, 0.0
      %5076 = vset.pattern.permute.xlu0 1
      %5077 = vperm.xlu0 %5076, %v5066
      %v5078 = vpop.permute.xlu0 %5077
      %v5080 = vsel %vm4257, %v5078, %v5072
      %v5081 = vsel %vm4258, %v5078, %v5073
      %v5082 = vsel %vm4259, %v5078, %v5074
      %v5083 = vsel %vm4260, %v5078, %v5075
      %v5084 = vmul.f32 %v4916, %v5080
      %v5085 = vmul.f32 %v4918, %v5081
      %v5086 = vmul.f32 %v4987, %v5082
      %v5087 = vmul.f32 %v4989, %v5083
      %5088 = vset.pattern.permute.xlu0 3
      %5089 = vperm.xlu0 %5088, %v1592
      %v5090 = vpop.permute.xlu0 %5089
      %v5092 = vlaneseq
      %v5093 = vshrl.u32 %v5092, 7
      %v5094 = vsub.s32 0, %v5093
      %v5095 = vrot.slane %v5090, %v5094
      %v5096 = vmul.f32 %v5095, %v1581
      %v5098 = vlaneseq
      %v5099 = vshrl.u32 %v5098, 7
      %v5100 = vsub.s32 0, %v5099
      %v5101 = vrot.slane %v5096, %v5100
      %v5102 = vlaneseq
      %v5103 = vshrl.u32 %v5102, 7
      %v5104 = vsub.s32 1, %v5103
      %v5105 = vrot.slane %v5096, %v5104
      %v5106 = vlaneseq
      %v5107 = vshrl.u32 %v5106, 7
      %v5108 = vsub.s32 2, %v5107
      %v5109 = vrot.slane %v5096, %v5108
      %v5110 = vlaneseq
      %v5111 = vshrl.u32 %v5110, 7
      %v5112 = vsub.s32 3, %v5111
      %v5113 = vrot.slane %v5096, %v5112
      %v5118 = vadd.f32 %v5084, %v5101
      %v5119 = vadd.f32 %v5085, %v5105
      %v5120 = vadd.f32 %v5086, %v5109
      %v5121 = vadd.f32 %v5087, %v5113
      %5123 = vset.pattern.permute.xlu0 0
      %5124 = vperm.xlu0 %5123, %v1580
      %v5125 = vpop.permute.xlu0 %5124
      %v5127 = vadd.f32 %v5118, %v5125
      %v5128 = vadd.f32 %v5119, %v5125
      %v5129 = vadd.f32 %v5120, %v5125
      %v5130 = vadd.f32 %v5121, %v5125
      %v5131 = vmul.f32 %v5127, 0.2
      %v5132 = vmul.f32 %v5128, 0.2
      %v5133 = vmul.f32 %v5129, 0.2
      %v5134 = vmul.f32 %v5130, 0.2
      %v5135 = vmax.f32 %v5127, %v5131
      %v5136 = vmax.f32 %v5128, %v5132
      %v5137 = vmax.f32 %v5129, %v5133
      %v5138 = vmax.f32 %v5130, %v5134
      %v5139 = vmul.f32 %v5135, 1.4142135
      %v5140 = vmul.f32 %v5136, 1.4142135
      %v5141 = vmul.f32 %v5137, 1.4142135
      %v5142 = vmul.f32 %v5138, 1.4142135
      %5144 = vset.pattern.permute.xlu0 0
      %5145 = vperm.xlu0 %5144, %v1850
      %v5146 = vpop.permute.xlu0 %5145
      %v5148 = vsel %vm4227, %v5146, 0.0
      %v5149 = vsel %vm4228, %v5146, 0.0
      %v5150 = vsel %vm4229, %v5146, 0.0
      %v5151 = vsel %vm4230, %v5146, 0.0
      %5152 = vset.pattern.permute.xlu0 1
      %5153 = vperm.xlu0 %5152, %v1850
      %v5154 = vpop.permute.xlu0 %5153
      %v5156 = vsel %vm4257, %v5154, %v5148
      %v5157 = vsel %vm4258, %v5154, %v5149
      %v5158 = vsel %vm4259, %v5154, %v5150
      %v5159 = vsel %vm4260, %v5154, %v5151
      %v5160 = vmul.f32 %v5139, %v5156
      %v5161 = vmul.f32 %v5140, %v5157
      %v5162 = vmul.f32 %v5141, %v5158
      %v5163 = vmul.f32 %v5142, %v5159
      %5168 = vrot.lane.b32.xlu0 %v5160, 17
      %v5169 = vpop.permute.xlu0 %5168
      %5170 = vrot.lane.b32.xlu0 %v5161, 17
      %v5171 = vpop.permute.xlu0 %5170
      %5172 = vrot.lane.b32.xlu0 %v5162, 17
      %v5173 = vpop.permute.xlu0 %5172
      %5174 = vrot.lane.b32.xlu0 %v5163, 17
      %v5175 = vpop.permute.xlu0 %5174
      %v5176 = vsel %vm4457, %v5169, %v5171
      %v5177 = vsel %vm4457, %v5171, %v5173
      %v5178 = vsel %vm4457, %v5173, %v5175
      %v5183 = vsel %vm4457, 0.0, %v5169
      %v5184 = vsel %vm4478, %v5183, 0.0
      %v5185 = vsel %vm4479, %v5176, 0.0
      %v5186 = vsel %vm4480, %v5177, 0.0
      %v5187 = vsel %vm4481, %v5178, 0.0
      %5188 = vrot.lane.b32.xlu0 %v5160, 16
      %v5189 = vpop.permute.xlu0 %5188
      %5190 = vrot.lane.b32.xlu0 %v5161, 16
      %v5191 = vpop.permute.xlu0 %5190
      %5192 = vrot.lane.b32.xlu0 %v5162, 16
      %v5193 = vpop.permute.xlu0 %5192
      %5194 = vrot.lane.b32.xlu0 %v5163, 16
      %v5195 = vpop.permute.xlu0 %5194
      %v5196 = vsel %vm3481, %v5189, %v5191
      %v5197 = vsel %vm3481, %v5191, %v5193
      %v5198 = vsel %vm3481, %v5193, %v5195
      %v5203 = vsel %vm3481, 0.0, %v5189
      %v5204 = vsel %vm4526, %v5203, 0.0
      %v5205 = vsel %vm4527, %v5196, 0.0
      %v5206 = vsel %vm4528, %v5197, 0.0
      %v5207 = vsel %vm4529, %v5198, 0.0
      %5208 = vrot.lane.b32.xlu0 %v5160, 15
      %v5209 = vpop.permute.xlu0 %5208
      %5210 = vrot.lane.b32.xlu0 %v5161, 15
      %v5211 = vpop.permute.xlu0 %5210
      %5212 = vrot.lane.b32.xlu0 %v5162, 15
      %v5213 = vpop.permute.xlu0 %5212
      %5214 = vrot.lane.b32.xlu0 %v5163, 15
      %v5215 = vpop.permute.xlu0 %5214
      %v5216 = vsel %vm4554, %v5209, %v5211
      %v5217 = vsel %vm4554, %v5211, %v5213
      %v5218 = vsel %vm4554, %v5213, %v5215
      %v5223 = vsel %vm4554, 0.0, %v5209
      %v5224 = vsel %vm4575, %v5223, 0.0
      %v5225 = vsel %vm4576, %v5216, 0.0
      %v5226 = vsel %vm4577, %v5217, 0.0
      %v5227 = vsel %vm4578, %v5218, 0.0
      %5228 = vrot.lane.b32.xlu0 %v5160, 1
      %v5229 = vpop.permute.xlu0 %5228
      %5230 = vrot.lane.b32.xlu0 %v5161, 1
      %v5231 = vpop.permute.xlu0 %5230
      %5232 = vrot.lane.b32.xlu0 %v5162, 1
      %v5233 = vpop.permute.xlu0 %5232
      %5234 = vrot.lane.b32.xlu0 %v5163, 1
      %v5235 = vpop.permute.xlu0 %5234
      %v5236 = vsel %vm2040, %v5229, %v5231
      %v5237 = vsel %vm2040, %v5231, %v5233
      %v5238 = vsel %vm2040, %v5233, %v5235
      %v5243 = vsel %vm2040, 0.0, %v5229
      %v5244 = vsel %vm4623, %v5243, 0.0
      %v5245 = vsel %vm4624, %v5236, 0.0
      %v5246 = vsel %vm4625, %v5237, 0.0
      %v5247 = vsel %vm4626, %v5238, 0.0
      %v5248 = vsel %vm4639, %v5160, 0.0
      %v5249 = vsel %vm4640, %v5161, 0.0
      %v5250 = vsel %vm4641, %v5162, 0.0
      %v5251 = vsel %vm4642, %v5163, 0.0
      %5252 = vrot.lane.b32.xlu0 %v5160, 127
      %v5253 = vpop.permute.xlu0 %5252
      %5254 = vrot.lane.b32.xlu0 %v5161, 127
      %v5255 = vpop.permute.xlu0 %5254
      %5256 = vrot.lane.b32.xlu0 %v5162, 127
      %v5257 = vpop.permute.xlu0 %5256
      %5258 = vrot.lane.b32.xlu0 %v5163, 127
      %v5259 = vpop.permute.xlu0 %5258
      %v5260 = vsel %vm2991, %v5253, %v5255
      %v5261 = vsel %vm2991, %v5255, %v5257
      %v5262 = vsel %vm2991, %v5257, %v5259
      %v5267 = vsel %vm2991, %v5259, 0.0
      %v5268 = vsel %vm4687, %v5260, 0.0
      %v5269 = vsel %vm4688, %v5261, 0.0
      %v5270 = vsel %vm4689, %v5262, 0.0
      %v5271 = vsel %vm4690, %v5267, 0.0
      %5272 = vrot.lane.b32.xlu0 %v5160, 113
      %v5273 = vpop.permute.xlu0 %5272
      %5274 = vrot.lane.b32.xlu0 %v5161, 113
      %v5275 = vpop.permute.xlu0 %5274
      %5276 = vrot.lane.b32.xlu0 %v5162, 113
      %v5277 = vpop.permute.xlu0 %5276
      %5278 = vrot.lane.b32.xlu0 %v5163, 113
      %v5279 = vpop.permute.xlu0 %5278
      %v5280 = vsel %vm4715, %v5273, %v5275
      %v5281 = vsel %vm4715, %v5275, %v5277
      %v5282 = vsel %vm4715, %v5277, %v5279
      %v5287 = vsel %vm4715, %v5279, 0.0
      %v5288 = vsel %vm4736, %v5280, 0.0
      %v5289 = vsel %vm4737, %v5281, 0.0
      %v5290 = vsel %vm4738, %v5282, 0.0
      %v5291 = vsel %vm4739, %v5287, 0.0
      %5292 = vrot.lane.b32.xlu0 %v5160, 112
      %v5293 = vpop.permute.xlu0 %5292
      %5294 = vrot.lane.b32.xlu0 %v5161, 112
      %v5295 = vpop.permute.xlu0 %5294
      %5296 = vrot.lane.b32.xlu0 %v5162, 112
      %v5297 = vpop.permute.xlu0 %5296
      %5298 = vrot.lane.b32.xlu0 %v5163, 112
      %v5299 = vpop.permute.xlu0 %5298
      %v5300 = vsel %vm4764, %v5293, %v5295
      %v5301 = vsel %vm4764, %v5295, %v5297
      %v5302 = vsel %vm4764, %v5297, %v5299
      %v5307 = vsel %vm4764, %v5299, 0.0
      %v5308 = vsel %vm4785, %v5300, 0.0
      %v5309 = vsel %vm4786, %v5301, 0.0
      %v5310 = vsel %vm4787, %v5302, 0.0
      %v5311 = vsel %vm4788, %v5307, 0.0
      %5312 = vrot.lane.b32.xlu0 %v5160, 111
      %v5313 = vpop.permute.xlu0 %5312
      %5314 = vrot.lane.b32.xlu0 %v5161, 111
      %v5315 = vpop.permute.xlu0 %5314
      %5316 = vrot.lane.b32.xlu0 %v5162, 111
      %v5317 = vpop.permute.xlu0 %5316
      %5318 = vrot.lane.b32.xlu0 %v5163, 111
      %v5319 = vpop.permute.xlu0 %5318
      %v5320 = vsel %vm4813, %v5313, %v5315
      %v5321 = vsel %vm4813, %v5315, %v5317
      %v5322 = vsel %vm4813, %v5317, %v5319
      %v5327 = vsel %vm4813, %v5319, 0.0
      %v5328 = vsel %vm4834, %v5320, 0.0
      %v5329 = vsel %vm4835, %v5321, 0.0
      %v5330 = vsel %vm4836, %v5322, 0.0
      %v5331 = vsel %vm4837, %v5327, 0.0
      %vm5332 = vcmask 588800
      %v5334 = vsel %vm5332, %v1582, 0
      %5336 = vmatprep.subr.mxu0 0.0
      %5337 = vmatpush1.msra.mxu0 0.0
      %5338 = vmatprep.subr.mxu0 0.0
      %5339 = vmatpush1.msra.mxu0 0.0
      %5340 = vmatprep.subr.mxu0 0.0
      %5341 = vmatpush1.msra.mxu0 0.0
      %5342 = vmatprep.subr.mxu0 0.0
      %5343 = vmatpush1.msra.mxu0 0.0
      %5344 = vmatprep.subr.mxu0 0.0
      %5345 = vmatpush1.msra.mxu0 0.0
      %5346 = vmatprep.subr.mxu0 0.0
      %5347 = vmatpush1.msra.mxu0 0.0
      %5348 = vmatprep.subr.mxu0 0.0
      %5349 = vmatpush1.msra.mxu0 0.0
      %5350 = vmatprep.subr.mxu0 %v5329
      %5351 = vmatpush1.msra.mxu0 %v5328
      %5352 = vmatprep.subr.mxu0 %v5309
      %5353 = vmatpush1.msra.mxu0 %v5308
      %5354 = vmatprep.subr.mxu0 %v5289
      %5355 = vmatpush1.msra.mxu0 %v5288
      %5356 = vmatprep.subr.mxu0 %v5269
      %5357 = vmatpush1.msra.mxu0 %v5268
      %5358 = vmatprep.subr.mxu0 %v5249
      %5359 = vmatpush1.msra.mxu0 %v5248
      %5360 = vmatprep.subr.mxu0 %v5245
      %5361 = vmatpush1.msra.mxu0 %v5244
      %5362 = vmatprep.subr.mxu0 %v5225
      %5363 = vmatpush1.msra.mxu0 %v5224
      %5364 = vmatprep.subr.mxu0 %v5205
      %5365 = vmatpush1.msra.mxu0 %v5204
      %5366 = vmatprep.subr.mxu0 %v5185
      %5367 = vmatpush1.msra.mxu0 %v5184
      %5368 = vmatprep.subr.mxu0 0.0
      %5369 = vmatpush2.msra.mxu0 0.0
      %5370 = vmatprep.subr.mxu0 0.0
      %5371 = vmatpush2.msra.mxu0 0.0
      %5372 = vmatprep.subr.mxu0 0.0
      %5373 = vmatpush2.msra.mxu0 0.0
      %5374 = vmatprep.subr.mxu0 0.0
      %5375 = vmatpush2.msra.mxu0 0.0
      %5376 = vmatprep.subr.mxu0 0.0
      %5377 = vmatpush2.msra.mxu0 0.0
      %5378 = vmatprep.subr.mxu0 0.0
      %5379 = vmatpush2.msra.mxu0 0.0
      %5380 = vmatprep.subr.mxu0 0.0
      %5381 = vmatpush2.msra.mxu0 0.0
      %5382 = vmatprep.subr.mxu0 0.0
      %5383 = vmatpush2.msra.mxu0 0.0
      %5384 = vmatprep.subr.mxu0 0.0
      %5385 = vmatpush2.msra.mxu0 0.0
      %5386 = vmatprep.subr.mxu0 0.0
      %5387 = vmatpush2.msra.mxu0 0.0
      %5388 = vmatprep.subr.mxu0 0.0
      %5389 = vmatpush2.msra.mxu0 0.0
      %5390 = vmatprep.subr.mxu0 0.0
      %5391 = vmatpush2.msra.mxu0 0.0
      %5392 = vmatprep.subr.mxu0 0.0
      %5393 = vmatpush2.msra.mxu0 0.0
      %5394 = vmatprep.subr.mxu0 0.0
      %5395 = vmatpush2.msra.mxu0 0.0
      %5396 = vmatprep.subr.mxu0 0.0
      %5397 = vmatpush2.msra.mxu0 0.0
      %5398 = vmatprep.subr.mxu0 0.0
      %5399 = vmatpush2.msra.mxu0 0.0
      %5400 = vmatprep.mubr.f32.mxu0 0.0
      %5401 = vmatmul.mubr.f32.gmra.mxu0 %v5334
      %v5402 = vpop.f32.mrf.mxu0
      %v5403 = vadd.f32 0.0, %v5402
      %v5404 = vpop.f32.mrf.mxu0
      %v5405 = vadd.f32 0.0, %v5404
      %5406 = vdwg.mxu0
      %5407 = vmatprep.subr.mxu0 0.0
      %5408 = vmatpush1.msra.mxu0 0.0
      %5409 = vmatprep.subr.mxu0 0.0
      %5410 = vmatpush1.msra.mxu0 0.0
      %5411 = vmatprep.subr.mxu0 0.0
      %5412 = vmatpush1.msra.mxu0 0.0
      %5413 = vmatprep.subr.mxu0 0.0
      %5414 = vmatpush1.msra.mxu0 0.0
      %5415 = vmatprep.subr.mxu0 0.0
      %5416 = vmatpush1.msra.mxu0 0.0
      %5417 = vmatprep.subr.mxu0 0.0
      %5418 = vmatpush1.msra.mxu0 0.0
      %5419 = vmatprep.subr.mxu0 0.0
      %5420 = vmatpush1.msra.mxu0 0.0
      %5421 = vmatprep.subr.mxu0 %v5331
      %5422 = vmatpush1.msra.mxu0 %v5330
      %5423 = vmatprep.subr.mxu0 %v5311
      %5424 = vmatpush1.msra.mxu0 %v5310
      %5425 = vmatprep.subr.mxu0 %v5291
      %5426 = vmatpush1.msra.mxu0 %v5290
      %5427 = vmatprep.subr.mxu0 %v5271
      %5428 = vmatpush1.msra.mxu0 %v5270
      %5429 = vmatprep.subr.mxu0 %v5251
      %5430 = vmatpush1.msra.mxu0 %v5250
      %5431 = vmatprep.subr.mxu0 %v5247
      %5432 = vmatpush1.msra.mxu0 %v5246
      %5433 = vmatprep.subr.mxu0 %v5227
      %5434 = vmatpush1.msra.mxu0 %v5226
      %5435 = vmatprep.subr.mxu0 %v5207
      %5436 = vmatpush1.msra.mxu0 %v5206
      %5437 = vmatprep.subr.mxu0 %v5187
      %5438 = vmatpush1.msra.mxu0 %v5186
      %5439 = vmatprep.subr.mxu0 0.0
      %5440 = vmatpush2.msra.mxu0 0.0
      %5441 = vmatprep.subr.mxu0 0.0
      %5442 = vmatpush2.msra.mxu0 0.0
      %5443 = vmatprep.subr.mxu0 0.0
      %5444 = vmatpush2.msra.mxu0 0.0
      %5445 = vmatprep.subr.mxu0 0.0
      %5446 = vmatpush2.msra.mxu0 0.0
      %5447 = vmatprep.subr.mxu0 0.0
      %5448 = vmatpush2.msra.mxu0 0.0
      %5449 = vmatprep.subr.mxu0 0.0
      %5450 = vmatpush2.msra.mxu0 0.0
      %5451 = vmatprep.subr.mxu0 0.0
      %5452 = vmatpush2.msra.mxu0 0.0
      %5453 = vmatprep.subr.mxu0 0.0
      %5454 = vmatpush2.msra.mxu0 0.0
      %5455 = vmatprep.subr.mxu0 0.0
      %5456 = vmatpush2.msra.mxu0 0.0
      %5457 = vmatprep.subr.mxu0 0.0
      %5458 = vmatpush2.msra.mxu0 0.0
      %5459 = vmatprep.subr.mxu0 0.0
      %5460 = vmatpush2.msra.mxu0 0.0
      %5461 = vmatprep.subr.mxu0 0.0
      %5462 = vmatpush2.msra.mxu0 0.0
      %5463 = vmatprep.subr.mxu0 0.0
      %5464 = vmatpush2.msra.mxu0 0.0
      %5465 = vmatprep.subr.mxu0 0.0
      %5466 = vmatpush2.msra.mxu0 0.0
      %5467 = vmatprep.subr.mxu0 0.0
      %5468 = vmatpush2.msra.mxu0 0.0
      %5469 = vmatprep.subr.mxu0 0.0
      %5470 = vmatpush2.msra.mxu0 0.0
      %5471 = vmatprep.mubr.f32.mxu0 0.0
      %5472 = vmatmul.mubr.f32.gmra.mxu0 %v5334
      %v5473 = vpop.f32.mrf.mxu0
      %v5474 = vadd.f32 0.0, %v5473
      %v5475 = vpop.f32.mrf.mxu0
      %v5476 = vadd.f32 0.0, %v5475
      %5477 = vdwg.mxu0
      %v5478 = vmul.f32 %v1850, %v1850
      %v5480 = vsel %vm2917, %v1583, 0
      %5482 = vmatprep.subr.mxu0 0.0
      %5483 = vmatpush1.msra.mxu0 0.0
      %5484 = vmatprep.subr.mxu0 0.0
      %5485 = vmatpush1.msra.mxu0 0.0
      %5486 = vmatprep.subr.mxu0 0.0
      %5487 = vmatpush1.msra.mxu0 0.0
      %5488 = vmatprep.subr.mxu0 0.0
      %5489 = vmatpush1.msra.mxu0 0.0
      %5490 = vmatprep.subr.mxu0 0.0
      %5491 = vmatpush1.msra.mxu0 0.0
      %5492 = vmatprep.subr.mxu0 0.0
      %5493 = vmatpush1.msra.mxu0 0.0
      %5494 = vmatprep.subr.mxu0 0.0
      %5495 = vmatpush1.msra.mxu0 0.0
      %5496 = vmatprep.subr.mxu0 0.0
      %5497 = vmatpush1.msra.mxu0 0.0
      %5498 = vmatprep.subr.mxu0 0.0
      %5499 = vmatpush1.msra.mxu0 0.0
      %5500 = vmatprep.subr.mxu0 0.0
      %5501 = vmatpush1.msra.mxu0 0.0
      %5502 = vmatprep.subr.mxu0 0.0
      %5503 = vmatpush1.msra.mxu0 0.0
      %5504 = vmatprep.subr.mxu0 0.0
      %5505 = vmatpush1.msra.mxu0 0.0
      %5506 = vmatprep.subr.mxu0 0.0
      %5507 = vmatpush1.msra.mxu0 0.0
      %5508 = vmatprep.subr.mxu0 0.0
      %5509 = vmatpush1.msra.mxu0 0.0
      %5510 = vmatprep.subr.mxu0 0.0
      %5511 = vmatpush1.msra.mxu0 0.0
      %5512 = vmatprep.subr.mxu0 0.0
      %5513 = vmatpush1.msra.mxu0 %v5478
      %5514 = vmatprep.subr.mxu0 0.0
      %5515 = vmatpush2.msra.mxu0 0.0
      %5516 = vmatprep.subr.mxu0 0.0
      %5517 = vmatpush2.msra.mxu0 0.0
      %5518 = vmatprep.subr.mxu0 0.0
      %5519 = vmatpush2.msra.mxu0 0.0
      %5520 = vmatprep.subr.mxu0 0.0
      %5521 = vmatpush2.msra.mxu0 0.0
      %5522 = vmatprep.subr.mxu0 0.0
      %5523 = vmatpush2.msra.mxu0 0.0
      %5524 = vmatprep.subr.mxu0 0.0
      %5525 = vmatpush2.msra.mxu0 0.0
      %5526 = vmatprep.subr.mxu0 0.0
      %5527 = vmatpush2.msra.mxu0 0.0
      %5528 = vmatprep.subr.mxu0 0.0
      %5529 = vmatpush2.msra.mxu0 0.0
      %5530 = vmatprep.subr.mxu0 0.0
      %5531 = vmatpush2.msra.mxu0 0.0
      %5532 = vmatprep.subr.mxu0 0.0
      %5533 = vmatpush2.msra.mxu0 0.0
      %5534 = vmatprep.subr.mxu0 0.0
      %5535 = vmatpush2.msra.mxu0 0.0
      %5536 = vmatprep.subr.mxu0 0.0
      %5537 = vmatpush2.msra.mxu0 0.0
      %5538 = vmatprep.subr.mxu0 0.0
      %5539 = vmatpush2.msra.mxu0 0.0
      %5540 = vmatprep.subr.mxu0 0.0
      %5541 = vmatpush2.msra.mxu0 0.0
      %5542 = vmatprep.subr.mxu0 0.0
      %5543 = vmatpush2.msra.mxu0 0.0
      %5544 = vmatprep.subr.mxu0 0.0
      %5545 = vmatpush2.msra.mxu0 0.0
      %5546 = vmatprep.mubr.f32.mxu0 0.0
      %5547 = vmatmul.mubr.f32.gmra.mxu0 %v5480
      %v5548 = vpop.f32.mrf.mxu0
      %v5549 = vadd.f32 1e-08, %v5548
      %v5550 = vpop.f32.mrf.mxu0
      %5551 = vdwg.mxu0
      %v5552 = vrsqrt.pop %v5549
      %5554 = vset.pattern.permute.xlu0 0
      %5555 = vperm.xlu0 %5554, %v5552
      %v5556 = vpop.permute.xlu0 %5555
      %v5558 = vsel %vm4227, %v5556, 0.0
      %v5559 = vsel %vm4228, %v5556, 0.0
      %v5560 = vsel %vm4229, %v5556, 0.0
      %v5561 = vsel %vm4230, %v5556, 0.0
      %5562 = vset.pattern.permute.xlu0 1
      %5563 = vperm.xlu0 %5562, %v5552
      %v5564 = vpop.permute.xlu0 %5563
      %v5566 = vsel %vm4257, %v5564, %v5558
      %v5567 = vsel %vm4258, %v5564, %v5559
      %v5568 = vsel %vm4259, %v5564, %v5560
      %v5569 = vsel %vm4260, %v5564, %v5561
      %v5570 = vmul.f32 %v5403, %v5566
      %v5571 = vmul.f32 %v5405, %v5567
      %v5572 = vmul.f32 %v5474, %v5568
      %v5573 = vmul.f32 %v5476, %v5569
      %5574 = vset.pattern.permute.xlu0 4
      %5575 = vperm.xlu0 %5574, %v1592
      %v5576 = vpop.permute.xlu0 %5575
      %v5578 = vlaneseq
      %v5579 = vshrl.u32 %v5578, 7
      %v5580 = vsub.s32 0, %v5579
      %v5581 = vrot.slane %v5576, %v5580
      %v5582 = vmul.f32 %v5581, %v1585
      %v5584 = vlaneseq
      %v5585 = vshrl.u32 %v5584, 7
      %v5586 = vsub.s32 0, %v5585
      %v5587 = vrot.slane %v5582, %v5586
      %v5588 = vlaneseq
      %v5589 = vshrl.u32 %v5588, 7
      %v5590 = vsub.s32 1, %v5589
      %v5591 = vrot.slane %v5582, %v5590
      %v5592 = vlaneseq
      %v5593 = vshrl.u32 %v5592, 7
      %v5594 = vsub.s32 2, %v5593
      %v5595 = vrot.slane %v5582, %v5594
      %v5596 = vlaneseq
      %v5597 = vshrl.u32 %v5596, 7
      %v5598 = vsub.s32 3, %v5597
      %v5599 = vrot.slane %v5582, %v5598
      %v5604 = vadd.f32 %v5570, %v5587
      %v5605 = vadd.f32 %v5571, %v5591
      %v5606 = vadd.f32 %v5572, %v5595
      %v5607 = vadd.f32 %v5573, %v5599
      %5609 = vset.pattern.permute.xlu0 0
      %5610 = vperm.xlu0 %5609, %v1584
      %v5611 = vpop.permute.xlu0 %5610
      %v5613 = vadd.f32 %v5604, %v5611
      %v5614 = vadd.f32 %v5605, %v5611
      %v5615 = vadd.f32 %v5606, %v5611
      %v5616 = vadd.f32 %v5607, %v5611
      %v5617 = vmul.f32 %v5613, 0.2
      %v5618 = vmul.f32 %v5614, 0.2
      %v5619 = vmul.f32 %v5615, 0.2
      %v5620 = vmul.f32 %v5616, 0.2
      %v5621 = vmax.f32 %v5613, %v5617
      %v5622 = vmax.f32 %v5614, %v5618
      %v5623 = vmax.f32 %v5615, %v5619
      %v5624 = vmax.f32 %v5616, %v5620
      %v5625 = vmul.f32 %v5621, 1.4142135
      %v5626 = vmul.f32 %v5622, 1.4142135
      %v5627 = vmul.f32 %v5623, 1.4142135
      %v5628 = vmul.f32 %v5624, 1.4142135
      %5630 = vset.pattern.permute.xlu0 0
      %5631 = vperm.xlu0 %5630, %v1855
      %v5632 = vpop.permute.xlu0 %5631
      %v5634 = vsel %vm4227, %v5632, 0.0
      %v5635 = vsel %vm4228, %v5632, 0.0
      %v5636 = vsel %vm4229, %v5632, 0.0
      %v5637 = vsel %vm4230, %v5632, 0.0
      %5638 = vset.pattern.permute.xlu0 1
      %5639 = vperm.xlu0 %5638, %v1855
      %v5640 = vpop.permute.xlu0 %5639
      %v5642 = vsel %vm4257, %v5640, %v5634
      %v5643 = vsel %vm4258, %v5640, %v5635
      %v5644 = vsel %vm4259, %v5640, %v5636
      %v5645 = vsel %vm4260, %v5640, %v5637
      %v5646 = vmul.f32 %v5625, %v5642
      %v5647 = vmul.f32 %v5626, %v5643
      %v5648 = vmul.f32 %v5627, %v5644
      %v5649 = vmul.f32 %v5628, %v5645
      %5651 = vset.pattern.permute.xlu0 0
      %5652 = vperm.xlu0 %5651, %v1591
      %v5653 = vpop.permute.xlu0 %5652
      %v5656 = vsel %vm2917, %v1590, 0
      %5658 = vmatprep.subr.mxu0 0.0
      %5659 = vmatpush1.msra.mxu0 0.0
      %5660 = vmatprep.subr.mxu0 0.0
      %5661 = vmatpush1.msra.mxu0 0.0
      %5662 = vmatprep.subr.mxu0 0.0
      %5663 = vmatpush1.msra.mxu0 0.0
      %5664 = vmatprep.subr.mxu0 0.0
      %5665 = vmatpush1.msra.mxu0 0.0
      %5666 = vmatprep.subr.mxu0 0.0
      %5667 = vmatpush1.msra.mxu0 0.0
      %5668 = vmatprep.subr.mxu0 0.0
      %5669 = vmatpush1.msra.mxu0 0.0
      %5670 = vmatprep.subr.mxu0 0.0
      %5671 = vmatpush1.msra.mxu0 0.0
      %5672 = vmatprep.subr.mxu0 0.0
      %5673 = vmatpush1.msra.mxu0 0.0
      %5674 = vmatprep.subr.mxu0 0.0
      %5675 = vmatpush1.msra.mxu0 0.0
      %5676 = vmatprep.subr.mxu0 0.0
      %5677 = vmatpush1.msra.mxu0 0.0
      %5678 = vmatprep.subr.mxu0 0.0
      %5679 = vmatpush1.msra.mxu0 0.0
      %5680 = vmatprep.subr.mxu0 0.0
      %5681 = vmatpush1.msra.mxu0 0.0
      %5682 = vmatprep.subr.mxu0 0.0
      %5683 = vmatpush1.msra.mxu0 0.0
      %5684 = vmatprep.subr.mxu0 0.0
      %5685 = vmatpush1.msra.mxu0 0.0
      %5686 = vmatprep.subr.mxu0 0.0
      %5687 = vmatpush1.msra.mxu0 0.0
      %5688 = vmatprep.subr.mxu0 %v5647
      %5689 = vmatpush1.msra.mxu0 %v5646
      %5690 = vmatprep.subr.mxu0 0.0
      %5691 = vmatpush2.msra.mxu0 0.0
      %5692 = vmatprep.subr.mxu0 0.0
      %5693 = vmatpush2.msra.mxu0 0.0
      %5694 = vmatprep.subr.mxu0 0.0
      %5695 = vmatpush2.msra.mxu0 0.0
      %5696 = vmatprep.subr.mxu0 0.0
      %5697 = vmatpush2.msra.mxu0 0.0
      %5698 = vmatprep.subr.mxu0 0.0
      %5699 = vmatpush2.msra.mxu0 0.0
      %5700 = vmatprep.subr.mxu0 0.0
      %5701 = vmatpush2.msra.mxu0 0.0
      %5702 = vmatprep.subr.mxu0 0.0
      %5703 = vmatpush2.msra.mxu0 0.0
      %5704 = vmatprep.subr.mxu0 0.0
      %5705 = vmatpush2.msra.mxu0 0.0
      %5706 = vmatprep.subr.mxu0 0.0
      %5707 = vmatpush2.msra.mxu0 0.0
      %5708 = vmatprep.subr.mxu0 0.0
      %5709 = vmatpush2.msra.mxu0 0.0
      %5710 = vmatprep.subr.mxu0 0.0
      %5711 = vmatpush2.msra.mxu0 0.0
      %5712 = vmatprep.subr.mxu0 0.0
      %5713 = vmatpush2.msra.mxu0 0.0
      %5714 = vmatprep.subr.mxu0 0.0
      %5715 = vmatpush2.msra.mxu0 0.0
      %5716 = vmatprep.subr.mxu0 0.0
      %5717 = vmatpush2.msra.mxu0 0.0
      %5718 = vmatprep.subr.mxu0 0.0
      %5719 = vmatpush2.msra.mxu0 0.0
      %5720 = vmatprep.subr.mxu0 0.0
      %5721 = vmatpush2.msra.mxu0 0.0
      %5722 = vmatprep.mubr.f32.mxu0 0.0
      %5723 = vmatmul.mubr.f32.gmra.mxu0 %v5656
      %v5724 = vpop.f32.mrf.mxu0
      %v5725 = vadd.f32 %v5653, %v5724
      %v5726 = vpop.f32.mrf.mxu0
      %v5727 = vadd.f32 %v5653, %v5726
      %5728 = vdwg.mxu0
      %5729 = vmatprep.subr.mxu0 0.0
      %5730 = vmatpush1.msra.mxu0 0.0
      %5731 = vmatprep.subr.mxu0 0.0
      %5732 = vmatpush1.msra.mxu0 0.0
      %5733 = vmatprep.subr.mxu0 0.0
      %5734 = vmatpush1.msra.mxu0 0.0
      %5735 = vmatprep.subr.mxu0 0.0
      %5736 = vmatpush1.msra.mxu0 0.0
      %5737 = vmatprep.subr.mxu0 0.0
      %5738 = vmatpush1.msra.mxu0 0.0
      %5739 = vmatprep.subr.mxu0 0.0
      %5740 = vmatpush1.msra.mxu0 0.0
      %5741 = vmatprep.subr.mxu0 0.0
      %5742 = vmatpush1.msra.mxu0 0.0
      %5743 = vmatprep.subr.mxu0 0.0
      %5744 = vmatpush1.msra.mxu0 0.0
      %5745 = vmatprep.subr.mxu0 0.0
      %5746 = vmatpush1.msra.mxu0 0.0
      %5747 = vmatprep.subr.mxu0 0.0
      %5748 = vmatpush1.msra.mxu0 0.0
      %5749 = vmatprep.subr.mxu0 0.0
      %5750 = vmatpush1.msra.mxu0 0.0
      %5751 = vmatprep.subr.mxu0 0.0
      %5752 = vmatpush1.msra.mxu0 0.0
      %5753 = vmatprep.subr.mxu0 0.0
      %5754 = vmatpush1.msra.mxu0 0.0
      %5755 = vmatprep.subr.mxu0 0.0
      %5756 = vmatpush1.msra.mxu0 0.0
      %5757 = vmatprep.subr.mxu0 0.0
      %5758 = vmatpush1.msra.mxu0 0.0
      %5759 = vmatprep.subr.mxu0 %v5649
      %5760 = vmatpush1.msra.mxu0 %v5648
      %5761 = vmatprep.subr.mxu0 0.0
      %5762 = vmatpush2.msra.mxu0 0.0
      %5763 = vmatprep.subr.mxu0 0.0
      %5764 = vmatpush2.msra.mxu0 0.0
      %5765 = vmatprep.subr.mxu0 0.0
      %5766 = vmatpush2.msra.mxu0 0.0
      %5767 = vmatprep.subr.mxu0 0.0
      %5768 = vmatpush2.msra.mxu0 0.0
      %5769 = vmatprep.subr.mxu0 0.0
      %5770 = vmatpush2.msra.mxu0 0.0
      %5771 = vmatprep.subr.mxu0 0.0
      %5772 = vmatpush2.msra.mxu0 0.0
      %5773 = vmatprep.subr.mxu0 0.0
      %5774 = vmatpush2.msra.mxu0 0.0
      %5775 = vmatprep.subr.mxu0 0.0
      %5776 = vmatpush2.msra.mxu0 0.0
      %5777 = vmatprep.subr.mxu0 0.0
      %5778 = vmatpush2.msra.mxu0 0.0
      %5779 = vmatprep.subr.mxu0 0.0
      %5780 = vmatpush2.msra.mxu0 0.0
      %5781 = vmatprep.subr.mxu0 0.0
      %5782 = vmatpush2.msra.mxu0 0.0
      %5783 = vmatprep.subr.mxu0 0.0
      %5784 = vmatpush2.msra.mxu0 0.0
      %5785 = vmatprep.subr.mxu0 0.0
      %5786 = vmatpush2.msra.mxu0 0.0
      %5787 = vmatprep.subr.mxu0 0.0
      %5788 = vmatpush2.msra.mxu0 0.0
      %5789 = vmatprep.subr.mxu0 0.0
      %5790 = vmatpush2.msra.mxu0 0.0
      %5791 = vmatprep.subr.mxu0 0.0
      %5792 = vmatpush2.msra.mxu0 0.0
      %5793 = vmatprep.mubr.f32.mxu0 0.0
      %5794 = vmatmul.mubr.f32.gmra.mxu0 %v5656
      %v5795 = vpop.f32.mrf.mxu0
      %v5796 = vadd.f32 %v5653, %v5795
      %v5797 = vpop.f32.mrf.mxu0
      %v5798 = vadd.f32 %v5653, %v5797
      %5799 = vdwg.mxu0
      %5800 = vmatprep.subr.mxu0 %v4062
      %5801 = vmatpush1.msra.mxu0 %v4061
      %5802 = vmatprep.subr.mxu0 %v4058
      %5803 = vmatpush1.msra.mxu0 %v4057
      %5804 = vmatprep.subr.mxu0 %v4054
      %5805 = vmatpush1.msra.mxu0 %v4053
      %5806 = vmatprep.subr.mxu0 %v4050
      %5807 = vmatpush1.msra.mxu0 %v4049
      %5808 = vmatprep.subr.mxu0 %v4046
      %5809 = vmatpush1.msra.mxu0 %v4045
      %5810 = vmatprep.subr.mxu0 %v4042
      %5811 = vmatpush1.msra.mxu0 %v4041
      %5812 = vmatprep.subr.mxu0 %v4038
      %5813 = vmatpush1.msra.mxu0 %v4037
      %5814 = vmatprep.subr.mxu0 %v4034
      %5815 = vmatpush1.msra.mxu0 %v4033
      %5816 = vmatprep.subr.mxu0 %v4030
      %5817 = vmatpush1.msra.mxu0 %v4029
      %5818 = vmatprep.subr.mxu0 %v4026
      %5819 = vmatpush1.msra.mxu0 %v4025
      %5820 = vmatprep.subr.mxu0 %v4022
      %5821 = vmatpush1.msra.mxu0 %v4021
      %5822 = vmatprep.subr.mxu0 %v4018
      %5823 = vmatpush1.msra.mxu0 %v4017
      %5824 = vmatprep.subr.mxu0 %v4014
      %5825 = vmatpush1.msra.mxu0 %v4013
      %5826 = vmatprep.subr.mxu0 %v4010
      %5827 = vmatpush1.msra.mxu0 %v4009
      %5828 = vmatprep.subr.mxu0 %v4006
      %5829 = vmatpush1.msra.mxu0 %v4005
      %5830 = vmatprep.subr.mxu0 %v4002
      %5831 = vmatpush1.msra.mxu0 %v4001
      %5832 = vmatprep.subr.mxu0 0.0
      %5833 = vmatpush2.msra.mxu0 0.0
      %5834 = vmatprep.subr.mxu0 0.0
      %5835 = vmatpush2.msra.mxu0 0.0
      %5836 = vmatprep.subr.mxu0 0.0
      %5837 = vmatpush2.msra.mxu0 0.0
      %5838 = vmatprep.subr.mxu0 0.0
      %5839 = vmatpush2.msra.mxu0 0.0
      %5840 = vmatprep.subr.mxu0 0.0
      %5841 = vmatpush2.msra.mxu0 0.0
      %5842 = vmatprep.subr.mxu0 0.0
      %5843 = vmatpush2.msra.mxu0 0.0
      %5844 = vmatprep.subr.mxu0 0.0
      %5845 = vmatpush2.msra.mxu0 0.0
      %5846 = vmatprep.subr.mxu0 0.0
      %5847 = vmatpush2.msra.mxu0 0.0
      %5848 = vmatprep.subr.mxu0 0.0
      %5849 = vmatpush2.msra.mxu0 0.0
      %5850 = vmatprep.subr.mxu0 0.0
      %5851 = vmatpush2.msra.mxu0 0.0
      %5852 = vmatprep.subr.mxu0 0.0
      %5853 = vmatpush2.msra.mxu0 0.0
      %5854 = vmatprep.subr.mxu0 0.0
      %5855 = vmatpush2.msra.mxu0 0.0
      %5856 = vmatprep.subr.mxu0 0.0
      %5857 = vmatpush2.msra.mxu0 0.0
      %5858 = vmatprep.subr.mxu0 0.0
      %5859 = vmatpush2.msra.mxu0 0.0
      %5860 = vmatprep.subr.mxu0 0.0
      %5861 = vmatpush2.msra.mxu0 0.0
      %5862 = vmatprep.subr.mxu0 0.0
      %5863 = vmatpush2.msra.mxu0 0.0
      %5864 = vmatprep.mubr.f32.mxu0 0.0
      %5865 = vmatmul.mubr.f32.gmra.mxu0 %v3879
      %v5866 = vpop.f32.mrf.mxu0
      %v5867 = vadd.f32 %v5725, %v5866
      %v5868 = vpop.f32.mrf.mxu0
      %v5869 = vadd.f32 %v5727, %v5868
      %5870 = vdwg.mxu0
      %5871 = vmatprep.subr.mxu0 %v4064
      %5872 = vmatpush1.msra.mxu0 %v4063
      %5873 = vmatprep.subr.mxu0 %v4060
      %5874 = vmatpush1.msra.mxu0 %v4059
      %5875 = vmatprep.subr.mxu0 %v4056
      %5876 = vmatpush1.msra.mxu0 %v4055
      %5877 = vmatprep.subr.mxu0 %v4052
      %5878 = vmatpush1.msra.mxu0 %v4051
      %5879 = vmatprep.subr.mxu0 %v4048
      %5880 = vmatpush1.msra.mxu0 %v4047
      %5881 = vmatprep.subr.mxu0 %v4044
      %5882 = vmatpush1.msra.mxu0 %v4043
      %5883 = vmatprep.subr.mxu0 %v4040
      %5884 = vmatpush1.msra.mxu0 %v4039
      %5885 = vmatprep.subr.mxu0 %v4036
      %5886 = vmatpush1.msra.mxu0 %v4035
      %5887 = vmatprep.subr.mxu0 %v4032
      %5888 = vmatpush1.msra.mxu0 %v4031
      %5889 = vmatprep.subr.mxu0 %v4028
      %5890 = vmatpush1.msra.mxu0 %v4027
      %5891 = vmatprep.subr.mxu0 %v4024
      %5892 = vmatpush1.msra.mxu0 %v4023
      %5893 = vmatprep.subr.mxu0 %v4020
      %5894 = vmatpush1.msra.mxu0 %v4019
      %5895 = vmatprep.subr.mxu0 %v4016
      %5896 = vmatpush1.msra.mxu0 %v4015
      %5897 = vmatprep.subr.mxu0 %v4012
      %5898 = vmatpush1.msra.mxu0 %v4011
      %5899 = vmatprep.subr.mxu0 %v4008
      %5900 = vmatpush1.msra.mxu0 %v4007
      %5901 = vmatprep.subr.mxu0 %v4004
      %5902 = vmatpush1.msra.mxu0 %v4003
      %5903 = vmatprep.subr.mxu0 0.0
      %5904 = vmatpush2.msra.mxu0 0.0
      %5905 = vmatprep.subr.mxu0 0.0
      %5906 = vmatpush2.msra.mxu0 0.0
      %5907 = vmatprep.subr.mxu0 0.0
      %5908 = vmatpush2.msra.mxu0 0.0
      %5909 = vmatprep.subr.mxu0 0.0
      %5910 = vmatpush2.msra.mxu0 0.0
      %5911 = vmatprep.subr.mxu0 0.0
      %5912 = vmatpush2.msra.mxu0 0.0
      %5913 = vmatprep.subr.mxu0 0.0
      %5914 = vmatpush2.msra.mxu0 0.0
      %5915 = vmatprep.subr.mxu0 0.0
      %5916 = vmatpush2.msra.mxu0 0.0
      %5917 = vmatprep.subr.mxu0 0.0
      %5918 = vmatpush2.msra.mxu0 0.0
      %5919 = vmatprep.subr.mxu0 0.0
      %5920 = vmatpush2.msra.mxu0 0.0
      %5921 = vmatprep.subr.mxu0 0.0
      %5922 = vmatpush2.msra.mxu0 0.0
      %5923 = vmatprep.subr.mxu0 0.0
      %5924 = vmatpush2.msra.mxu0 0.0
      %5925 = vmatprep.subr.mxu0 0.0
      %5926 = vmatpush2.msra.mxu0 0.0
      %5927 = vmatprep.subr.mxu0 0.0
      %5928 = vmatpush2.msra.mxu0 0.0
      %5929 = vmatprep.subr.mxu0 0.0
      %5930 = vmatpush2.msra.mxu0 0.0
      %5931 = vmatprep.subr.mxu0 0.0
      %5932 = vmatpush2.msra.mxu0 0.0
      %5933 = vmatprep.subr.mxu0 0.0
      %5934 = vmatpush2.msra.mxu0 0.0
      %5935 = vmatprep.mubr.f32.mxu0 0.0
      %5936 = vmatmul.mubr.f32.gmra.mxu0 %v3879
      %v5937 = vpop.f32.mrf.mxu0
      %v5938 = vadd.f32 %v5796, %v5937
      %v5939 = vpop.f32.mrf.mxu0
      %v5940 = vadd.f32 %v5798, %v5939
      %5941 = vdwg.mxu0
      %v5946 = vcombine.low %v5867, %v5869
      %v5947 = vcombine.low %v5938, %v5940
      %5950 = vst [vmem:[%s1475] sm:$0x77] %v5946
      %5951 = vst [vmem:[%s1475 + $0x8] sm:$0x77] %v5947
      %p5952 = scmp.lt.s32.totalorder %s74, 1
      %s5953 = scalar_select %p5952, %s74, 1
      %s5954 = smul.addr %s5953, 4
      %s5955 = smul.addr %s5954, 4
      %s5956 = scalar_lea.vmem %s63, %s5955
      // Predicated region
      $region145: #{zssgan_forward.3} parent=143 // pred_check
        %p5957 = pneg %p893
      $region146: #{zssgan_forward.3} parent=143 // pred_check_branch
        %5959 = sbr.rel (%p5957) target = $region148
      $region147: #{zssgan_forward.3} parent=143 // pred_region
        _
      $region148: #{zssgan_forward.3} parent=143 // pred_fallthru
        _
    $region144: #{zssgan_forward.3} parent=5 // pred_fallthru
      _
    %p5960 = scmp.le.s32.totalorder 2, %s69
    // Predicated region
    $region149: #{zssgan_forward.3} parent=5 // pred_check
      %p5961 = pneg %p5960
    $region150: #{zssgan_forward.3} parent=5 // pred_check_branch
      %5963 = sbr.rel (%p5961) target = $region152
    $region151: #{zssgan_forward.3} parent=5 // pred_region
      %s5964 = ssub.s32 %s69, 2
      // Predicated region
      $region153: #{zssgan_forward.3} parent=151 // pred_check
        %p5965 = pneg %p899
      $region154: #{zssgan_forward.3} parent=151 // pred_check_branch
        %5967 = sbr.rel (%p5965) target = $region156
      $region155: #{zssgan_forward.3} parent=151 // pred_region
        %p5968 = scmp.lt.s32.totalorder %s75, 1
        %s5969 = scalar_select %p5968, %s75, 1
        %s5970 = smul.addr %s5969, 4
        %s5971 = smul.addr %s5970, 4
        %s5972 = scalar_lea.vmem %s63, %s5971
      $region156: #{zssgan_forward.3} parent=151 // pred_fallthru
        _
    $region152: #{zssgan_forward.3} parent=5 // pred_fallthru
      _
  $region6: #{zssgan_forward.3} parent=0 // loop_footer
    %s73 = sadd.s32 1, %s69
  $region7: #{zssgan_forward.3} parent=0 // loop_footer_branch
    %68 = sbr.rel target = $region3
  $region8: #{zssgan_forward.3} parent=0 // loop_exit
    _

</llo_original>
